<compile_context>
chip_gen: v6e
topology: v6e:2x2x1
jax: 0.10.0
libtpu: 0.0.40
codegen_flags: <defaults>
</compile_context>

<pallas_src>
import functools
import math

import jax
import jax.numpy as jnp
from jax import lax
from jax.experimental import pallas as pl
from jax.experimental.pallas import tpu as pltpu


# --------------------------------------------------------------------------- #
# In-kernel helpers
# --------------------------------------------------------------------------- #
def _layernorm(x, gamma, beta, eps=1e-5):
    mu = jnp.mean(x, axis=-1, keepdims=True)
    xc = x - mu
    var = jnp.mean(xc * xc, axis=-1, keepdims=True)
    return xc * lax.rsqrt(var + eps) * gamma + beta


def _gru_scan(proj_ref, whh, bhn, write_fn, unroll):
    """Shared GRU recurrence over the time axis.

    proj_ref : (S, B, 3*G) bf16 scratch holding x@W_ih + b_ih (+ b_hh for r,z),
               gate column layout [r | z | n], each G lanes wide.
    whh      : (G, 3*G) bf16 recurrent weight (pre-transposed, same layout).
    bhn      : (1, G) f32 b_hh of the n gate (must stay inside r * (...)).
    write_fn : (step, h_new) -> None   stores the step output.
    """
    S, B, three_g = proj_ref.shape
    G = three_g // 3

    def body(i, h):
        xp = proj_ref[i].astype(jnp.float32)                              # (B, 3G)
        hp = jnp.dot(h.astype(jnp.bfloat16), whh,
                     preferred_element_type=jnp.float32)                  # (B, 3G)
        # One EUP pass for both r and z (contiguous, 128-lane aligned).
        rz = jax.nn.sigmoid(xp[:, :2 * G] + hp[:, :2 * G])
        r = rz[:, :G]
        z = rz[:, G:]
        n = jnp.tanh(xp[:, 2 * G:] + r * (hp[:, 2 * G:] + bhn))
        h_new = (1.0 - z) * n + z * h
        write_fn(i, h_new)
        return h_new

    lax.fori_loop(0, S, body, jnp.zeros((B, G), jnp.float32), unroll=unroll)


# --------------------------------------------------------------------------- #
# Fused kernel: biGRU -> LN1 -> GRU1 -> (residual) LN2 -> GRU2
# --------------------------------------------------------------------------- #
def _extraction_gru_kernel(hidden_size, unroll,
                           x_ref,                                   # (S,Bt,2E) bf16
                           wih01_ref, whh01_ref, b01_ref, bhn01_ref,  # merged biGRU
                           ln1g_ref, ln1b_ref,
                           wih1_ref, whh1_ref, b1_ref, bhn1_ref,      # gru_1
                           ln2g_ref, ln2b_ref,
                           wih2_ref, whh2_ref, b2_ref, bhn2_ref,      # gru_2
                           o_ref,                                   # (S,Bt,2H) f32
                           proj_ref,                                # (S,Bt,6H) bf16
                           acc_ref):                                # (S,Bt,2H) f32
    H = hidden_size
    G = 2 * H                       # 2H: biGRU pair width == unidirectional width
    S, Bt, _ = x_ref.shape

    def project(rows_bf16, wih_ref, b_ref):
        # One sequence-batched MXU pass over all S*Bt rows, stored as bf16.
        p = jnp.dot(rows_bf16, wih_ref[...],
                    preferred_element_type=jnp.float32) + b_ref[...]
        proj_ref[...] = p.reshape(S, Bt, 3 * G).astype(jnp.bfloat16)

    # ---- bidirectional GRU: one merged projection + one interleaved scan ----
    project(x_ref[...].reshape(S * Bt, x_ref.shape[-1]), wih01_ref, b01_ref)

    def write_bi(i, h_new):
        # fwd half of the state is time i, bwd half is time S-1-i.
        acc_ref[i, :, 0:H] = h_new[:, 0:H]
        acc_ref[S - 1 - i, :, H:G] = h_new[:, H:G]

    _gru_scan(proj_ref, whh01_ref[...], bhn01_ref[...], write_bi, unroll)

    # ---- LayerNorm_1 -> gru_1 (residual accumulated in place) ---------------
    gru0 = acc_ref[...].reshape(S * Bt, G)
    ln1 = _layernorm(gru0, ln1g_ref[...], ln1b_ref[...])
    project(ln1.astype(jnp.bfloat16), wih1_ref, b1_ref)

    def write_residual(t, h_new):
        acc_ref[t] = acc_ref[t] + h_new          # acc becomes h0 + gru_1(LN1(h0))

    _gru_scan(proj_ref, whh1_ref[...], bhn1_ref[...], write_residual, unroll)

    # ---- LayerNorm_2 -> gru_2 (writes straight to the output) ---------------
    ln2 = _layernorm(acc_ref[...].reshape(S * Bt, G), ln2g_ref[...], ln2b_ref[...])
    project(ln2.astype(jnp.bfloat16), wih2_ref, b2_ref)

    def write_out(t, h_new):
        o_ref[t] = h_new

    _gru_scan(proj_ref, whh2_ref[...], bhn2_ref[...], write_out, unroll)


# --------------------------------------------------------------------------- #
# Host-side weight packing (PyTorch layout -> kernel layout)
# --------------------------------------------------------------------------- #
def _pack_bigru_params(p, embed_size, hidden_size):
    """Merge fwd/bwd biGRU weights into one MXU-friendly set.

    Column layout of the 6H gate axis: [r_f|r_b, z_f|z_b, n_f|n_b] so each
    gate pair is a 128-lane aligned slice.  W_ih rows 0:E take x[t]; rows
    E:2E take x[S-1-t] (time-reversed copy concatenated on the host).
    b_hh of r and z is folded into the projection bias.
    """
    E, H = embed_size, hidden_size
    G = 2 * H
    wih = jnp.zeros((2 * E, 3 * G), jnp.float32)
    whh = jnp.zeros((G, 3 * G), jnp.float32)
    bias = jnp.zeros((1, 3 * G), jnp.float32)
    for g in range(3):                               # gate order: r, z, n
        sg = slice(H * g, H * (g + 1))               # plain [r,z,n] layout
        cf = slice(G * g, G * g + H)                 # fwd half of gate pair g
        cb = slice(G * g + H, G * (g + 1))           # bwd half of gate pair g
        wih = wih.at[:E, cf].set(p["wih_f"][:, sg])
        wih = wih.at[E:, cb].set(p["wih_b"][:, sg])
        whh = whh.at[:H, cf].set(p["whh_f"][:, sg])
        whh = whh.at[H:, cb].set(p["whh_b"][:, sg])
        if g < 2:                                    # fold b_hh of r, z
            bias = bias.at[:, cf].set(p["bih_f"][:, sg] + p["bhh_f"][:, sg])
            bias = bias.at[:, cb].set(p["bih_b"][:, sg] + p["bhh_b"][:, sg])
        else:                                        # b_hh_n stays in-recurrence
            bias = bias.at[:, cf].set(p["bih_f"][:, sg])
            bias = bias.at[:, cb].set(p["bih_b"][:, sg])
    bhn = jnp.concatenate([p["bhh_f"][:, 2 * H:], p["bhh_b"][:, 2 * H:]], axis=-1)
    return wih.astype(jnp.bfloat16), whh.astype(jnp.bfloat16), bias, bhn


def _pack_gru_params(wih, whh, bih, bhh):
    """Fold b_hh of r,z into the projection bias; keep b_hh_n separate."""
    D = whh.shape[0]
    bias = jnp.concatenate([bih[:, :2 * D] + bhh[:, :2 * D], bih[:, 2 * D:]], axis=-1)
    return wih.astype(jnp.bfloat16), whh.astype(jnp.bfloat16), bias, bhh[:, 2 * D:]


# --------------------------------------------------------------------------- #
# Public wrapper
# --------------------------------------------------------------------------- #
def extraction_gru(x, inp_len, params, hidden_size, batch_tiles=1):
    """Forward pass of Extraction_GRU.

    x          : (B, S, E) f32
    inp_len    : (B,) i32 -- accepted for parity; the reference forward()
                 never uses it.
    params     : plain (pre-transposed, [r,z,n] gate order) parameters from
                 init_params(); packed for the kernel here on the host.
    batch_tiles: grid tiles over the batch ("parallel"); set to 2 on v7x to
                 shard independent batch halves across its two TensorCores.
    """
    del inp_len  # reference forward() ignores it entirely (no masking)
    B, S, E = x.shape
    H = hidden_size
    G = 2 * H
    if G % 128 != 0:
        raise ValueError("2*hidden_size must be a multiple of 128 for this kernel")

    # Pad batch to a multiple of 8 sublanes (and evenly across batch tiles).
    step = 8 * batch_tiles
    Bp = max(step, ((B + step - 1) // step) * step)
    Bt = Bp // batch_tiles

    xt = jnp.transpose(x, (1, 0, 2))                      # (S, B, E) time-major
    if Bp != B:
        xt = jnp.pad(xt, ((0, 0), (0, Bp - B), (0, 0)))
    # Concatenate x with its time reversal so the interleaved fwd/bwd biGRU
    # scan reads both directions' inputs from the same proj[t] row.
    xcat = jnp.concatenate([xt, xt[::-1]], axis=-1).astype(jnp.bfloat16)  # (S,Bp,2E)

    wih01, whh01, b01, bhn01 = _pack_bigru_params(params, E, H)
    wih1, whh1, b1, bhn1 = _pack_gru_params(params["wih1"], params["whh1"],
                                            params["bih1"], params["bhh1"])
    wih2, whh2, b2, bhn2 = _pack_gru_params(params["wih2"], params["whh2"],
                                            params["bih2"], params["bhh2"])

    unroll = True if S <= 16 else 8   # bounded unroll for long sequences

    def full(shape):
        return pl.BlockSpec(shape, lambda b: (0,) * len(shape))

    grid_spec = pltpu.PrefetchScalarGridSpec(
        num_scalar_prefetch=0,
        grid=(batch_tiles,),
        in_specs=[
            pl.BlockSpec((S, Bt, 2 * E), lambda b: (0, b, 0)),
            # merged biGRU
            full((2 * E, 3 * G)), full((G, 3 * G)), full((1, 3 * G)), full((1, G)),
            # LayerNorm 1
            full((1, G)), full((1, G)),
            # gru_1
            full((G, 3 * G)), full((G, 3 * G)), full((1, 3 * G)), full((1, G)),
            # LayerNorm 2
            full((1, G)), full((1, G)),
            # gru_2
            full((G, 3 * G)), full((G, 3 * G)), full((1, 3 * G)), full((1, G)),
        ],
        out_specs=pl.BlockSpec((S, Bt, G), lambda b: (0, b, 0)),
        scratch_shapes=[
            pltpu.VMEM((S, Bt, 3 * G), jnp.bfloat16),   # shared projection scratch
            pltpu.VMEM((S, Bt, G), jnp.float32),        # biGRU out, then + gru_1
        ],
    )

    fn = pl.pallas_call(
        functools.partial(_extraction_gru_kernel, H, unroll),
        out_shape=jax.ShapeDtypeStruct((S, Bp, G), jnp.float32),
        grid_spec=grid_spec,
        compiler_params=pltpu.CompilerParams(
            dimension_semantics=("parallel",),          # batch tiles independent
            vmem_limit_bytes=32 * 1024 * 1024,
        ),
    )

    out_t = fn(xcat,
               wih01, whh01, b01, bhn01,
               params["ln1_g"], params["ln1_b"],
               wih1, whh1, b1, bhn1,
               params["ln2_g"], params["ln2_b"],
               wih2, whh2, b2, bhn2)

    return jnp.transpose(out_t, (1, 0, 2))[:B]            # (B, S, 2H)


# --------------------------------------------------------------------------- #
# Parameters (PyTorch-default init) and a pure-JAX f32 reference
# --------------------------------------------------------------------------- #
def init_params(key, embed_size, hidden_size):
    """GRU weights/biases ~ U(-1/sqrt(h), 1/sqrt(h)); LayerNorm gamma=1, beta=0.
    Weights stored pre-transposed to (in_dim, 3h), gate order [r, z, n]."""
    E, H = embed_size, hidden_size
    G = 2 * H
    ks = jax.random.split(key, 16)

    def u(k, shape, bound):
        return jax.random.uniform(k, shape, jnp.float32, -bound, bound)

    kH, kG = 1.0 / math.sqrt(H), 1.0 / math.sqrt(G)
    return dict(
        wih_f=u(ks[0], (E, 3 * H), kH), whh_f=u(ks[1], (H, 3 * H), kH),
        bih_f=u(ks[2], (1, 3 * H), kH), bhh_f=u(ks[3], (1, 3 * H), kH),
        wih_b=u(ks[4], (E, 3 * H), kH), whh_b=u(ks[5], (H, 3 * H), kH),
        bih_b=u(ks[6], (1, 3 * H), kH), bhh_b=u(ks[7], (1, 3 * H), kH),
        ln1_g=jnp.ones((1, G), jnp.float32), ln1_b=jnp.zeros((1, G), jnp.float32),
        wih1=u(ks[8], (G, 3 * G), kG), whh1=u(ks[9], (G, 3 * G), kG),
        bih1=u(ks[10], (1, 3 * G), kG), bhh1=u(ks[11], (1, 3 * G), kG),
        ln2_g=jnp.ones((1, G), jnp.float32), ln2_b=jnp.zeros((1, G), jnp.float32),
        wih2=u(ks[12], (G, 3 * G), kG), whh2=u(ks[13], (G, 3 * G), kG),
        bih2=u(ks[14], (1, 3 * G), kG), bhh2=u(ks[15], (1, 3 * G), kG),
    )


def _reference_forward(x, params, hidden_size):
    """Pure-JAX f32 reference of the PyTorch module forward (eval mode)."""
    p = params

    def gru_seq(seq, wih, whh, bih, bhh, reverse=False):
        B, S, _ = seq.shape
        D = whh.shape[0]
        h = jnp.zeros((B, D), jnp.float32)
        order = range(S - 1, -1, -1) if reverse else range(S)
        outs = [None] * S
        for t in order:
            xp = seq[:, t] @ wih + bih
            hp = h @ whh + bhh
            r = jax.nn.sigmoid(xp[:, :D] + hp[:, :D])
            z = jax.nn.sigmoid(xp[:, D:2 * D] + hp[:, D:2 * D])
            n = jnp.tanh(xp[:, 2 * D:] + r * hp[:, 2 * D:])
            h = (1.0 - z) * n + z * h
            outs[t] = h
        return jnp.stack(outs, axis=1)

    def ln(v, g, b, eps=1e-5):
        mu = v.mean(-1, keepdims=True)
        var = ((v - mu) ** 2).mean(-1, keepdims=True)
        return (v - mu) / jnp.sqrt(var + eps) * g + b

    h0 = jnp.concatenate(
        [gru_seq(x, p["wih_f"], p["whh_f"], p["bih_f"], p["bhh_f"]),
         gru_seq(x, p["wih_b"], p["whh_b"], p["bih_b"], p["bhh_b"], reverse=True)],
        axis=-1)
    h1 = gru_seq(ln(h0, p["ln1_g"], p["ln1_b"]),
                 p["wih1"], p["whh1"], p["bih1"], p["bhh1"])
    h2 = ln(h0 + h1, p["ln2_g"], p["ln2_b"])
    return gru_seq(h2, p["wih2"], p["whh2"], p["bih2"], p["bhh2"])


if __name__ == "__main__":
    B, S = 2, 8
    EMBED, HIDDEN = 32, 64            # 2*HIDDEN = 128 -> lane-dense gates/outputs

    key = jax.random.PRNGKey(0)
    kx, kp = jax.random.split(key)
    x = jax.random.normal(kx, (B, S, EMBED), jnp.float32)
    inp_len = jnp.array([S, 5], dtype=jnp.int32)   # unused by reference forward()
    params = init_params(kp, EMBED, HIDDEN)

    out = extraction_gru(x, inp_len, params, HIDDEN)
    jax.block_until_ready(out)

    assert out.shape == (B, S, 2 * HIDDEN)
    assert bool(jnp.all(jnp.isfinite(out)))

    # Structural correctness check against an f32 reference (loose tolerance:
    # the kernel intentionally uses bf16 weights / projection scratch).
    ref = _reference_forward(x, params, HIDDEN)
    rel_l2 = float(jnp.linalg.norm(out - ref) / (jnp.linalg.norm(ref) + 1e-12))
    assert rel_l2 < 0.1, f"kernel deviates from f32 reference: rel_l2={rel_l2}"

    print("KERNEL_OK")
</pallas_src>

<mosaic_0001>
module attributes {stable_mosaic.version = 11 : i64} {
  func.func @_extraction_gru_kernel(%arg0: i32, %arg1: memref<8x8x64xbf16, #tpu.memory_space<vmem>>, %arg2: memref<64x384xbf16, #tpu.memory_space<vmem>>, %arg3: memref<128x384xbf16, #tpu.memory_space<vmem>>, %arg4: memref<1x384xf32, #tpu.memory_space<vmem>>, %arg5: memref<1x128xf32, #tpu.memory_space<vmem>>, %arg6: memref<1x128xf32, #tpu.memory_space<vmem>>, %arg7: memref<1x128xf32, #tpu.memory_space<vmem>>, %arg8: memref<128x384xbf16, #tpu.memory_space<vmem>>, %arg9: memref<128x384xbf16, #tpu.memory_space<vmem>>, %arg10: memref<1x384xf32, #tpu.memory_space<vmem>>, %arg11: memref<1x128xf32, #tpu.memory_space<vmem>>, %arg12: memref<1x128xf32, #tpu.memory_space<vmem>>, %arg13: memref<1x128xf32, #tpu.memory_space<vmem>>, %arg14: memref<128x384xbf16, #tpu.memory_space<vmem>>, %arg15: memref<128x384xbf16, #tpu.memory_space<vmem>>, %arg16: memref<1x384xf32, #tpu.memory_space<vmem>>, %arg17: memref<1x128xf32, #tpu.memory_space<vmem>>, %arg18: memref<8x8x128xf32, #tpu.memory_space<vmem>>, %arg19: memref<8x8x384xbf16, #tpu.memory_space<vmem>>, %arg20: memref<8x8x128xf32, #tpu.memory_space<vmem>>) attributes {dimension_semantics = [#tpu.dimension_semantics<parallel>], iteration_bounds = array<i64: 1>, scalar_prefetch = 0 : i64, scratch_operands = 2 : i64, tpu.core_type = #tpu.core_type<tc>, window_params = [{transform_indices = @transform_0, window_bounds = array<i64: 8, 8, 64>}, {pipeline_mode = #tpu.pipeline_mode<synchronous>, transform_indices = @transform_1, window_bounds = array<i64: 64, 384>}, {pipeline_mode = #tpu.pipeline_mode<synchronous>, transform_indices = @transform_2, window_bounds = array<i64: 128, 384>}, {pipeline_mode = #tpu.pipeline_mode<synchronous>, transform_indices = @transform_3, window_bounds = array<i64: 1, 384>}, {pipeline_mode = #tpu.pipeline_mode<synchronous>, transform_indices = @transform_4, window_bounds = array<i64: 1, 128>}, {pipeline_mode = #tpu.pipeline_mode<synchronous>, transform_indices = @transform_5, window_bounds = array<i64: 1, 128>}, {pipeline_mode = #tpu.pipeline_mode<synchronous>, transform_indices = @transform_6, window_bounds = array<i64: 1, 128>}, {pipeline_mode = #tpu.pipeline_mode<synchronous>, transform_indices = @transform_7, window_bounds = array<i64: 128, 384>}, {pipeline_mode = #tpu.pipeline_mode<synchronous>, transform_indices = @transform_8, window_bounds = array<i64: 128, 384>}, {pipeline_mode = #tpu.pipeline_mode<synchronous>, transform_indices = @transform_9, window_bounds = array<i64: 1, 384>}, {pipeline_mode = #tpu.pipeline_mode<synchronous>, transform_indices = @transform_10, window_bounds = array<i64: 1, 128>}, {pipeline_mode = #tpu.pipeline_mode<synchronous>, transform_indices = @transform_11, window_bounds = array<i64: 1, 128>}, {pipeline_mode = #tpu.pipeline_mode<synchronous>, transform_indices = @transform_12, window_bounds = array<i64: 1, 128>}, {pipeline_mode = #tpu.pipeline_mode<synchronous>, transform_indices = @transform_13, window_bounds = array<i64: 128, 384>}, {pipeline_mode = #tpu.pipeline_mode<synchronous>, transform_indices = @transform_14, window_bounds = array<i64: 128, 384>}, {pipeline_mode = #tpu.pipeline_mode<synchronous>, transform_indices = @transform_15, window_bounds = array<i64: 1, 384>}, {pipeline_mode = #tpu.pipeline_mode<synchronous>, transform_indices = @transform_16, window_bounds = array<i64: 1, 128>}, {transform_indices = @transform_17, window_bounds = array<i64: 8, 8, 128>}]} {
    %c0 = arith.constant 0 : index
    %c0_0 = arith.constant 0 : index
    %c0_1 = arith.constant 0 : index
    %0 = vector.load %arg1[%c0, %c0_0, %c0_1] : memref<8x8x64xbf16, #tpu.memory_space<vmem>>, vector<8x8x64xbf16>
    %1 = vector.shape_cast %0 : vector<8x8x64xbf16> to vector<64x64xbf16>
    %c0_2 = arith.constant 0 : index
    %c0_3 = arith.constant 0 : index
    %2 = vector.load %arg2[%c0_2, %c0_3] : memref<64x384xbf16, #tpu.memory_space<vmem>>, vector<64x384xbf16>
    %cst = arith.constant dense<0.000000e+00> : vector<64x384xf32>
    %3 = tpu.matmul %1, %2, %cst {dimension_numbers = #tpu.dot_dimension_numbers<[1], [0], [0], [1], [0, 0, 1, 1], [], []>} : vector<64x64xbf16>, vector<64x384xbf16>, vector<64x384xf32> -> vector<64x384xf32>
    %c0_4 = arith.constant 0 : index
    %c0_5 = arith.constant 0 : index
    %4 = vector.load %arg4[%c0_4, %c0_5] : memref<1x384xf32, #tpu.memory_space<vmem>>, vector<1x384xf32>
    %5 = vector.broadcast %4 : vector<1x384xf32> to vector<64x384xf32>
    %6 = arith.addf %3, %5 : vector<64x384xf32>
    %7 = vector.shape_cast %6 : vector<64x384xf32> to vector<8x8x384xf32>
    %8 = arith.truncf %7 : vector<8x8x384xf32> to vector<8x8x384xbf16>
    %c0_6 = arith.constant 0 : index
    %c0_7 = arith.constant 0 : index
    %c0_8 = arith.constant 0 : index
    %9 = vector.load %arg19[%c0_6, %c0_7, %c0_8] : memref<8x8x384xbf16, #tpu.memory_space<vmem>>, vector<8x8x384xbf16>
    tpu.vector_store %arg19[%c0_6, %c0_7, %c0_8], %8 {strides = array<i32>} : memref<8x8x384xbf16, #tpu.memory_space<vmem>>, vector<8x8x384xbf16>,
    %c0_9 = arith.constant 0 : index
    %c0_10 = arith.constant 0 : index
    %10 = vector.load %arg3[%c0_9, %c0_10] : memref<128x384xbf16, #tpu.memory_space<vmem>>, vector<128x384xbf16>
    %c0_11 = arith.constant 0 : index
    %c0_12 = arith.constant 0 : index
    %11 = vector.load %arg5[%c0_11, %c0_12] : memref<1x128xf32, #tpu.memory_space<vmem>>, vector<1x128xf32>
    %cst_13 = arith.constant 0.000000e+00 : f32
    %12 = vector.broadcast %cst_13 : f32 to vector<8x128xf32>
    %c0_i32 = arith.constant 0 : i32
    %13 = arith.index_cast %c0_i32 : i32 to index
    %c0_14 = arith.constant 0 : index
    %c0_15 = arith.constant 0 : index
    %14 = vector.load %arg19[%13, %c0_14, %c0_15] : memref<8x8x384xbf16, #tpu.memory_space<vmem>>, vector<1x8x384xbf16>
    %15 = vector.shape_cast %14 : vector<1x8x384xbf16> to vector<8x384xbf16>
    %16 = arith.extf %15 : vector<8x384xbf16> to vector<8x384xf32>
    %17 = arith.truncf %12 : vector<8x128xf32> to vector<8x128xbf16>
    %cst_16 = arith.constant dense<0.000000e+00> : vector<8x384xf32>
    %18 = tpu.matmul %17, %10, %cst_16 {dimension_numbers = #tpu.dot_dimension_numbers<[1], [0], [0], [1], [0, 0, 1, 1], [], []>} : vector<8x128xbf16>, vector<128x384xbf16>, vector<8x384xf32> -> vector<8x384xf32>
    %19 = vector.extract_strided_slice %16 {offsets = [0, 0], sizes = [8, 256], strides = [1, 1]} : vector<8x384xf32> to vector<8x256xf32>
    %20 = vector.extract_strided_slice %18 {offsets = [0, 0], sizes = [8, 256], strides = [1, 1]} : vector<8x384xf32> to vector<8x256xf32>
    %21 = arith.addf %19, %20 : vector<8x256xf32>
    %22 = arith.negf %21 : vector<8x256xf32>
    %23 = math.exp %22 : vector<8x256xf32>
    %cst_17 = arith.constant 1.000000e+00 : f32
    %24 = vector.broadcast %cst_17 : f32 to vector<8x256xf32>
    %25 = arith.addf %24, %23 : vector<8x256xf32>
    %26 = arith.divf %24, %25 : vector<8x256xf32>
    %27 = vector.extract_strided_slice %26 {offsets = [0, 0], sizes = [8, 128], strides = [1, 1]} : vector<8x256xf32> to vector<8x128xf32>
    %28 = vector.extract_strided_slice %26 {offsets = [0, 128], sizes = [8, 128], strides = [1, 1]} : vector<8x256xf32> to vector<8x128xf32>
    %29 = vector.extract_strided_slice %16 {offsets = [0, 256], sizes = [8, 128], strides = [1, 1]} : vector<8x384xf32> to vector<8x128xf32>
    %30 = vector.extract_strided_slice %18 {offsets = [0, 256], sizes = [8, 128], strides = [1, 1]} : vector<8x384xf32> to vector<8x128xf32>
    %31 = vector.broadcast %11 : vector<1x128xf32> to vector<8x128xf32>
    %32 = arith.addf %30, %31 : vector<8x128xf32>
    %33 = arith.mulf %27, %32 : vector<8x128xf32>
    %34 = arith.addf %29, %33 : vector<8x128xf32>
    %35 = math.tanh %34 : vector<8x128xf32>
    %cst_18 = arith.constant 1.000000e+00 : f32
    %36 = vector.broadcast %cst_18 : f32 to vector<8x128xf32>
    %37 = arith.subf %36, %28 : vector<8x128xf32>
    %38 = arith.mulf %37, %35 : vector<8x128xf32>
    %39 = arith.mulf %28, %12 : vector<8x128xf32>
    %40 = arith.addf %38, %39 : vector<8x128xf32>
    %41 = vector.extract_strided_slice %40 {offsets = [0, 0], sizes = [8, 64], strides = [1, 1]} : vector<8x128xf32> to vector<8x64xf32>
    %42 = arith.index_cast %c0_i32 : i32 to index
    %c0_19 = arith.constant 0 : index
    %c0_20 = arith.constant 0 : index
    %43 = vector.load %arg20[%42, %c0_19, %c0_20] : memref<8x8x128xf32, #tpu.memory_space<vmem>>, vector<1x8x64xf32>
    %44 = vector.shape_cast %43 : vector<1x8x64xf32> to vector<8x64xf32>
    %45 = vector.shape_cast %41 : vector<8x64xf32> to vector<1x8x64xf32>
    tpu.vector_store %arg20[%42, %c0_19, %c0_20], %45 {strides = array<i32>} : memref<8x8x128xf32, #tpu.memory_space<vmem>>, vector<1x8x64xf32>,
    %46 = vector.extract_strided_slice %40 {offsets = [0, 64], sizes = [8, 64], strides = [1, 1]} : vector<8x128xf32> to vector<8x64xf32>
    %c7_i32 = arith.constant 7 : i32
    %47 = arith.subi %c7_i32, %c0_i32 : i32
    %48 = arith.index_cast %47 : i32 to index
    %c0_21 = arith.constant 0 : index
    %c64 = arith.constant 64 : index
    %49 = vector.load %arg20[%48, %c0_21, %c64] : memref<8x8x128xf32, #tpu.memory_space<vmem>>, vector<1x8x64xf32>
    %50 = vector.shape_cast %49 : vector<1x8x64xf32> to vector<8x64xf32>
    %51 = vector.shape_cast %46 : vector<8x64xf32> to vector<1x8x64xf32>
    tpu.vector_store %arg20[%48, %c0_21, %c64], %51 {strides = array<i32>} : memref<8x8x128xf32, #tpu.memory_space<vmem>>, vector<1x8x64xf32>,
    %c1_i32 = arith.constant 1 : i32
    %52 = arith.index_cast %c1_i32 : i32 to index
    %c0_22 = arith.constant 0 : index
    %c0_23 = arith.constant 0 : index
    %53 = vector.load %arg19[%52, %c0_22, %c0_23] : memref<8x8x384xbf16, #tpu.memory_space<vmem>>, vector<1x8x384xbf16>
    %54 = vector.shape_cast %53 : vector<1x8x384xbf16> to vector<8x384xbf16>
    %55 = arith.extf %54 : vector<8x384xbf16> to vector<8x384xf32>
    %56 = arith.truncf %40 : vector<8x128xf32> to vector<8x128xbf16>
    %cst_24 = arith.constant dense<0.000000e+00> : vector<8x384xf32>
    %57 = tpu.matmul %56, %10, %cst_24 {dimension_numbers = #tpu.dot_dimension_numbers<[1], [0], [0], [1], [0, 0, 1, 1], [], []>} : vector<8x128xbf16>, vector<128x384xbf16>, vector<8x384xf32> -> vector<8x384xf32>
    %58 = vector.extract_strided_slice %55 {offsets = [0, 0], sizes = [8, 256], strides = [1, 1]} : vector<8x384xf32> to vector<8x256xf32>
    %59 = vector.extract_strided_slice %57 {offsets = [0, 0], sizes = [8, 256], strides = [1, 1]} : vector<8x384xf32> to vector<8x256xf32>
    %60 = arith.addf %58, %59 : vector<8x256xf32>
    %61 = arith.negf %60 : vector<8x256xf32>
    %62 = math.exp %61 : vector<8x256xf32>
    %cst_25 = arith.constant 1.000000e+00 : f32
    %63 = vector.broadcast %cst_25 : f32 to vector<8x256xf32>
    %64 = arith.addf %63, %62 : vector<8x256xf32>
    %65 = arith.divf %63, %64 : vector<8x256xf32>
    %66 = vector.extract_strided_slice %65 {offsets = [0, 0], sizes = [8, 128], strides = [1, 1]} : vector<8x256xf32> to vector<8x128xf32>
    %67 = vector.extract_strided_slice %65 {offsets = [0, 128], sizes = [8, 128], strides = [1, 1]} : vector<8x256xf32> to vector<8x128xf32>
    %68 = vector.extract_strided_slice %55 {offsets = [0, 256], sizes = [8, 128], strides = [1, 1]} : vector<8x384xf32> to vector<8x128xf32>
    %69 = vector.extract_strided_slice %57 {offsets = [0, 256], sizes = [8, 128], strides = [1, 1]} : vector<8x384xf32> to vector<8x128xf32>
    %70 = vector.broadcast %11 : vector<1x128xf32> to vector<8x128xf32>
    %71 = arith.addf %69, %70 : vector<8x128xf32>
    %72 = arith.mulf %66, %71 : vector<8x128xf32>
    %73 = arith.addf %68, %72 : vector<8x128xf32>
    %74 = math.tanh %73 : vector<8x128xf32>
    %cst_26 = arith.constant 1.000000e+00 : f32
    %75 = vector.broadcast %cst_26 : f32 to vector<8x128xf32>
    %76 = arith.subf %75, %67 : vector<8x128xf32>
    %77 = arith.mulf %76, %74 : vector<8x128xf32>
    %78 = arith.mulf %67, %40 : vector<8x128xf32>
    %79 = arith.addf %77, %78 : vector<8x128xf32>
    %80 = vector.extract_strided_slice %79 {offsets = [0, 0], sizes = [8, 64], strides = [1, 1]} : vector<8x128xf32> to vector<8x64xf32>
    %81 = arith.index_cast %c1_i32 : i32 to index
    %c0_27 = arith.constant 0 : index
    %c0_28 = arith.constant 0 : index
    %82 = vector.load %arg20[%81, %c0_27, %c0_28] : memref<8x8x128xf32, #tpu.memory_space<vmem>>, vector<1x8x64xf32>
    %83 = vector.shape_cast %82 : vector<1x8x64xf32> to vector<8x64xf32>
    %84 = vector.shape_cast %80 : vector<8x64xf32> to vector<1x8x64xf32>
    tpu.vector_store %arg20[%81, %c0_27, %c0_28], %84 {strides = array<i32>} : memref<8x8x128xf32, #tpu.memory_space<vmem>>, vector<1x8x64xf32>,
    %85 = vector.extract_strided_slice %79 {offsets = [0, 64], sizes = [8, 64], strides = [1, 1]} : vector<8x128xf32> to vector<8x64xf32>
    %c7_i32_29 = arith.constant 7 : i32
    %86 = arith.subi %c7_i32_29, %c1_i32 : i32
    %87 = arith.index_cast %86 : i32 to index
    %c0_30 = arith.constant 0 : index
    %c64_31 = arith.constant 64 : index
    %88 = vector.load %arg20[%87, %c0_30, %c64_31] : memref<8x8x128xf32, #tpu.memory_space<vmem>>, vector<1x8x64xf32>
    %89 = vector.shape_cast %88 : vector<1x8x64xf32> to vector<8x64xf32>
    %90 = vector.shape_cast %85 : vector<8x64xf32> to vector<1x8x64xf32>
    tpu.vector_store %arg20[%87, %c0_30, %c64_31], %90 {strides = array<i32>} : memref<8x8x128xf32, #tpu.memory_space<vmem>>, vector<1x8x64xf32>,
    %c2_i32 = arith.constant 2 : i32
    %91 = arith.index_cast %c2_i32 : i32 to index
    %c0_32 = arith.constant 0 : index
    %c0_33 = arith.constant 0 : index
    %92 = vector.load %arg19[%91, %c0_32, %c0_33] : memref<8x8x384xbf16, #tpu.memory_space<vmem>>, vector<1x8x384xbf16>
    %93 = vector.shape_cast %92 : vector<1x8x384xbf16> to vector<8x384xbf16>
    %94 = arith.extf %93 : vector<8x384xbf16> to vector<8x384xf32>
    %95 = arith.truncf %79 : vector<8x128xf32> to vector<8x128xbf16>
    %cst_34 = arith.constant dense<0.000000e+00> : vector<8x384xf32>
    %96 = tpu.matmul %95, %10, %cst_34 {dimension_numbers = #tpu.dot_dimension_numbers<[1], [0], [0], [1], [0, 0, 1, 1], [], []>} : vector<8x128xbf16>, vector<128x384xbf16>, vector<8x384xf32> -> vector<8x384xf32>
    %97 = vector.extract_strided_slice %94 {offsets = [0, 0], sizes = [8, 256], strides = [1, 1]} : vector<8x384xf32> to vector<8x256xf32>
    %98 = vector.extract_strided_slice %96 {offsets = [0, 0], sizes = [8, 256], strides = [1, 1]} : vector<8x384xf32> to vector<8x256xf32>
    %99 = arith.addf %97, %98 : vector<8x256xf32>
    %100 = arith.negf %99 : vector<8x256xf32>
    %101 = math.exp %100 : vector<8x256xf32>
    %cst_35 = arith.constant 1.000000e+00 : f32
    %102 = vector.broadcast %cst_35 : f32 to vector<8x256xf32>
    %103 = arith.addf %102, %101 : vector<8x256xf32>
    %104 = arith.divf %102, %103 : vector<8x256xf32>
    %105 = vector.extract_strided_slice %104 {offsets = [0, 0], sizes = [8, 128], strides = [1, 1]} : vector<8x256xf32> to vector<8x128xf32>
    %106 = vector.extract_strided_slice %104 {offsets = [0, 128], sizes = [8, 128], strides = [1, 1]} : vector<8x256xf32> to vector<8x128xf32>
    %107 = vector.extract_strided_slice %94 {offsets = [0, 256], sizes = [8, 128], strides = [1, 1]} : vector<8x384xf32> to vector<8x128xf32>
    %108 = vector.extract_strided_slice %96 {offsets = [0, 256], sizes = [8, 128], strides = [1, 1]} : vector<8x384xf32> to vector<8x128xf32>
    %109 = vector.broadcast %11 : vector<1x128xf32> to vector<8x128xf32>
    %110 = arith.addf %108, %109 : vector<8x128xf32>
    %111 = arith.mulf %105, %110 : vector<8x128xf32>
    %112 = arith.addf %107, %111 : vector<8x128xf32>
    %113 = math.tanh %112 : vector<8x128xf32>
    %cst_36 = arith.constant 1.000000e+00 : f32
    %114 = vector.broadcast %cst_36 : f32 to vector<8x128xf32>
    %115 = arith.subf %114, %106 : vector<8x128xf32>
    %116 = arith.mulf %115, %113 : vector<8x128xf32>
    %117 = arith.mulf %106, %79 : vector<8x128xf32>
    %118 = arith.addf %116, %117 : vector<8x128xf32>
    %119 = vector.extract_strided_slice %118 {offsets = [0, 0], sizes = [8, 64], strides = [1, 1]} : vector<8x128xf32> to vector<8x64xf32>
    %120 = arith.index_cast %c2_i32 : i32 to index
    %c0_37 = arith.constant 0 : index
    %c0_38 = arith.constant 0 : index
    %121 = vector.load %arg20[%120, %c0_37, %c0_38] : memref<8x8x128xf32, #tpu.memory_space<vmem>>, vector<1x8x64xf32>
    %122 = vector.shape_cast %121 : vector<1x8x64xf32> to vector<8x64xf32>
    %123 = vector.shape_cast %119 : vector<8x64xf32> to vector<1x8x64xf32>
    tpu.vector_store %arg20[%120, %c0_37, %c0_38], %123 {strides = array<i32>} : memref<8x8x128xf32, #tpu.memory_space<vmem>>, vector<1x8x64xf32>,
    %124 = vector.extract_strided_slice %118 {offsets = [0, 64], sizes = [8, 64], strides = [1, 1]} : vector<8x128xf32> to vector<8x64xf32>
    %c7_i32_39 = arith.constant 7 : i32
    %125 = arith.subi %c7_i32_39, %c2_i32 : i32
    %126 = arith.index_cast %125 : i32 to index
    %c0_40 = arith.constant 0 : index
    %c64_41 = arith.constant 64 : index
    %127 = vector.load %arg20[%126, %c0_40, %c64_41] : memref<8x8x128xf32, #tpu.memory_space<vmem>>, vector<1x8x64xf32>
    %128 = vector.shape_cast %127 : vector<1x8x64xf32> to vector<8x64xf32>
    %129 = vector.shape_cast %124 : vector<8x64xf32> to vector<1x8x64xf32>
    tpu.vector_store %arg20[%126, %c0_40, %c64_41], %129 {strides = array<i32>} : memref<8x8x128xf32, #tpu.memory_space<vmem>>, vector<1x8x64xf32>,
    %c3_i32 = arith.constant 3 : i32
    %130 = arith.index_cast %c3_i32 : i32 to index
    %c0_42 = arith.constant 0 : index
    %c0_43 = arith.constant 0 : index
    %131 = vector.load %arg19[%130, %c0_42, %c0_43] : memref<8x8x384xbf16, #tpu.memory_space<vmem>>, vector<1x8x384xbf16>
    %132 = vector.shape_cast %131 : vector<1x8x384xbf16> to vector<8x384xbf16>
    %133 = arith.extf %132 : vector<8x384xbf16> to vector<8x384xf32>
    %134 = arith.truncf %118 : vector<8x128xf32> to vector<8x128xbf16>
    %cst_44 = arith.constant dense<0.000000e+00> : vector<8x384xf32>
    %135 = tpu.matmul %134, %10, %cst_44 {dimension_numbers = #tpu.dot_dimension_numbers<[1], [0], [0], [1], [0, 0, 1, 1], [], []>} : vector<8x128xbf16>, vector<128x384xbf16>, vector<8x384xf32> -> vector<8x384xf32>
    %136 = vector.extract_strided_slice %133 {offsets = [0, 0], sizes = [8, 256], strides = [1, 1]} : vector<8x384xf32> to vector<8x256xf32>
    %137 = vector.extract_strided_slice %135 {offsets = [0, 0], sizes = [8, 256], strides = [1, 1]} : vector<8x384xf32> to vector<8x256xf32>
    %138 = arith.addf %136, %137 : vector<8x256xf32>
    %139 = arith.negf %138 : vector<8x256xf32>
    %140 = math.exp %139 : vector<8x256xf32>
    %cst_45 = arith.constant 1.000000e+00 : f32
    %141 = vector.broadcast %cst_45 : f32 to vector<8x256xf32>
    %142 = arith.addf %141, %140 : vector<8x256xf32>
    %143 = arith.divf %141, %142 : vector<8x256xf32>
    %144 = vector.extract_strided_slice %143 {offsets = [0, 0], sizes = [8, 128], strides = [1, 1]} : vector<8x256xf32> to vector<8x128xf32>
    %145 = vector.extract_strided_slice %143 {offsets = [0, 128], sizes = [8, 128], strides = [1, 1]} : vector<8x256xf32> to vector<8x128xf32>
    %146 = vector.extract_strided_slice %133 {offsets = [0, 256], sizes = [8, 128], strides = [1, 1]} : vector<8x384xf32> to vector<8x128xf32>
    %147 = vector.extract_strided_slice %135 {offsets = [0, 256], sizes = [8, 128], strides = [1, 1]} : vector<8x384xf32> to vector<8x128xf32>
    %148 = vector.broadcast %11 : vector<1x128xf32> to vector<8x128xf32>
    %149 = arith.addf %147, %148 : vector<8x128xf32>
    %150 = arith.mulf %144, %149 : vector<8x128xf32>
    %151 = arith.addf %146, %150 : vector<8x128xf32>
    %152 = math.tanh %151 : vector<8x128xf32>
    %cst_46 = arith.constant 1.000000e+00 : f32
    %153 = vector.broadcast %cst_46 : f32 to vector<8x128xf32>
    %154 = arith.subf %153, %145 : vector<8x128xf32>
    %155 = arith.mulf %154, %152 : vector<8x128xf32>
    %156 = arith.mulf %145, %118 : vector<8x128xf32>
    %157 = arith.addf %155, %156 : vector<8x128xf32>
    %158 = vector.extract_strided_slice %157 {offsets = [0, 0], sizes = [8, 64], strides = [1, 1]} : vector<8x128xf32> to vector<8x64xf32>
    %159 = arith.index_cast %c3_i32 : i32 to index
    %c0_47 = arith.constant 0 : index
    %c0_48 = arith.constant 0 : index
    %160 = vector.load %arg20[%159, %c0_47, %c0_48] : memref<8x8x128xf32, #tpu.memory_space<vmem>>, vector<1x8x64xf32>
    %161 = vector.shape_cast %160 : vector<1x8x64xf32> to vector<8x64xf32>
    %162 = vector.shape_cast %158 : vector<8x64xf32> to vector<1x8x64xf32>
    tpu.vector_store %arg20[%159, %c0_47, %c0_48], %162 {strides = array<i32>} : memref<8x8x128xf32, #tpu.memory_space<vmem>>, vector<1x8x64xf32>,
    %163 = vector.extract_strided_slice %157 {offsets = [0, 64], sizes = [8, 64], strides = [1, 1]} : vector<8x128xf32> to vector<8x64xf32>
    %c7_i32_49 = arith.constant 7 : i32
    %164 = arith.subi %c7_i32_49, %c3_i32 : i32
    %165 = arith.index_cast %164 : i32 to index
    %c0_50 = arith.constant 0 : index
    %c64_51 = arith.constant 64 : index
    %166 = vector.load %arg20[%165, %c0_50, %c64_51] : memref<8x8x128xf32, #tpu.memory_space<vmem>>, vector<1x8x64xf32>
    %167 = vector.shape_cast %166 : vector<1x8x64xf32> to vector<8x64xf32>
    %168 = vector.shape_cast %163 : vector<8x64xf32> to vector<1x8x64xf32>
    tpu.vector_store %arg20[%165, %c0_50, %c64_51], %168 {strides = array<i32>} : memref<8x8x128xf32, #tpu.memory_space<vmem>>, vector<1x8x64xf32>,
    %c4_i32 = arith.constant 4 : i32
    %169 = arith.index_cast %c4_i32 : i32 to index
    %c0_52 = arith.constant 0 : index
    %c0_53 = arith.constant 0 : index
    %170 = vector.load %arg19[%169, %c0_52, %c0_53] : memref<8x8x384xbf16, #tpu.memory_space<vmem>>, vector<1x8x384xbf16>
    %171 = vector.shape_cast %170 : vector<1x8x384xbf16> to vector<8x384xbf16>
    %172 = arith.extf %171 : vector<8x384xbf16> to vector<8x384xf32>
    %173 = arith.truncf %157 : vector<8x128xf32> to vector<8x128xbf16>
    %cst_54 = arith.constant dense<0.000000e+00> : vector<8x384xf32>
    %174 = tpu.matmul %173, %10, %cst_54 {dimension_numbers = #tpu.dot_dimension_numbers<[1], [0], [0], [1], [0, 0, 1, 1], [], []>} : vector<8x128xbf16>, vector<128x384xbf16>, vector<8x384xf32> -> vector<8x384xf32>
    %175 = vector.extract_strided_slice %172 {offsets = [0, 0], sizes = [8, 256], strides = [1, 1]} : vector<8x384xf32> to vector<8x256xf32>
    %176 = vector.extract_strided_slice %174 {offsets = [0, 0], sizes = [8, 256], strides = [1, 1]} : vector<8x384xf32> to vector<8x256xf32>
    %177 = arith.addf %175, %176 : vector<8x256xf32>
    %178 = arith.negf %177 : vector<8x256xf32>
    %179 = math.exp %178 : vector<8x256xf32>
    %cst_55 = arith.constant 1.000000e+00 : f32
    %180 = vector.broadcast %cst_55 : f32 to vector<8x256xf32>
    %181 = arith.addf %180, %179 : vector<8x256xf32>
    %182 = arith.divf %180, %181 : vector<8x256xf32>
    %183 = vector.extract_strided_slice %182 {offsets = [0, 0], sizes = [8, 128], strides = [1, 1]} : vector<8x256xf32> to vector<8x128xf32>
    %184 = vector.extract_strided_slice %182 {offsets = [0, 128], sizes = [8, 128], strides = [1, 1]} : vector<8x256xf32> to vector<8x128xf32>
    %185 = vector.extract_strided_slice %172 {offsets = [0, 256], sizes = [8, 128], strides = [1, 1]} : vector<8x384xf32> to vector<8x128xf32>
    %186 = vector.extract_strided_slice %174 {offsets = [0, 256], sizes = [8, 128], strides = [1, 1]} : vector<8x384xf32> to vector<8x128xf32>
    %187 = vector.broadcast %11 : vector<1x128xf32> to vector<8x128xf32>
    %188 = arith.addf %186, %187 : vector<8x128xf32>
    %189 = arith.mulf %183, %188 : vector<8x128xf32>
    %190 = arith.addf %185, %189 : vector<8x128xf32>
    %191 = math.tanh %190 : vector<8x128xf32>
    %cst_56 = arith.constant 1.000000e+00 : f32
    %192 = vector.broadcast %cst_56 : f32 to vector<8x128xf32>
    %193 = arith.subf %192, %184 : vector<8x128xf32>
    %194 = arith.mulf %193, %191 : vector<8x128xf32>
    %195 = arith.mulf %184, %157 : vector<8x128xf32>
    %196 = arith.addf %194, %195 : vector<8x128xf32>
    %197 = vector.extract_strided_slice %196 {offsets = [0, 0], sizes = [8, 64], strides = [1, 1]} : vector<8x128xf32> to vector<8x64xf32>
    %198 = arith.index_cast %c4_i32 : i32 to index
    %c0_57 = arith.constant 0 : index
    %c0_58 = arith.constant 0 : index
    %199 = vector.load %arg20[%198, %c0_57, %c0_58] : memref<8x8x128xf32, #tpu.memory_space<vmem>>, vector<1x8x64xf32>
    %200 = vector.shape_cast %199 : vector<1x8x64xf32> to vector<8x64xf32>
    %201 = vector.shape_cast %197 : vector<8x64xf32> to vector<1x8x64xf32>
    tpu.vector_store %arg20[%198, %c0_57, %c0_58], %201 {strides = array<i32>} : memref<8x8x128xf32, #tpu.memory_space<vmem>>, vector<1x8x64xf32>,
    %202 = vector.extract_strided_slice %196 {offsets = [0, 64], sizes = [8, 64], strides = [1, 1]} : vector<8x128xf32> to vector<8x64xf32>
    %c7_i32_59 = arith.constant 7 : i32
    %203 = arith.subi %c7_i32_59, %c4_i32 : i32
    %204 = arith.index_cast %203 : i32 to index
    %c0_60 = arith.constant 0 : index
    %c64_61 = arith.constant 64 : index
    %205 = vector.load %arg20[%204, %c0_60, %c64_61] : memref<8x8x128xf32, #tpu.memory_space<vmem>>, vector<1x8x64xf32>
    %206 = vector.shape_cast %205 : vector<1x8x64xf32> to vector<8x64xf32>
    %207 = vector.shape_cast %202 : vector<8x64xf32> to vector<1x8x64xf32>
    tpu.vector_store %arg20[%204, %c0_60, %c64_61], %207 {strides = array<i32>} : memref<8x8x128xf32, #tpu.memory_space<vmem>>, vector<1x8x64xf32>,
    %c5_i32 = arith.constant 5 : i32
    %208 = arith.index_cast %c5_i32 : i32 to index
    %c0_62 = arith.constant 0 : index
    %c0_63 = arith.constant 0 : index
    %209 = vector.load %arg19[%208, %c0_62, %c0_63] : memref<8x8x384xbf16, #tpu.memory_space<vmem>>, vector<1x8x384xbf16>
    %210 = vector.shape_cast %209 : vector<1x8x384xbf16> to vector<8x384xbf16>
    %211 = arith.extf %210 : vector<8x384xbf16> to vector<8x384xf32>
    %212 = arith.truncf %196 : vector<8x128xf32> to vector<8x128xbf16>
    %cst_64 = arith.constant dense<0.000000e+00> : vector<8x384xf32>
    %213 = tpu.matmul %212, %10, %cst_64 {dimension_numbers = #tpu.dot_dimension_numbers<[1], [0], [0], [1], [0, 0, 1, 1], [], []>} : vector<8x128xbf16>, vector<128x384xbf16>, vector<8x384xf32> -> vector<8x384xf32>
    %214 = vector.extract_strided_slice %211 {offsets = [0, 0], sizes = [8, 256], strides = [1, 1]} : vector<8x384xf32> to vector<8x256xf32>
    %215 = vector.extract_strided_slice %213 {offsets = [0, 0], sizes = [8, 256], strides = [1, 1]} : vector<8x384xf32> to vector<8x256xf32>
    %216 = arith.addf %214, %215 : vector<8x256xf32>
    %217 = arith.negf %216 : vector<8x256xf32>
    %218 = math.exp %217 : vector<8x256xf32>
    %cst_65 = arith.constant 1.000000e+00 : f32
    %219 = vector.broadcast %cst_65 : f32 to vector<8x256xf32>
    %220 = arith.addf %219, %218 : vector<8x256xf32>
    %221 = arith.divf %219, %220 : vector<8x256xf32>
    %222 = vector.extract_strided_slice %221 {offsets = [0, 0], sizes = [8, 128], strides = [1, 1]} : vector<8x256xf32> to vector<8x128xf32>
    %223 = vector.extract_strided_slice %221 {offsets = [0, 128], sizes = [8, 128], strides = [1, 1]} : vector<8x256xf32> to vector<8x128xf32>
    %224 = vector.extract_strided_slice %211 {offsets = [0, 256], sizes = [8, 128], strides = [1, 1]} : vector<8x384xf32> to vector<8x128xf32>
    %225 = vector.extract_strided_slice %213 {offsets = [0, 256], sizes = [8, 128], strides = [1, 1]} : vector<8x384xf32> to vector<8x128xf32>
    %226 = vector.broadcast %11 : vector<1x128xf32> to vector<8x128xf32>
    %227 = arith.addf %225, %226 : vector<8x128xf32>
    %228 = arith.mulf %222, %227 : vector<8x128xf32>
    %229 = arith.addf %224, %228 : vector<8x128xf32>
    %230 = math.tanh %229 : vector<8x128xf32>
    %cst_66 = arith.constant 1.000000e+00 : f32
    %231 = vector.broadcast %cst_66 : f32 to vector<8x128xf32>
    %232 = arith.subf %231, %223 : vector<8x128xf32>
    %233 = arith.mulf %232, %230 : vector<8x128xf32>
    %234 = arith.mulf %223, %196 : vector<8x128xf32>
    %235 = arith.addf %233, %234 : vector<8x128xf32>
    %236 = vector.extract_strided_slice %235 {offsets = [0, 0], sizes = [8, 64], strides = [1, 1]} : vector<8x128xf32> to vector<8x64xf32>
    %237 = arith.index_cast %c5_i32 : i32 to index
    %c0_67 = arith.constant 0 : index
    %c0_68 = arith.constant 0 : index
    %238 = vector.load %arg20[%237, %c0_67, %c0_68] : memref<8x8x128xf32, #tpu.memory_space<vmem>>, vector<1x8x64xf32>
    %239 = vector.shape_cast %238 : vector<1x8x64xf32> to vector<8x64xf32>
    %240 = vector.shape_cast %236 : vector<8x64xf32> to vector<1x8x64xf32>
    tpu.vector_store %arg20[%237, %c0_67, %c0_68], %240 {strides = array<i32>} : memref<8x8x128xf32, #tpu.memory_space<vmem>>, vector<1x8x64xf32>,
    %241 = vector.extract_strided_slice %235 {offsets = [0, 64], sizes = [8, 64], strides = [1, 1]} : vector<8x128xf32> to vector<8x64xf32>
    %c7_i32_69 = arith.constant 7 : i32
    %242 = arith.subi %c7_i32_69, %c5_i32 : i32
    %243 = arith.index_cast %242 : i32 to index
    %c0_70 = arith.constant 0 : index
    %c64_71 = arith.constant 64 : index
    %244 = vector.load %arg20[%243, %c0_70, %c64_71] : memref<8x8x128xf32, #tpu.memory_space<vmem>>, vector<1x8x64xf32>
    %245 = vector.shape_cast %244 : vector<1x8x64xf32> to vector<8x64xf32>
    %246 = vector.shape_cast %241 : vector<8x64xf32> to vector<1x8x64xf32>
    tpu.vector_store %arg20[%243, %c0_70, %c64_71], %246 {strides = array<i32>} : memref<8x8x128xf32, #tpu.memory_space<vmem>>, vector<1x8x64xf32>,
    %c6_i32 = arith.constant 6 : i32
    %247 = arith.index_cast %c6_i32 : i32 to index
    %c0_72 = arith.constant 0 : index
    %c0_73 = arith.constant 0 : index
    %248 = vector.load %arg19[%247, %c0_72, %c0_73] : memref<8x8x384xbf16, #tpu.memory_space<vmem>>, vector<1x8x384xbf16>
    %249 = vector.shape_cast %248 : vector<1x8x384xbf16> to vector<8x384xbf16>
    %250 = arith.extf %249 : vector<8x384xbf16> to vector<8x384xf32>
    %251 = arith.truncf %235 : vector<8x128xf32> to vector<8x128xbf16>
    %cst_74 = arith.constant dense<0.000000e+00> : vector<8x384xf32>
    %252 = tpu.matmul %251, %10, %cst_74 {dimension_numbers = #tpu.dot_dimension_numbers<[1], [0], [0], [1], [0, 0, 1, 1], [], []>} : vector<8x128xbf16>, vector<128x384xbf16>, vector<8x384xf32> -> vector<8x384xf32>
    %253 = vector.extract_strided_slice %250 {offsets = [0, 0], sizes = [8, 256], strides = [1, 1]} : vector<8x384xf32> to vector<8x256xf32>
    %254 = vector.extract_strided_slice %252 {offsets = [0, 0], sizes = [8, 256], strides = [1, 1]} : vector<8x384xf32> to vector<8x256xf32>
    %255 = arith.addf %253, %254 : vector<8x256xf32>
    %256 = arith.negf %255 : vector<8x256xf32>
    %257 = math.exp %256 : vector<8x256xf32>
    %cst_75 = arith.constant 1.000000e+00 : f32
    %258 = vector.broadcast %cst_75 : f32 to vector<8x256xf32>
    %259 = arith.addf %258, %257 : vector<8x256xf32>
    %260 = arith.divf %258, %259 : vector<8x256xf32>
    %261 = vector.extract_strided_slice %260 {offsets = [0, 0], sizes = [8, 128], strides = [1, 1]} : vector<8x256xf32> to vector<8x128xf32>
    %262 = vector.extract_strided_slice %260 {offsets = [0, 128], sizes = [8, 128], strides = [1, 1]} : vector<8x256xf32> to vector<8x128xf32>
    %263 = vector.extract_strided_slice %250 {offsets = [0, 256], sizes = [8, 128], strides = [1, 1]} : vector<8x384xf32> to vector<8x128xf32>
    %264 = vector.extract_strided_slice %252 {offsets = [0, 256], sizes = [8, 128], strides = [1, 1]} : vector<8x384xf32> to vector<8x128xf32>
    %265 = vector.broadcast %11 : vector<1x128xf32> to vector<8x128xf32>
    %266 = arith.addf %264, %265 : vector<8x128xf32>
    %267 = arith.mulf %261, %266 : vector<8x128xf32>
    %268 = arith.addf %263, %267 : vector<8x128xf32>
    %269 = math.tanh %268 : vector<8x128xf32>
    %cst_76 = arith.constant 1.000000e+00 : f32
    %270 = vector.broadcast %cst_76 : f32 to vector<8x128xf32>
    %271 = arith.subf %270, %262 : vector<8x128xf32>
    %272 = arith.mulf %271, %269 : vector<8x128xf32>
    %273 = arith.mulf %262, %235 : vector<8x128xf32>
    %274 = arith.addf %272, %273 : vector<8x128xf32>
    %275 = vector.extract_strided_slice %274 {offsets = [0, 0], sizes = [8, 64], strides = [1, 1]} : vector<8x128xf32> to vector<8x64xf32>
    %276 = arith.index_cast %c6_i32 : i32 to index
    %c0_77 = arith.constant 0 : index
    %c0_78 = arith.constant 0 : index
    %277 = vector.load %arg20[%276, %c0_77, %c0_78] : memref<8x8x128xf32, #tpu.memory_space<vmem>>, vector<1x8x64xf32>
    %278 = vector.shape_cast %277 : vector<1x8x64xf32> to vector<8x64xf32>
    %279 = vector.shape_cast %275 : vector<8x64xf32> to vector<1x8x64xf32>
    tpu.vector_store %arg20[%276, %c0_77, %c0_78], %279 {strides = array<i32>} : memref<8x8x128xf32, #tpu.memory_space<vmem>>, vector<1x8x64xf32>,
    %280 = vector.extract_strided_slice %274 {offsets = [0, 64], sizes = [8, 64], strides = [1, 1]} : vector<8x128xf32> to vector<8x64xf32>
    %c7_i32_79 = arith.constant 7 : i32
    %281 = arith.subi %c7_i32_79, %c6_i32 : i32
    %282 = arith.index_cast %281 : i32 to index
    %c0_80 = arith.constant 0 : index
    %c64_81 = arith.constant 64 : index
    %283 = vector.load %arg20[%282, %c0_80, %c64_81] : memref<8x8x128xf32, #tpu.memory_space<vmem>>, vector<1x8x64xf32>
    %284 = vector.shape_cast %283 : vector<1x8x64xf32> to vector<8x64xf32>
    %285 = vector.shape_cast %280 : vector<8x64xf32> to vector<1x8x64xf32>
    tpu.vector_store %arg20[%282, %c0_80, %c64_81], %285 {strides = array<i32>} : memref<8x8x128xf32, #tpu.memory_space<vmem>>, vector<1x8x64xf32>,
    %c7_i32_82 = arith.constant 7 : i32
    %286 = arith.index_cast %c7_i32_82 : i32 to index
    %c0_83 = arith.constant 0 : index
    %c0_84 = arith.constant 0 : index
    %287 = vector.load %arg19[%286, %c0_83, %c0_84] : memref<8x8x384xbf16, #tpu.memory_space<vmem>>, vector<1x8x384xbf16>
    %288 = vector.shape_cast %287 : vector<1x8x384xbf16> to vector<8x384xbf16>
    %289 = arith.extf %288 : vector<8x384xbf16> to vector<8x384xf32>
    %290 = arith.truncf %274 : vector<8x128xf32> to vector<8x128xbf16>
    %cst_85 = arith.constant dense<0.000000e+00> : vector<8x384xf32>
    %291 = tpu.matmul %290, %10, %cst_85 {dimension_numbers = #tpu.dot_dimension_numbers<[1], [0], [0], [1], [0, 0, 1, 1], [], []>} : vector<8x128xbf16>, vector<128x384xbf16>, vector<8x384xf32> -> vector<8x384xf32>
    %292 = vector.extract_strided_slice %289 {offsets = [0, 0], sizes = [8, 256], strides = [1, 1]} : vector<8x384xf32> to vector<8x256xf32>
    %293 = vector.extract_strided_slice %291 {offsets = [0, 0], sizes = [8, 256], strides = [1, 1]} : vector<8x384xf32> to vector<8x256xf32>
    %294 = arith.addf %292, %293 : vector<8x256xf32>
    %295 = arith.negf %294 : vector<8x256xf32>
    %296 = math.exp %295 : vector<8x256xf32>
    %cst_86 = arith.constant 1.000000e+00 : f32
    %297 = vector.broadcast %cst_86 : f32 to vector<8x256xf32>
    %298 = arith.addf %297, %296 : vector<8x256xf32>
    %299 = arith.divf %297, %298 : vector<8x256xf32>
    %300 = vector.extract_strided_slice %299 {offsets = [0, 0], sizes = [8, 128], strides = [1, 1]} : vector<8x256xf32> to vector<8x128xf32>
    %301 = vector.extract_strided_slice %299 {offsets = [0, 128], sizes = [8, 128], strides = [1, 1]} : vector<8x256xf32> to vector<8x128xf32>
    %302 = vector.extract_strided_slice %289 {offsets = [0, 256], sizes = [8, 128], strides = [1, 1]} : vector<8x384xf32> to vector<8x128xf32>
    %303 = vector.extract_strided_slice %291 {offsets = [0, 256], sizes = [8, 128], strides = [1, 1]} : vector<8x384xf32> to vector<8x128xf32>
    %304 = vector.broadcast %11 : vector<1x128xf32> to vector<8x128xf32>
    %305 = arith.addf %303, %304 : vector<8x128xf32>
    %306 = arith.mulf %300, %305 : vector<8x128xf32>
    %307 = arith.addf %302, %306 : vector<8x128xf32>
    %308 = math.tanh %307 : vector<8x128xf32>
    %cst_87 = arith.constant 1.000000e+00 : f32
    %309 = vector.broadcast %cst_87 : f32 to vector<8x128xf32>
    %310 = arith.subf %309, %301 : vector<8x128xf32>
    %311 = arith.mulf %310, %308 : vector<8x128xf32>
    %312 = arith.mulf %301, %274 : vector<8x128xf32>
    %313 = arith.addf %311, %312 : vector<8x128xf32>
    %314 = vector.extract_strided_slice %313 {offsets = [0, 0], sizes = [8, 64], strides = [1, 1]} : vector<8x128xf32> to vector<8x64xf32>
    %315 = arith.index_cast %c7_i32_82 : i32 to index
    %c0_88 = arith.constant 0 : index
    %c0_89 = arith.constant 0 : index
    %316 = vector.load %arg20[%315, %c0_88, %c0_89] : memref<8x8x128xf32, #tpu.memory_space<vmem>>, vector<1x8x64xf32>
    %317 = vector.shape_cast %316 : vector<1x8x64xf32> to vector<8x64xf32>
    %318 = vector.shape_cast %314 : vector<8x64xf32> to vector<1x8x64xf32>
    tpu.vector_store %arg20[%315, %c0_88, %c0_89], %318 {strides = array<i32>} : memref<8x8x128xf32, #tpu.memory_space<vmem>>, vector<1x8x64xf32>,
    %319 = vector.extract_strided_slice %313 {offsets = [0, 64], sizes = [8, 64], strides = [1, 1]} : vector<8x128xf32> to vector<8x64xf32>
    %c7_i32_90 = arith.constant 7 : i32
    %320 = arith.subi %c7_i32_90, %c7_i32_82 : i32
    %321 = arith.index_cast %320 : i32 to index
    %c0_91 = arith.constant 0 : index
    %c64_92 = arith.constant 64 : index
    %322 = vector.load %arg20[%321, %c0_91, %c64_92] : memref<8x8x128xf32, #tpu.memory_space<vmem>>, vector<1x8x64xf32>
    %323 = vector.shape_cast %322 : vector<1x8x64xf32> to vector<8x64xf32>
    %324 = vector.shape_cast %319 : vector<8x64xf32> to vector<1x8x64xf32>
    tpu.vector_store %arg20[%321, %c0_91, %c64_92], %324 {strides = array<i32>} : memref<8x8x128xf32, #tpu.memory_space<vmem>>, vector<1x8x64xf32>,
    %c8_i32 = arith.constant 8 : i32
    %c0_93 = arith.constant 0 : index
    %c0_94 = arith.constant 0 : index
    %c0_95 = arith.constant 0 : index
    %325 = vector.load %arg20[%c0_93, %c0_94, %c0_95] : memref<8x8x128xf32, #tpu.memory_space<vmem>>, vector<8x8x128xf32>
    %326 = vector.shape_cast %325 : vector<8x8x128xf32> to vector<64x128xf32>
    %c0_96 = arith.constant 0 : index
    %c0_97 = arith.constant 0 : index
    %327 = vector.load %arg6[%c0_96, %c0_97] : memref<1x128xf32, #tpu.memory_space<vmem>>, vector<1x128xf32>
    %c0_98 = arith.constant 0 : index
    %c0_99 = arith.constant 0 : index
    %328 = vector.load %arg7[%c0_98, %c0_99] : memref<1x128xf32, #tpu.memory_space<vmem>>, vector<1x128xf32>
    %cst_100 = arith.constant dense<0.000000e+00> : vector<64xf32>
    %329 = vector.multi_reduction <add>, %326, %cst_100 [1] : vector<64x128xf32> to vector<64xf32>
    %330 = vector.shape_cast %329 : vector<64xf32> to vector<64x1xf32>
    %cst_101 = arith.constant 1.280000e+02 : f32
    %331 = vector.broadcast %cst_101 : f32 to vector<64x1xf32>
    %332 = arith.divf %330, %331 : vector<64x1xf32>
    %333 = vector.broadcast %332 : vector<64x1xf32> to vector<64x128xf32>
    %334 = arith.subf %326, %333 : vector<64x128xf32>
    %335 = arith.mulf %334, %334 : vector<64x128xf32>
    %cst_102 = arith.constant dense<0.000000e+00> : vector<64xf32>
    %336 = vector.multi_reduction <add>, %335, %cst_102 [1] : vector<64x128xf32> to vector<64xf32>
    %337 = vector.shape_cast %336 : vector<64xf32> to vector<64x1xf32>
    %cst_103 = arith.constant 1.280000e+02 : f32
    %338 = vector.broadcast %cst_103 : f32 to vector<64x1xf32>
    %339 = arith.divf %337, %338 : vector<64x1xf32>
    %cst_104 = arith.constant 9.99999974E-6 : f32
    %340 = vector.broadcast %cst_104 : f32 to vector<64x1xf32>
    %341 = arith.addf %339, %340 : vector<64x1xf32>
    %342 = math.rsqrt %341 : vector<64x1xf32>
    %343 = vector.broadcast %342 : vector<64x1xf32> to vector<64x128xf32>
    %344 = arith.mulf %334, %343 : vector<64x128xf32>
    %345 = vector.broadcast %327 : vector<1x128xf32> to vector<64x128xf32>
    %346 = arith.mulf %344, %345 : vector<64x128xf32>
    %347 = vector.broadcast %328 : vector<1x128xf32> to vector<64x128xf32>
    %348 = arith.addf %346, %347 : vector<64x128xf32>
    %349 = arith.truncf %348 : vector<64x128xf32> to vector<64x128xbf16>
    %c0_105 = arith.constant 0 : index
    %c0_106 = arith.constant 0 : index
    %350 = vector.load %arg8[%c0_105, %c0_106] : memref<128x384xbf16, #tpu.memory_space<vmem>>, vector<128x384xbf16>
    %cst_107 = arith.constant dense<0.000000e+00> : vector<64x384xf32>
    %351 = tpu.matmul %349, %350, %cst_107 {dimension_numbers = #tpu.dot_dimension_numbers<[1], [0], [0], [1], [0, 0, 1, 1], [], []>} : vector<64x128xbf16>, vector<128x384xbf16>, vector<64x384xf32> -> vector<64x384xf32>
    %c0_108 = arith.constant 0 : index
    %c0_109 = arith.constant 0 : index
    %352 = vector.load %arg10[%c0_108, %c0_109] : memref<1x384xf32, #tpu.memory_space<vmem>>, vector<1x384xf32>
    %353 = vector.broadcast %352 : vector<1x384xf32> to vector<64x384xf32>
    %354 = arith.addf %351, %353 : vector<64x384xf32>
    %355 = vector.shape_cast %354 : vector<64x384xf32> to vector<8x8x384xf32>
    %356 = arith.truncf %355 : vector<8x8x384xf32> to vector<8x8x384xbf16>
    %c0_110 = arith.constant 0 : index
    %c0_111 = arith.constant 0 : index
    %c0_112 = arith.constant 0 : index
    %357 = vector.load %arg19[%c0_110, %c0_111, %c0_112] : memref<8x8x384xbf16, #tpu.memory_space<vmem>>, vector<8x8x384xbf16>
    tpu.vector_store %arg19[%c0_110, %c0_111, %c0_112], %356 {strides = array<i32>} : memref<8x8x384xbf16, #tpu.memory_space<vmem>>, vector<8x8x384xbf16>,
    %c0_113 = arith.constant 0 : index
    %c0_114 = arith.constant 0 : index
    %358 = vector.load %arg9[%c0_113, %c0_114] : memref<128x384xbf16, #tpu.memory_space<vmem>>, vector<128x384xbf16>
    %c0_115 = arith.constant 0 : index
    %c0_116 = arith.constant 0 : index
    %359 = vector.load %arg11[%c0_115, %c0_116] : memref<1x128xf32, #tpu.memory_space<vmem>>, vector<1x128xf32>
    %cst_117 = arith.constant 0.000000e+00 : f32
    %360 = vector.broadcast %cst_117 : f32 to vector<8x128xf32>
    %c0_i32_118 = arith.constant 0 : i32
    %361 = arith.index_cast %c0_i32_118 : i32 to index
    %c0_119 = arith.constant 0 : index
    %c0_120 = arith.constant 0 : index
    %362 = vector.load %arg19[%361, %c0_119, %c0_120] : memref<8x8x384xbf16, #tpu.memory_space<vmem>>, vector<1x8x384xbf16>
    %363 = vector.shape_cast %362 : vector<1x8x384xbf16> to vector<8x384xbf16>
    %364 = arith.extf %363 : vector<8x384xbf16> to vector<8x384xf32>
    %365 = arith.truncf %360 : vector<8x128xf32> to vector<8x128xbf16>
    %cst_121 = arith.constant dense<0.000000e+00> : vector<8x384xf32>
    %366 = tpu.matmul %365, %358, %cst_121 {dimension_numbers = #tpu.dot_dimension_numbers<[1], [0], [0], [1], [0, 0, 1, 1], [], []>} : vector<8x128xbf16>, vector<128x384xbf16>, vector<8x384xf32> -> vector<8x384xf32>
    %367 = vector.extract_strided_slice %364 {offsets = [0, 0], sizes = [8, 256], strides = [1, 1]} : vector<8x384xf32> to vector<8x256xf32>
    %368 = vector.extract_strided_slice %366 {offsets = [0, 0], sizes = [8, 256], strides = [1, 1]} : vector<8x384xf32> to vector<8x256xf32>
    %369 = arith.addf %367, %368 : vector<8x256xf32>
    %370 = arith.negf %369 : vector<8x256xf32>
    %371 = math.exp %370 : vector<8x256xf32>
    %cst_122 = arith.constant 1.000000e+00 : f32
    %372 = vector.broadcast %cst_122 : f32 to vector<8x256xf32>
    %373 = arith.addf %372, %371 : vector<8x256xf32>
    %374 = arith.divf %372, %373 : vector<8x256xf32>
    %375 = vector.extract_strided_slice %374 {offsets = [0, 0], sizes = [8, 128], strides = [1, 1]} : vector<8x256xf32> to vector<8x128xf32>
    %376 = vector.extract_strided_slice %374 {offsets = [0, 128], sizes = [8, 128], strides = [1, 1]} : vector<8x256xf32> to vector<8x128xf32>
    %377 = vector.extract_strided_slice %364 {offsets = [0, 256], sizes = [8, 128], strides = [1, 1]} : vector<8x384xf32> to vector<8x128xf32>
    %378 = vector.extract_strided_slice %366 {offsets = [0, 256], sizes = [8, 128], strides = [1, 1]} : vector<8x384xf32> to vector<8x128xf32>
    %379 = vector.broadcast %359 : vector<1x128xf32> to vector<8x128xf32>
    %380 = arith.addf %378, %379 : vector<8x128xf32>
    %381 = arith.mulf %375, %380 : vector<8x128xf32>
    %382 = arith.addf %377, %381 : vector<8x128xf32>
    %383 = math.tanh %382 : vector<8x128xf32>
    %cst_123 = arith.constant 1.000000e+00 : f32
    %384 = vector.broadcast %cst_123 : f32 to vector<8x128xf32>
    %385 = arith.subf %384, %376 : vector<8x128xf32>
    %386 = arith.mulf %385, %383 : vector<8x128xf32>
    %387 = arith.mulf %376, %360 : vector<8x128xf32>
    %388 = arith.addf %386, %387 : vector<8x128xf32>
    %389 = arith.index_cast %c0_i32_118 : i32 to index
    %c0_124 = arith.constant 0 : index
    %c0_125 = arith.constant 0 : index
    %390 = vector.load %arg20[%389, %c0_124, %c0_125] : memref<8x8x128xf32, #tpu.memory_space<vmem>>, vector<1x8x128xf32>
    %391 = vector.shape_cast %390 : vector<1x8x128xf32> to vector<8x128xf32>
    %392 = arith.addf %391, %388 : vector<8x128xf32>
    %393 = arith.index_cast %c0_i32_118 : i32 to index
    %c0_126 = arith.constant 0 : index
    %c0_127 = arith.constant 0 : index
    %394 = vector.load %arg20[%393, %c0_126, %c0_127] : memref<8x8x128xf32, #tpu.memory_space<vmem>>, vector<1x8x128xf32>
    %395 = vector.shape_cast %394 : vector<1x8x128xf32> to vector<8x128xf32>
    %396 = vector.shape_cast %392 : vector<8x128xf32> to vector<1x8x128xf32>
    tpu.vector_store %arg20[%393, %c0_126, %c0_127], %396 {strides = array<i32>} : memref<8x8x128xf32, #tpu.memory_space<vmem>>, vector<1x8x128xf32>,
    %c1_i32_128 = arith.constant 1 : i32
    %397 = arith.index_cast %c1_i32_128 : i32 to index
    %c0_129 = arith.constant 0 : index
    %c0_130 = arith.constant 0 : index
    %398 = vector.load %arg19[%397, %c0_129, %c0_130] : memref<8x8x384xbf16, #tpu.memory_space<vmem>>, vector<1x8x384xbf16>
    %399 = vector.shape_cast %398 : vector<1x8x384xbf16> to vector<8x384xbf16>
    %400 = arith.extf %399 : vector<8x384xbf16> to vector<8x384xf32>
    %401 = arith.truncf %388 : vector<8x128xf32> to vector<8x128xbf16>
    %cst_131 = arith.constant dense<0.000000e+00> : vector<8x384xf32>
    %402 = tpu.matmul %401, %358, %cst_131 {dimension_numbers = #tpu.dot_dimension_numbers<[1], [0], [0], [1], [0, 0, 1, 1], [], []>} : vector<8x128xbf16>, vector<128x384xbf16>, vector<8x384xf32> -> vector<8x384xf32>
    %403 = vector.extract_strided_slice %400 {offsets = [0, 0], sizes = [8, 256], strides = [1, 1]} : vector<8x384xf32> to vector<8x256xf32>
    %404 = vector.extract_strided_slice %402 {offsets = [0, 0], sizes = [8, 256], strides = [1, 1]} : vector<8x384xf32> to vector<8x256xf32>
    %405 = arith.addf %403, %404 : vector<8x256xf32>
    %406 = arith.negf %405 : vector<8x256xf32>
    %407 = math.exp %406 : vector<8x256xf32>
    %cst_132 = arith.constant 1.000000e+00 : f32
    %408 = vector.broadcast %cst_132 : f32 to vector<8x256xf32>
    %409 = arith.addf %408, %407 : vector<8x256xf32>
    %410 = arith.divf %408, %409 : vector<8x256xf32>
    %411 = vector.extract_strided_slice %410 {offsets = [0, 0], sizes = [8, 128], strides = [1, 1]} : vector<8x256xf32> to vector<8x128xf32>
    %412 = vector.extract_strided_slice %410 {offsets = [0, 128], sizes = [8, 128], strides = [1, 1]} : vector<8x256xf32> to vector<8x128xf32>
    %413 = vector.extract_strided_slice %400 {offsets = [0, 256], sizes = [8, 128], strides = [1, 1]} : vector<8x384xf32> to vector<8x128xf32>
    %414 = vector.extract_strided_slice %402 {offsets = [0, 256], sizes = [8, 128], strides = [1, 1]} : vector<8x384xf32> to vector<8x128xf32>
    %415 = vector.broadcast %359 : vector<1x128xf32> to vector<8x128xf32>
    %416 = arith.addf %414, %415 : vector<8x128xf32>
    %417 = arith.mulf %411, %416 : vector<8x128xf32>
    %418 = arith.addf %413, %417 : vector<8x128xf32>
    %419 = math.tanh %418 : vector<8x128xf32>
    %cst_133 = arith.constant 1.000000e+00 : f32
    %420 = vector.broadcast %cst_133 : f32 to vector<8x128xf32>
    %421 = arith.subf %420, %412 : vector<8x128xf32>
    %422 = arith.mulf %421, %419 : vector<8x128xf32>
    %423 = arith.mulf %412, %388 : vector<8x128xf32>
    %424 = arith.addf %422, %423 : vector<8x128xf32>
    %425 = arith.index_cast %c1_i32_128 : i32 to index
    %c0_134 = arith.constant 0 : index
    %c0_135 = arith.constant 0 : index
    %426 = vector.load %arg20[%425, %c0_134, %c0_135] : memref<8x8x128xf32, #tpu.memory_space<vmem>>, vector<1x8x128xf32>
    %427 = vector.shape_cast %426 : vector<1x8x128xf32> to vector<8x128xf32>
    %428 = arith.addf %427, %424 : vector<8x128xf32>
    %429 = arith.index_cast %c1_i32_128 : i32 to index
    %c0_136 = arith.constant 0 : index
    %c0_137 = arith.constant 0 : index
    %430 = vector.load %arg20[%429, %c0_136, %c0_137] : memref<8x8x128xf32, #tpu.memory_space<vmem>>, vector<1x8x128xf32>
    %431 = vector.shape_cast %430 : vector<1x8x128xf32> to vector<8x128xf32>
    %432 = vector.shape_cast %428 : vector<8x128xf32> to vector<1x8x128xf32>
    tpu.vector_store %arg20[%429, %c0_136, %c0_137], %432 {strides = array<i32>} : memref<8x8x128xf32, #tpu.memory_space<vmem>>, vector<1x8x128xf32>,
    %c2_i32_138 = arith.constant 2 : i32
    %433 = arith.index_cast %c2_i32_138 : i32 to index
    %c0_139 = arith.constant 0 : index
    %c0_140 = arith.constant 0 : index
    %434 = vector.load %arg19[%433, %c0_139, %c0_140] : memref<8x8x384xbf16, #tpu.memory_space<vmem>>, vector<1x8x384xbf16>
    %435 = vector.shape_cast %434 : vector<1x8x384xbf16> to vector<8x384xbf16>
    %436 = arith.extf %435 : vector<8x384xbf16> to vector<8x384xf32>
    %437 = arith.truncf %424 : vector<8x128xf32> to vector<8x128xbf16>
    %cst_141 = arith.constant dense<0.000000e+00> : vector<8x384xf32>
    %438 = tpu.matmul %437, %358, %cst_141 {dimension_numbers = #tpu.dot_dimension_numbers<[1], [0], [0], [1], [0, 0, 1, 1], [], []>} : vector<8x128xbf16>, vector<128x384xbf16>, vector<8x384xf32> -> vector<8x384xf32>
    %439 = vector.extract_strided_slice %436 {offsets = [0, 0], sizes = [8, 256], strides = [1, 1]} : vector<8x384xf32> to vector<8x256xf32>
    %440 = vector.extract_strided_slice %438 {offsets = [0, 0], sizes = [8, 256], strides = [1, 1]} : vector<8x384xf32> to vector<8x256xf32>
    %441 = arith.addf %439, %440 : vector<8x256xf32>
    %442 = arith.negf %441 : vector<8x256xf32>
    %443 = math.exp %442 : vector<8x256xf32>
    %cst_142 = arith.constant 1.000000e+00 : f32
    %444 = vector.broadcast %cst_142 : f32 to vector<8x256xf32>
    %445 = arith.addf %444, %443 : vector<8x256xf32>
    %446 = arith.divf %444, %445 : vector<8x256xf32>
    %447 = vector.extract_strided_slice %446 {offsets = [0, 0], sizes = [8, 128], strides = [1, 1]} : vector<8x256xf32> to vector<8x128xf32>
    %448 = vector.extract_strided_slice %446 {offsets = [0, 128], sizes = [8, 128], strides = [1, 1]} : vector<8x256xf32> to vector<8x128xf32>
    %449 = vector.extract_strided_slice %436 {offsets = [0, 256], sizes = [8, 128], strides = [1, 1]} : vector<8x384xf32> to vector<8x128xf32>
    %450 = vector.extract_strided_slice %438 {offsets = [0, 256], sizes = [8, 128], strides = [1, 1]} : vector<8x384xf32> to vector<8x128xf32>
    %451 = vector.broadcast %359 : vector<1x128xf32> to vector<8x128xf32>
    %452 = arith.addf %450, %451 : vector<8x128xf32>
    %453 = arith.mulf %447, %452 : vector<8x128xf32>
    %454 = arith.addf %449, %453 : vector<8x128xf32>
    %455 = math.tanh %454 : vector<8x128xf32>
    %cst_143 = arith.constant 1.000000e+00 : f32
    %456 = vector.broadcast %cst_143 : f32 to vector<8x128xf32>
    %457 = arith.subf %456, %448 : vector<8x128xf32>
    %458 = arith.mulf %457, %455 : vector<8x128xf32>
    %459 = arith.mulf %448, %424 : vector<8x128xf32>
    %460 = arith.addf %458, %459 : vector<8x128xf32>
    %461 = arith.index_cast %c2_i32_138 : i32 to index
    %c0_144 = arith.constant 0 : index
    %c0_145 = arith.constant 0 : index
    %462 = vector.load %arg20[%461, %c0_144, %c0_145] : memref<8x8x128xf32, #tpu.memory_space<vmem>>, vector<1x8x128xf32>
    %463 = vector.shape_cast %462 : vector<1x8x128xf32> to vector<8x128xf32>
    %464 = arith.addf %463, %460 : vector<8x128xf32>
    %465 = arith.index_cast %c2_i32_138 : i32 to index
    %c0_146 = arith.constant 0 : index
    %c0_147 = arith.constant 0 : index
    %466 = vector.load %arg20[%465, %c0_146, %c0_147] : memref<8x8x128xf32, #tpu.memory_space<vmem>>, vector<1x8x128xf32>
    %467 = vector.shape_cast %466 : vector<1x8x128xf32> to vector<8x128xf32>
    %468 = vector.shape_cast %464 : vector<8x128xf32> to vector<1x8x128xf32>
    tpu.vector_store %arg20[%465, %c0_146, %c0_147], %468 {strides = array<i32>} : memref<8x8x128xf32, #tpu.memory_space<vmem>>, vector<1x8x128xf32>,
    %c3_i32_148 = arith.constant 3 : i32
    %469 = arith.index_cast %c3_i32_148 : i32 to index
    %c0_149 = arith.constant 0 : index
    %c0_150 = arith.constant 0 : index
    %470 = vector.load %arg19[%469, %c0_149, %c0_150] : memref<8x8x384xbf16, #tpu.memory_space<vmem>>, vector<1x8x384xbf16>
    %471 = vector.shape_cast %470 : vector<1x8x384xbf16> to vector<8x384xbf16>
    %472 = arith.extf %471 : vector<8x384xbf16> to vector<8x384xf32>
    %473 = arith.truncf %460 : vector<8x128xf32> to vector<8x128xbf16>
    %cst_151 = arith.constant dense<0.000000e+00> : vector<8x384xf32>
    %474 = tpu.matmul %473, %358, %cst_151 {dimension_numbers = #tpu.dot_dimension_numbers<[1], [0], [0], [1], [0, 0, 1, 1], [], []>} : vector<8x128xbf16>, vector<128x384xbf16>, vector<8x384xf32> -> vector<8x384xf32>
    %475 = vector.extract_strided_slice %472 {offsets = [0, 0], sizes = [8, 256], strides = [1, 1]} : vector<8x384xf32> to vector<8x256xf32>
    %476 = vector.extract_strided_slice %474 {offsets = [0, 0], sizes = [8, 256], strides = [1, 1]} : vector<8x384xf32> to vector<8x256xf32>
    %477 = arith.addf %475, %476 : vector<8x256xf32>
    %478 = arith.negf %477 : vector<8x256xf32>
    %479 = math.exp %478 : vector<8x256xf32>
    %cst_152 = arith.constant 1.000000e+00 : f32
    %480 = vector.broadcast %cst_152 : f32 to vector<8x256xf32>
    %481 = arith.addf %480, %479 : vector<8x256xf32>
    %482 = arith.divf %480, %481 : vector<8x256xf32>
    %483 = vector.extract_strided_slice %482 {offsets = [0, 0], sizes = [8, 128], strides = [1, 1]} : vector<8x256xf32> to vector<8x128xf32>
    %484 = vector.extract_strided_slice %482 {offsets = [0, 128], sizes = [8, 128], strides = [1, 1]} : vector<8x256xf32> to vector<8x128xf32>
    %485 = vector.extract_strided_slice %472 {offsets = [0, 256], sizes = [8, 128], strides = [1, 1]} : vector<8x384xf32> to vector<8x128xf32>
    %486 = vector.extract_strided_slice %474 {offsets = [0, 256], sizes = [8, 128], strides = [1, 1]} : vector<8x384xf32> to vector<8x128xf32>
    %487 = vector.broadcast %359 : vector<1x128xf32> to vector<8x128xf32>
    %488 = arith.addf %486, %487 : vector<8x128xf32>
    %489 = arith.mulf %483, %488 : vector<8x128xf32>
    %490 = arith.addf %485, %489 : vector<8x128xf32>
    %491 = math.tanh %490 : vector<8x128xf32>
    %cst_153 = arith.constant 1.000000e+00 : f32
    %492 = vector.broadcast %cst_153 : f32 to vector<8x128xf32>
    %493 = arith.subf %492, %484 : vector<8x128xf32>
    %494 = arith.mulf %493, %491 : vector<8x128xf32>
    %495 = arith.mulf %484, %460 : vector<8x128xf32>
    %496 = arith.addf %494, %495 : vector<8x128xf32>
    %497 = arith.index_cast %c3_i32_148 : i32 to index
    %c0_154 = arith.constant 0 : index
    %c0_155 = arith.constant 0 : index
    %498 = vector.load %arg20[%497, %c0_154, %c0_155] : memref<8x8x128xf32, #tpu.memory_space<vmem>>, vector<1x8x128xf32>
    %499 = vector.shape_cast %498 : vector<1x8x128xf32> to vector<8x128xf32>
    %500 = arith.addf %499, %496 : vector<8x128xf32>
    %501 = arith.index_cast %c3_i32_148 : i32 to index
    %c0_156 = arith.constant 0 : index
    %c0_157 = arith.constant 0 : index
    %502 = vector.load %arg20[%501, %c0_156, %c0_157] : memref<8x8x128xf32, #tpu.memory_space<vmem>>, vector<1x8x128xf32>
    %503 = vector.shape_cast %502 : vector<1x8x128xf32> to vector<8x128xf32>
    %504 = vector.shape_cast %500 : vector<8x128xf32> to vector<1x8x128xf32>
    tpu.vector_store %arg20[%501, %c0_156, %c0_157], %504 {strides = array<i32>} : memref<8x8x128xf32, #tpu.memory_space<vmem>>, vector<1x8x128xf32>,
    %c4_i32_158 = arith.constant 4 : i32
    %505 = arith.index_cast %c4_i32_158 : i32 to index
    %c0_159 = arith.constant 0 : index
    %c0_160 = arith.constant 0 : index
    %506 = vector.load %arg19[%505, %c0_159, %c0_160] : memref<8x8x384xbf16, #tpu.memory_space<vmem>>, vector<1x8x384xbf16>
    %507 = vector.shape_cast %506 : vector<1x8x384xbf16> to vector<8x384xbf16>
    %508 = arith.extf %507 : vector<8x384xbf16> to vector<8x384xf32>
    %509 = arith.truncf %496 : vector<8x128xf32> to vector<8x128xbf16>
    %cst_161 = arith.constant dense<0.000000e+00> : vector<8x384xf32>
    %510 = tpu.matmul %509, %358, %cst_161 {dimension_numbers = #tpu.dot_dimension_numbers<[1], [0], [0], [1], [0, 0, 1, 1], [], []>} : vector<8x128xbf16>, vector<128x384xbf16>, vector<8x384xf32> -> vector<8x384xf32>
    %511 = vector.extract_strided_slice %508 {offsets = [0, 0], sizes = [8, 256], strides = [1, 1]} : vector<8x384xf32> to vector<8x256xf32>
    %512 = vector.extract_strided_slice %510 {offsets = [0, 0], sizes = [8, 256], strides = [1, 1]} : vector<8x384xf32> to vector<8x256xf32>
    %513 = arith.addf %511, %512 : vector<8x256xf32>
    %514 = arith.negf %513 : vector<8x256xf32>
    %515 = math.exp %514 : vector<8x256xf32>
    %cst_162 = arith.constant 1.000000e+00 : f32
    %516 = vector.broadcast %cst_162 : f32 to vector<8x256xf32>
    %517 = arith.addf %516, %515 : vector<8x256xf32>
    %518 = arith.divf %516, %517 : vector<8x256xf32>
    %519 = vector.extract_strided_slice %518 {offsets = [0, 0], sizes = [8, 128], strides = [1, 1]} : vector<8x256xf32> to vector<8x128xf32>
    %520 = vector.extract_strided_slice %518 {offsets = [0, 128], sizes = [8, 128], strides = [1, 1]} : vector<8x256xf32> to vector<8x128xf32>
    %521 = vector.extract_strided_slice %508 {offsets = [0, 256], sizes = [8, 128], strides = [1, 1]} : vector<8x384xf32> to vector<8x128xf32>
    %522 = vector.extract_strided_slice %510 {offsets = [0, 256], sizes = [8, 128], strides = [1, 1]} : vector<8x384xf32> to vector<8x128xf32>
    %523 = vector.broadcast %359 : vector<1x128xf32> to vector<8x128xf32>
    %524 = arith.addf %522, %523 : vector<8x128xf32>
    %525 = arith.mulf %519, %524 : vector<8x128xf32>
    %526 = arith.addf %521, %525 : vector<8x128xf32>
    %527 = math.tanh %526 : vector<8x128xf32>
    %cst_163 = arith.constant 1.000000e+00 : f32
    %528 = vector.broadcast %cst_163 : f32 to vector<8x128xf32>
    %529 = arith.subf %528, %520 : vector<8x128xf32>
    %530 = arith.mulf %529, %527 : vector<8x128xf32>
    %531 = arith.mulf %520, %496 : vector<8x128xf32>
    %532 = arith.addf %530, %531 : vector<8x128xf32>
    %533 = arith.index_cast %c4_i32_158 : i32 to index
    %c0_164 = arith.constant 0 : index
    %c0_165 = arith.constant 0 : index
    %534 = vector.load %arg20[%533, %c0_164, %c0_165] : memref<8x8x128xf32, #tpu.memory_space<vmem>>, vector<1x8x128xf32>
    %535 = vector.shape_cast %534 : vector<1x8x128xf32> to vector<8x128xf32>
    %536 = arith.addf %535, %532 : vector<8x128xf32>
    %537 = arith.index_cast %c4_i32_158 : i32 to index
    %c0_166 = arith.constant 0 : index
    %c0_167 = arith.constant 0 : index
    %538 = vector.load %arg20[%537, %c0_166, %c0_167] : memref<8x8x128xf32, #tpu.memory_space<vmem>>, vector<1x8x128xf32>
    %539 = vector.shape_cast %538 : vector<1x8x128xf32> to vector<8x128xf32>
    %540 = vector.shape_cast %536 : vector<8x128xf32> to vector<1x8x128xf32>
    tpu.vector_store %arg20[%537, %c0_166, %c0_167], %540 {strides = array<i32>} : memref<8x8x128xf32, #tpu.memory_space<vmem>>, vector<1x8x128xf32>,
    %c5_i32_168 = arith.constant 5 : i32
    %541 = arith.index_cast %c5_i32_168 : i32 to index
    %c0_169 = arith.constant 0 : index
    %c0_170 = arith.constant 0 : index
    %542 = vector.load %arg19[%541, %c0_169, %c0_170] : memref<8x8x384xbf16, #tpu.memory_space<vmem>>, vector<1x8x384xbf16>
    %543 = vector.shape_cast %542 : vector<1x8x384xbf16> to vector<8x384xbf16>
    %544 = arith.extf %543 : vector<8x384xbf16> to vector<8x384xf32>
    %545 = arith.truncf %532 : vector<8x128xf32> to vector<8x128xbf16>
    %cst_171 = arith.constant dense<0.000000e+00> : vector<8x384xf32>
    %546 = tpu.matmul %545, %358, %cst_171 {dimension_numbers = #tpu.dot_dimension_numbers<[1], [0], [0], [1], [0, 0, 1, 1], [], []>} : vector<8x128xbf16>, vector<128x384xbf16>, vector<8x384xf32> -> vector<8x384xf32>
    %547 = vector.extract_strided_slice %544 {offsets = [0, 0], sizes = [8, 256], strides = [1, 1]} : vector<8x384xf32> to vector<8x256xf32>
    %548 = vector.extract_strided_slice %546 {offsets = [0, 0], sizes = [8, 256], strides = [1, 1]} : vector<8x384xf32> to vector<8x256xf32>
    %549 = arith.addf %547, %548 : vector<8x256xf32>
    %550 = arith.negf %549 : vector<8x256xf32>
    %551 = math.exp %550 : vector<8x256xf32>
    %cst_172 = arith.constant 1.000000e+00 : f32
    %552 = vector.broadcast %cst_172 : f32 to vector<8x256xf32>
    %553 = arith.addf %552, %551 : vector<8x256xf32>
    %554 = arith.divf %552, %553 : vector<8x256xf32>
    %555 = vector.extract_strided_slice %554 {offsets = [0, 0], sizes = [8, 128], strides = [1, 1]} : vector<8x256xf32> to vector<8x128xf32>
    %556 = vector.extract_strided_slice %554 {offsets = [0, 128], sizes = [8, 128], strides = [1, 1]} : vector<8x256xf32> to vector<8x128xf32>
    %557 = vector.extract_strided_slice %544 {offsets = [0, 256], sizes = [8, 128], strides = [1, 1]} : vector<8x384xf32> to vector<8x128xf32>
    %558 = vector.extract_strided_slice %546 {offsets = [0, 256], sizes = [8, 128], strides = [1, 1]} : vector<8x384xf32> to vector<8x128xf32>
    %559 = vector.broadcast %359 : vector<1x128xf32> to vector<8x128xf32>
    %560 = arith.addf %558, %559 : vector<8x128xf32>
    %561 = arith.mulf %555, %560 : vector<8x128xf32>
    %562 = arith.addf %557, %561 : vector<8x128xf32>
    %563 = math.tanh %562 : vector<8x128xf32>
    %cst_173 = arith.constant 1.000000e+00 : f32
    %564 = vector.broadcast %cst_173 : f32 to vector<8x128xf32>
    %565 = arith.subf %564, %556 : vector<8x128xf32>
    %566 = arith.mulf %565, %563 : vector<8x128xf32>
    %567 = arith.mulf %556, %532 : vector<8x128xf32>
    %568 = arith.addf %566, %567 : vector<8x128xf32>
    %569 = arith.index_cast %c5_i32_168 : i32 to index
    %c0_174 = arith.constant 0 : index
    %c0_175 = arith.constant 0 : index
    %570 = vector.load %arg20[%569, %c0_174, %c0_175] : memref<8x8x128xf32, #tpu.memory_space<vmem>>, vector<1x8x128xf32>
    %571 = vector.shape_cast %570 : vector<1x8x128xf32> to vector<8x128xf32>
    %572 = arith.addf %571, %568 : vector<8x128xf32>
    %573 = arith.index_cast %c5_i32_168 : i32 to index
    %c0_176 = arith.constant 0 : index
    %c0_177 = arith.constant 0 : index
    %574 = vector.load %arg20[%573, %c0_176, %c0_177] : memref<8x8x128xf32, #tpu.memory_space<vmem>>, vector<1x8x128xf32>
    %575 = vector.shape_cast %574 : vector<1x8x128xf32> to vector<8x128xf32>
    %576 = vector.shape_cast %572 : vector<8x128xf32> to vector<1x8x128xf32>
    tpu.vector_store %arg20[%573, %c0_176, %c0_177], %576 {strides = array<i32>} : memref<8x8x128xf32, #tpu.memory_space<vmem>>, vector<1x8x128xf32>,
    %c6_i32_178 = arith.constant 6 : i32
    %577 = arith.index_cast %c6_i32_178 : i32 to index
    %c0_179 = arith.constant 0 : index
    %c0_180 = arith.constant 0 : index
    %578 = vector.load %arg19[%577, %c0_179, %c0_180] : memref<8x8x384xbf16, #tpu.memory_space<vmem>>, vector<1x8x384xbf16>
    %579 = vector.shape_cast %578 : vector<1x8x384xbf16> to vector<8x384xbf16>
    %580 = arith.extf %579 : vector<8x384xbf16> to vector<8x384xf32>
    %581 = arith.truncf %568 : vector<8x128xf32> to vector<8x128xbf16>
    %cst_181 = arith.constant dense<0.000000e+00> : vector<8x384xf32>
    %582 = tpu.matmul %581, %358, %cst_181 {dimension_numbers = #tpu.dot_dimension_numbers<[1], [0], [0], [1], [0, 0, 1, 1], [], []>} : vector<8x128xbf16>, vector<128x384xbf16>, vector<8x384xf32> -> vector<8x384xf32>
    %583 = vector.extract_strided_slice %580 {offsets = [0, 0], sizes = [8, 256], strides = [1, 1]} : vector<8x384xf32> to vector<8x256xf32>
    %584 = vector.extract_strided_slice %582 {offsets = [0, 0], sizes = [8, 256], strides = [1, 1]} : vector<8x384xf32> to vector<8x256xf32>
    %585 = arith.addf %583, %584 : vector<8x256xf32>
    %586 = arith.negf %585 : vector<8x256xf32>
    %587 = math.exp %586 : vector<8x256xf32>
    %cst_182 = arith.constant 1.000000e+00 : f32
    %588 = vector.broadcast %cst_182 : f32 to vector<8x256xf32>
    %589 = arith.addf %588, %587 : vector<8x256xf32>
    %590 = arith.divf %588, %589 : vector<8x256xf32>
    %591 = vector.extract_strided_slice %590 {offsets = [0, 0], sizes = [8, 128], strides = [1, 1]} : vector<8x256xf32> to vector<8x128xf32>
    %592 = vector.extract_strided_slice %590 {offsets = [0, 128], sizes = [8, 128], strides = [1, 1]} : vector<8x256xf32> to vector<8x128xf32>
    %593 = vector.extract_strided_slice %580 {offsets = [0, 256], sizes = [8, 128], strides = [1, 1]} : vector<8x384xf32> to vector<8x128xf32>
    %594 = vector.extract_strided_slice %582 {offsets = [0, 256], sizes = [8, 128], strides = [1, 1]} : vector<8x384xf32> to vector<8x128xf32>
    %595 = vector.broadcast %359 : vector<1x128xf32> to vector<8x128xf32>
    %596 = arith.addf %594, %595 : vector<8x128xf32>
    %597 = arith.mulf %591, %596 : vector<8x128xf32>
    %598 = arith.addf %593, %597 : vector<8x128xf32>
    %599 = math.tanh %598 : vector<8x128xf32>
    %cst_183 = arith.constant 1.000000e+00 : f32
    %600 = vector.broadcast %cst_183 : f32 to vector<8x128xf32>
    %601 = arith.subf %600, %592 : vector<8x128xf32>
    %602 = arith.mulf %601, %599 : vector<8x128xf32>
    %603 = arith.mulf %592, %568 : vector<8x128xf32>
    %604 = arith.addf %602, %603 : vector<8x128xf32>
    %605 = arith.index_cast %c6_i32_178 : i32 to index
    %c0_184 = arith.constant 0 : index
    %c0_185 = arith.constant 0 : index
    %606 = vector.load %arg20[%605, %c0_184, %c0_185] : memref<8x8x128xf32, #tpu.memory_space<vmem>>, vector<1x8x128xf32>
    %607 = vector.shape_cast %606 : vector<1x8x128xf32> to vector<8x128xf32>
    %608 = arith.addf %607, %604 : vector<8x128xf32>
    %609 = arith.index_cast %c6_i32_178 : i32 to index
    %c0_186 = arith.constant 0 : index
    %c0_187 = arith.constant 0 : index
    %610 = vector.load %arg20[%609, %c0_186, %c0_187] : memref<8x8x128xf32, #tpu.memory_space<vmem>>, vector<1x8x128xf32>
    %611 = vector.shape_cast %610 : vector<1x8x128xf32> to vector<8x128xf32>
    %612 = vector.shape_cast %608 : vector<8x128xf32> to vector<1x8x128xf32>
    tpu.vector_store %arg20[%609, %c0_186, %c0_187], %612 {strides = array<i32>} : memref<8x8x128xf32, #tpu.memory_space<vmem>>, vector<1x8x128xf32>,
    %c7_i32_188 = arith.constant 7 : i32
    %613 = arith.index_cast %c7_i32_188 : i32 to index
    %c0_189 = arith.constant 0 : index
    %c0_190 = arith.constant 0 : index
    %614 = vector.load %arg19[%613, %c0_189, %c0_190] : memref<8x8x384xbf16, #tpu.memory_space<vmem>>, vector<1x8x384xbf16>
    %615 = vector.shape_cast %614 : vector<1x8x384xbf16> to vector<8x384xbf16>
    %616 = arith.extf %615 : vector<8x384xbf16> to vector<8x384xf32>
    %617 = arith.truncf %604 : vector<8x128xf32> to vector<8x128xbf16>
    %cst_191 = arith.constant dense<0.000000e+00> : vector<8x384xf32>
    %618 = tpu.matmul %617, %358, %cst_191 {dimension_numbers = #tpu.dot_dimension_numbers<[1], [0], [0], [1], [0, 0, 1, 1], [], []>} : vector<8x128xbf16>, vector<128x384xbf16>, vector<8x384xf32> -> vector<8x384xf32>
    %619 = vector.extract_strided_slice %616 {offsets = [0, 0], sizes = [8, 256], strides = [1, 1]} : vector<8x384xf32> to vector<8x256xf32>
    %620 = vector.extract_strided_slice %618 {offsets = [0, 0], sizes = [8, 256], strides = [1, 1]} : vector<8x384xf32> to vector<8x256xf32>
    %621 = arith.addf %619, %620 : vector<8x256xf32>
    %622 = arith.negf %621 : vector<8x256xf32>
    %623 = math.exp %622 : vector<8x256xf32>
    %cst_192 = arith.constant 1.000000e+00 : f32
    %624 = vector.broadcast %cst_192 : f32 to vector<8x256xf32>
    %625 = arith.addf %624, %623 : vector<8x256xf32>
    %626 = arith.divf %624, %625 : vector<8x256xf32>
    %627 = vector.extract_strided_slice %626 {offsets = [0, 0], sizes = [8, 128], strides = [1, 1]} : vector<8x256xf32> to vector<8x128xf32>
    %628 = vector.extract_strided_slice %626 {offsets = [0, 128], sizes = [8, 128], strides = [1, 1]} : vector<8x256xf32> to vector<8x128xf32>
    %629 = vector.extract_strided_slice %616 {offsets = [0, 256], sizes = [8, 128], strides = [1, 1]} : vector<8x384xf32> to vector<8x128xf32>
    %630 = vector.extract_strided_slice %618 {offsets = [0, 256], sizes = [8, 128], strides = [1, 1]} : vector<8x384xf32> to vector<8x128xf32>
    %631 = vector.broadcast %359 : vector<1x128xf32> to vector<8x128xf32>
    %632 = arith.addf %630, %631 : vector<8x128xf32>
    %633 = arith.mulf %627, %632 : vector<8x128xf32>
    %634 = arith.addf %629, %633 : vector<8x128xf32>
    %635 = math.tanh %634 : vector<8x128xf32>
    %cst_193 = arith.constant 1.000000e+00 : f32
    %636 = vector.broadcast %cst_193 : f32 to vector<8x128xf32>
    %637 = arith.subf %636, %628 : vector<8x128xf32>
    %638 = arith.mulf %637, %635 : vector<8x128xf32>
    %639 = arith.mulf %628, %604 : vector<8x128xf32>
    %640 = arith.addf %638, %639 : vector<8x128xf32>
    %641 = arith.index_cast %c7_i32_188 : i32 to index
    %c0_194 = arith.constant 0 : index
    %c0_195 = arith.constant 0 : index
    %642 = vector.load %arg20[%641, %c0_194, %c0_195] : memref<8x8x128xf32, #tpu.memory_space<vmem>>, vector<1x8x128xf32>
    %643 = vector.shape_cast %642 : vector<1x8x128xf32> to vector<8x128xf32>
    %644 = arith.addf %643, %640 : vector<8x128xf32>
    %645 = arith.index_cast %c7_i32_188 : i32 to index
    %c0_196 = arith.constant 0 : index
    %c0_197 = arith.constant 0 : index
    %646 = vector.load %arg20[%645, %c0_196, %c0_197] : memref<8x8x128xf32, #tpu.memory_space<vmem>>, vector<1x8x128xf32>
    %647 = vector.shape_cast %646 : vector<1x8x128xf32> to vector<8x128xf32>
    %648 = vector.shape_cast %644 : vector<8x128xf32> to vector<1x8x128xf32>
    tpu.vector_store %arg20[%645, %c0_196, %c0_197], %648 {strides = array<i32>} : memref<8x8x128xf32, #tpu.memory_space<vmem>>, vector<1x8x128xf32>,
    %c8_i32_198 = arith.constant 8 : i32
    %c0_199 = arith.constant 0 : index
    %c0_200 = arith.constant 0 : index
    %c0_201 = arith.constant 0 : index
    %649 = vector.load %arg20[%c0_199, %c0_200, %c0_201] : memref<8x8x128xf32, #tpu.memory_space<vmem>>, vector<8x8x128xf32>
    %650 = vector.shape_cast %649 : vector<8x8x128xf32> to vector<64x128xf32>
    %c0_202 = arith.constant 0 : index
    %c0_203 = arith.constant 0 : index
    %651 = vector.load %arg12[%c0_202, %c0_203] : memref<1x128xf32, #tpu.memory_space<vmem>>, vector<1x128xf32>
    %c0_204 = arith.constant 0 : index
    %c0_205 = arith.constant 0 : index
    %652 = vector.load %arg13[%c0_204, %c0_205] : memref<1x128xf32, #tpu.memory_space<vmem>>, vector<1x128xf32>
    %cst_206 = arith.constant dense<0.000000e+00> : vector<64xf32>
    %653 = vector.multi_reduction <add>, %650, %cst_206 [1] : vector<64x128xf32> to vector<64xf32>
    %654 = vector.shape_cast %653 : vector<64xf32> to vector<64x1xf32>
    %cst_207 = arith.constant 1.280000e+02 : f32
    %655 = vector.broadcast %cst_207 : f32 to vector<64x1xf32>
    %656 = arith.divf %654, %655 : vector<64x1xf32>
    %657 = vector.broadcast %656 : vector<64x1xf32> to vector<64x128xf32>
    %658 = arith.subf %650, %657 : vector<64x128xf32>
    %659 = arith.mulf %658, %658 : vector<64x128xf32>
    %cst_208 = arith.constant dense<0.000000e+00> : vector<64xf32>
    %660 = vector.multi_reduction <add>, %659, %cst_208 [1] : vector<64x128xf32> to vector<64xf32>
    %661 = vector.shape_cast %660 : vector<64xf32> to vector<64x1xf32>
    %cst_209 = arith.constant 1.280000e+02 : f32
    %662 = vector.broadcast %cst_209 : f32 to vector<64x1xf32>
    %663 = arith.divf %661, %662 : vector<64x1xf32>
    %cst_210 = arith.constant 9.99999974E-6 : f32
    %664 = vector.broadcast %cst_210 : f32 to vector<64x1xf32>
    %665 = arith.addf %663, %664 : vector<64x1xf32>
    %666 = math.rsqrt %665 : vector<64x1xf32>
    %667 = vector.broadcast %666 : vector<64x1xf32> to vector<64x128xf32>
    %668 = arith.mulf %658, %667 : vector<64x128xf32>
    %669 = vector.broadcast %651 : vector<1x128xf32> to vector<64x128xf32>
    %670 = arith.mulf %668, %669 : vector<64x128xf32>
    %671 = vector.broadcast %652 : vector<1x128xf32> to vector<64x128xf32>
    %672 = arith.addf %670, %671 : vector<64x128xf32>
    %673 = arith.truncf %672 : vector<64x128xf32> to vector<64x128xbf16>
    %c0_211 = arith.constant 0 : index
    %c0_212 = arith.constant 0 : index
    %674 = vector.load %arg14[%c0_211, %c0_212] : memref<128x384xbf16, #tpu.memory_space<vmem>>, vector<128x384xbf16>
    %cst_213 = arith.constant dense<0.000000e+00> : vector<64x384xf32>
    %675 = tpu.matmul %673, %674, %cst_213 {dimension_numbers = #tpu.dot_dimension_numbers<[1], [0], [0], [1], [0, 0, 1, 1], [], []>} : vector<64x128xbf16>, vector<128x384xbf16>, vector<64x384xf32> -> vector<64x384xf32>
    %c0_214 = arith.constant 0 : index
    %c0_215 = arith.constant 0 : index
    %676 = vector.load %arg16[%c0_214, %c0_215] : memref<1x384xf32, #tpu.memory_space<vmem>>, vector<1x384xf32>
    %677 = vector.broadcast %676 : vector<1x384xf32> to vector<64x384xf32>
    %678 = arith.addf %675, %677 : vector<64x384xf32>
    %679 = vector.shape_cast %678 : vector<64x384xf32> to vector<8x8x384xf32>
    %680 = arith.truncf %679 : vector<8x8x384xf32> to vector<8x8x384xbf16>
    %c0_216 = arith.constant 0 : index
    %c0_217 = arith.constant 0 : index
    %c0_218 = arith.constant 0 : index
    %681 = vector.load %arg19[%c0_216, %c0_217, %c0_218] : memref<8x8x384xbf16, #tpu.memory_space<vmem>>, vector<8x8x384xbf16>
    tpu.vector_store %arg19[%c0_216, %c0_217, %c0_218], %680 {strides = array<i32>} : memref<8x8x384xbf16, #tpu.memory_space<vmem>>, vector<8x8x384xbf16>,
    %c0_219 = arith.constant 0 : index
    %c0_220 = arith.constant 0 : index
    %682 = vector.load %arg15[%c0_219, %c0_220] : memref<128x384xbf16, #tpu.memory_space<vmem>>, vector<128x384xbf16>
    %c0_221 = arith.constant 0 : index
    %c0_222 = arith.constant 0 : index
    %683 = vector.load %arg17[%c0_221, %c0_222] : memref<1x128xf32, #tpu.memory_space<vmem>>, vector<1x128xf32>
    %cst_223 = arith.constant 0.000000e+00 : f32
    %684 = vector.broadcast %cst_223 : f32 to vector<8x128xf32>
    %c0_i32_224 = arith.constant 0 : i32
    %685 = arith.index_cast %c0_i32_224 : i32 to index
    %c0_225 = arith.constant 0 : index
    %c0_226 = arith.constant 0 : index
    %686 = vector.load %arg19[%685, %c0_225, %c0_226] : memref<8x8x384xbf16, #tpu.memory_space<vmem>>, vector<1x8x384xbf16>
    %687 = vector.shape_cast %686 : vector<1x8x384xbf16> to vector<8x384xbf16>
    %688 = arith.extf %687 : vector<8x384xbf16> to vector<8x384xf32>
    %689 = arith.truncf %684 : vector<8x128xf32> to vector<8x128xbf16>
    %cst_227 = arith.constant dense<0.000000e+00> : vector<8x384xf32>
    %690 = tpu.matmul %689, %682, %cst_227 {dimension_numbers = #tpu.dot_dimension_numbers<[1], [0], [0], [1], [0, 0, 1, 1], [], []>} : vector<8x128xbf16>, vector<128x384xbf16>, vector<8x384xf32> -> vector<8x384xf32>
    %691 = vector.extract_strided_slice %688 {offsets = [0, 0], sizes = [8, 256], strides = [1, 1]} : vector<8x384xf32> to vector<8x256xf32>
    %692 = vector.extract_strided_slice %690 {offsets = [0, 0], sizes = [8, 256], strides = [1, 1]} : vector<8x384xf32> to vector<8x256xf32>
    %693 = arith.addf %691, %692 : vector<8x256xf32>
    %694 = arith.negf %693 : vector<8x256xf32>
    %695 = math.exp %694 : vector<8x256xf32>
    %cst_228 = arith.constant 1.000000e+00 : f32
    %696 = vector.broadcast %cst_228 : f32 to vector<8x256xf32>
    %697 = arith.addf %696, %695 : vector<8x256xf32>
    %698 = arith.divf %696, %697 : vector<8x256xf32>
    %699 = vector.extract_strided_slice %698 {offsets = [0, 0], sizes = [8, 128], strides = [1, 1]} : vector<8x256xf32> to vector<8x128xf32>
    %700 = vector.extract_strided_slice %698 {offsets = [0, 128], sizes = [8, 128], strides = [1, 1]} : vector<8x256xf32> to vector<8x128xf32>
    %701 = vector.extract_strided_slice %688 {offsets = [0, 256], sizes = [8, 128], strides = [1, 1]} : vector<8x384xf32> to vector<8x128xf32>
    %702 = vector.extract_strided_slice %690 {offsets = [0, 256], sizes = [8, 128], strides = [1, 1]} : vector<8x384xf32> to vector<8x128xf32>
    %703 = vector.broadcast %683 : vector<1x128xf32> to vector<8x128xf32>
    %704 = arith.addf %702, %703 : vector<8x128xf32>
    %705 = arith.mulf %699, %704 : vector<8x128xf32>
    %706 = arith.addf %701, %705 : vector<8x128xf32>
    %707 = math.tanh %706 : vector<8x128xf32>
    %cst_229 = arith.constant 1.000000e+00 : f32
    %708 = vector.broadcast %cst_229 : f32 to vector<8x128xf32>
    %709 = arith.subf %708, %700 : vector<8x128xf32>
    %710 = arith.mulf %709, %707 : vector<8x128xf32>
    %711 = arith.mulf %700, %684 : vector<8x128xf32>
    %712 = arith.addf %710, %711 : vector<8x128xf32>
    %713 = arith.index_cast %c0_i32_224 : i32 to index
    %c0_230 = arith.constant 0 : index
    %c0_231 = arith.constant 0 : index
    %714 = vector.load %arg18[%713, %c0_230, %c0_231] : memref<8x8x128xf32, #tpu.memory_space<vmem>>, vector<1x8x128xf32>
    %715 = vector.shape_cast %714 : vector<1x8x128xf32> to vector<8x128xf32>
    %716 = vector.shape_cast %712 : vector<8x128xf32> to vector<1x8x128xf32>
    tpu.vector_store %arg18[%713, %c0_230, %c0_231], %716 {strides = array<i32>} : memref<8x8x128xf32, #tpu.memory_space<vmem>>, vector<1x8x128xf32>,
    %c1_i32_232 = arith.constant 1 : i32
    %717 = arith.index_cast %c1_i32_232 : i32 to index
    %c0_233 = arith.constant 0 : index
    %c0_234 = arith.constant 0 : index
    %718 = vector.load %arg19[%717, %c0_233, %c0_234] : memref<8x8x384xbf16, #tpu.memory_space<vmem>>, vector<1x8x384xbf16>
    %719 = vector.shape_cast %718 : vector<1x8x384xbf16> to vector<8x384xbf16>
    %720 = arith.extf %719 : vector<8x384xbf16> to vector<8x384xf32>
    %721 = arith.truncf %712 : vector<8x128xf32> to vector<8x128xbf16>
    %cst_235 = arith.constant dense<0.000000e+00> : vector<8x384xf32>
    %722 = tpu.matmul %721, %682, %cst_235 {dimension_numbers = #tpu.dot_dimension_numbers<[1], [0], [0], [1], [0, 0, 1, 1], [], []>} : vector<8x128xbf16>, vector<128x384xbf16>, vector<8x384xf32> -> vector<8x384xf32>
    %723 = vector.extract_strided_slice %720 {offsets = [0, 0], sizes = [8, 256], strides = [1, 1]} : vector<8x384xf32> to vector<8x256xf32>
    %724 = vector.extract_strided_slice %722 {offsets = [0, 0], sizes = [8, 256], strides = [1, 1]} : vector<8x384xf32> to vector<8x256xf32>
    %725 = arith.addf %723, %724 : vector<8x256xf32>
    %726 = arith.negf %725 : vector<8x256xf32>
    %727 = math.exp %726 : vector<8x256xf32>
    %cst_236 = arith.constant 1.000000e+00 : f32
    %728 = vector.broadcast %cst_236 : f32 to vector<8x256xf32>
    %729 = arith.addf %728, %727 : vector<8x256xf32>
    %730 = arith.divf %728, %729 : vector<8x256xf32>
    %731 = vector.extract_strided_slice %730 {offsets = [0, 0], sizes = [8, 128], strides = [1, 1]} : vector<8x256xf32> to vector<8x128xf32>
    %732 = vector.extract_strided_slice %730 {offsets = [0, 128], sizes = [8, 128], strides = [1, 1]} : vector<8x256xf32> to vector<8x128xf32>
    %733 = vector.extract_strided_slice %720 {offsets = [0, 256], sizes = [8, 128], strides = [1, 1]} : vector<8x384xf32> to vector<8x128xf32>
    %734 = vector.extract_strided_slice %722 {offsets = [0, 256], sizes = [8, 128], strides = [1, 1]} : vector<8x384xf32> to vector<8x128xf32>
    %735 = vector.broadcast %683 : vector<1x128xf32> to vector<8x128xf32>
    %736 = arith.addf %734, %735 : vector<8x128xf32>
    %737 = arith.mulf %731, %736 : vector<8x128xf32>
    %738 = arith.addf %733, %737 : vector<8x128xf32>
    %739 = math.tanh %738 : vector<8x128xf32>
    %cst_237 = arith.constant 1.000000e+00 : f32
    %740 = vector.broadcast %cst_237 : f32 to vector<8x128xf32>
    %741 = arith.subf %740, %732 : vector<8x128xf32>
    %742 = arith.mulf %741, %739 : vector<8x128xf32>
    %743 = arith.mulf %732, %712 : vector<8x128xf32>
    %744 = arith.addf %742, %743 : vector<8x128xf32>
    %745 = arith.index_cast %c1_i32_232 : i32 to index
    %c0_238 = arith.constant 0 : index
    %c0_239 = arith.constant 0 : index
    %746 = vector.load %arg18[%745, %c0_238, %c0_239] : memref<8x8x128xf32, #tpu.memory_space<vmem>>, vector<1x8x128xf32>
    %747 = vector.shape_cast %746 : vector<1x8x128xf32> to vector<8x128xf32>
    %748 = vector.shape_cast %744 : vector<8x128xf32> to vector<1x8x128xf32>
    tpu.vector_store %arg18[%745, %c0_238, %c0_239], %748 {strides = array<i32>} : memref<8x8x128xf32, #tpu.memory_space<vmem>>, vector<1x8x128xf32>,
    %c2_i32_240 = arith.constant 2 : i32
    %749 = arith.index_cast %c2_i32_240 : i32 to index
    %c0_241 = arith.constant 0 : index
    %c0_242 = arith.constant 0 : index
    %750 = vector.load %arg19[%749, %c0_241, %c0_242] : memref<8x8x384xbf16, #tpu.memory_space<vmem>>, vector<1x8x384xbf16>
    %751 = vector.shape_cast %750 : vector<1x8x384xbf16> to vector<8x384xbf16>
    %752 = arith.extf %751 : vector<8x384xbf16> to vector<8x384xf32>
    %753 = arith.truncf %744 : vector<8x128xf32> to vector<8x128xbf16>
    %cst_243 = arith.constant dense<0.000000e+00> : vector<8x384xf32>
    %754 = tpu.matmul %753, %682, %cst_243 {dimension_numbers = #tpu.dot_dimension_numbers<[1], [0], [0], [1], [0, 0, 1, 1], [], []>} : vector<8x128xbf16>, vector<128x384xbf16>, vector<8x384xf32> -> vector<8x384xf32>
    %755 = vector.extract_strided_slice %752 {offsets = [0, 0], sizes = [8, 256], strides = [1, 1]} : vector<8x384xf32> to vector<8x256xf32>
    %756 = vector.extract_strided_slice %754 {offsets = [0, 0], sizes = [8, 256], strides = [1, 1]} : vector<8x384xf32> to vector<8x256xf32>
    %757 = arith.addf %755, %756 : vector<8x256xf32>
    %758 = arith.negf %757 : vector<8x256xf32>
    %759 = math.exp %758 : vector<8x256xf32>
    %cst_244 = arith.constant 1.000000e+00 : f32
    %760 = vector.broadcast %cst_244 : f32 to vector<8x256xf32>
    %761 = arith.addf %760, %759 : vector<8x256xf32>
    %762 = arith.divf %760, %761 : vector<8x256xf32>
    %763 = vector.extract_strided_slice %762 {offsets = [0, 0], sizes = [8, 128], strides = [1, 1]} : vector<8x256xf32> to vector<8x128xf32>
    %764 = vector.extract_strided_slice %762 {offsets = [0, 128], sizes = [8, 128], strides = [1, 1]} : vector<8x256xf32> to vector<8x128xf32>
    %765 = vector.extract_strided_slice %752 {offsets = [0, 256], sizes = [8, 128], strides = [1, 1]} : vector<8x384xf32> to vector<8x128xf32>
    %766 = vector.extract_strided_slice %754 {offsets = [0, 256], sizes = [8, 128], strides = [1, 1]} : vector<8x384xf32> to vector<8x128xf32>
    %767 = vector.broadcast %683 : vector<1x128xf32> to vector<8x128xf32>
    %768 = arith.addf %766, %767 : vector<8x128xf32>
    %769 = arith.mulf %763, %768 : vector<8x128xf32>
    %770 = arith.addf %765, %769 : vector<8x128xf32>
    %771 = math.tanh %770 : vector<8x128xf32>
    %cst_245 = arith.constant 1.000000e+00 : f32
    %772 = vector.broadcast %cst_245 : f32 to vector<8x128xf32>
    %773 = arith.subf %772, %764 : vector<8x128xf32>
    %774 = arith.mulf %773, %771 : vector<8x128xf32>
    %775 = arith.mulf %764, %744 : vector<8x128xf32>
    %776 = arith.addf %774, %775 : vector<8x128xf32>
    %777 = arith.index_cast %c2_i32_240 : i32 to index
    %c0_246 = arith.constant 0 : index
    %c0_247 = arith.constant 0 : index
    %778 = vector.load %arg18[%777, %c0_246, %c0_247] : memref<8x8x128xf32, #tpu.memory_space<vmem>>, vector<1x8x128xf32>
    %779 = vector.shape_cast %778 : vector<1x8x128xf32> to vector<8x128xf32>
    %780 = vector.shape_cast %776 : vector<8x128xf32> to vector<1x8x128xf32>
    tpu.vector_store %arg18[%777, %c0_246, %c0_247], %780 {strides = array<i32>} : memref<8x8x128xf32, #tpu.memory_space<vmem>>, vector<1x8x128xf32>,
    %c3_i32_248 = arith.constant 3 : i32
    %781 = arith.index_cast %c3_i32_248 : i32 to index
    %c0_249 = arith.constant 0 : index
    %c0_250 = arith.constant 0 : index
    %782 = vector.load %arg19[%781, %c0_249, %c0_250] : memref<8x8x384xbf16, #tpu.memory_space<vmem>>, vector<1x8x384xbf16>
    %783 = vector.shape_cast %782 : vector<1x8x384xbf16> to vector<8x384xbf16>
    %784 = arith.extf %783 : vector<8x384xbf16> to vector<8x384xf32>
    %785 = arith.truncf %776 : vector<8x128xf32> to vector<8x128xbf16>
    %cst_251 = arith.constant dense<0.000000e+00> : vector<8x384xf32>
    %786 = tpu.matmul %785, %682, %cst_251 {dimension_numbers = #tpu.dot_dimension_numbers<[1], [0], [0], [1], [0, 0, 1, 1], [], []>} : vector<8x128xbf16>, vector<128x384xbf16>, vector<8x384xf32> -> vector<8x384xf32>
    %787 = vector.extract_strided_slice %784 {offsets = [0, 0], sizes = [8, 256], strides = [1, 1]} : vector<8x384xf32> to vector<8x256xf32>
    %788 = vector.extract_strided_slice %786 {offsets = [0, 0], sizes = [8, 256], strides = [1, 1]} : vector<8x384xf32> to vector<8x256xf32>
    %789 = arith.addf %787, %788 : vector<8x256xf32>
    %790 = arith.negf %789 : vector<8x256xf32>
    %791 = math.exp %790 : vector<8x256xf32>
    %cst_252 = arith.constant 1.000000e+00 : f32
    %792 = vector.broadcast %cst_252 : f32 to vector<8x256xf32>
    %793 = arith.addf %792, %791 : vector<8x256xf32>
    %794 = arith.divf %792, %793 : vector<8x256xf32>
    %795 = vector.extract_strided_slice %794 {offsets = [0, 0], sizes = [8, 128], strides = [1, 1]} : vector<8x256xf32> to vector<8x128xf32>
    %796 = vector.extract_strided_slice %794 {offsets = [0, 128], sizes = [8, 128], strides = [1, 1]} : vector<8x256xf32> to vector<8x128xf32>
    %797 = vector.extract_strided_slice %784 {offsets = [0, 256], sizes = [8, 128], strides = [1, 1]} : vector<8x384xf32> to vector<8x128xf32>
    %798 = vector.extract_strided_slice %786 {offsets = [0, 256], sizes = [8, 128], strides = [1, 1]} : vector<8x384xf32> to vector<8x128xf32>
    %799 = vector.broadcast %683 : vector<1x128xf32> to vector<8x128xf32>
    %800 = arith.addf %798, %799 : vector<8x128xf32>
    %801 = arith.mulf %795, %800 : vector<8x128xf32>
    %802 = arith.addf %797, %801 : vector<8x128xf32>
    %803 = math.tanh %802 : vector<8x128xf32>
    %cst_253 = arith.constant 1.000000e+00 : f32
    %804 = vector.broadcast %cst_253 : f32 to vector<8x128xf32>
    %805 = arith.subf %804, %796 : vector<8x128xf32>
    %806 = arith.mulf %805, %803 : vector<8x128xf32>
    %807 = arith.mulf %796, %776 : vector<8x128xf32>
    %808 = arith.addf %806, %807 : vector<8x128xf32>
    %809 = arith.index_cast %c3_i32_248 : i32 to index
    %c0_254 = arith.constant 0 : index
    %c0_255 = arith.constant 0 : index
    %810 = vector.load %arg18[%809, %c0_254, %c0_255] : memref<8x8x128xf32, #tpu.memory_space<vmem>>, vector<1x8x128xf32>
    %811 = vector.shape_cast %810 : vector<1x8x128xf32> to vector<8x128xf32>
    %812 = vector.shape_cast %808 : vector<8x128xf32> to vector<1x8x128xf32>
    tpu.vector_store %arg18[%809, %c0_254, %c0_255], %812 {strides = array<i32>} : memref<8x8x128xf32, #tpu.memory_space<vmem>>, vector<1x8x128xf32>,
    %c4_i32_256 = arith.constant 4 : i32
    %813 = arith.index_cast %c4_i32_256 : i32 to index
    %c0_257 = arith.constant 0 : index
    %c0_258 = arith.constant 0 : index
    %814 = vector.load %arg19[%813, %c0_257, %c0_258] : memref<8x8x384xbf16, #tpu.memory_space<vmem>>, vector<1x8x384xbf16>
    %815 = vector.shape_cast %814 : vector<1x8x384xbf16> to vector<8x384xbf16>
    %816 = arith.extf %815 : vector<8x384xbf16> to vector<8x384xf32>
    %817 = arith.truncf %808 : vector<8x128xf32> to vector<8x128xbf16>
    %cst_259 = arith.constant dense<0.000000e+00> : vector<8x384xf32>
    %818 = tpu.matmul %817, %682, %cst_259 {dimension_numbers = #tpu.dot_dimension_numbers<[1], [0], [0], [1], [0, 0, 1, 1], [], []>} : vector<8x128xbf16>, vector<128x384xbf16>, vector<8x384xf32> -> vector<8x384xf32>
    %819 = vector.extract_strided_slice %816 {offsets = [0, 0], sizes = [8, 256], strides = [1, 1]} : vector<8x384xf32> to vector<8x256xf32>
    %820 = vector.extract_strided_slice %818 {offsets = [0, 0], sizes = [8, 256], strides = [1, 1]} : vector<8x384xf32> to vector<8x256xf32>
    %821 = arith.addf %819, %820 : vector<8x256xf32>
    %822 = arith.negf %821 : vector<8x256xf32>
    %823 = math.exp %822 : vector<8x256xf32>
    %cst_260 = arith.constant 1.000000e+00 : f32
    %824 = vector.broadcast %cst_260 : f32 to vector<8x256xf32>
    %825 = arith.addf %824, %823 : vector<8x256xf32>
    %826 = arith.divf %824, %825 : vector<8x256xf32>
    %827 = vector.extract_strided_slice %826 {offsets = [0, 0], sizes = [8, 128], strides = [1, 1]} : vector<8x256xf32> to vector<8x128xf32>
    %828 = vector.extract_strided_slice %826 {offsets = [0, 128], sizes = [8, 128], strides = [1, 1]} : vector<8x256xf32> to vector<8x128xf32>
    %829 = vector.extract_strided_slice %816 {offsets = [0, 256], sizes = [8, 128], strides = [1, 1]} : vector<8x384xf32> to vector<8x128xf32>
    %830 = vector.extract_strided_slice %818 {offsets = [0, 256], sizes = [8, 128], strides = [1, 1]} : vector<8x384xf32> to vector<8x128xf32>
    %831 = vector.broadcast %683 : vector<1x128xf32> to vector<8x128xf32>
    %832 = arith.addf %830, %831 : vector<8x128xf32>
    %833 = arith.mulf %827, %832 : vector<8x128xf32>
    %834 = arith.addf %829, %833 : vector<8x128xf32>
    %835 = math.tanh %834 : vector<8x128xf32>
    %cst_261 = arith.constant 1.000000e+00 : f32
    %836 = vector.broadcast %cst_261 : f32 to vector<8x128xf32>
    %837 = arith.subf %836, %828 : vector<8x128xf32>
    %838 = arith.mulf %837, %835 : vector<8x128xf32>
    %839 = arith.mulf %828, %808 : vector<8x128xf32>
    %840 = arith.addf %838, %839 : vector<8x128xf32>
    %841 = arith.index_cast %c4_i32_256 : i32 to index
    %c0_262 = arith.constant 0 : index
    %c0_263 = arith.constant 0 : index
    %842 = vector.load %arg18[%841, %c0_262, %c0_263] : memref<8x8x128xf32, #tpu.memory_space<vmem>>, vector<1x8x128xf32>
    %843 = vector.shape_cast %842 : vector<1x8x128xf32> to vector<8x128xf32>
    %844 = vector.shape_cast %840 : vector<8x128xf32> to vector<1x8x128xf32>
    tpu.vector_store %arg18[%841, %c0_262, %c0_263], %844 {strides = array<i32>} : memref<8x8x128xf32, #tpu.memory_space<vmem>>, vector<1x8x128xf32>,
    %c5_i32_264 = arith.constant 5 : i32
    %845 = arith.index_cast %c5_i32_264 : i32 to index
    %c0_265 = arith.constant 0 : index
    %c0_266 = arith.constant 0 : index
    %846 = vector.load %arg19[%845, %c0_265, %c0_266] : memref<8x8x384xbf16, #tpu.memory_space<vmem>>, vector<1x8x384xbf16>
    %847 = vector.shape_cast %846 : vector<1x8x384xbf16> to vector<8x384xbf16>
    %848 = arith.extf %847 : vector<8x384xbf16> to vector<8x384xf32>
    %849 = arith.truncf %840 : vector<8x128xf32> to vector<8x128xbf16>
    %cst_267 = arith.constant dense<0.000000e+00> : vector<8x384xf32>
    %850 = tpu.matmul %849, %682, %cst_267 {dimension_numbers = #tpu.dot_dimension_numbers<[1], [0], [0], [1], [0, 0, 1, 1], [], []>} : vector<8x128xbf16>, vector<128x384xbf16>, vector<8x384xf32> -> vector<8x384xf32>
    %851 = vector.extract_strided_slice %848 {offsets = [0, 0], sizes = [8, 256], strides = [1, 1]} : vector<8x384xf32> to vector<8x256xf32>
    %852 = vector.extract_strided_slice %850 {offsets = [0, 0], sizes = [8, 256], strides = [1, 1]} : vector<8x384xf32> to vector<8x256xf32>
    %853 = arith.addf %851, %852 : vector<8x256xf32>
    %854 = arith.negf %853 : vector<8x256xf32>
    %855 = math.exp %854 : vector<8x256xf32>
    %cst_268 = arith.constant 1.000000e+00 : f32
    %856 = vector.broadcast %cst_268 : f32 to vector<8x256xf32>
    %857 = arith.addf %856, %855 : vector<8x256xf32>
    %858 = arith.divf %856, %857 : vector<8x256xf32>
    %859 = vector.extract_strided_slice %858 {offsets = [0, 0], sizes = [8, 128], strides = [1, 1]} : vector<8x256xf32> to vector<8x128xf32>
    %860 = vector.extract_strided_slice %858 {offsets = [0, 128], sizes = [8, 128], strides = [1, 1]} : vector<8x256xf32> to vector<8x128xf32>
    %861 = vector.extract_strided_slice %848 {offsets = [0, 256], sizes = [8, 128], strides = [1, 1]} : vector<8x384xf32> to vector<8x128xf32>
    %862 = vector.extract_strided_slice %850 {offsets = [0, 256], sizes = [8, 128], strides = [1, 1]} : vector<8x384xf32> to vector<8x128xf32>
    %863 = vector.broadcast %683 : vector<1x128xf32> to vector<8x128xf32>
    %864 = arith.addf %862, %863 : vector<8x128xf32>
    %865 = arith.mulf %859, %864 : vector<8x128xf32>
    %866 = arith.addf %861, %865 : vector<8x128xf32>
    %867 = math.tanh %866 : vector<8x128xf32>
    %cst_269 = arith.constant 1.000000e+00 : f32
    %868 = vector.broadcast %cst_269 : f32 to vector<8x128xf32>
    %869 = arith.subf %868, %860 : vector<8x128xf32>
    %870 = arith.mulf %869, %867 : vector<8x128xf32>
    %871 = arith.mulf %860, %840 : vector<8x128xf32>
    %872 = arith.addf %870, %871 : vector<8x128xf32>
    %873 = arith.index_cast %c5_i32_264 : i32 to index
    %c0_270 = arith.constant 0 : index
    %c0_271 = arith.constant 0 : index
    %874 = vector.load %arg18[%873, %c0_270, %c0_271] : memref<8x8x128xf32, #tpu.memory_space<vmem>>, vector<1x8x128xf32>
    %875 = vector.shape_cast %874 : vector<1x8x128xf32> to vector<8x128xf32>
    %876 = vector.shape_cast %872 : vector<8x128xf32> to vector<1x8x128xf32>
    tpu.vector_store %arg18[%873, %c0_270, %c0_271], %876 {strides = array<i32>} : memref<8x8x128xf32, #tpu.memory_space<vmem>>, vector<1x8x128xf32>,
    %c6_i32_272 = arith.constant 6 : i32
    %877 = arith.index_cast %c6_i32_272 : i32 to index
    %c0_273 = arith.constant 0 : index
    %c0_274 = arith.constant 0 : index
    %878 = vector.load %arg19[%877, %c0_273, %c0_274] : memref<8x8x384xbf16, #tpu.memory_space<vmem>>, vector<1x8x384xbf16>
    %879 = vector.shape_cast %878 : vector<1x8x384xbf16> to vector<8x384xbf16>
    %880 = arith.extf %879 : vector<8x384xbf16> to vector<8x384xf32>
    %881 = arith.truncf %872 : vector<8x128xf32> to vector<8x128xbf16>
    %cst_275 = arith.constant dense<0.000000e+00> : vector<8x384xf32>
    %882 = tpu.matmul %881, %682, %cst_275 {dimension_numbers = #tpu.dot_dimension_numbers<[1], [0], [0], [1], [0, 0, 1, 1], [], []>} : vector<8x128xbf16>, vector<128x384xbf16>, vector<8x384xf32> -> vector<8x384xf32>
    %883 = vector.extract_strided_slice %880 {offsets = [0, 0], sizes = [8, 256], strides = [1, 1]} : vector<8x384xf32> to vector<8x256xf32>
    %884 = vector.extract_strided_slice %882 {offsets = [0, 0], sizes = [8, 256], strides = [1, 1]} : vector<8x384xf32> to vector<8x256xf32>
    %885 = arith.addf %883, %884 : vector<8x256xf32>
    %886 = arith.negf %885 : vector<8x256xf32>
    %887 = math.exp %886 : vector<8x256xf32>
    %cst_276 = arith.constant 1.000000e+00 : f32
    %888 = vector.broadcast %cst_276 : f32 to vector<8x256xf32>
    %889 = arith.addf %888, %887 : vector<8x256xf32>
    %890 = arith.divf %888, %889 : vector<8x256xf32>
    %891 = vector.extract_strided_slice %890 {offsets = [0, 0], sizes = [8, 128], strides = [1, 1]} : vector<8x256xf32> to vector<8x128xf32>
    %892 = vector.extract_strided_slice %890 {offsets = [0, 128], sizes = [8, 128], strides = [1, 1]} : vector<8x256xf32> to vector<8x128xf32>
    %893 = vector.extract_strided_slice %880 {offsets = [0, 256], sizes = [8, 128], strides = [1, 1]} : vector<8x384xf32> to vector<8x128xf32>
    %894 = vector.extract_strided_slice %882 {offsets = [0, 256], sizes = [8, 128], strides = [1, 1]} : vector<8x384xf32> to vector<8x128xf32>
    %895 = vector.broadcast %683 : vector<1x128xf32> to vector<8x128xf32>
    %896 = arith.addf %894, %895 : vector<8x128xf32>
    %897 = arith.mulf %891, %896 : vector<8x128xf32>
    %898 = arith.addf %893, %897 : vector<8x128xf32>
    %899 = math.tanh %898 : vector<8x128xf32>
    %cst_277 = arith.constant 1.000000e+00 : f32
    %900 = vector.broadcast %cst_277 : f32 to vector<8x128xf32>
    %901 = arith.subf %900, %892 : vector<8x128xf32>
    %902 = arith.mulf %901, %899 : vector<8x128xf32>
    %903 = arith.mulf %892, %872 : vector<8x128xf32>
    %904 = arith.addf %902, %903 : vector<8x128xf32>
    %905 = arith.index_cast %c6_i32_272 : i32 to index
    %c0_278 = arith.constant 0 : index
    %c0_279 = arith.constant 0 : index
    %906 = vector.load %arg18[%905, %c0_278, %c0_279] : memref<8x8x128xf32, #tpu.memory_space<vmem>>, vector<1x8x128xf32>
    %907 = vector.shape_cast %906 : vector<1x8x128xf32> to vector<8x128xf32>
    %908 = vector.shape_cast %904 : vector<8x128xf32> to vector<1x8x128xf32>
    tpu.vector_store %arg18[%905, %c0_278, %c0_279], %908 {strides = array<i32>} : memref<8x8x128xf32, #tpu.memory_space<vmem>>, vector<1x8x128xf32>,
    %c7_i32_280 = arith.constant 7 : i32
    %909 = arith.index_cast %c7_i32_280 : i32 to index
    %c0_281 = arith.constant 0 : index
    %c0_282 = arith.constant 0 : index
    %910 = vector.load %arg19[%909, %c0_281, %c0_282] : memref<8x8x384xbf16, #tpu.memory_space<vmem>>, vector<1x8x384xbf16>
    %911 = vector.shape_cast %910 : vector<1x8x384xbf16> to vector<8x384xbf16>
    %912 = arith.extf %911 : vector<8x384xbf16> to vector<8x384xf32>
    %913 = arith.truncf %904 : vector<8x128xf32> to vector<8x128xbf16>
    %cst_283 = arith.constant dense<0.000000e+00> : vector<8x384xf32>
    %914 = tpu.matmul %913, %682, %cst_283 {dimension_numbers = #tpu.dot_dimension_numbers<[1], [0], [0], [1], [0, 0, 1, 1], [], []>} : vector<8x128xbf16>, vector<128x384xbf16>, vector<8x384xf32> -> vector<8x384xf32>
    %915 = vector.extract_strided_slice %912 {offsets = [0, 0], sizes = [8, 256], strides = [1, 1]} : vector<8x384xf32> to vector<8x256xf32>
    %916 = vector.extract_strided_slice %914 {offsets = [0, 0], sizes = [8, 256], strides = [1, 1]} : vector<8x384xf32> to vector<8x256xf32>
    %917 = arith.addf %915, %916 : vector<8x256xf32>
    %918 = arith.negf %917 : vector<8x256xf32>
    %919 = math.exp %918 : vector<8x256xf32>
    %cst_284 = arith.constant 1.000000e+00 : f32
    %920 = vector.broadcast %cst_284 : f32 to vector<8x256xf32>
    %921 = arith.addf %920, %919 : vector<8x256xf32>
    %922 = arith.divf %920, %921 : vector<8x256xf32>
    %923 = vector.extract_strided_slice %922 {offsets = [0, 0], sizes = [8, 128], strides = [1, 1]} : vector<8x256xf32> to vector<8x128xf32>
    %924 = vector.extract_strided_slice %922 {offsets = [0, 128], sizes = [8, 128], strides = [1, 1]} : vector<8x256xf32> to vector<8x128xf32>
    %925 = vector.extract_strided_slice %912 {offsets = [0, 256], sizes = [8, 128], strides = [1, 1]} : vector<8x384xf32> to vector<8x128xf32>
    %926 = vector.extract_strided_slice %914 {offsets = [0, 256], sizes = [8, 128], strides = [1, 1]} : vector<8x384xf32> to vector<8x128xf32>
    %927 = vector.broadcast %683 : vector<1x128xf32> to vector<8x128xf32>
    %928 = arith.addf %926, %927 : vector<8x128xf32>
    %929 = arith.mulf %923, %928 : vector<8x128xf32>
    %930 = arith.addf %925, %929 : vector<8x128xf32>
    %931 = math.tanh %930 : vector<8x128xf32>
    %cst_285 = arith.constant 1.000000e+00 : f32
    %932 = vector.broadcast %cst_285 : f32 to vector<8x128xf32>
    %933 = arith.subf %932, %924 : vector<8x128xf32>
    %934 = arith.mulf %933, %931 : vector<8x128xf32>
    %935 = arith.mulf %924, %904 : vector<8x128xf32>
    %936 = arith.addf %934, %935 : vector<8x128xf32>
    %937 = arith.index_cast %c7_i32_280 : i32 to index
    %c0_286 = arith.constant 0 : index
    %c0_287 = arith.constant 0 : index
    %938 = vector.load %arg18[%937, %c0_286, %c0_287] : memref<8x8x128xf32, #tpu.memory_space<vmem>>, vector<1x8x128xf32>
    %939 = vector.shape_cast %938 : vector<1x8x128xf32> to vector<8x128xf32>
    %940 = vector.shape_cast %936 : vector<8x128xf32> to vector<1x8x128xf32>
    tpu.vector_store %arg18[%937, %c0_286, %c0_287], %940 {strides = array<i32>} : memref<8x8x128xf32, #tpu.memory_space<vmem>>, vector<1x8x128xf32>,
    %c8_i32_288 = arith.constant 8 : i32
    return
  }
  func.func @transform_0(%arg0: i32) -> (i32, i32, i32) {
    %c0_i32 = arith.constant 0 : i32
    %c0_i32_0 = arith.constant 0 : i32
    %c0_i32_1 = arith.constant 0 : i32
    return %c0_i32, %arg0, %c0_i32_0 : i32, i32, i32
  }
  func.func @transform_1(%arg0: i32) -> (i32, i32) {
    %c0_i32 = arith.constant 0 : i32
    %c0_i32_0 = arith.constant 0 : i32
    %c0_i32_1 = arith.constant 0 : i32
    return %c0_i32, %c0_i32_0 : i32, i32
  }
  func.func @transform_2(%arg0: i32) -> (i32, i32) {
    %c0_i32 = arith.constant 0 : i32
    %c0_i32_0 = arith.constant 0 : i32
    %c0_i32_1 = arith.constant 0 : i32
    return %c0_i32, %c0_i32_0 : i32, i32
  }
  func.func @transform_3(%arg0: i32) -> (i32, i32) {
    %c0_i32 = arith.constant 0 : i32
    %c0_i32_0 = arith.constant 0 : i32
    %c0_i32_1 = arith.constant 0 : i32
    return %c0_i32, %c0_i32_0 : i32, i32
  }
  func.func @transform_4(%arg0: i32) -> (i32, i32) {
    %c0_i32 = arith.constant 0 : i32
    %c0_i32_0 = arith.constant 0 : i32
    %c0_i32_1 = arith.constant 0 : i32
    return %c0_i32, %c0_i32_0 : i32, i32
  }
  func.func @transform_5(%arg0: i32) -> (i32, i32) {
    %c0_i32 = arith.constant 0 : i32
    %c0_i32_0 = arith.constant 0 : i32
    %c0_i32_1 = arith.constant 0 : i32
    return %c0_i32, %c0_i32_0 : i32, i32
  }
  func.func @transform_6(%arg0: i32) -> (i32, i32) {
    %c0_i32 = arith.constant 0 : i32
    %c0_i32_0 = arith.constant 0 : i32
    %c0_i32_1 = arith.constant 0 : i32
    return %c0_i32, %c0_i32_0 : i32, i32
  }
  func.func @transform_7(%arg0: i32) -> (i32, i32) {
    %c0_i32 = arith.constant 0 : i32
    %c0_i32_0 = arith.constant 0 : i32
    %c0_i32_1 = arith.constant 0 : i32
    return %c0_i32, %c0_i32_0 : i32, i32
  }
  func.func @transform_8(%arg0: i32) -> (i32, i32) {
    %c0_i32 = arith.constant 0 : i32
    %c0_i32_0 = arith.constant 0 : i32
    %c0_i32_1 = arith.constant 0 : i32
    return %c0_i32, %c0_i32_0 : i32, i32
  }
  func.func @transform_9(%arg0: i32) -> (i32, i32) {
    %c0_i32 = arith.constant 0 : i32
    %c0_i32_0 = arith.constant 0 : i32
    %c0_i32_1 = arith.constant 0 : i32
    return %c0_i32, %c0_i32_0 : i32, i32
  }
  func.func @transform_10(%arg0: i32) -> (i32, i32) {
    %c0_i32 = arith.constant 0 : i32
    %c0_i32_0 = arith.constant 0 : i32
    %c0_i32_1 = arith.constant 0 : i32
    return %c0_i32, %c0_i32_0 : i32, i32
  }
  func.func @transform_11(%arg0: i32) -> (i32, i32) {
    %c0_i32 = arith.constant 0 : i32
    %c0_i32_0 = arith.constant 0 : i32
    %c0_i32_1 = arith.constant 0 : i32
    return %c0_i32, %c0_i32_0 : i32, i32
  }
  func.func @transform_12(%arg0: i32) -> (i32, i32) {
    %c0_i32 = arith.constant 0 : i32
    %c0_i32_0 = arith.constant 0 : i32
    %c0_i32_1 = arith.constant 0 : i32
    return %c0_i32, %c0_i32_0 : i32, i32
  }
  func.func @transform_13(%arg0: i32) -> (i32, i32) {
    %c0_i32 = arith.constant 0 : i32
    %c0_i32_0 = arith.constant 0 : i32
    %c0_i32_1 = arith.constant 0 : i32
    return %c0_i32, %c0_i32_0 : i32, i32
  }
  func.func @transform_14(%arg0: i32) -> (i32, i32) {
    %c0_i32 = arith.constant 0 : i32
    %c0_i32_0 = arith.constant 0 : i32
    %c0_i32_1 = arith.constant 0 : i32
    return %c0_i32, %c0_i32_0 : i32, i32
  }
  func.func @transform_15(%arg0: i32) -> (i32, i32) {
    %c0_i32 = arith.constant 0 : i32
    %c0_i32_0 = arith.constant 0 : i32
    %c0_i32_1 = arith.constant 0 : i32
    return %c0_i32, %c0_i32_0 : i32, i32
  }
  func.func @transform_16(%arg0: i32) -> (i32, i32) {
    %c0_i32 = arith.constant 0 : i32
    %c0_i32_0 = arith.constant 0 : i32
    %c0_i32_1 = arith.constant 0 : i32
    return %c0_i32, %c0_i32_0 : i32, i32
  }
  func.func @transform_17(%arg0: i32) -> (i32, i32, i32) {
    %c0_i32 = arith.constant 0 : i32
    %c0_i32_0 = arith.constant 0 : i32
    %c0_i32_1 = arith.constant 0 : i32
    return %c0_i32, %arg0, %c0_i32_0 : i32, i32, i32
  }
}

</mosaic_0001>

<llo_original>
// kernel: tpu_custom_call.1
$region0: #{tpu_custom_call.1}
  #allocation0 [shape = 'u32[]', space=smem, size = 0x4, offset = 0x4, fixed_abs, tag = 'smem constant byte address 0x4 - core index']
  #allocation1 [shape = 'u32[144,128]{1,0:T(1,128)}', space=vmem, size = 0x12000, scoped, tag = 'internal scratch']
  #allocation2 [shape = 'bf16[8,8,384]{2,1,0:T(8,128)(2,1)}', space=vmem, size = 0xc000, scoped, tag = 'scratch operand']
  #allocation3 [shape = 'f32[8,8,128]{2,1,0:T(8,128)}', space=vmem, size = 0x8000, scoped, tag = 'scratch operand']
  %s0 = inlined_call_operand.hbm [shape: bf16[8,8,64], index: 0, kind: input, shape index: {}]
  %s1 = inlined_call_operand.hbm [shape: bf16[64,384], index: 1, kind: input, shape index: {}]
  %s2 = inlined_call_operand.hbm [shape: bf16[128,384], index: 2, kind: input, shape index: {}]
  %s3 = inlined_call_operand.vmem [shape: f32[1,384], index: 3, kind: input, shape index: {}]
  %s4 = inlined_call_operand.hbm [shape: f32[1,128], index: 4, kind: input, shape index: {}]
  %s5 = inlined_call_operand.hbm [shape: f32[1,128], index: 5, kind: input, shape index: {}]
  %s6 = inlined_call_operand.vmem [shape: f32[1,128], index: 6, kind: input, shape index: {}]
  %s7 = inlined_call_operand.hbm [shape: bf16[128,384], index: 7, kind: input, shape index: {}]
  %s8 = inlined_call_operand.hbm [shape: bf16[128,384], index: 8, kind: input, shape index: {}]
  %s9 = inlined_call_operand.vmem [shape: f32[1,384], index: 9, kind: input, shape index: {}]
  %s10 = inlined_call_operand.vmem [shape: f32[1,128], index: 10, kind: input, shape index: {}]
  %s11 = inlined_call_operand.vmem [shape: f32[1,128], index: 11, kind: input, shape index: {}]
  %s12 = inlined_call_operand.vmem [shape: f32[1,128], index: 12, kind: input, shape index: {}]
  %s13 = inlined_call_operand.hbm [shape: bf16[128,384], index: 13, kind: input, shape index: {}]
  %s14 = inlined_call_operand.hbm [shape: bf16[128,384], index: 14, kind: input, shape index: {}]
  %s15 = inlined_call_operand.vmem [shape: f32[1,384], index: 15, kind: input, shape index: {}]
  %s16 = inlined_call_operand.vmem [shape: f32[1,128], index: 16, kind: input, shape index: {}]
  %s17 = inlined_call_operand.hbm [shape: f32[8,8,128], index: 17, kind: output, shape index: {}]
  %s18 = sld [smem:[#allocation0]]
  $region114: #{tpu_custom_call.1} parent=0
    _
  %s20 = ssub.s32 1, %s18
  %s21 = scalar_select 0, %s20, %s18
  $region1: #{tpu_custom_call.1} parent=0
    #allocation4 [shape = 'u8[16384]{0}', space=vmem, size = 0x4000, scoped, tag = 'input window, operand 0, single buffered']
    #allocation5 [shape = 's32[1]{0}', space=sflag, size = 0x4, scoped, tag = 'scoped memory for tpu_custom_call.1']
    #allocation6 [shape = 's32[1]{0}', space=sflag, size = 0x4, scoped, tag = 'scoped memory for tpu_custom_call.1']
    #allocation7 [shape = 'u8[49152]{0}', space=vmem, size = 0xc000, scoped, tag = 'input window, operand 1, single buffered']
    #allocation8 [shape = 's32[1]{0}', space=sflag, size = 0x4, scoped, tag = 'scoped memory for tpu_custom_call.1']
    #allocation9 [shape = 'u8[98304]{0}', space=vmem, size = 0x18000, scoped, tag = 'input window, operand 2, single buffered']
    #allocation10 [shape = 'u8[512]{0}', space=vmem, size = 0x400, scoped, tag = 'input window, operand 4, single buffered']
    #allocation11 [shape = 's32[1]{0}', space=sflag, size = 0x4, scoped, tag = 'scoped memory for tpu_custom_call.1']
    #allocation12 [shape = 'u8[512]{0}', space=vmem, size = 0x400, scoped, tag = 'input window, operand 5, single buffered']
    #allocation13 [shape = 'u8[98304]{0}', space=vmem, size = 0x18000, scoped, tag = 'input window, operand 7, single buffered']
    #allocation14 [shape = 's32[1]{0}', space=sflag, size = 0x4, scoped, tag = 'scoped memory for tpu_custom_call.1']
    #allocation15 [shape = 'u8[98304]{0}', space=vmem, size = 0x18000, scoped, tag = 'input window, operand 8, single buffered']
    #allocation16 [shape = 'u8[98304]{0}', space=vmem, size = 0x18000, scoped, tag = 'input window, operand 13, single buffered']
    #allocation17 [shape = 's32[1]{0}', space=sflag, size = 0x4, scoped, tag = 'scoped memory for tpu_custom_call.1']
    #allocation18 [shape = 'u8[98304]{0}', space=vmem, size = 0x18000, scoped, tag = 'input window, operand 14, single buffered']
    #allocation19 [shape = 'u8[32768]{0}', space=vmem, size = 0x8000, scoped, tag = 'output window, operand 0, single buffered']
    %22 = vsyncpa [#allocation5], 0
    %23 = vsyncpa [#allocation8], 0
    %24 = vsyncpa [#allocation11], 0
    %25 = vsyncpa [#allocation14], 0
    %26 = vsyncpa [#allocation17], 0
    %27 = vsyncpa [#allocation6], 0
    // Predicated region
    $region2: #{tpu_custom_call.1} parent=1 // pred_check
      _
    $region3: #{tpu_custom_call.1} parent=1 // pred_check_branch
      %29 = sbr.rel (0) target = $region5
    $region4: #{tpu_custom_call.1} parent=1 // pred_region
      %s31 = ssub.s32 512, 512
      %32 = vsyncadd [#allocation5], %s31
      %s33 = sshll.u32 [#allocation4], 4
      %s34 = int_to_ptr.vmem [resolvable:$true] %s33
      %39 = dma.hbm_to_vmem [thread:$0]  %s0, 512, %s34, [#allocation5], 64, 64, 4
    $region5: #{tpu_custom_call.1} parent=1 // pred_fallthru
      _
    // Predicated region
    $region6: #{tpu_custom_call.1} parent=1 // pred_check
      _
    $region7: #{tpu_custom_call.1} parent=1 // pred_check_branch
      %41 = sbr.rel (0) target = $region9
    $region8: #{tpu_custom_call.1} parent=1 // pred_region
      %s43 = ssub.s32 1536, 1536
      %44 = vsyncadd [#allocation8], %s43
      %s45 = sshll.u32 [#allocation7], 4
      %s46 = int_to_ptr.vmem [resolvable:$true] %s45
      %51 = dma.hbm_to_vmem [thread:$0]  %s1, 1536, %s46, [#allocation8], 192, 192, 12
    $region9: #{tpu_custom_call.1} parent=1 // pred_fallthru
      _
    // Predicated region
    $region10: #{tpu_custom_call.1} parent=1 // pred_check
      _
    $region11: #{tpu_custom_call.1} parent=1 // pred_check_branch
      %53 = sbr.rel (0) target = $region13
    $region12: #{tpu_custom_call.1} parent=1 // pred_region
      %s55 = ssub.s32 3072, 3072
      %56 = vsyncadd [#allocation8], %s55
      %s57 = sshll.u32 [#allocation9], 4
      %s58 = int_to_ptr.vmem [resolvable:$true] %s57
      %63 = dma.hbm_to_vmem [thread:$0]  %s2, 3072, %s58, [#allocation8], 192, 192, 12
    $region13: #{tpu_custom_call.1} parent=1 // pred_fallthru
      _
    // Predicated region
    $region14: #{tpu_custom_call.1} parent=1 // pred_check
      _
    $region15: #{tpu_custom_call.1} parent=1 // pred_check_branch
      %65 = sbr.rel (0) target = $region17
    $region16: #{tpu_custom_call.1} parent=1 // pred_region
      _
    $region17: #{tpu_custom_call.1} parent=1 // pred_fallthru
      _
    // Predicated region
    $region18: #{tpu_custom_call.1} parent=1 // pred_check
      _
    $region19: #{tpu_custom_call.1} parent=1 // pred_check_branch
      %67 = sbr.rel (0) target = $region21
    $region20: #{tpu_custom_call.1} parent=1 // pred_region
      %s69 = ssub.s32 16, 16
      %70 = vsyncadd [#allocation11], %s69
      %s72 = sshll.u32 [#allocation10], 4
      %s73 = int_to_ptr.vmem [resolvable:$true] %s72
      %75 = dma.hbm_to_vmem [thread:$0]  %s4, 16, %s73, [#allocation11]
    $region21: #{tpu_custom_call.1} parent=1 // pred_fallthru
      _
    // Predicated region
    $region22: #{tpu_custom_call.1} parent=1 // pred_check
      _
    $region23: #{tpu_custom_call.1} parent=1 // pred_check_branch
      %77 = sbr.rel (0) target = $region25
    $region24: #{tpu_custom_call.1} parent=1 // pred_region
      %s79 = ssub.s32 16, 16
      %80 = vsyncadd [#allocation11], %s79
      %s82 = sshll.u32 [#allocation12], 4
      %s83 = int_to_ptr.vmem [resolvable:$true] %s82
      %85 = dma.hbm_to_vmem [thread:$0]  %s5, 16, %s83, [#allocation11]
    $region25: #{tpu_custom_call.1} parent=1 // pred_fallthru
      _
    // Predicated region
    $region26: #{tpu_custom_call.1} parent=1 // pred_check
      _
    $region27: #{tpu_custom_call.1} parent=1 // pred_check_branch
      %87 = sbr.rel (0) target = $region29
    $region28: #{tpu_custom_call.1} parent=1 // pred_region
      _
    $region29: #{tpu_custom_call.1} parent=1 // pred_fallthru
      _
    // Predicated region
    $region30: #{tpu_custom_call.1} parent=1 // pred_check
      _
    $region31: #{tpu_custom_call.1} parent=1 // pred_check_branch
      %89 = sbr.rel (0) target = $region33
    $region32: #{tpu_custom_call.1} parent=1 // pred_region
      %s91 = ssub.s32 3072, 3072
      %92 = vsyncadd [#allocation14], %s91
      %s93 = sshll.u32 [#allocation13], 4
      %s94 = int_to_ptr.vmem [resolvable:$true] %s93
      %99 = dma.hbm_to_vmem [thread:$0]  %s7, 3072, %s94, [#allocation14], 192, 192, 12
    $region33: #{tpu_custom_call.1} parent=1 // pred_fallthru
      _
    // Predicated region
    $region34: #{tpu_custom_call.1} parent=1 // pred_check
      _
    $region35: #{tpu_custom_call.1} parent=1 // pred_check_branch
      %101 = sbr.rel (0) target = $region37
    $region36: #{tpu_custom_call.1} parent=1 // pred_region
      %s103 = ssub.s32 3072, 3072
      %104 = vsyncadd [#allocation14], %s103
      %s105 = sshll.u32 [#allocation15], 4
      %s106 = int_to_ptr.vmem [resolvable:$true] %s105
      %111 = dma.hbm_to_vmem [thread:$0]  %s8, 3072, %s106, [#allocation14], 192, 192, 12
    $region37: #{tpu_custom_call.1} parent=1 // pred_fallthru
      _
    // Predicated region
    $region38: #{tpu_custom_call.1} parent=1 // pred_check
      _
    $region39: #{tpu_custom_call.1} parent=1 // pred_check_branch
      %113 = sbr.rel (0) target = $region41
    $region40: #{tpu_custom_call.1} parent=1 // pred_region
      _
    $region41: #{tpu_custom_call.1} parent=1 // pred_fallthru
      _
    // Predicated region
    $region42: #{tpu_custom_call.1} parent=1 // pred_check
      _
    $region43: #{tpu_custom_call.1} parent=1 // pred_check_branch
      %115 = sbr.rel (0) target = $region45
    $region44: #{tpu_custom_call.1} parent=1 // pred_region
      _
    $region45: #{tpu_custom_call.1} parent=1 // pred_fallthru
      _
    // Predicated region
    $region46: #{tpu_custom_call.1} parent=1 // pred_check
      _
    $region47: #{tpu_custom_call.1} parent=1 // pred_check_branch
      %117 = sbr.rel (0) target = $region49
    $region48: #{tpu_custom_call.1} parent=1 // pred_region
      _
    $region49: #{tpu_custom_call.1} parent=1 // pred_fallthru
      _
    // Predicated region
    $region50: #{tpu_custom_call.1} parent=1 // pred_check
      _
    $region51: #{tpu_custom_call.1} parent=1 // pred_check_branch
      %119 = sbr.rel (0) target = $region53
    $region52: #{tpu_custom_call.1} parent=1 // pred_region
      _
    $region53: #{tpu_custom_call.1} parent=1 // pred_fallthru
      _
    // Predicated region
    $region54: #{tpu_custom_call.1} parent=1 // pred_check
      _
    $region55: #{tpu_custom_call.1} parent=1 // pred_check_branch
      %121 = sbr.rel (0) target = $region57
    $region56: #{tpu_custom_call.1} parent=1 // pred_region
      %s123 = ssub.s32 3072, 3072
      %124 = vsyncadd [#allocation17], %s123
      %s125 = sshll.u32 [#allocation16], 4
      %s126 = int_to_ptr.vmem [resolvable:$true] %s125
      %131 = dma.hbm_to_vmem [thread:$0]  %s13, 3072, %s126, [#allocation17], 192, 192, 12
    $region57: #{tpu_custom_call.1} parent=1 // pred_fallthru
      _
    // Predicated region
    $region58: #{tpu_custom_call.1} parent=1 // pred_check
      _
    $region59: #{tpu_custom_call.1} parent=1 // pred_check_branch
      %133 = sbr.rel (0) target = $region61
    $region60: #{tpu_custom_call.1} parent=1 // pred_region
      %s135 = ssub.s32 3072, 3072
      %136 = vsyncadd [#allocation17], %s135
      %s137 = sshll.u32 [#allocation18], 4
      %s138 = int_to_ptr.vmem [resolvable:$true] %s137
      %143 = dma.hbm_to_vmem [thread:$0]  %s14, 3072, %s138, [#allocation17], 192, 192, 12
    $region61: #{tpu_custom_call.1} parent=1 // pred_fallthru
      _
    // Predicated region
    $region62: #{tpu_custom_call.1} parent=1 // pred_check
      _
    $region63: #{tpu_custom_call.1} parent=1 // pred_check_branch
      %145 = sbr.rel (0) target = $region65
    $region64: #{tpu_custom_call.1} parent=1 // pred_region
      _
    $region65: #{tpu_custom_call.1} parent=1 // pred_fallthru
      _
    // Predicated region
    $region66: #{tpu_custom_call.1} parent=1 // pred_check
      _
    $region67: #{tpu_custom_call.1} parent=1 // pred_check_branch
      %147 = sbr.rel (0) target = $region69
    $region68: #{tpu_custom_call.1} parent=1 // pred_region
      _
    $region69: #{tpu_custom_call.1} parent=1 // pred_fallthru
      _
    // Predicated region
    $region70: #{tpu_custom_call.1} parent=1 // pred_check
      _
    $region71: #{tpu_custom_call.1} parent=1 // pred_check_branch
      %149 = sbr.rel (0) target = $region73
    $region72: #{tpu_custom_call.1} parent=1 // pred_region
      %150 = dma.done [#allocation5], 512
    $region73: #{tpu_custom_call.1} parent=1 // pred_fallthru
      _
    // Predicated region
    $region74: #{tpu_custom_call.1} parent=1 // pred_check
      _
    $region75: #{tpu_custom_call.1} parent=1 // pred_check_branch
      %152 = sbr.rel (0) target = $region77
    $region76: #{tpu_custom_call.1} parent=1 // pred_region
      %153 = dma.done [#allocation8], 1536
    $region77: #{tpu_custom_call.1} parent=1 // pred_fallthru
      _
    // Predicated region
    $region78: #{tpu_custom_call.1} parent=1 // pred_check
      _
    $region79: #{tpu_custom_call.1} parent=1 // pred_check_branch
      %155 = sbr.rel (0) target = $region81
    $region80: #{tpu_custom_call.1} parent=1 // pred_region
      %156 = dma.done [#allocation8], 3072
    $region81: #{tpu_custom_call.1} parent=1 // pred_fallthru
      _
    // Predicated region
    $region82: #{tpu_custom_call.1} parent=1 // pred_check
      _
    $region83: #{tpu_custom_call.1} parent=1 // pred_check_branch
      %158 = sbr.rel (0) target = $region85
    $region84: #{tpu_custom_call.1} parent=1 // pred_region
      %159 = dma.done [#allocation11], 16
    $region85: #{tpu_custom_call.1} parent=1 // pred_fallthru
      _
    // Predicated region
    $region86: #{tpu_custom_call.1} parent=1 // pred_check
      _
    $region87: #{tpu_custom_call.1} parent=1 // pred_check_branch
      %161 = sbr.rel (0) target = $region89
    $region88: #{tpu_custom_call.1} parent=1 // pred_region
      %162 = dma.done [#allocation11], 16
    $region89: #{tpu_custom_call.1} parent=1 // pred_fallthru
      _
    // Predicated region
    $region90: #{tpu_custom_call.1} parent=1 // pred_check
      _
    $region91: #{tpu_custom_call.1} parent=1 // pred_check_branch
      %164 = sbr.rel (0) target = $region93
    $region92: #{tpu_custom_call.1} parent=1 // pred_region
      %165 = dma.done [#allocation14], 3072
    $region93: #{tpu_custom_call.1} parent=1 // pred_fallthru
      _
    // Predicated region
    $region94: #{tpu_custom_call.1} parent=1 // pred_check
      _
    $region95: #{tpu_custom_call.1} parent=1 // pred_check_branch
      %167 = sbr.rel (0) target = $region97
    $region96: #{tpu_custom_call.1} parent=1 // pred_region
      %168 = dma.done [#allocation14], 3072
    $region97: #{tpu_custom_call.1} parent=1 // pred_fallthru
      _
    // Predicated region
    $region98: #{tpu_custom_call.1} parent=1 // pred_check
      _
    $region99: #{tpu_custom_call.1} parent=1 // pred_check_branch
      %170 = sbr.rel (0) target = $region101
    $region100: #{tpu_custom_call.1} parent=1 // pred_region
      %171 = dma.done [#allocation17], 3072
    $region101: #{tpu_custom_call.1} parent=1 // pred_fallthru
      _
    // Predicated region
    $region102: #{tpu_custom_call.1} parent=1 // pred_check
      _
    $region103: #{tpu_custom_call.1} parent=1 // pred_check_branch
      %173 = sbr.rel (0) target = $region105
    $region104: #{tpu_custom_call.1} parent=1 // pred_region
      %174 = dma.done [#allocation17], 3072
    $region105: #{tpu_custom_call.1} parent=1 // pred_fallthru
      _
    %v176 = vld [vmem:[#allocation4] sm:$0xf]
    %v177 = vld [vmem:[#allocation4 + $0x4] sm:$0xf]
    %v178 = vld [vmem:[#allocation4 + $0x8] sm:$0xf]
    %v179 = vld [vmem:[#allocation4 + $0xc] sm:$0xf]
    %v180 = vld [vmem:[#allocation4 + $0x10] sm:$0xf]
    %v181 = vld [vmem:[#allocation4 + $0x14] sm:$0xf]
    %v182 = vld [vmem:[#allocation4 + $0x18] sm:$0xf]
    %v183 = vld [vmem:[#allocation4 + $0x1c] sm:$0xf]
    %v184 = vld [vmem:[#allocation7] sm:$0xff]
    %v185 = vld [vmem:[#allocation7 + $0x8] sm:$0xf]
    %v186 = vld [vmem:[#allocation7 + $0xc] sm:$0xff]
    %v187 = vld [vmem:[#allocation7 + $0x14] sm:$0xf]
    %v188 = vld [vmem:[#allocation7 + $0x18] sm:$0xff]
    %v189 = vld [vmem:[#allocation7 + $0x20] sm:$0xf]
    %v190 = vld [vmem:[#allocation7 + $0x24] sm:$0xff]
    %v191 = vld [vmem:[#allocation7 + $0x2c] sm:$0xf]
    %v192 = vld [vmem:[#allocation7 + $0x30] sm:$0xff]
    %v193 = vld [vmem:[#allocation7 + $0x38] sm:$0xf]
    %v194 = vld [vmem:[#allocation7 + $0x3c] sm:$0xff]
    %v195 = vld [vmem:[#allocation7 + $0x44] sm:$0xf]
    %v196 = vld [vmem:[#allocation7 + $0x48] sm:$0xff]
    %v197 = vld [vmem:[#allocation7 + $0x50] sm:$0xf]
    %v198 = vld [vmem:[#allocation7 + $0x54] sm:$0xff]
    %v199 = vld [vmem:[#allocation7 + $0x5c] sm:$0xf]
    %v200 = vld [vmem:[%s3] sm:$0x7]
    %v202 = vlaneseq
    %v203 = vshrl.u32 %v202, 7
    %v204 = vsub.s32 0, %v203
    %v205 = vrot.slane %v200, %v204
    %v206 = vlaneseq
    %v207 = vshrl.u32 %v206, 7
    %v208 = vsub.s32 1, %v207
    %v209 = vrot.slane %v200, %v208
    %v210 = vlaneseq
    %v211 = vshrl.u32 %v210, 7
    %v212 = vsub.s32 2, %v211
    %v213 = vrot.slane %v200, %v212
    %v225 = vunpack.c.l.b16 %v176
    %v226 = vunpack.c.l.b16 %v177
    %v227 = vunpack.c.l.b16 %v178
    %v228 = vunpack.c.l.b16 %v179
    %v229 = vunpack.c.l.b16 %v180
    %v230 = vunpack.c.l.b16 %v181
    %v231 = vunpack.c.l.b16 %v182
    %v232 = vunpack.c.l.b16 %v183
    %v233 = vpack.c.b16 %v226, %v225
    %v234 = vpack.c.b16 %v228, %v227
    %v235 = vpack.c.b16 %v230, %v229
    %v236 = vpack.c.b16 %v232, %v231
    %v253 = vunpack.c.l.b16 %v184
    %v254 = vunpack.c.h.b16 %v184
    %v255 = vunpack.c.l.b16 %v185
    %v256 = vunpack.c.l.b16 %v186
    %v257 = vunpack.c.h.b16 %v186
    %v258 = vunpack.c.l.b16 %v187
    %v259 = vunpack.c.l.b16 %v188
    %v260 = vunpack.c.h.b16 %v188
    %v261 = vunpack.c.l.b16 %v189
    %v262 = vunpack.c.l.b16 %v190
    %v263 = vunpack.c.h.b16 %v190
    %v264 = vunpack.c.l.b16 %v191
    %v265 = vunpack.c.l.b16 %v192
    %v266 = vunpack.c.h.b16 %v192
    %v267 = vunpack.c.l.b16 %v193
    %v268 = vunpack.c.l.b16 %v194
    %v269 = vunpack.c.h.b16 %v194
    %v270 = vunpack.c.l.b16 %v195
    %v271 = vunpack.c.l.b16 %v196
    %v272 = vunpack.c.h.b16 %v196
    %v273 = vunpack.c.l.b16 %v197
    %v274 = vunpack.c.l.b16 %v198
    %v275 = vunpack.c.h.b16 %v198
    %v276 = vunpack.c.l.b16 %v199
    %v277 = vpack.c.b16 %v256, %v253
    %v278 = vpack.c.b16 %v257, %v254
    %v279 = vpack.c.b16 %v258, %v255
    %v280 = vpack.c.b16 %v262, %v259
    %v281 = vpack.c.b16 %v263, %v260
    %v282 = vpack.c.b16 %v264, %v261
    %v283 = vpack.c.b16 %v268, %v265
    %v284 = vpack.c.b16 %v269, %v266
    %v285 = vpack.c.b16 %v270, %v267
    %v286 = vpack.c.b16 %v274, %v271
    %v287 = vpack.c.b16 %v275, %v272
    %v288 = vpack.c.b16 %v276, %v273
    %vm301 = vcmask 523264
    %v303 = vsel %vm301, %v233, 0
    %v306 = vsel %vm301, %v234, 0
    %v309 = vsel %vm301, %v235, 0
    %v312 = vsel %vm301, %v236, 0
    %314 = vmatprep.subr.bf16.mxu0 0
    %315 = vmatpush1.bf16.msra.mxu0 0
    %316 = vmatprep.subr.bf16.mxu0 0
    %317 = vmatpush1.bf16.msra.mxu0 0
    %318 = vmatprep.subr.bf16.mxu0 0
    %319 = vmatpush1.bf16.msra.mxu0 0
    %320 = vmatprep.subr.bf16.mxu0 0
    %321 = vmatpush1.bf16.msra.mxu0 0
    %322 = vmatprep.subr.bf16.mxu0 %v287
    %323 = vmatpush1.bf16.msra.mxu0 %v286
    %324 = vmatprep.subr.bf16.mxu0 %v284
    %325 = vmatpush1.bf16.msra.mxu0 %v283
    %326 = vmatprep.subr.bf16.mxu0 %v281
    %327 = vmatpush1.bf16.msra.mxu0 %v280
    %328 = vmatprep.subr.bf16.mxu0 %v278
    %329 = vmatpush1.bf16.msra.mxu0 %v277
    %330 = vmatprep.subr.bf16.mxu0 0
    %331 = vmatpush2.bf16.msra.mxu0 0
    %332 = vmatprep.subr.bf16.mxu0 0
    %333 = vmatpush2.bf16.msra.mxu0 0
    %334 = vmatprep.subr.bf16.mxu0 0
    %335 = vmatpush2.bf16.msra.mxu0 0
    %336 = vmatprep.subr.bf16.mxu0 0
    %337 = vmatpush2.bf16.msra.mxu0 0
    %338 = vmatprep.subr.bf16.mxu0 0
    %339 = vmatpush2.bf16.msra.mxu0 0
    %340 = vmatprep.subr.bf16.mxu0 0
    %341 = vmatpush2.bf16.msra.mxu0 0
    %342 = vmatprep.subr.bf16.mxu0 0
    %343 = vmatpush2.bf16.msra.mxu0 0
    %344 = vmatprep.subr.bf16.mxu0 0
    %345 = vmatpush2.bf16.msra.mxu0 0
    %346 = vmatprep.mubr.bf16.mxu0 0
    %347 = vmatmul.mubr.bf16.gmra.mxu0 %v303
    %v348 = vpop.f32.mrf.mxu0
    %v349 = vadd.f32 %v205, %v348
    %v350 = vpop.f32.mrf.mxu0
    %v351 = vadd.f32 %v209, %v350
    %v352 = vpop.f32.mrf.mxu0
    %v353 = vadd.f32 %v205, %v352
    %v354 = vpop.f32.mrf.mxu0
    %v355 = vadd.f32 %v209, %v354
    %356 = vmatprep.mubr.bf16.mxu0 0
    %357 = vmatmul.mubr.bf16.gmra.mxu0 %v306
    %v358 = vpop.f32.mrf.mxu0
    %v359 = vadd.f32 %v205, %v358
    %v360 = vpop.f32.mrf.mxu0
    %v361 = vadd.f32 %v209, %v360
    %v362 = vpop.f32.mrf.mxu0
    %v363 = vadd.f32 %v205, %v362
    %v364 = vpop.f32.mrf.mxu0
    %v365 = vadd.f32 %v209, %v364
    %366 = vmatprep.mubr.bf16.mxu0 0
    %367 = vmatmul.mubr.bf16.gmra.mxu0 %v309
    %v368 = vpop.f32.mrf.mxu0
    %v369 = vadd.f32 %v205, %v368
    %v370 = vpop.f32.mrf.mxu0
    %v371 = vadd.f32 %v209, %v370
    %v372 = vpop.f32.mrf.mxu0
    %v373 = vadd.f32 %v205, %v372
    %v374 = vpop.f32.mrf.mxu0
    %v375 = vadd.f32 %v209, %v374
    %376 = vmatprep.mubr.bf16.mxu0 0
    %377 = vmatmul.mubr.bf16.gmra.mxu0 %v312
    %v378 = vpop.f32.mrf.mxu0
    %v379 = vadd.f32 %v205, %v378
    %v380 = vpop.f32.mrf.mxu0
    %v381 = vadd.f32 %v209, %v380
    %v382 = vpop.f32.mrf.mxu0
    %v383 = vadd.f32 %v205, %v382
    %v384 = vpop.f32.mrf.mxu0
    %v385 = vadd.f32 %v209, %v384
    %386 = vdwg.mxu0
    %387 = vmatprep.subr.bf16.mxu0 0
    %388 = vmatpush1.bf16.msra.mxu0 0
    %389 = vmatprep.subr.bf16.mxu0 0
    %390 = vmatpush1.bf16.msra.mxu0 0
    %391 = vmatprep.subr.bf16.mxu0 0
    %392 = vmatpush1.bf16.msra.mxu0 0
    %393 = vmatprep.subr.bf16.mxu0 0
    %394 = vmatpush1.bf16.msra.mxu0 0
    %395 = vmatprep.subr.bf16.mxu0 0
    %396 = vmatpush1.bf16.msra.mxu0 %v288
    %397 = vmatprep.subr.bf16.mxu0 0
    %398 = vmatpush1.bf16.msra.mxu0 %v285
    %399 = vmatprep.subr.bf16.mxu0 0
    %400 = vmatpush1.bf16.msra.mxu0 %v282
    %401 = vmatprep.subr.bf16.mxu0 0
    %402 = vmatpush1.bf16.msra.mxu0 %v279
    %403 = vmatprep.subr.bf16.mxu0 0
    %404 = vmatpush2.bf16.msra.mxu0 0
    %405 = vmatprep.subr.bf16.mxu0 0
    %406 = vmatpush2.bf16.msra.mxu0 0
    %407 = vmatprep.subr.bf16.mxu0 0
    %408 = vmatpush2.bf16.msra.mxu0 0
    %409 = vmatprep.subr.bf16.mxu0 0
    %410 = vmatpush2.bf16.msra.mxu0 0
    %411 = vmatprep.subr.bf16.mxu0 0
    %412 = vmatpush2.bf16.msra.mxu0 0
    %413 = vmatprep.subr.bf16.mxu0 0
    %414 = vmatpush2.bf16.msra.mxu0 0
    %415 = vmatprep.subr.bf16.mxu0 0
    %416 = vmatpush2.bf16.msra.mxu0 0
    %417 = vmatprep.subr.bf16.mxu0 0
    %418 = vmatpush2.bf16.msra.mxu0 0
    %419 = vmatprep.mubr.bf16.mxu0 0
    %420 = vmatmul.mubr.bf16.gmra.mxu0 %v303
    %v421 = vpop.f32.mrf.mxu0
    %v422 = vadd.f32 %v213, %v421
    %v423 = vpop.f32.mrf.mxu0
    %v424 = vpop.f32.mrf.mxu0
    %v425 = vadd.f32 %v213, %v424
    %v426 = vpop.f32.mrf.mxu0
    %427 = vmatprep.mubr.bf16.mxu0 0
    %428 = vmatmul.mubr.bf16.gmra.mxu0 %v306
    %v429 = vpop.f32.mrf.mxu0
    %v430 = vadd.f32 %v213, %v429
    %v431 = vpop.f32.mrf.mxu0
    %v432 = vpop.f32.mrf.mxu0
    %v433 = vadd.f32 %v213, %v432
    %v434 = vpop.f32.mrf.mxu0
    %435 = vmatprep.mubr.bf16.mxu0 0
    %436 = vmatmul.mubr.bf16.gmra.mxu0 %v309
    %v437 = vpop.f32.mrf.mxu0
    %v438 = vadd.f32 %v213, %v437
    %v439 = vpop.f32.mrf.mxu0
    %v440 = vpop.f32.mrf.mxu0
    %v441 = vadd.f32 %v213, %v440
    %v442 = vpop.f32.mrf.mxu0
    %443 = vmatprep.mubr.bf16.mxu0 0
    %444 = vmatmul.mubr.bf16.gmra.mxu0 %v312
    %v445 = vpop.f32.mrf.mxu0
    %v446 = vadd.f32 %v213, %v445
    %v447 = vpop.f32.mrf.mxu0
    %v448 = vpop.f32.mrf.mxu0
    %v449 = vadd.f32 %v213, %v448
    %v450 = vpop.f32.mrf.mxu0
    %451 = vdwg.mxu0
    %v452 = vpack.c.bf16 %v349, %v349
    %v453 = vpack.c.bf16 %v351, %v351
    %v454 = vpack.c.bf16 %v422, %v422
    %v455 = vpack.c.bf16 %v353, %v353
    %v456 = vpack.c.bf16 %v355, %v355
    %v457 = vpack.c.bf16 %v425, %v425
    %v458 = vpack.c.bf16 %v359, %v359
    %v459 = vpack.c.bf16 %v361, %v361
    %v460 = vpack.c.bf16 %v430, %v430
    %v461 = vpack.c.bf16 %v363, %v363
    %v462 = vpack.c.bf16 %v365, %v365
    %v463 = vpack.c.bf16 %v433, %v433
    %v464 = vpack.c.bf16 %v369, %v369
    %v465 = vpack.c.bf16 %v371, %v371
    %v466 = vpack.c.bf16 %v438, %v438
    %v467 = vpack.c.bf16 %v373, %v373
    %v468 = vpack.c.bf16 %v375, %v375
    %v469 = vpack.c.bf16 %v441, %v441
    %v470 = vpack.c.bf16 %v379, %v379
    %v471 = vpack.c.bf16 %v381, %v381
    %v472 = vpack.c.bf16 %v446, %v446
    %v473 = vpack.c.bf16 %v383, %v383
    %v474 = vpack.c.bf16 %v385, %v385
    %v475 = vpack.c.bf16 %v449, %v449
    %v500 = vunpack.c.l.b16 %v452
    %v501 = vunpack.c.l.b16 %v453
    %v502 = vunpack.c.l.b16 %v454
    %v503 = vunpack.c.l.b16 %v455
    %v504 = vunpack.c.l.b16 %v456
    %v505 = vunpack.c.l.b16 %v457
    %v506 = vunpack.c.l.b16 %v458
    %v507 = vunpack.c.l.b16 %v459
    %v508 = vunpack.c.l.b16 %v460
    %v509 = vunpack.c.l.b16 %v461
    %v510 = vunpack.c.l.b16 %v462
    %v511 = vunpack.c.l.b16 %v463
    %v512 = vunpack.c.l.b16 %v464
    %v513 = vunpack.c.l.b16 %v465
    %v514 = vunpack.c.l.b16 %v466
    %v515 = vunpack.c.l.b16 %v467
    %v516 = vunpack.c.l.b16 %v468
    %v517 = vunpack.c.l.b16 %v469
    %v518 = vunpack.c.l.b16 %v470
    %v519 = vunpack.c.l.b16 %v471
    %v520 = vunpack.c.l.b16 %v472
    %v521 = vunpack.c.l.b16 %v473
    %v522 = vunpack.c.l.b16 %v474
    %v523 = vunpack.c.l.b16 %v475
    %v524 = vpack.c.b16 %v501, %v500
    %v525 = vpack.c.b16 %v502, %v502
    %v526 = vpack.c.b16 %v504, %v503
    %v527 = vpack.c.b16 %v505, %v505
    %v528 = vpack.c.b16 %v507, %v506
    %v529 = vpack.c.b16 %v508, %v508
    %v530 = vpack.c.b16 %v510, %v509
    %v531 = vpack.c.b16 %v511, %v511
    %v532 = vpack.c.b16 %v513, %v512
    %v533 = vpack.c.b16 %v514, %v514
    %v534 = vpack.c.b16 %v516, %v515
    %v535 = vpack.c.b16 %v517, %v517
    %v536 = vpack.c.b16 %v519, %v518
    %v537 = vpack.c.b16 %v520, %v520
    %v538 = vpack.c.b16 %v522, %v521
    %v539 = vpack.c.b16 %v523, %v523
    %556 = vst [vmem:[#allocation2] sm:$0xff] %v524
    %557 = vst [vmem:[#allocation2 + $0x8] sm:$0xf] %v525
    %558 = vst [vmem:[#allocation2 + $0xc] sm:$0xff] %v526
    %559 = vst [vmem:[#allocation2 + $0x14] sm:$0xf] %v527
    %560 = vst [vmem:[#allocation2 + $0x18] sm:$0xff] %v528
    %561 = vst [vmem:[#allocation2 + $0x20] sm:$0xf] %v529
    %562 = vst [vmem:[#allocation2 + $0x24] sm:$0xff] %v530
    %563 = vst [vmem:[#allocation2 + $0x2c] sm:$0xf] %v531
    %564 = vst [vmem:[#allocation2 + $0x30] sm:$0xff] %v532
    %565 = vst [vmem:[#allocation2 + $0x38] sm:$0xf] %v533
    %566 = vst [vmem:[#allocation2 + $0x3c] sm:$0xff] %v534
    %567 = vst [vmem:[#allocation2 + $0x44] sm:$0xf] %v535
    %568 = vst [vmem:[#allocation2 + $0x48] sm:$0xff] %v536
    %569 = vst [vmem:[#allocation2 + $0x50] sm:$0xf] %v537
    %570 = vst [vmem:[#allocation2 + $0x54] sm:$0xff] %v538
    %571 = vst [vmem:[#allocation2 + $0x5c] sm:$0xf] %v539
    %v572 = vld [vmem:[#allocation9] sm:$0xff]
    %v573 = vld [vmem:[#allocation9 + $0x8] sm:$0xf]
    %v574 = vld [vmem:[#allocation9 + $0xc] sm:$0xff]
    %v575 = vld [vmem:[#allocation9 + $0x14] sm:$0xf]
    %v576 = vld [vmem:[#allocation9 + $0x18] sm:$0xff]
    %v577 = vld [vmem:[#allocation9 + $0x20] sm:$0xf]
    %v578 = vld [vmem:[#allocation9 + $0x24] sm:$0xff]
    %v579 = vld [vmem:[#allocation9 + $0x2c] sm:$0xf]
    %v580 = vld [vmem:[#allocation9 + $0x30] sm:$0xff]
    %v581 = vld [vmem:[#allocation9 + $0x38] sm:$0xf]
    %v582 = vld [vmem:[#allocation9 + $0x3c] sm:$0xff]
    %v583 = vld [vmem:[#allocation9 + $0x44] sm:$0xf]
    %v584 = vld [vmem:[#allocation9 + $0x48] sm:$0xff]
    %v585 = vld [vmem:[#allocation9 + $0x50] sm:$0xf]
    %v586 = vld [vmem:[#allocation9 + $0x54] sm:$0xff]
    %v587 = vld [vmem:[#allocation9 + $0x5c] sm:$0xf]
    %v588 = vld [vmem:[#allocation9 + $0x60] sm:$0xff]
    %v589 = vld [vmem:[#allocation9 + $0x68] sm:$0xf]
    %v590 = vld [vmem:[#allocation9 + $0x6c] sm:$0xff]
    %v591 = vld [vmem:[#allocation9 + $0x74] sm:$0xf]
    %v592 = vld [vmem:[#allocation9 + $0x78] sm:$0xff]
    %v593 = vld [vmem:[#allocation9 + $0x80] sm:$0xf]
    %v594 = vld [vmem:[#allocation9 + $0x84] sm:$0xff]
    %v595 = vld [vmem:[#allocation9 + $0x8c] sm:$0xf]
    %v596 = vld [vmem:[#allocation9 + $0x90] sm:$0xff]
    %v597 = vld [vmem:[#allocation9 + $0x98] sm:$0xf]
    %v598 = vld [vmem:[#allocation9 + $0x9c] sm:$0xff]
    %v599 = vld [vmem:[#allocation9 + $0xa4] sm:$0xf]
    %v600 = vld [vmem:[#allocation9 + $0xa8] sm:$0xff]
    %v601 = vld [vmem:[#allocation9 + $0xb0] sm:$0xf]
    %v602 = vld [vmem:[#allocation9 + $0xb4] sm:$0xff]
    %v603 = vld [vmem:[#allocation9 + $0xbc] sm:$0xf]
    %v604 = vld [vmem:[#allocation10] sm:$0x1]
    %v605 = vld [vmem:[#allocation2] sm:$0xff]
    %v606 = vld [vmem:[#allocation2 + $0x8] sm:$0xf]
    %v607 = vunpack.c.l.bf16 %v605
    %v608 = vunpack.c.h.bf16 %v605
    %v609 = vunpack.c.l.bf16 %v606
    %v642 = vunpack.c.l.b16 %v572
    %v643 = vunpack.c.h.b16 %v572
    %v644 = vunpack.c.l.b16 %v573
    %v645 = vunpack.c.l.b16 %v574
    %v646 = vunpack.c.h.b16 %v574
    %v647 = vunpack.c.l.b16 %v575
    %v648 = vunpack.c.l.b16 %v576
    %v649 = vunpack.c.h.b16 %v576
    %v650 = vunpack.c.l.b16 %v577
    %v651 = vunpack.c.l.b16 %v578
    %v652 = vunpack.c.h.b16 %v578
    %v653 = vunpack.c.l.b16 %v579
    %v654 = vunpack.c.l.b16 %v580
    %v655 = vunpack.c.h.b16 %v580
    %v656 = vunpack.c.l.b16 %v581
    %v657 = vunpack.c.l.b16 %v582
    %v658 = vunpack.c.h.b16 %v582
    %v659 = vunpack.c.l.b16 %v583
    %v660 = vunpack.c.l.b16 %v584
    %v661 = vunpack.c.h.b16 %v584
    %v662 = vunpack.c.l.b16 %v585
    %v663 = vunpack.c.l.b16 %v586
    %v664 = vunpack.c.h.b16 %v586
    %v665 = vunpack.c.l.b16 %v587
    %v666 = vunpack.c.l.b16 %v588
    %v667 = vunpack.c.h.b16 %v588
    %v668 = vunpack.c.l.b16 %v589
    %v669 = vunpack.c.l.b16 %v590
    %v670 = vunpack.c.h.b16 %v590
    %v671 = vunpack.c.l.b16 %v591
    %v672 = vunpack.c.l.b16 %v592
    %v673 = vunpack.c.h.b16 %v592
    %v674 = vunpack.c.l.b16 %v593
    %v675 = vunpack.c.l.b16 %v594
    %v676 = vunpack.c.h.b16 %v594
    %v677 = vunpack.c.l.b16 %v595
    %v678 = vunpack.c.l.b16 %v596
    %v679 = vunpack.c.h.b16 %v596
    %v680 = vunpack.c.l.b16 %v597
    %v681 = vunpack.c.l.b16 %v598
    %v682 = vunpack.c.h.b16 %v598
    %v683 = vunpack.c.l.b16 %v599
    %v684 = vunpack.c.l.b16 %v600
    %v685 = vunpack.c.h.b16 %v600
    %v686 = vunpack.c.l.b16 %v601
    %v687 = vunpack.c.l.b16 %v602
    %v688 = vunpack.c.h.b16 %v602
    %v689 = vunpack.c.l.b16 %v603
    %v690 = vpack.c.b16 %v645, %v642
    %v691 = vpack.c.b16 %v646, %v643
    %v692 = vpack.c.b16 %v647, %v644
    %v693 = vpack.c.b16 %v651, %v648
    %v694 = vpack.c.b16 %v652, %v649
    %v695 = vpack.c.b16 %v653, %v650
    %v696 = vpack.c.b16 %v657, %v654
    %v697 = vpack.c.b16 %v658, %v655
    %v698 = vpack.c.b16 %v659, %v656
    %v699 = vpack.c.b16 %v663, %v660
    %v700 = vpack.c.b16 %v664, %v661
    %v701 = vpack.c.b16 %v665, %v662
    %v702 = vpack.c.b16 %v669, %v666
    %v703 = vpack.c.b16 %v670, %v667
    %v704 = vpack.c.b16 %v671, %v668
    %v705 = vpack.c.b16 %v675, %v672
    %v706 = vpack.c.b16 %v676, %v673
    %v707 = vpack.c.b16 %v677, %v674
    %v708 = vpack.c.b16 %v681, %v678
    %v709 = vpack.c.b16 %v682, %v679
    %v710 = vpack.c.b16 %v683, %v680
    %v711 = vpack.c.b16 %v687, %v684
    %v712 = vpack.c.b16 %v688, %v685
    %v713 = vpack.c.b16 %v689, %v686
    %738 = vmatprep.subr.bf16.mxu0 %v712
    %739 = vmatpush1.bf16.msra.mxu0 %v711
    %740 = vmatprep.subr.bf16.mxu0 %v709
    %741 = vmatpush1.bf16.msra.mxu0 %v708
    %742 = vmatprep.subr.bf16.mxu0 %v706
    %743 = vmatpush1.bf16.msra.mxu0 %v705
    %744 = vmatprep.subr.bf16.mxu0 %v703
    %745 = vmatpush1.bf16.msra.mxu0 %v702
    %746 = vmatprep.subr.bf16.mxu0 %v700
    %747 = vmatpush1.bf16.msra.mxu0 %v699
    %748 = vmatprep.subr.bf16.mxu0 %v697
    %749 = vmatpush1.bf16.msra.mxu0 %v696
    %750 = vmatprep.subr.bf16.mxu0 %v694
    %751 = vmatpush1.bf16.msra.mxu0 %v693
    %752 = vmatprep.subr.bf16.mxu0 %v691
    %753 = vmatpush1.bf16.msra.mxu0 %v690
    %754 = vmatprep.subr.bf16.mxu0 0
    %755 = vmatpush2.bf16.msra.mxu0 0
    %756 = vmatprep.subr.bf16.mxu0 0
    %757 = vmatpush2.bf16.msra.mxu0 0
    %758 = vmatprep.subr.bf16.mxu0 0
    %759 = vmatpush2.bf16.msra.mxu0 0
    %760 = vmatprep.subr.bf16.mxu0 0
    %761 = vmatpush2.bf16.msra.mxu0 0
    %762 = vmatprep.subr.bf16.mxu0 0
    %763 = vmatpush2.bf16.msra.mxu0 0
    %764 = vmatprep.subr.bf16.mxu0 0
    %765 = vmatpush2.bf16.msra.mxu0 0
    %766 = vmatprep.subr.bf16.mxu0 0
    %767 = vmatpush2.bf16.msra.mxu0 0
    %768 = vmatprep.subr.bf16.mxu0 0
    %769 = vmatpush2.bf16.msra.mxu0 0
    %770 = vmatprep.mubr.bf16.mxu0 0
    %771 = vmatmul.mubr.bf16.gmra.mxu0 0
    %v772 = vpop.f32.mrf.mxu0
    %v773 = vadd.f32 0.0, %v772
    %v774 = vpop.f32.mrf.mxu0
    %v775 = vadd.f32 0.0, %v774
    %v776 = vpop.f32.mrf.mxu0
    %v777 = vpop.f32.mrf.mxu0
    %778 = vdwg.mxu0
    %779 = vmatprep.subr.bf16.mxu0 0
    %780 = vmatpush1.bf16.msra.mxu0 %v713
    %781 = vmatprep.subr.bf16.mxu0 0
    %782 = vmatpush1.bf16.msra.mxu0 %v710
    %783 = vmatprep.subr.bf16.mxu0 0
    %784 = vmatpush1.bf16.msra.mxu0 %v707
    %785 = vmatprep.subr.bf16.mxu0 0
    %786 = vmatpush1.bf16.msra.mxu0 %v704
    %787 = vmatprep.subr.bf16.mxu0 0
    %788 = vmatpush1.bf16.msra.mxu0 %v701
    %789 = vmatprep.subr.bf16.mxu0 0
    %790 = vmatpush1.bf16.msra.mxu0 %v698
    %791 = vmatprep.subr.bf16.mxu0 0
    %792 = vmatpush1.bf16.msra.mxu0 %v695
    %793 = vmatprep.subr.bf16.mxu0 0
    %794 = vmatpush1.bf16.msra.mxu0 %v692
    %795 = vmatprep.subr.bf16.mxu0 0
    %796 = vmatpush2.bf16.msra.mxu0 0
    %797 = vmatprep.subr.bf16.mxu0 0
    %798 = vmatpush2.bf16.msra.mxu0 0
    %799 = vmatprep.subr.bf16.mxu0 0
    %800 = vmatpush2.bf16.msra.mxu0 0
    %801 = vmatprep.subr.bf16.mxu0 0
    %802 = vmatpush2.bf16.msra.mxu0 0
    %803 = vmatprep.subr.bf16.mxu0 0
    %804 = vmatpush2.bf16.msra.mxu0 0
    %805 = vmatprep.subr.bf16.mxu0 0
    %806 = vmatpush2.bf16.msra.mxu0 0
    %807 = vmatprep.subr.bf16.mxu0 0
    %808 = vmatpush2.bf16.msra.mxu0 0
    %809 = vmatprep.subr.bf16.mxu0 0
    %810 = vmatpush2.bf16.msra.mxu0 0
    %811 = vmatprep.mubr.bf16.mxu0 0
    %812 = vmatmul.mubr.bf16.gmra.mxu0 0
    %v813 = vpop.f32.mrf.mxu0
    %v814 = vadd.f32 0.0, %v813
    %v815 = vpop.f32.mrf.mxu0
    %v816 = vpop.f32.mrf.mxu0
    %v817 = vpop.f32.mrf.mxu0
    %818 = vdwg.mxu0
    %v819 = vadd.f32 %v607, %v773
    %v820 = vadd.f32 %v608, %v775
    %v821 = vxor.u32 %v819, 2147483648
    %v822 = vxor.u32 %v820, 2147483648
    %v823 = vmul.f32 %v821, 1.442695
    %v824 = vpow.pop %v823
    %v825 = vmul.f32 %v822, 1.442695
    %v826 = vpow.pop %v825
    %v827 = vadd.f32 %v824, 1.0
    %v828 = vadd.f32 %v826, 1.0
    %v829 = vrcp.pop %v827
    %v830 = vmul.f32 1.0, %v829
    %v831 = vrcp.pop %v828
    %v832 = vmul.f32 1.0, %v831
    %v834 = vlaneseq
    %v835 = vshrl.u32 %v834, 7
    %v836 = vsub.s32 0, %v835
    %v837 = vrot.slane %v604, %v836
    %v839 = vadd.f32 %v814, %v837
    %v840 = vmul.f32 %v830, %v839
    %v841 = vadd.f32 %v609, %v840
    %v842 = vtanh.pop %v841
    %v843 = vsub.f32 1.0, %v832
    %v844 = vmul.f32 %v843, %v842
    %v845 = vmul.f32 %v832, 0.0
    %v846 = vadd.f32 %v844, %v845
    %847 = vst.msk [vmem:[#allocation3] sm:$0xff] %vm301, %v846
    %s848 = scalar_lea.vmem [#allocation3], 56
    %vm849 = vcmask 1048064
    %850 = vst.msk [vmem:[%s848] sm:$0xff] %vm849, %v846
    %s851 = scalar_lea.vmem [#allocation2], 12
    %v852 = vld [vmem:[%s851] sm:$0xff]
    %v853 = vld [vmem:[%s851 + $0x8] sm:$0xf]
    %v854 = vunpack.c.l.bf16 %v852
    %v855 = vunpack.c.h.bf16 %v852
    %v856 = vunpack.c.l.bf16 %v853
    %v857 = vpack.c.bf16 %v846, %v846
    %858 = vmatprep.subr.bf16.mxu0 %v712
    %859 = vmatpush1.bf16.msra.mxu0 %v711
    %860 = vmatprep.subr.bf16.mxu0 %v709
    %861 = vmatpush1.bf16.msra.mxu0 %v708
    %862 = vmatprep.subr.bf16.mxu0 %v706
    %863 = vmatpush1.bf16.msra.mxu0 %v705
    %864 = vmatprep.subr.bf16.mxu0 %v703
    %865 = vmatpush1.bf16.msra.mxu0 %v702
    %866 = vmatprep.subr.bf16.mxu0 %v700
    %867 = vmatpush1.bf16.msra.mxu0 %v699
    %868 = vmatprep.subr.bf16.mxu0 %v697
    %869 = vmatpush1.bf16.msra.mxu0 %v696
    %870 = vmatprep.subr.bf16.mxu0 %v694
    %871 = vmatpush1.bf16.msra.mxu0 %v693
    %872 = vmatprep.subr.bf16.mxu0 %v691
    %873 = vmatpush1.bf16.msra.mxu0 %v690
    %874 = vmatprep.subr.bf16.mxu0 0
    %875 = vmatpush2.bf16.msra.mxu0 0
    %876 = vmatprep.subr.bf16.mxu0 0
    %877 = vmatpush2.bf16.msra.mxu0 0
    %878 = vmatprep.subr.bf16.mxu0 0
    %879 = vmatpush2.bf16.msra.mxu0 0
    %880 = vmatprep.subr.bf16.mxu0 0
    %881 = vmatpush2.bf16.msra.mxu0 0
    %882 = vmatprep.subr.bf16.mxu0 0
    %883 = vmatpush2.bf16.msra.mxu0 0
    %884 = vmatprep.subr.bf16.mxu0 0
    %885 = vmatpush2.bf16.msra.mxu0 0
    %886 = vmatprep.subr.bf16.mxu0 0
    %887 = vmatpush2.bf16.msra.mxu0 0
    %888 = vmatprep.subr.bf16.mxu0 0
    %889 = vmatpush2.bf16.msra.mxu0 0
    %890 = vmatprep.mubr.bf16.mxu0 0
    %891 = vmatmul.mubr.bf16.gmra.mxu0 %v857
    %v892 = vpop.f32.mrf.mxu0
    %v893 = vadd.f32 0.0, %v892
    %v894 = vpop.f32.mrf.mxu0
    %v895 = vadd.f32 0.0, %v894
    %v896 = vpop.f32.mrf.mxu0
    %v897 = vpop.f32.mrf.mxu0
    %898 = vdwg.mxu0
    %899 = vmatprep.subr.bf16.mxu0 0
    %900 = vmatpush1.bf16.msra.mxu0 %v713
    %901 = vmatprep.subr.bf16.mxu0 0
    %902 = vmatpush1.bf16.msra.mxu0 %v710
    %903 = vmatprep.subr.bf16.mxu0 0
    %904 = vmatpush1.bf16.msra.mxu0 %v707
    %905 = vmatprep.subr.bf16.mxu0 0
    %906 = vmatpush1.bf16.msra.mxu0 %v704
    %907 = vmatprep.subr.bf16.mxu0 0
    %908 = vmatpush1.bf16.msra.mxu0 %v701
    %909 = vmatprep.subr.bf16.mxu0 0
    %910 = vmatpush1.bf16.msra.mxu0 %v698
    %911 = vmatprep.subr.bf16.mxu0 0
    %912 = vmatpush1.bf16.msra.mxu0 %v695
    %913 = vmatprep.subr.bf16.mxu0 0
    %914 = vmatpush1.bf16.msra.mxu0 %v692
    %915 = vmatprep.subr.bf16.mxu0 0
    %916 = vmatpush2.bf16.msra.mxu0 0
    %917 = vmatprep.subr.bf16.mxu0 0
    %918 = vmatpush2.bf16.msra.mxu0 0
    %919 = vmatprep.subr.bf16.mxu0 0
    %920 = vmatpush2.bf16.msra.mxu0 0
    %921 = vmatprep.subr.bf16.mxu0 0
    %922 = vmatpush2.bf16.msra.mxu0 0
    %923 = vmatprep.subr.bf16.mxu0 0
    %924 = vmatpush2.bf16.msra.mxu0 0
    %925 = vmatprep.subr.bf16.mxu0 0
    %926 = vmatpush2.bf16.msra.mxu0 0
    %927 = vmatprep.subr.bf16.mxu0 0
    %928 = vmatpush2.bf16.msra.mxu0 0
    %929 = vmatprep.subr.bf16.mxu0 0
    %930 = vmatpush2.bf16.msra.mxu0 0
    %931 = vmatprep.mubr.bf16.mxu0 0
    %932 = vmatmul.mubr.bf16.gmra.mxu0 %v857
    %v933 = vpop.f32.mrf.mxu0
    %v934 = vadd.f32 0.0, %v933
    %v935 = vpop.f32.mrf.mxu0
    %v936 = vpop.f32.mrf.mxu0
    %v937 = vpop.f32.mrf.mxu0
    %938 = vdwg.mxu0
    %v939 = vadd.f32 %v854, %v893
    %v940 = vadd.f32 %v855, %v895
    %v941 = vxor.u32 %v939, 2147483648
    %v942 = vxor.u32 %v940, 2147483648
    %v943 = vmul.f32 %v941, 1.442695
    %v944 = vpow.pop %v943
    %v945 = vmul.f32 %v942, 1.442695
    %v946 = vpow.pop %v945
    %v947 = vadd.f32 %v944, 1.0
    %v948 = vadd.f32 %v946, 1.0
    %v949 = vrcp.pop %v947
    %v950 = vmul.f32 1.0, %v949
    %v951 = vrcp.pop %v948
    %v952 = vmul.f32 1.0, %v951
    %v953 = vadd.f32 %v934, %v837
    %v954 = vmul.f32 %v950, %v953
    %v955 = vadd.f32 %v856, %v954
    %v956 = vtanh.pop %v955
    %v957 = vsub.f32 1.0, %v952
    %v958 = vmul.f32 %v957, %v956
    %v959 = vmul.f32 %v952, %v846
    %v960 = vadd.f32 %v958, %v959
    %s961 = scalar_lea.vmem [#allocation3], 8
    %962 = vst.msk [vmem:[%s961] sm:$0xff] %vm301, %v960
    %s963 = scalar_lea.vmem [#allocation3], 48
    %964 = vst.msk [vmem:[%s963] sm:$0xff] %vm849, %v960
    %s965 = scalar_lea.vmem [#allocation2], 24
    %v966 = vld [vmem:[%s965] sm:$0xff]
    %v967 = vld [vmem:[%s965 + $0x8] sm:$0xf]
    %v968 = vunpack.c.l.bf16 %v966
    %v969 = vunpack.c.h.bf16 %v966
    %v970 = vunpack.c.l.bf16 %v967
    %v971 = vpack.c.bf16 %v960, %v960
    %972 = vmatprep.subr.bf16.mxu0 %v712
    %973 = vmatpush1.bf16.msra.mxu0 %v711
    %974 = vmatprep.subr.bf16.mxu0 %v709
    %975 = vmatpush1.bf16.msra.mxu0 %v708
    %976 = vmatprep.subr.bf16.mxu0 %v706
    %977 = vmatpush1.bf16.msra.mxu0 %v705
    %978 = vmatprep.subr.bf16.mxu0 %v703
    %979 = vmatpush1.bf16.msra.mxu0 %v702
    %980 = vmatprep.subr.bf16.mxu0 %v700
    %981 = vmatpush1.bf16.msra.mxu0 %v699
    %982 = vmatprep.subr.bf16.mxu0 %v697
    %983 = vmatpush1.bf16.msra.mxu0 %v696
    %984 = vmatprep.subr.bf16.mxu0 %v694
    %985 = vmatpush1.bf16.msra.mxu0 %v693
    %986 = vmatprep.subr.bf16.mxu0 %v691
    %987 = vmatpush1.bf16.msra.mxu0 %v690
    %988 = vmatprep.subr.bf16.mxu0 0
    %989 = vmatpush2.bf16.msra.mxu0 0
    %990 = vmatprep.subr.bf16.mxu0 0
    %991 = vmatpush2.bf16.msra.mxu0 0
    %992 = vmatprep.subr.bf16.mxu0 0
    %993 = vmatpush2.bf16.msra.mxu0 0
    %994 = vmatprep.subr.bf16.mxu0 0
    %995 = vmatpush2.bf16.msra.mxu0 0
    %996 = vmatprep.subr.bf16.mxu0 0
    %997 = vmatpush2.bf16.msra.mxu0 0
    %998 = vmatprep.subr.bf16.mxu0 0
    %999 = vmatpush2.bf16.msra.mxu0 0
    %1000 = vmatprep.subr.bf16.mxu0 0
    %1001 = vmatpush2.bf16.msra.mxu0 0
    %1002 = vmatprep.subr.bf16.mxu0 0
    %1003 = vmatpush2.bf16.msra.mxu0 0
    %1004 = vmatprep.mubr.bf16.mxu0 0
    %1005 = vmatmul.mubr.bf16.gmra.mxu0 %v971
    %v1006 = vpop.f32.mrf.mxu0
    %v1007 = vadd.f32 0.0, %v1006
    %v1008 = vpop.f32.mrf.mxu0
    %v1009 = vadd.f32 0.0, %v1008
    %v1010 = vpop.f32.mrf.mxu0
    %v1011 = vpop.f32.mrf.mxu0
    %1012 = vdwg.mxu0
    %1013 = vmatprep.subr.bf16.mxu0 0
    %1014 = vmatpush1.bf16.msra.mxu0 %v713
    %1015 = vmatprep.subr.bf16.mxu0 0
    %1016 = vmatpush1.bf16.msra.mxu0 %v710
    %1017 = vmatprep.subr.bf16.mxu0 0
    %1018 = vmatpush1.bf16.msra.mxu0 %v707
    %1019 = vmatprep.subr.bf16.mxu0 0
    %1020 = vmatpush1.bf16.msra.mxu0 %v704
    %1021 = vmatprep.subr.bf16.mxu0 0
    %1022 = vmatpush1.bf16.msra.mxu0 %v701
    %1023 = vmatprep.subr.bf16.mxu0 0
    %1024 = vmatpush1.bf16.msra.mxu0 %v698
    %1025 = vmatprep.subr.bf16.mxu0 0
    %1026 = vmatpush1.bf16.msra.mxu0 %v695
    %1027 = vmatprep.subr.bf16.mxu0 0
    %1028 = vmatpush1.bf16.msra.mxu0 %v692
    %1029 = vmatprep.subr.bf16.mxu0 0
    %1030 = vmatpush2.bf16.msra.mxu0 0
    %1031 = vmatprep.subr.bf16.mxu0 0
    %1032 = vmatpush2.bf16.msra.mxu0 0
    %1033 = vmatprep.subr.bf16.mxu0 0
    %1034 = vmatpush2.bf16.msra.mxu0 0
    %1035 = vmatprep.subr.bf16.mxu0 0
    %1036 = vmatpush2.bf16.msra.mxu0 0
    %1037 = vmatprep.subr.bf16.mxu0 0
    %1038 = vmatpush2.bf16.msra.mxu0 0
    %1039 = vmatprep.subr.bf16.mxu0 0
    %1040 = vmatpush2.bf16.msra.mxu0 0
    %1041 = vmatprep.subr.bf16.mxu0 0
    %1042 = vmatpush2.bf16.msra.mxu0 0
    %1043 = vmatprep.subr.bf16.mxu0 0
    %1044 = vmatpush2.bf16.msra.mxu0 0
    %1045 = vmatprep.mubr.bf16.mxu0 0
    %1046 = vmatmul.mubr.bf16.gmra.mxu0 %v971
    %v1047 = vpop.f32.mrf.mxu0
    %v1048 = vadd.f32 0.0, %v1047
    %v1049 = vpop.f32.mrf.mxu0
    %v1050 = vpop.f32.mrf.mxu0
    %v1051 = vpop.f32.mrf.mxu0
    %1052 = vdwg.mxu0
    %v1053 = vadd.f32 %v968, %v1007
    %v1054 = vadd.f32 %v969, %v1009
    %v1055 = vxor.u32 %v1053, 2147483648
    %v1056 = vxor.u32 %v1054, 2147483648
    %v1057 = vmul.f32 %v1055, 1.442695
    %v1058 = vpow.pop %v1057
    %v1059 = vmul.f32 %v1056, 1.442695
    %v1060 = vpow.pop %v1059
    %v1061 = vadd.f32 %v1058, 1.0
    %v1062 = vadd.f32 %v1060, 1.0
    %v1063 = vrcp.pop %v1061
    %v1064 = vmul.f32 1.0, %v1063
    %v1065 = vrcp.pop %v1062
    %v1066 = vmul.f32 1.0, %v1065
    %v1067 = vadd.f32 %v1048, %v837
    %v1068 = vmul.f32 %v1064, %v1067
    %v1069 = vadd.f32 %v970, %v1068
    %v1070 = vtanh.pop %v1069
    %v1071 = vsub.f32 1.0, %v1066
    %v1072 = vmul.f32 %v1071, %v1070
    %v1073 = vmul.f32 %v1066, %v960
    %v1074 = vadd.f32 %v1072, %v1073
    %s1075 = scalar_lea.vmem [#allocation3], 16
    %1076 = vst.msk [vmem:[%s1075] sm:$0xff] %vm301, %v1074
    %s1077 = scalar_lea.vmem [#allocation3], 40
    %1078 = vst.msk [vmem:[%s1077] sm:$0xff] %vm849, %v1074
    %s1079 = scalar_lea.vmem [#allocation2], 36
    %v1080 = vld [vmem:[%s1079] sm:$0xff]
    %v1081 = vld [vmem:[%s1079 + $0x8] sm:$0xf]
    %v1082 = vunpack.c.l.bf16 %v1080
    %v1083 = vunpack.c.h.bf16 %v1080
    %v1084 = vunpack.c.l.bf16 %v1081
    %v1085 = vpack.c.bf16 %v1074, %v1074
    %1086 = vmatprep.subr.bf16.mxu0 %v712
    %1087 = vmatpush1.bf16.msra.mxu0 %v711
    %1088 = vmatprep.subr.bf16.mxu0 %v709
    %1089 = vmatpush1.bf16.msra.mxu0 %v708
    %1090 = vmatprep.subr.bf16.mxu0 %v706
    %1091 = vmatpush1.bf16.msra.mxu0 %v705
    %1092 = vmatprep.subr.bf16.mxu0 %v703
    %1093 = vmatpush1.bf16.msra.mxu0 %v702
    %1094 = vmatprep.subr.bf16.mxu0 %v700
    %1095 = vmatpush1.bf16.msra.mxu0 %v699
    %1096 = vmatprep.subr.bf16.mxu0 %v697
    %1097 = vmatpush1.bf16.msra.mxu0 %v696
    %1098 = vmatprep.subr.bf16.mxu0 %v694
    %1099 = vmatpush1.bf16.msra.mxu0 %v693
    %1100 = vmatprep.subr.bf16.mxu0 %v691
    %1101 = vmatpush1.bf16.msra.mxu0 %v690
    %1102 = vmatprep.subr.bf16.mxu0 0
    %1103 = vmatpush2.bf16.msra.mxu0 0
    %1104 = vmatprep.subr.bf16.mxu0 0
    %1105 = vmatpush2.bf16.msra.mxu0 0
    %1106 = vmatprep.subr.bf16.mxu0 0
    %1107 = vmatpush2.bf16.msra.mxu0 0
    %1108 = vmatprep.subr.bf16.mxu0 0
    %1109 = vmatpush2.bf16.msra.mxu0 0
    %1110 = vmatprep.subr.bf16.mxu0 0
    %1111 = vmatpush2.bf16.msra.mxu0 0
    %1112 = vmatprep.subr.bf16.mxu0 0
    %1113 = vmatpush2.bf16.msra.mxu0 0
    %1114 = vmatprep.subr.bf16.mxu0 0
    %1115 = vmatpush2.bf16.msra.mxu0 0
    %1116 = vmatprep.subr.bf16.mxu0 0
    %1117 = vmatpush2.bf16.msra.mxu0 0
    %1118 = vmatprep.mubr.bf16.mxu0 0
    %1119 = vmatmul.mubr.bf16.gmra.mxu0 %v1085
    %v1120 = vpop.f32.mrf.mxu0
    %v1121 = vadd.f32 0.0, %v1120
    %v1122 = vpop.f32.mrf.mxu0
    %v1123 = vadd.f32 0.0, %v1122
    %v1124 = vpop.f32.mrf.mxu0
    %v1125 = vpop.f32.mrf.mxu0
    %1126 = vdwg.mxu0
    %1127 = vmatprep.subr.bf16.mxu0 0
    %1128 = vmatpush1.bf16.msra.mxu0 %v713
    %1129 = vmatprep.subr.bf16.mxu0 0
    %1130 = vmatpush1.bf16.msra.mxu0 %v710
    %1131 = vmatprep.subr.bf16.mxu0 0
    %1132 = vmatpush1.bf16.msra.mxu0 %v707
    %1133 = vmatprep.subr.bf16.mxu0 0
    %1134 = vmatpush1.bf16.msra.mxu0 %v704
    %1135 = vmatprep.subr.bf16.mxu0 0
    %1136 = vmatpush1.bf16.msra.mxu0 %v701
    %1137 = vmatprep.subr.bf16.mxu0 0
    %1138 = vmatpush1.bf16.msra.mxu0 %v698
    %1139 = vmatprep.subr.bf16.mxu0 0
    %1140 = vmatpush1.bf16.msra.mxu0 %v695
    %1141 = vmatprep.subr.bf16.mxu0 0
    %1142 = vmatpush1.bf16.msra.mxu0 %v692
    %1143 = vmatprep.subr.bf16.mxu0 0
    %1144 = vmatpush2.bf16.msra.mxu0 0
    %1145 = vmatprep.subr.bf16.mxu0 0
    %1146 = vmatpush2.bf16.msra.mxu0 0
    %1147 = vmatprep.subr.bf16.mxu0 0
    %1148 = vmatpush2.bf16.msra.mxu0 0
    %1149 = vmatprep.subr.bf16.mxu0 0
    %1150 = vmatpush2.bf16.msra.mxu0 0
    %1151 = vmatprep.subr.bf16.mxu0 0
    %1152 = vmatpush2.bf16.msra.mxu0 0
    %1153 = vmatprep.subr.bf16.mxu0 0
    %1154 = vmatpush2.bf16.msra.mxu0 0
    %1155 = vmatprep.subr.bf16.mxu0 0
    %1156 = vmatpush2.bf16.msra.mxu0 0
    %1157 = vmatprep.subr.bf16.mxu0 0
    %1158 = vmatpush2.bf16.msra.mxu0 0
    %1159 = vmatprep.mubr.bf16.mxu0 0
    %1160 = vmatmul.mubr.bf16.gmra.mxu0 %v1085
    %v1161 = vpop.f32.mrf.mxu0
    %v1162 = vadd.f32 0.0, %v1161
    %v1163 = vpop.f32.mrf.mxu0
    %v1164 = vpop.f32.mrf.mxu0
    %v1165 = vpop.f32.mrf.mxu0
    %1166 = vdwg.mxu0
    %v1167 = vadd.f32 %v1082, %v1121
    %v1168 = vadd.f32 %v1083, %v1123
    %v1169 = vxor.u32 %v1167, 2147483648
    %v1170 = vxor.u32 %v1168, 2147483648
    %v1171 = vmul.f32 %v1169, 1.442695
    %v1172 = vpow.pop %v1171
    %v1173 = vmul.f32 %v1170, 1.442695
    %v1174 = vpow.pop %v1173
    %v1175 = vadd.f32 %v1172, 1.0
    %v1176 = vadd.f32 %v1174, 1.0
    %v1177 = vrcp.pop %v1175
    %v1178 = vmul.f32 1.0, %v1177
    %v1179 = vrcp.pop %v1176
    %v1180 = vmul.f32 1.0, %v1179
    %v1181 = vadd.f32 %v1162, %v837
    %v1182 = vmul.f32 %v1178, %v1181
    %v1183 = vadd.f32 %v1084, %v1182
    %v1184 = vtanh.pop %v1183
    %v1185 = vsub.f32 1.0, %v1180
    %v1186 = vmul.f32 %v1185, %v1184
    %v1187 = vmul.f32 %v1180, %v1074
    %v1188 = vadd.f32 %v1186, %v1187
    %s1189 = scalar_lea.vmem [#allocation3], 24
    %1190 = vst.msk [vmem:[%s1189] sm:$0xff] %vm301, %v1188
    %s1191 = scalar_lea.vmem [#allocation3], 32
    %1192 = vst.msk [vmem:[%s1191] sm:$0xff] %vm849, %v1188
    %s1193 = scalar_lea.vmem [#allocation2], 48
    %v1194 = vld [vmem:[%s1193] sm:$0xff]
    %v1195 = vld [vmem:[%s1193 + $0x8] sm:$0xf]
    %v1196 = vunpack.c.l.bf16 %v1194
    %v1197 = vunpack.c.h.bf16 %v1194
    %v1198 = vunpack.c.l.bf16 %v1195
    %v1199 = vpack.c.bf16 %v1188, %v1188
    %1200 = vmatprep.subr.bf16.mxu0 %v712
    %1201 = vmatpush1.bf16.msra.mxu0 %v711
    %1202 = vmatprep.subr.bf16.mxu0 %v709
    %1203 = vmatpush1.bf16.msra.mxu0 %v708
    %1204 = vmatprep.subr.bf16.mxu0 %v706
    %1205 = vmatpush1.bf16.msra.mxu0 %v705
    %1206 = vmatprep.subr.bf16.mxu0 %v703
    %1207 = vmatpush1.bf16.msra.mxu0 %v702
    %1208 = vmatprep.subr.bf16.mxu0 %v700
    %1209 = vmatpush1.bf16.msra.mxu0 %v699
    %1210 = vmatprep.subr.bf16.mxu0 %v697
    %1211 = vmatpush1.bf16.msra.mxu0 %v696
    %1212 = vmatprep.subr.bf16.mxu0 %v694
    %1213 = vmatpush1.bf16.msra.mxu0 %v693
    %1214 = vmatprep.subr.bf16.mxu0 %v691
    %1215 = vmatpush1.bf16.msra.mxu0 %v690
    %1216 = vmatprep.subr.bf16.mxu0 0
    %1217 = vmatpush2.bf16.msra.mxu0 0
    %1218 = vmatprep.subr.bf16.mxu0 0
    %1219 = vmatpush2.bf16.msra.mxu0 0
    %1220 = vmatprep.subr.bf16.mxu0 0
    %1221 = vmatpush2.bf16.msra.mxu0 0
    %1222 = vmatprep.subr.bf16.mxu0 0
    %1223 = vmatpush2.bf16.msra.mxu0 0
    %1224 = vmatprep.subr.bf16.mxu0 0
    %1225 = vmatpush2.bf16.msra.mxu0 0
    %1226 = vmatprep.subr.bf16.mxu0 0
    %1227 = vmatpush2.bf16.msra.mxu0 0
    %1228 = vmatprep.subr.bf16.mxu0 0
    %1229 = vmatpush2.bf16.msra.mxu0 0
    %1230 = vmatprep.subr.bf16.mxu0 0
    %1231 = vmatpush2.bf16.msra.mxu0 0
    %1232 = vmatprep.mubr.bf16.mxu0 0
    %1233 = vmatmul.mubr.bf16.gmra.mxu0 %v1199
    %v1234 = vpop.f32.mrf.mxu0
    %v1235 = vadd.f32 0.0, %v1234
    %v1236 = vpop.f32.mrf.mxu0
    %v1237 = vadd.f32 0.0, %v1236
    %v1238 = vpop.f32.mrf.mxu0
    %v1239 = vpop.f32.mrf.mxu0
    %1240 = vdwg.mxu0
    %1241 = vmatprep.subr.bf16.mxu0 0
    %1242 = vmatpush1.bf16.msra.mxu0 %v713
    %1243 = vmatprep.subr.bf16.mxu0 0
    %1244 = vmatpush1.bf16.msra.mxu0 %v710
    %1245 = vmatprep.subr.bf16.mxu0 0
    %1246 = vmatpush1.bf16.msra.mxu0 %v707
    %1247 = vmatprep.subr.bf16.mxu0 0
    %1248 = vmatpush1.bf16.msra.mxu0 %v704
    %1249 = vmatprep.subr.bf16.mxu0 0
    %1250 = vmatpush1.bf16.msra.mxu0 %v701
    %1251 = vmatprep.subr.bf16.mxu0 0
    %1252 = vmatpush1.bf16.msra.mxu0 %v698
    %1253 = vmatprep.subr.bf16.mxu0 0
    %1254 = vmatpush1.bf16.msra.mxu0 %v695
    %1255 = vmatprep.subr.bf16.mxu0 0
    %1256 = vmatpush1.bf16.msra.mxu0 %v692
    %1257 = vmatprep.subr.bf16.mxu0 0
    %1258 = vmatpush2.bf16.msra.mxu0 0
    %1259 = vmatprep.subr.bf16.mxu0 0
    %1260 = vmatpush2.bf16.msra.mxu0 0
    %1261 = vmatprep.subr.bf16.mxu0 0
    %1262 = vmatpush2.bf16.msra.mxu0 0
    %1263 = vmatprep.subr.bf16.mxu0 0
    %1264 = vmatpush2.bf16.msra.mxu0 0
    %1265 = vmatprep.subr.bf16.mxu0 0
    %1266 = vmatpush2.bf16.msra.mxu0 0
    %1267 = vmatprep.subr.bf16.mxu0 0
    %1268 = vmatpush2.bf16.msra.mxu0 0
    %1269 = vmatprep.subr.bf16.mxu0 0
    %1270 = vmatpush2.bf16.msra.mxu0 0
    %1271 = vmatprep.subr.bf16.mxu0 0
    %1272 = vmatpush2.bf16.msra.mxu0 0
    %1273 = vmatprep.mubr.bf16.mxu0 0
    %1274 = vmatmul.mubr.bf16.gmra.mxu0 %v1199
    %v1275 = vpop.f32.mrf.mxu0
    %v1276 = vadd.f32 0.0, %v1275
    %v1277 = vpop.f32.mrf.mxu0
    %v1278 = vpop.f32.mrf.mxu0
    %v1279 = vpop.f32.mrf.mxu0
    %1280 = vdwg.mxu0
    %v1281 = vadd.f32 %v1196, %v1235
    %v1282 = vadd.f32 %v1197, %v1237
    %v1283 = vxor.u32 %v1281, 2147483648
    %v1284 = vxor.u32 %v1282, 2147483648
    %v1285 = vmul.f32 %v1283, 1.442695
    %v1286 = vpow.pop %v1285
    %v1287 = vmul.f32 %v1284, 1.442695
    %v1288 = vpow.pop %v1287
    %v1289 = vadd.f32 %v1286, 1.0
    %v1290 = vadd.f32 %v1288, 1.0
    %v1291 = vrcp.pop %v1289
    %v1292 = vmul.f32 1.0, %v1291
    %v1293 = vrcp.pop %v1290
    %v1294 = vmul.f32 1.0, %v1293
    %v1295 = vadd.f32 %v1276, %v837
    %v1296 = vmul.f32 %v1292, %v1295
    %v1297 = vadd.f32 %v1198, %v1296
    %v1298 = vtanh.pop %v1297
    %v1299 = vsub.f32 1.0, %v1294
    %v1300 = vmul.f32 %v1299, %v1298
    %v1301 = vmul.f32 %v1294, %v1188
    %v1302 = vadd.f32 %v1300, %v1301
    %1303 = vst.msk [vmem:[%s1191] sm:$0xff] %vm301, %v1302
    %1304 = vst.msk [vmem:[%s1189] sm:$0xff] %vm849, %v1302
    %s1305 = scalar_lea.vmem [#allocation2], 60
    %v1306 = vld [vmem:[%s1305] sm:$0xff]
    %v1307 = vld [vmem:[%s1305 + $0x8] sm:$0xf]
    %v1308 = vunpack.c.l.bf16 %v1306
    %v1309 = vunpack.c.h.bf16 %v1306
    %v1310 = vunpack.c.l.bf16 %v1307
    %v1311 = vpack.c.bf16 %v1302, %v1302
    %1312 = vmatprep.subr.bf16.mxu0 %v712
    %1313 = vmatpush1.bf16.msra.mxu0 %v711
    %1314 = vmatprep.subr.bf16.mxu0 %v709
    %1315 = vmatpush1.bf16.msra.mxu0 %v708
    %1316 = vmatprep.subr.bf16.mxu0 %v706
    %1317 = vmatpush1.bf16.msra.mxu0 %v705
    %1318 = vmatprep.subr.bf16.mxu0 %v703
    %1319 = vmatpush1.bf16.msra.mxu0 %v702
    %1320 = vmatprep.subr.bf16.mxu0 %v700
    %1321 = vmatpush1.bf16.msra.mxu0 %v699
    %1322 = vmatprep.subr.bf16.mxu0 %v697
    %1323 = vmatpush1.bf16.msra.mxu0 %v696
    %1324 = vmatprep.subr.bf16.mxu0 %v694
    %1325 = vmatpush1.bf16.msra.mxu0 %v693
    %1326 = vmatprep.subr.bf16.mxu0 %v691
    %1327 = vmatpush1.bf16.msra.mxu0 %v690
    %1328 = vmatprep.subr.bf16.mxu0 0
    %1329 = vmatpush2.bf16.msra.mxu0 0
    %1330 = vmatprep.subr.bf16.mxu0 0
    %1331 = vmatpush2.bf16.msra.mxu0 0
    %1332 = vmatprep.subr.bf16.mxu0 0
    %1333 = vmatpush2.bf16.msra.mxu0 0
    %1334 = vmatprep.subr.bf16.mxu0 0
    %1335 = vmatpush2.bf16.msra.mxu0 0
    %1336 = vmatprep.subr.bf16.mxu0 0
    %1337 = vmatpush2.bf16.msra.mxu0 0
    %1338 = vmatprep.subr.bf16.mxu0 0
    %1339 = vmatpush2.bf16.msra.mxu0 0
    %1340 = vmatprep.subr.bf16.mxu0 0
    %1341 = vmatpush2.bf16.msra.mxu0 0
    %1342 = vmatprep.subr.bf16.mxu0 0
    %1343 = vmatpush2.bf16.msra.mxu0 0
    %1344 = vmatprep.mubr.bf16.mxu0 0
    %1345 = vmatmul.mubr.bf16.gmra.mxu0 %v1311
    %v1346 = vpop.f32.mrf.mxu0
    %v1347 = vadd.f32 0.0, %v1346
    %v1348 = vpop.f32.mrf.mxu0
    %v1349 = vadd.f32 0.0, %v1348
    %v1350 = vpop.f32.mrf.mxu0
    %v1351 = vpop.f32.mrf.mxu0
    %1352 = vdwg.mxu0
    %1353 = vmatprep.subr.bf16.mxu0 0
    %1354 = vmatpush1.bf16.msra.mxu0 %v713
    %1355 = vmatprep.subr.bf16.mxu0 0
    %1356 = vmatpush1.bf16.msra.mxu0 %v710
    %1357 = vmatprep.subr.bf16.mxu0 0
    %1358 = vmatpush1.bf16.msra.mxu0 %v707
    %1359 = vmatprep.subr.bf16.mxu0 0
    %1360 = vmatpush1.bf16.msra.mxu0 %v704
    %1361 = vmatprep.subr.bf16.mxu0 0
    %1362 = vmatpush1.bf16.msra.mxu0 %v701
    %1363 = vmatprep.subr.bf16.mxu0 0
    %1364 = vmatpush1.bf16.msra.mxu0 %v698
    %1365 = vmatprep.subr.bf16.mxu0 0
    %1366 = vmatpush1.bf16.msra.mxu0 %v695
    %1367 = vmatprep.subr.bf16.mxu0 0
    %1368 = vmatpush1.bf16.msra.mxu0 %v692
    %1369 = vmatprep.subr.bf16.mxu0 0
    %1370 = vmatpush2.bf16.msra.mxu0 0
    %1371 = vmatprep.subr.bf16.mxu0 0
    %1372 = vmatpush2.bf16.msra.mxu0 0
    %1373 = vmatprep.subr.bf16.mxu0 0
    %1374 = vmatpush2.bf16.msra.mxu0 0
    %1375 = vmatprep.subr.bf16.mxu0 0
    %1376 = vmatpush2.bf16.msra.mxu0 0
    %1377 = vmatprep.subr.bf16.mxu0 0
    %1378 = vmatpush2.bf16.msra.mxu0 0
    %1379 = vmatprep.subr.bf16.mxu0 0
    %1380 = vmatpush2.bf16.msra.mxu0 0
    %1381 = vmatprep.subr.bf16.mxu0 0
    %1382 = vmatpush2.bf16.msra.mxu0 0
    %1383 = vmatprep.subr.bf16.mxu0 0
    %1384 = vmatpush2.bf16.msra.mxu0 0
    %1385 = vmatprep.mubr.bf16.mxu0 0
    %1386 = vmatmul.mubr.bf16.gmra.mxu0 %v1311
    %v1387 = vpop.f32.mrf.mxu0
    %v1388 = vadd.f32 0.0, %v1387
    %v1389 = vpop.f32.mrf.mxu0
    %v1390 = vpop.f32.mrf.mxu0
    %v1391 = vpop.f32.mrf.mxu0
    %1392 = vdwg.mxu0
    %v1393 = vadd.f32 %v1308, %v1347
    %v1394 = vadd.f32 %v1309, %v1349
    %v1395 = vxor.u32 %v1393, 2147483648
    %v1396 = vxor.u32 %v1394, 2147483648
    %v1397 = vmul.f32 %v1395, 1.442695
    %v1398 = vpow.pop %v1397
    %v1399 = vmul.f32 %v1396, 1.442695
    %v1400 = vpow.pop %v1399
    %v1401 = vadd.f32 %v1398, 1.0
    %v1402 = vadd.f32 %v1400, 1.0
    %v1403 = vrcp.pop %v1401
    %v1404 = vmul.f32 1.0, %v1403
    %v1405 = vrcp.pop %v1402
    %v1406 = vmul.f32 1.0, %v1405
    %v1407 = vadd.f32 %v1388, %v837
    %v1408 = vmul.f32 %v1404, %v1407
    %v1409 = vadd.f32 %v1310, %v1408
    %v1410 = vtanh.pop %v1409
    %v1411 = vsub.f32 1.0, %v1406
    %v1412 = vmul.f32 %v1411, %v1410
    %v1413 = vmul.f32 %v1406, %v1302
    %v1414 = vadd.f32 %v1412, %v1413
    %1415 = vst.msk [vmem:[%s1077] sm:$0xff] %vm301, %v1414
    %1416 = vst.msk [vmem:[%s1075] sm:$0xff] %vm849, %v1414
    %s1417 = scalar_lea.vmem [#allocation2], 72
    %v1418 = vld [vmem:[%s1417] sm:$0xff]
    %v1419 = vld [vmem:[%s1417 + $0x8] sm:$0xf]
    %v1420 = vunpack.c.l.bf16 %v1418
    %v1421 = vunpack.c.h.bf16 %v1418
    %v1422 = vunpack.c.l.bf16 %v1419
    %v1423 = vpack.c.bf16 %v1414, %v1414
    %1424 = vmatprep.subr.bf16.mxu0 %v712
    %1425 = vmatpush1.bf16.msra.mxu0 %v711
    %1426 = vmatprep.subr.bf16.mxu0 %v709
    %1427 = vmatpush1.bf16.msra.mxu0 %v708
    %1428 = vmatprep.subr.bf16.mxu0 %v706
    %1429 = vmatpush1.bf16.msra.mxu0 %v705
    %1430 = vmatprep.subr.bf16.mxu0 %v703
    %1431 = vmatpush1.bf16.msra.mxu0 %v702
    %1432 = vmatprep.subr.bf16.mxu0 %v700
    %1433 = vmatpush1.bf16.msra.mxu0 %v699
    %1434 = vmatprep.subr.bf16.mxu0 %v697
    %1435 = vmatpush1.bf16.msra.mxu0 %v696
    %1436 = vmatprep.subr.bf16.mxu0 %v694
    %1437 = vmatpush1.bf16.msra.mxu0 %v693
    %1438 = vmatprep.subr.bf16.mxu0 %v691
    %1439 = vmatpush1.bf16.msra.mxu0 %v690
    %1440 = vmatprep.subr.bf16.mxu0 0
    %1441 = vmatpush2.bf16.msra.mxu0 0
    %1442 = vmatprep.subr.bf16.mxu0 0
    %1443 = vmatpush2.bf16.msra.mxu0 0
    %1444 = vmatprep.subr.bf16.mxu0 0
    %1445 = vmatpush2.bf16.msra.mxu0 0
    %1446 = vmatprep.subr.bf16.mxu0 0
    %1447 = vmatpush2.bf16.msra.mxu0 0
    %1448 = vmatprep.subr.bf16.mxu0 0
    %1449 = vmatpush2.bf16.msra.mxu0 0
    %1450 = vmatprep.subr.bf16.mxu0 0
    %1451 = vmatpush2.bf16.msra.mxu0 0
    %1452 = vmatprep.subr.bf16.mxu0 0
    %1453 = vmatpush2.bf16.msra.mxu0 0
    %1454 = vmatprep.subr.bf16.mxu0 0
    %1455 = vmatpush2.bf16.msra.mxu0 0
    %1456 = vmatprep.mubr.bf16.mxu0 0
    %1457 = vmatmul.mubr.bf16.gmra.mxu0 %v1423
    %v1458 = vpop.f32.mrf.mxu0
    %v1459 = vadd.f32 0.0, %v1458
    %v1460 = vpop.f32.mrf.mxu0
    %v1461 = vadd.f32 0.0, %v1460
    %v1462 = vpop.f32.mrf.mxu0
    %v1463 = vpop.f32.mrf.mxu0
    %1464 = vdwg.mxu0
    %1465 = vmatprep.subr.bf16.mxu0 0
    %1466 = vmatpush1.bf16.msra.mxu0 %v713
    %1467 = vmatprep.subr.bf16.mxu0 0
    %1468 = vmatpush1.bf16.msra.mxu0 %v710
    %1469 = vmatprep.subr.bf16.mxu0 0
    %1470 = vmatpush1.bf16.msra.mxu0 %v707
    %1471 = vmatprep.subr.bf16.mxu0 0
    %1472 = vmatpush1.bf16.msra.mxu0 %v704
    %1473 = vmatprep.subr.bf16.mxu0 0
    %1474 = vmatpush1.bf16.msra.mxu0 %v701
    %1475 = vmatprep.subr.bf16.mxu0 0
    %1476 = vmatpush1.bf16.msra.mxu0 %v698
    %1477 = vmatprep.subr.bf16.mxu0 0
    %1478 = vmatpush1.bf16.msra.mxu0 %v695
    %1479 = vmatprep.subr.bf16.mxu0 0
    %1480 = vmatpush1.bf16.msra.mxu0 %v692
    %1481 = vmatprep.subr.bf16.mxu0 0
    %1482 = vmatpush2.bf16.msra.mxu0 0
    %1483 = vmatprep.subr.bf16.mxu0 0
    %1484 = vmatpush2.bf16.msra.mxu0 0
    %1485 = vmatprep.subr.bf16.mxu0 0
    %1486 = vmatpush2.bf16.msra.mxu0 0
    %1487 = vmatprep.subr.bf16.mxu0 0
    %1488 = vmatpush2.bf16.msra.mxu0 0
    %1489 = vmatprep.subr.bf16.mxu0 0
    %1490 = vmatpush2.bf16.msra.mxu0 0
    %1491 = vmatprep.subr.bf16.mxu0 0
    %1492 = vmatpush2.bf16.msra.mxu0 0
    %1493 = vmatprep.subr.bf16.mxu0 0
    %1494 = vmatpush2.bf16.msra.mxu0 0
    %1495 = vmatprep.subr.bf16.mxu0 0
    %1496 = vmatpush2.bf16.msra.mxu0 0
    %1497 = vmatprep.mubr.bf16.mxu0 0
    %1498 = vmatmul.mubr.bf16.gmra.mxu0 %v1423
    %v1499 = vpop.f32.mrf.mxu0
    %v1500 = vadd.f32 0.0, %v1499
    %v1501 = vpop.f32.mrf.mxu0
    %v1502 = vpop.f32.mrf.mxu0
    %v1503 = vpop.f32.mrf.mxu0
    %1504 = vdwg.mxu0
    %v1505 = vadd.f32 %v1420, %v1459
    %v1506 = vadd.f32 %v1421, %v1461
    %v1507 = vxor.u32 %v1505, 2147483648
    %v1508 = vxor.u32 %v1506, 2147483648
    %v1509 = vmul.f32 %v1507, 1.442695
    %v1510 = vpow.pop %v1509
    %v1511 = vmul.f32 %v1508, 1.442695
    %v1512 = vpow.pop %v1511
    %v1513 = vadd.f32 %v1510, 1.0
    %v1514 = vadd.f32 %v1512, 1.0
    %v1515 = vrcp.pop %v1513
    %v1516 = vmul.f32 1.0, %v1515
    %v1517 = vrcp.pop %v1514
    %v1518 = vmul.f32 1.0, %v1517
    %v1519 = vadd.f32 %v1500, %v837
    %v1520 = vmul.f32 %v1516, %v1519
    %v1521 = vadd.f32 %v1422, %v1520
    %v1522 = vtanh.pop %v1521
    %v1523 = vsub.f32 1.0, %v1518
    %v1524 = vmul.f32 %v1523, %v1522
    %v1525 = vmul.f32 %v1518, %v1414
    %v1526 = vadd.f32 %v1524, %v1525
    %1527 = vst.msk [vmem:[%s963] sm:$0xff] %vm301, %v1526
    %1528 = vst.msk [vmem:[%s961] sm:$0xff] %vm849, %v1526
    %s1529 = scalar_lea.vmem [#allocation2], 84
    %v1530 = vld [vmem:[%s1529] sm:$0xff]
    %v1531 = vld [vmem:[%s1529 + $0x8] sm:$0xf]
    %v1532 = vunpack.c.l.bf16 %v1530
    %v1533 = vunpack.c.h.bf16 %v1530
    %v1534 = vunpack.c.l.bf16 %v1531
    %v1535 = vpack.c.bf16 %v1526, %v1526
    %1536 = vmatprep.subr.bf16.mxu0 %v712
    %1537 = vmatpush1.bf16.msra.mxu0 %v711
    %1538 = vmatprep.subr.bf16.mxu0 %v709
    %1539 = vmatpush1.bf16.msra.mxu0 %v708
    %1540 = vmatprep.subr.bf16.mxu0 %v706
    %1541 = vmatpush1.bf16.msra.mxu0 %v705
    %1542 = vmatprep.subr.bf16.mxu0 %v703
    %1543 = vmatpush1.bf16.msra.mxu0 %v702
    %1544 = vmatprep.subr.bf16.mxu0 %v700
    %1545 = vmatpush1.bf16.msra.mxu0 %v699
    %1546 = vmatprep.subr.bf16.mxu0 %v697
    %1547 = vmatpush1.bf16.msra.mxu0 %v696
    %1548 = vmatprep.subr.bf16.mxu0 %v694
    %1549 = vmatpush1.bf16.msra.mxu0 %v693
    %1550 = vmatprep.subr.bf16.mxu0 %v691
    %1551 = vmatpush1.bf16.msra.mxu0 %v690
    %1552 = vmatprep.subr.bf16.mxu0 0
    %1553 = vmatpush2.bf16.msra.mxu0 0
    %1554 = vmatprep.subr.bf16.mxu0 0
    %1555 = vmatpush2.bf16.msra.mxu0 0
    %1556 = vmatprep.subr.bf16.mxu0 0
    %1557 = vmatpush2.bf16.msra.mxu0 0
    %1558 = vmatprep.subr.bf16.mxu0 0
    %1559 = vmatpush2.bf16.msra.mxu0 0
    %1560 = vmatprep.subr.bf16.mxu0 0
    %1561 = vmatpush2.bf16.msra.mxu0 0
    %1562 = vmatprep.subr.bf16.mxu0 0
    %1563 = vmatpush2.bf16.msra.mxu0 0
    %1564 = vmatprep.subr.bf16.mxu0 0
    %1565 = vmatpush2.bf16.msra.mxu0 0
    %1566 = vmatprep.subr.bf16.mxu0 0
    %1567 = vmatpush2.bf16.msra.mxu0 0
    %1568 = vmatprep.mubr.bf16.mxu0 0
    %1569 = vmatmul.mubr.bf16.gmra.mxu0 %v1535
    %v1570 = vpop.f32.mrf.mxu0
    %v1571 = vadd.f32 0.0, %v1570
    %v1572 = vpop.f32.mrf.mxu0
    %v1573 = vadd.f32 0.0, %v1572
    %v1574 = vpop.f32.mrf.mxu0
    %v1575 = vpop.f32.mrf.mxu0
    %1576 = vdwg.mxu0
    %1577 = vmatprep.subr.bf16.mxu0 0
    %1578 = vmatpush1.bf16.msra.mxu0 %v713
    %1579 = vmatprep.subr.bf16.mxu0 0
    %1580 = vmatpush1.bf16.msra.mxu0 %v710
    %1581 = vmatprep.subr.bf16.mxu0 0
    %1582 = vmatpush1.bf16.msra.mxu0 %v707
    %1583 = vmatprep.subr.bf16.mxu0 0
    %1584 = vmatpush1.bf16.msra.mxu0 %v704
    %1585 = vmatprep.subr.bf16.mxu0 0
    %1586 = vmatpush1.bf16.msra.mxu0 %v701
    %1587 = vmatprep.subr.bf16.mxu0 0
    %1588 = vmatpush1.bf16.msra.mxu0 %v698
    %1589 = vmatprep.subr.bf16.mxu0 0
    %1590 = vmatpush1.bf16.msra.mxu0 %v695
    %1591 = vmatprep.subr.bf16.mxu0 0
    %1592 = vmatpush1.bf16.msra.mxu0 %v692
    %1593 = vmatprep.subr.bf16.mxu0 0
    %1594 = vmatpush2.bf16.msra.mxu0 0
    %1595 = vmatprep.subr.bf16.mxu0 0
    %1596 = vmatpush2.bf16.msra.mxu0 0
    %1597 = vmatprep.subr.bf16.mxu0 0
    %1598 = vmatpush2.bf16.msra.mxu0 0
    %1599 = vmatprep.subr.bf16.mxu0 0
    %1600 = vmatpush2.bf16.msra.mxu0 0
    %1601 = vmatprep.subr.bf16.mxu0 0
    %1602 = vmatpush2.bf16.msra.mxu0 0
    %1603 = vmatprep.subr.bf16.mxu0 0
    %1604 = vmatpush2.bf16.msra.mxu0 0
    %1605 = vmatprep.subr.bf16.mxu0 0
    %1606 = vmatpush2.bf16.msra.mxu0 0
    %1607 = vmatprep.subr.bf16.mxu0 0
    %1608 = vmatpush2.bf16.msra.mxu0 0
    %1609 = vmatprep.mubr.bf16.mxu0 0
    %1610 = vmatmul.mubr.bf16.gmra.mxu0 %v1535
    %v1611 = vpop.f32.mrf.mxu0
    %v1612 = vadd.f32 0.0, %v1611
    %v1613 = vpop.f32.mrf.mxu0
    %v1614 = vpop.f32.mrf.mxu0
    %v1615 = vpop.f32.mrf.mxu0
    %1616 = vdwg.mxu0
    %v1617 = vadd.f32 %v1532, %v1571
    %v1618 = vadd.f32 %v1533, %v1573
    %v1619 = vxor.u32 %v1617, 2147483648
    %v1620 = vxor.u32 %v1618, 2147483648
    %v1621 = vmul.f32 %v1619, 1.442695
    %v1622 = vpow.pop %v1621
    %v1623 = vmul.f32 %v1620, 1.442695
    %v1624 = vpow.pop %v1623
    %v1625 = vadd.f32 %v1622, 1.0
    %v1626 = vadd.f32 %v1624, 1.0
    %v1627 = vrcp.pop %v1625
    %v1628 = vmul.f32 1.0, %v1627
    %v1629 = vrcp.pop %v1626
    %v1630 = vmul.f32 1.0, %v1629
    %v1631 = vadd.f32 %v1612, %v837
    %v1632 = vmul.f32 %v1628, %v1631
    %v1633 = vadd.f32 %v1534, %v1632
    %v1634 = vtanh.pop %v1633
    %v1635 = vsub.f32 1.0, %v1630
    %v1636 = vmul.f32 %v1635, %v1634
    %v1637 = vmul.f32 %v1630, %v1526
    %v1638 = vadd.f32 %v1636, %v1637
    %1639 = vst.msk [vmem:[%s848] sm:$0xff] %vm301, %v1638
    %1640 = vst.msk [vmem:[#allocation3] sm:$0xff] %vm849, %v1638
    %v1641 = vld [vmem:[#allocation3] sm:$0xff]
    %v1642 = vld [vmem:[#allocation3 + $0x8] sm:$0xff]
    %v1643 = vld [vmem:[#allocation3 + $0x10] sm:$0xff]
    %v1644 = vld [vmem:[#allocation3 + $0x18] sm:$0xff]
    %v1645 = vld [vmem:[#allocation3 + $0x20] sm:$0xff]
    %v1646 = vld [vmem:[#allocation3 + $0x28] sm:$0xff]
    %v1647 = vld [vmem:[#allocation3 + $0x30] sm:$0xff]
    %v1648 = vld [vmem:[#allocation3 + $0x38] sm:$0xff]
    %v1649 = vld [vmem:[#allocation12] sm:$0x1]
    %v1650 = vld [vmem:[%s6] sm:$0x1]
    %1651 = vadd.xlane.f32.xlu0 %v1641
    %v1652 = vpop.xlane.xlu0 %1651
    %1653 = vadd.xlane.f32.xlu0 %v1642
    %v1654 = vpop.xlane.xlu0 %1653
    %1655 = vadd.xlane.f32.xlu0 %v1643
    %v1656 = vpop.xlane.xlu0 %1655
    %1657 = vadd.xlane.f32.xlu0 %v1644
    %v1658 = vpop.xlane.xlu0 %1657
    %1659 = vadd.xlane.f32.xlu0 %v1645
    %v1660 = vpop.xlane.xlu0 %1659
    %1661 = vadd.xlane.f32.xlu0 %v1646
    %v1662 = vpop.xlane.xlu0 %1661
    %1663 = vadd.xlane.f32.xlu0 %v1647
    %v1664 = vpop.xlane.xlu0 %1663
    %1665 = vadd.xlane.f32.xlu0 %v1648
    %v1666 = vpop.xlane.xlu0 %1665
    %v1667 = vrcp.pop 128.0
    %v1668 = vmul.f32 %v1652, %v1667
    %v1669 = vmul.f32 %v1654, %v1667
    %v1670 = vmul.f32 %v1656, %v1667
    %v1671 = vmul.f32 %v1658, %v1667
    %v1672 = vmul.f32 %v1660, %v1667
    %v1673 = vmul.f32 %v1662, %v1667
    %v1674 = vmul.f32 %v1664, %v1667
    %v1675 = vmul.f32 %v1666, %v1667
    %v1676 = vsub.f32 %v1641, %v1668
    %v1677 = vsub.f32 %v1642, %v1669
    %v1678 = vsub.f32 %v1643, %v1670
    %v1679 = vsub.f32 %v1644, %v1671
    %v1680 = vsub.f32 %v1645, %v1672
    %v1681 = vsub.f32 %v1646, %v1673
    %v1682 = vsub.f32 %v1647, %v1674
    %v1683 = vsub.f32 %v1648, %v1675
    %v1684 = vmul.f32 %v1676, %v1676
    %v1685 = vmul.f32 %v1677, %v1677
    %v1686 = vmul.f32 %v1678, %v1678
    %v1687 = vmul.f32 %v1679, %v1679
    %v1688 = vmul.f32 %v1680, %v1680
    %v1689 = vmul.f32 %v1681, %v1681
    %v1690 = vmul.f32 %v1682, %v1682
    %v1691 = vmul.f32 %v1683, %v1683
    %1692 = vadd.xlane.f32.xlu0 %v1684
    %v1693 = vpop.xlane.xlu0 %1692
    %1694 = vadd.xlane.f32.xlu0 %v1685
    %v1695 = vpop.xlane.xlu0 %1694
    %1696 = vadd.xlane.f32.xlu0 %v1686
    %v1697 = vpop.xlane.xlu0 %1696
    %1698 = vadd.xlane.f32.xlu0 %v1687
    %v1699 = vpop.xlane.xlu0 %1698
    %1700 = vadd.xlane.f32.xlu0 %v1688
    %v1701 = vpop.xlane.xlu0 %1700
    %1702 = vadd.xlane.f32.xlu0 %v1689
    %v1703 = vpop.xlane.xlu0 %1702
    %1704 = vadd.xlane.f32.xlu0 %v1690
    %v1705 = vpop.xlane.xlu0 %1704
    %1706 = vadd.xlane.f32.xlu0 %v1691
    %v1707 = vpop.xlane.xlu0 %1706
    %v1708 = vmul.f32 %v1693, %v1667
    %v1709 = vmul.f32 %v1695, %v1667
    %v1710 = vmul.f32 %v1697, %v1667
    %v1711 = vmul.f32 %v1699, %v1667
    %v1712 = vmul.f32 %v1701, %v1667
    %v1713 = vmul.f32 %v1703, %v1667
    %v1714 = vmul.f32 %v1705, %v1667
    %v1715 = vmul.f32 %v1707, %v1667
    %v1716 = vadd.f32 %v1708, 1e-05
    %v1717 = vadd.f32 %v1709, 1e-05
    %v1718 = vadd.f32 %v1710, 1e-05
    %v1719 = vadd.f32 %v1711, 1e-05
    %v1720 = vadd.f32 %v1712, 1e-05
    %v1721 = vadd.f32 %v1713, 1e-05
    %v1722 = vadd.f32 %v1714, 1e-05
    %v1723 = vadd.f32 %v1715, 1e-05
    %v1724 = vrsqrt.pop %v1716
    %v1725 = vrsqrt.pop %v1717
    %v1726 = vrsqrt.pop %v1718
    %v1727 = vrsqrt.pop %v1719
    %v1728 = vrsqrt.pop %v1720
    %v1729 = vrsqrt.pop %v1721
    %v1730 = vrsqrt.pop %v1722
    %v1731 = vrsqrt.pop %v1723
    %v1732 = vmul.f32 %v1676, %v1724
    %v1733 = vmul.f32 %v1677, %v1725
    %v1734 = vmul.f32 %v1678, %v1726
    %v1735 = vmul.f32 %v1679, %v1727
    %v1736 = vmul.f32 %v1680, %v1728
    %v1737 = vmul.f32 %v1681, %v1729
    %v1738 = vmul.f32 %v1682, %v1730
    %v1739 = vmul.f32 %v1683, %v1731
    %v1741 = vlaneseq
    %v1742 = vshrl.u32 %v1741, 7
    %v1743 = vsub.s32 0, %v1742
    %v1744 = vrot.slane %v1649, %v1743
    %v1746 = vmul.f32 %v1732, %v1744
    %v1747 = vmul.f32 %v1733, %v1744
    %v1748 = vmul.f32 %v1734, %v1744
    %v1749 = vmul.f32 %v1735, %v1744
    %v1750 = vmul.f32 %v1736, %v1744
    %v1751 = vmul.f32 %v1737, %v1744
    %v1752 = vmul.f32 %v1738, %v1744
    %v1753 = vmul.f32 %v1739, %v1744
    %v1755 = vlaneseq
    %v1756 = vshrl.u32 %v1755, 7
    %v1757 = vsub.s32 0, %v1756
    %v1758 = vrot.slane %v1650, %v1757
    %v1760 = vadd.f32 %v1746, %v1758
    %v1761 = vadd.f32 %v1747, %v1758
    %v1762 = vadd.f32 %v1748, %v1758
    %v1763 = vadd.f32 %v1749, %v1758
    %v1764 = vadd.f32 %v1750, %v1758
    %v1765 = vadd.f32 %v1751, %v1758
    %v1766 = vadd.f32 %v1752, %v1758
    %v1767 = vadd.f32 %v1753, %v1758
    %v1768 = vpack.c.bf16 %v1761, %v1760
    %v1769 = vpack.c.bf16 %v1763, %v1762
    %v1770 = vpack.c.bf16 %v1765, %v1764
    %v1771 = vpack.c.bf16 %v1767, %v1766
    %v1772 = vld [vmem:[#allocation13] sm:$0xff]
    %v1773 = vld [vmem:[#allocation13 + $0x8] sm:$0xf]
    %v1774 = vld [vmem:[#allocation13 + $0xc] sm:$0xff]
    %v1775 = vld [vmem:[#allocation13 + $0x14] sm:$0xf]
    %v1776 = vld [vmem:[#allocation13 + $0x18] sm:$0xff]
    %v1777 = vld [vmem:[#allocation13 + $0x20] sm:$0xf]
    %v1778 = vld [vmem:[#allocation13 + $0x24] sm:$0xff]
    %v1779 = vld [vmem:[#allocation13 + $0x2c] sm:$0xf]
    %v1780 = vld [vmem:[#allocation13 + $0x30] sm:$0xff]
    %v1781 = vld [vmem:[#allocation13 + $0x38] sm:$0xf]
    %v1782 = vld [vmem:[#allocation13 + $0x3c] sm:$0xff]
    %v1783 = vld [vmem:[#allocation13 + $0x44] sm:$0xf]
    %v1784 = vld [vmem:[#allocation13 + $0x48] sm:$0xff]
    %v1785 = vld [vmem:[#allocation13 + $0x50] sm:$0xf]
    %v1786 = vld [vmem:[#allocation13 + $0x54] sm:$0xff]
    %v1787 = vld [vmem:[#allocation13 + $0x5c] sm:$0xf]
    %v1788 = vld [vmem:[#allocation13 + $0x60] sm:$0xff]
    %v1789 = vld [vmem:[#allocation13 + $0x68] sm:$0xf]
    %v1790 = vld [vmem:[#allocation13 + $0x6c] sm:$0xff]
    %v1791 = vld [vmem:[#allocation13 + $0x74] sm:$0xf]
    %v1792 = vld [vmem:[#allocation13 + $0x78] sm:$0xff]
    %v1793 = vld [vmem:[#allocation13 + $0x80] sm:$0xf]
    %v1794 = vld [vmem:[#allocation13 + $0x84] sm:$0xff]
    %v1795 = vld [vmem:[#allocation13 + $0x8c] sm:$0xf]
    %v1796 = vld [vmem:[#allocation13 + $0x90] sm:$0xff]
    %v1797 = vld [vmem:[#allocation13 + $0x98] sm:$0xf]
    %v1798 = vld [vmem:[#allocation13 + $0x9c] sm:$0xff]
    %v1799 = vld [vmem:[#allocation13 + $0xa4] sm:$0xf]
    %v1800 = vld [vmem:[#allocation13 + $0xa8] sm:$0xff]
    %v1801 = vld [vmem:[#allocation13 + $0xb0] sm:$0xf]
    %v1802 = vld [vmem:[#allocation13 + $0xb4] sm:$0xff]
    %v1803 = vld [vmem:[#allocation13 + $0xbc] sm:$0xf]
    %v1804 = vld [vmem:[%s9] sm:$0x7]
    %v1806 = vlaneseq
    %v1807 = vshrl.u32 %v1806, 7
    %v1808 = vsub.s32 0, %v1807
    %v1809 = vrot.slane %v1804, %v1808
    %v1810 = vlaneseq
    %v1811 = vshrl.u32 %v1810, 7
    %v1812 = vsub.s32 1, %v1811
    %v1813 = vrot.slane %v1804, %v1812
    %v1814 = vlaneseq
    %v1815 = vshrl.u32 %v1814, 7
    %v1816 = vsub.s32 2, %v1815
    %v1817 = vrot.slane %v1804, %v1816
    %v1853 = vunpack.c.l.b16 %v1772
    %v1854 = vunpack.c.h.b16 %v1772
    %v1855 = vunpack.c.l.b16 %v1773
    %v1856 = vunpack.c.l.b16 %v1774
    %v1857 = vunpack.c.h.b16 %v1774
    %v1858 = vunpack.c.l.b16 %v1775
    %v1859 = vunpack.c.l.b16 %v1776
    %v1860 = vunpack.c.h.b16 %v1776
    %v1861 = vunpack.c.l.b16 %v1777
    %v1862 = vunpack.c.l.b16 %v1778
    %v1863 = vunpack.c.h.b16 %v1778
    %v1864 = vunpack.c.l.b16 %v1779
    %v1865 = vunpack.c.l.b16 %v1780
    %v1866 = vunpack.c.h.b16 %v1780
    %v1867 = vunpack.c.l.b16 %v1781
    %v1868 = vunpack.c.l.b16 %v1782
    %v1869 = vunpack.c.h.b16 %v1782
    %v1870 = vunpack.c.l.b16 %v1783
    %v1871 = vunpack.c.l.b16 %v1784
    %v1872 = vunpack.c.h.b16 %v1784
    %v1873 = vunpack.c.l.b16 %v1785
    %v1874 = vunpack.c.l.b16 %v1786
    %v1875 = vunpack.c.h.b16 %v1786
    %v1876 = vunpack.c.l.b16 %v1787
    %v1877 = vunpack.c.l.b16 %v1788
    %v1878 = vunpack.c.h.b16 %v1788
    %v1879 = vunpack.c.l.b16 %v1789
    %v1880 = vunpack.c.l.b16 %v1790
    %v1881 = vunpack.c.h.b16 %v1790
    %v1882 = vunpack.c.l.b16 %v1791
    %v1883 = vunpack.c.l.b16 %v1792
    %v1884 = vunpack.c.h.b16 %v1792
    %v1885 = vunpack.c.l.b16 %v1793
    %v1886 = vunpack.c.l.b16 %v1794
    %v1887 = vunpack.c.h.b16 %v1794
    %v1888 = vunpack.c.l.b16 %v1795
    %v1889 = vunpack.c.l.b16 %v1796
    %v1890 = vunpack.c.h.b16 %v1796
    %v1891 = vunpack.c.l.b16 %v1797
    %v1892 = vunpack.c.l.b16 %v1798
    %v1893 = vunpack.c.h.b16 %v1798
    %v1894 = vunpack.c.l.b16 %v1799
    %v1895 = vunpack.c.l.b16 %v1800
    %v1896 = vunpack.c.h.b16 %v1800
    %v1897 = vunpack.c.l.b16 %v1801
    %v1898 = vunpack.c.l.b16 %v1802
    %v1899 = vunpack.c.h.b16 %v1802
    %v1900 = vunpack.c.l.b16 %v1803
    %v1901 = vpack.c.b16 %v1856, %v1853
    %v1902 = vpack.c.b16 %v1857, %v1854
    %v1903 = vpack.c.b16 %v1858, %v1855
    %v1904 = vpack.c.b16 %v1862, %v1859
    %v1905 = vpack.c.b16 %v1863, %v1860
    %v1906 = vpack.c.b16 %v1864, %v1861
    %v1907 = vpack.c.b16 %v1868, %v1865
    %v1908 = vpack.c.b16 %v1869, %v1866
    %v1909 = vpack.c.b16 %v1870, %v1867
    %v1910 = vpack.c.b16 %v1874, %v1871
    %v1911 = vpack.c.b16 %v1875, %v1872
    %v1912 = vpack.c.b16 %v1876, %v1873
    %v1913 = vpack.c.b16 %v1880, %v1877
    %v1914 = vpack.c.b16 %v1881, %v1878
    %v1915 = vpack.c.b16 %v1882, %v1879
    %v1916 = vpack.c.b16 %v1886, %v1883
    %v1917 = vpack.c.b16 %v1887, %v1884
    %v1918 = vpack.c.b16 %v1888, %v1885
    %v1919 = vpack.c.b16 %v1892, %v1889
    %v1920 = vpack.c.b16 %v1893, %v1890
    %v1921 = vpack.c.b16 %v1894, %v1891
    %v1922 = vpack.c.b16 %v1898, %v1895
    %v1923 = vpack.c.b16 %v1899, %v1896
    %v1924 = vpack.c.b16 %v1900, %v1897
    %1949 = vmatprep.subr.bf16.mxu0 %v1923
    %1950 = vmatpush1.bf16.msra.mxu0 %v1922
    %1951 = vmatprep.subr.bf16.mxu0 %v1920
    %1952 = vmatpush1.bf16.msra.mxu0 %v1919
    %1953 = vmatprep.subr.bf16.mxu0 %v1917
    %1954 = vmatpush1.bf16.msra.mxu0 %v1916
    %1955 = vmatprep.subr.bf16.mxu0 %v1914
    %1956 = vmatpush1.bf16.msra.mxu0 %v1913
    %1957 = vmatprep.subr.bf16.mxu0 %v1911
    %1958 = vmatpush1.bf16.msra.mxu0 %v1910
    %1959 = vmatprep.subr.bf16.mxu0 %v1908
    %1960 = vmatpush1.bf16.msra.mxu0 %v1907
    %1961 = vmatprep.subr.bf16.mxu0 %v1905
    %1962 = vmatpush1.bf16.msra.mxu0 %v1904
    %1963 = vmatprep.subr.bf16.mxu0 %v1902
    %1964 = vmatpush1.bf16.msra.mxu0 %v1901
    %1965 = vmatprep.subr.bf16.mxu0 0
    %1966 = vmatpush2.bf16.msra.mxu0 0
    %1967 = vmatprep.subr.bf16.mxu0 0
    %1968 = vmatpush2.bf16.msra.mxu0 0
    %1969 = vmatprep.subr.bf16.mxu0 0
    %1970 = vmatpush2.bf16.msra.mxu0 0
    %1971 = vmatprep.subr.bf16.mxu0 0
    %1972 = vmatpush2.bf16.msra.mxu0 0
    %1973 = vmatprep.subr.bf16.mxu0 0
    %1974 = vmatpush2.bf16.msra.mxu0 0
    %1975 = vmatprep.subr.bf16.mxu0 0
    %1976 = vmatpush2.bf16.msra.mxu0 0
    %1977 = vmatprep.subr.bf16.mxu0 0
    %1978 = vmatpush2.bf16.msra.mxu0 0
    %1979 = vmatprep.subr.bf16.mxu0 0
    %1980 = vmatpush2.bf16.msra.mxu0 0
    %1981 = vmatprep.mubr.bf16.mxu0 0
    %1982 = vmatmul.mubr.bf16.gmra.mxu0 %v1768
    %v1983 = vpop.f32.mrf.mxu0
    %v1984 = vadd.f32 %v1809, %v1983
    %v1985 = vpop.f32.mrf.mxu0
    %v1986 = vadd.f32 %v1813, %v1985
    %v1987 = vpop.f32.mrf.mxu0
    %v1988 = vadd.f32 %v1809, %v1987
    %v1989 = vpop.f32.mrf.mxu0
    %v1990 = vadd.f32 %v1813, %v1989
    %1991 = vmatprep.mubr.bf16.mxu0 0
    %1992 = vmatmul.mubr.bf16.gmra.mxu0 %v1769
    %v1993 = vpop.f32.mrf.mxu0
    %v1994 = vadd.f32 %v1809, %v1993
    %v1995 = vpop.f32.mrf.mxu0
    %v1996 = vadd.f32 %v1813, %v1995
    %v1997 = vpop.f32.mrf.mxu0
    %v1998 = vadd.f32 %v1809, %v1997
    %v1999 = vpop.f32.mrf.mxu0
    %v2000 = vadd.f32 %v1813, %v1999
    %2001 = vmatprep.mubr.bf16.mxu0 0
    %2002 = vmatmul.mubr.bf16.gmra.mxu0 %v1770
    %v2003 = vpop.f32.mrf.mxu0
    %v2004 = vadd.f32 %v1809, %v2003
    %v2005 = vpop.f32.mrf.mxu0
    %v2006 = vadd.f32 %v1813, %v2005
    %v2007 = vpop.f32.mrf.mxu0
    %v2008 = vadd.f32 %v1809, %v2007
    %v2009 = vpop.f32.mrf.mxu0
    %v2010 = vadd.f32 %v1813, %v2009
    %2011 = vmatprep.mubr.bf16.mxu0 0
    %2012 = vmatmul.mubr.bf16.gmra.mxu0 %v1771
    %v2013 = vpop.f32.mrf.mxu0
    %v2014 = vadd.f32 %v1809, %v2013
    %v2015 = vpop.f32.mrf.mxu0
    %v2016 = vadd.f32 %v1813, %v2015
    %v2017 = vpop.f32.mrf.mxu0
    %v2018 = vadd.f32 %v1809, %v2017
    %v2019 = vpop.f32.mrf.mxu0
    %v2020 = vadd.f32 %v1813, %v2019
    %2021 = vdwg.mxu0
    %2022 = vmatprep.subr.bf16.mxu0 0
    %2023 = vmatpush1.bf16.msra.mxu0 %v1924
    %2024 = vmatprep.subr.bf16.mxu0 0
    %2025 = vmatpush1.bf16.msra.mxu0 %v1921
    %2026 = vmatprep.subr.bf16.mxu0 0
    %2027 = vmatpush1.bf16.msra.mxu0 %v1918
    %2028 = vmatprep.subr.bf16.mxu0 0
    %2029 = vmatpush1.bf16.msra.mxu0 %v1915
    %2030 = vmatprep.subr.bf16.mxu0 0
    %2031 = vmatpush1.bf16.msra.mxu0 %v1912
    %2032 = vmatprep.subr.bf16.mxu0 0
    %2033 = vmatpush1.bf16.msra.mxu0 %v1909
    %2034 = vmatprep.subr.bf16.mxu0 0
    %2035 = vmatpush1.bf16.msra.mxu0 %v1906
    %2036 = vmatprep.subr.bf16.mxu0 0
    %2037 = vmatpush1.bf16.msra.mxu0 %v1903
    %2038 = vmatprep.subr.bf16.mxu0 0
    %2039 = vmatpush2.bf16.msra.mxu0 0
    %2040 = vmatprep.subr.bf16.mxu0 0
    %2041 = vmatpush2.bf16.msra.mxu0 0
    %2042 = vmatprep.subr.bf16.mxu0 0
    %2043 = vmatpush2.bf16.msra.mxu0 0
    %2044 = vmatprep.subr.bf16.mxu0 0
    %2045 = vmatpush2.bf16.msra.mxu0 0
    %2046 = vmatprep.subr.bf16.mxu0 0
    %2047 = vmatpush2.bf16.msra.mxu0 0
    %2048 = vmatprep.subr.bf16.mxu0 0
    %2049 = vmatpush2.bf16.msra.mxu0 0
    %2050 = vmatprep.subr.bf16.mxu0 0
    %2051 = vmatpush2.bf16.msra.mxu0 0
    %2052 = vmatprep.subr.bf16.mxu0 0
    %2053 = vmatpush2.bf16.msra.mxu0 0
    %2054 = vmatprep.mubr.bf16.mxu0 0
    %2055 = vmatmul.mubr.bf16.gmra.mxu0 %v1768
    %v2056 = vpop.f32.mrf.mxu0
    %v2057 = vadd.f32 %v1817, %v2056
    %v2058 = vpop.f32.mrf.mxu0
    %v2059 = vpop.f32.mrf.mxu0
    %v2060 = vadd.f32 %v1817, %v2059
    %v2061 = vpop.f32.mrf.mxu0
    %2062 = vmatprep.mubr.bf16.mxu0 0
    %2063 = vmatmul.mubr.bf16.gmra.mxu0 %v1769
    %v2064 = vpop.f32.mrf.mxu0
    %v2065 = vadd.f32 %v1817, %v2064
    %v2066 = vpop.f32.mrf.mxu0
    %v2067 = vpop.f32.mrf.mxu0
    %v2068 = vadd.f32 %v1817, %v2067
    %v2069 = vpop.f32.mrf.mxu0
    %2070 = vmatprep.mubr.bf16.mxu0 0
    %2071 = vmatmul.mubr.bf16.gmra.mxu0 %v1770
    %v2072 = vpop.f32.mrf.mxu0
    %v2073 = vadd.f32 %v1817, %v2072
    %v2074 = vpop.f32.mrf.mxu0
    %v2075 = vpop.f32.mrf.mxu0
    %v2076 = vadd.f32 %v1817, %v2075
    %v2077 = vpop.f32.mrf.mxu0
    %2078 = vmatprep.mubr.bf16.mxu0 0
    %2079 = vmatmul.mubr.bf16.gmra.mxu0 %v1771
    %v2080 = vpop.f32.mrf.mxu0
    %v2081 = vadd.f32 %v1817, %v2080
    %v2082 = vpop.f32.mrf.mxu0
    %v2083 = vpop.f32.mrf.mxu0
    %v2084 = vadd.f32 %v1817, %v2083
    %v2085 = vpop.f32.mrf.mxu0
    %2086 = vdwg.mxu0
    %v2087 = vpack.c.bf16 %v1984, %v1984
    %v2088 = vpack.c.bf16 %v1986, %v1986
    %v2089 = vpack.c.bf16 %v2057, %v2057
    %v2090 = vpack.c.bf16 %v1988, %v1988
    %v2091 = vpack.c.bf16 %v1990, %v1990
    %v2092 = vpack.c.bf16 %v2060, %v2060
    %v2093 = vpack.c.bf16 %v1994, %v1994
    %v2094 = vpack.c.bf16 %v1996, %v1996
    %v2095 = vpack.c.bf16 %v2065, %v2065
    %v2096 = vpack.c.bf16 %v1998, %v1998
    %v2097 = vpack.c.bf16 %v2000, %v2000
    %v2098 = vpack.c.bf16 %v2068, %v2068
    %v2099 = vpack.c.bf16 %v2004, %v2004
    %v2100 = vpack.c.bf16 %v2006, %v2006
    %v2101 = vpack.c.bf16 %v2073, %v2073
    %v2102 = vpack.c.bf16 %v2008, %v2008
    %v2103 = vpack.c.bf16 %v2010, %v2010
    %v2104 = vpack.c.bf16 %v2076, %v2076
    %v2105 = vpack.c.bf16 %v2014, %v2014
    %v2106 = vpack.c.bf16 %v2016, %v2016
    %v2107 = vpack.c.bf16 %v2081, %v2081
    %v2108 = vpack.c.bf16 %v2018, %v2018
    %v2109 = vpack.c.bf16 %v2020, %v2020
    %v2110 = vpack.c.bf16 %v2084, %v2084
    %v2135 = vunpack.c.l.b16 %v2087
    %v2136 = vunpack.c.l.b16 %v2088
    %v2137 = vunpack.c.l.b16 %v2089
    %v2138 = vunpack.c.l.b16 %v2090
    %v2139 = vunpack.c.l.b16 %v2091
    %v2140 = vunpack.c.l.b16 %v2092
    %v2141 = vunpack.c.l.b16 %v2093
    %v2142 = vunpack.c.l.b16 %v2094
    %v2143 = vunpack.c.l.b16 %v2095
    %v2144 = vunpack.c.l.b16 %v2096
    %v2145 = vunpack.c.l.b16 %v2097
    %v2146 = vunpack.c.l.b16 %v2098
    %v2147 = vunpack.c.l.b16 %v2099
    %v2148 = vunpack.c.l.b16 %v2100
    %v2149 = vunpack.c.l.b16 %v2101
    %v2150 = vunpack.c.l.b16 %v2102
    %v2151 = vunpack.c.l.b16 %v2103
    %v2152 = vunpack.c.l.b16 %v2104
    %v2153 = vunpack.c.l.b16 %v2105
    %v2154 = vunpack.c.l.b16 %v2106
    %v2155 = vunpack.c.l.b16 %v2107
    %v2156 = vunpack.c.l.b16 %v2108
    %v2157 = vunpack.c.l.b16 %v2109
    %v2158 = vunpack.c.l.b16 %v2110
    %v2159 = vpack.c.b16 %v2136, %v2135
    %v2160 = vpack.c.b16 %v2137, %v2137
    %v2161 = vpack.c.b16 %v2139, %v2138
    %v2162 = vpack.c.b16 %v2140, %v2140
    %v2163 = vpack.c.b16 %v2142, %v2141
    %v2164 = vpack.c.b16 %v2143, %v2143
    %v2165 = vpack.c.b16 %v2145, %v2144
    %v2166 = vpack.c.b16 %v2146, %v2146
    %v2167 = vpack.c.b16 %v2148, %v2147
    %v2168 = vpack.c.b16 %v2149, %v2149
    %v2169 = vpack.c.b16 %v2151, %v2150
    %v2170 = vpack.c.b16 %v2152, %v2152
    %v2171 = vpack.c.b16 %v2154, %v2153
    %v2172 = vpack.c.b16 %v2155, %v2155
    %v2173 = vpack.c.b16 %v2157, %v2156
    %v2174 = vpack.c.b16 %v2158, %v2158
    %2191 = vst [vmem:[#allocation2] sm:$0xff] %v2159
    %2192 = vst [vmem:[#allocation2 + $0x8] sm:$0xf] %v2160
    %2193 = vst [vmem:[#allocation2 + $0xc] sm:$0xff] %v2161
    %2194 = vst [vmem:[#allocation2 + $0x14] sm:$0xf] %v2162
    %2195 = vst [vmem:[#allocation2 + $0x18] sm:$0xff] %v2163
    %2196 = vst [vmem:[#allocation2 + $0x20] sm:$0xf] %v2164
    %2197 = vst [vmem:[#allocation2 + $0x24] sm:$0xff] %v2165
    %2198 = vst [vmem:[#allocation2 + $0x2c] sm:$0xf] %v2166
    %2199 = vst [vmem:[#allocation2 + $0x30] sm:$0xff] %v2167
    %2200 = vst [vmem:[#allocation2 + $0x38] sm:$0xf] %v2168
    %2201 = vst [vmem:[#allocation2 + $0x3c] sm:$0xff] %v2169
    %2202 = vst [vmem:[#allocation2 + $0x44] sm:$0xf] %v2170
    %2203 = vst [vmem:[#allocation2 + $0x48] sm:$0xff] %v2171
    %2204 = vst [vmem:[#allocation2 + $0x50] sm:$0xf] %v2172
    %2205 = vst [vmem:[#allocation2 + $0x54] sm:$0xff] %v2173
    %2206 = vst [vmem:[#allocation2 + $0x5c] sm:$0xf] %v2174
    %v2207 = vld [vmem:[#allocation15] sm:$0xff]
    %v2208 = vld [vmem:[#allocation15 + $0x8] sm:$0xf]
    %v2209 = vld [vmem:[#allocation15 + $0xc] sm:$0xff]
    %v2210 = vld [vmem:[#allocation15 + $0x14] sm:$0xf]
    %v2211 = vld [vmem:[#allocation15 + $0x18] sm:$0xff]
    %v2212 = vld [vmem:[#allocation15 + $0x20] sm:$0xf]
    %v2213 = vld [vmem:[#allocation15 + $0x24] sm:$0xff]
    %v2214 = vld [vmem:[#allocation15 + $0x2c] sm:$0xf]
    %v2215 = vld [vmem:[#allocation15 + $0x30] sm:$0xff]
    %v2216 = vld [vmem:[#allocation15 + $0x38] sm:$0xf]
    %v2217 = vld [vmem:[#allocation15 + $0x3c] sm:$0xff]
    %v2218 = vld [vmem:[#allocation15 + $0x44] sm:$0xf]
    %v2219 = vld [vmem:[#allocation15 + $0x48] sm:$0xff]
    %v2220 = vld [vmem:[#allocation15 + $0x50] sm:$0xf]
    %v2221 = vld [vmem:[#allocation15 + $0x54] sm:$0xff]
    %v2222 = vld [vmem:[#allocation15 + $0x5c] sm:$0xf]
    %v2223 = vld [vmem:[#allocation15 + $0x60] sm:$0xff]
    %v2224 = vld [vmem:[#allocation15 + $0x68] sm:$0xf]
    %v2225 = vld [vmem:[#allocation15 + $0x6c] sm:$0xff]
    %v2226 = vld [vmem:[#allocation15 + $0x74] sm:$0xf]
    %v2227 = vld [vmem:[#allocation15 + $0x78] sm:$0xff]
    %v2228 = vld [vmem:[#allocation15 + $0x80] sm:$0xf]
    %v2229 = vld [vmem:[#allocation15 + $0x84] sm:$0xff]
    %v2230 = vld [vmem:[#allocation15 + $0x8c] sm:$0xf]
    %v2231 = vld [vmem:[#allocation15 + $0x90] sm:$0xff]
    %v2232 = vld [vmem:[#allocation15 + $0x98] sm:$0xf]
    %v2233 = vld [vmem:[#allocation15 + $0x9c] sm:$0xff]
    %v2234 = vld [vmem:[#allocation15 + $0xa4] sm:$0xf]
    %v2235 = vld [vmem:[#allocation15 + $0xa8] sm:$0xff]
    %v2236 = vld [vmem:[#allocation15 + $0xb0] sm:$0xf]
    %v2237 = vld [vmem:[#allocation15 + $0xb4] sm:$0xff]
    %v2238 = vld [vmem:[#allocation15 + $0xbc] sm:$0xf]
    %v2239 = vld [vmem:[%s10] sm:$0x1]
    %v2240 = vld [vmem:[#allocation2] sm:$0xff]
    %v2241 = vld [vmem:[#allocation2 + $0x8] sm:$0xf]
    %v2242 = vunpack.c.l.bf16 %v2240
    %v2243 = vunpack.c.h.bf16 %v2240
    %v2244 = vunpack.c.l.bf16 %v2241
    %v2277 = vunpack.c.l.b16 %v2207
    %v2278 = vunpack.c.h.b16 %v2207
    %v2279 = vunpack.c.l.b16 %v2208
    %v2280 = vunpack.c.l.b16 %v2209
    %v2281 = vunpack.c.h.b16 %v2209
    %v2282 = vunpack.c.l.b16 %v2210
    %v2283 = vunpack.c.l.b16 %v2211
    %v2284 = vunpack.c.h.b16 %v2211
    %v2285 = vunpack.c.l.b16 %v2212
    %v2286 = vunpack.c.l.b16 %v2213
    %v2287 = vunpack.c.h.b16 %v2213
    %v2288 = vunpack.c.l.b16 %v2214
    %v2289 = vunpack.c.l.b16 %v2215
    %v2290 = vunpack.c.h.b16 %v2215
    %v2291 = vunpack.c.l.b16 %v2216
    %v2292 = vunpack.c.l.b16 %v2217
    %v2293 = vunpack.c.h.b16 %v2217
    %v2294 = vunpack.c.l.b16 %v2218
    %v2295 = vunpack.c.l.b16 %v2219
    %v2296 = vunpack.c.h.b16 %v2219
    %v2297 = vunpack.c.l.b16 %v2220
    %v2298 = vunpack.c.l.b16 %v2221
    %v2299 = vunpack.c.h.b16 %v2221
    %v2300 = vunpack.c.l.b16 %v2222
    %v2301 = vunpack.c.l.b16 %v2223
    %v2302 = vunpack.c.h.b16 %v2223
    %v2303 = vunpack.c.l.b16 %v2224
    %v2304 = vunpack.c.l.b16 %v2225
    %v2305 = vunpack.c.h.b16 %v2225
    %v2306 = vunpack.c.l.b16 %v2226
    %v2307 = vunpack.c.l.b16 %v2227
    %v2308 = vunpack.c.h.b16 %v2227
    %v2309 = vunpack.c.l.b16 %v2228
    %v2310 = vunpack.c.l.b16 %v2229
    %v2311 = vunpack.c.h.b16 %v2229
    %v2312 = vunpack.c.l.b16 %v2230
    %v2313 = vunpack.c.l.b16 %v2231
    %v2314 = vunpack.c.h.b16 %v2231
    %v2315 = vunpack.c.l.b16 %v2232
    %v2316 = vunpack.c.l.b16 %v2233
    %v2317 = vunpack.c.h.b16 %v2233
    %v2318 = vunpack.c.l.b16 %v2234
    %v2319 = vunpack.c.l.b16 %v2235
    %v2320 = vunpack.c.h.b16 %v2235
    %v2321 = vunpack.c.l.b16 %v2236
    %v2322 = vunpack.c.l.b16 %v2237
    %v2323 = vunpack.c.h.b16 %v2237
    %v2324 = vunpack.c.l.b16 %v2238
    %v2325 = vpack.c.b16 %v2280, %v2277
    %v2326 = vpack.c.b16 %v2281, %v2278
    %v2327 = vpack.c.b16 %v2282, %v2279
    %v2328 = vpack.c.b16 %v2286, %v2283
    %v2329 = vpack.c.b16 %v2287, %v2284
    %v2330 = vpack.c.b16 %v2288, %v2285
    %v2331 = vpack.c.b16 %v2292, %v2289
    %v2332 = vpack.c.b16 %v2293, %v2290
    %v2333 = vpack.c.b16 %v2294, %v2291
    %v2334 = vpack.c.b16 %v2298, %v2295
    %v2335 = vpack.c.b16 %v2299, %v2296
    %v2336 = vpack.c.b16 %v2300, %v2297
    %v2337 = vpack.c.b16 %v2304, %v2301
    %v2338 = vpack.c.b16 %v2305, %v2302
    %v2339 = vpack.c.b16 %v2306, %v2303
    %v2340 = vpack.c.b16 %v2310, %v2307
    %v2341 = vpack.c.b16 %v2311, %v2308
    %v2342 = vpack.c.b16 %v2312, %v2309
    %v2343 = vpack.c.b16 %v2316, %v2313
    %v2344 = vpack.c.b16 %v2317, %v2314
    %v2345 = vpack.c.b16 %v2318, %v2315
    %v2346 = vpack.c.b16 %v2322, %v2319
    %v2347 = vpack.c.b16 %v2323, %v2320
    %v2348 = vpack.c.b16 %v2324, %v2321
    %2373 = vmatprep.subr.bf16.mxu0 %v2347
    %2374 = vmatpush1.bf16.msra.mxu0 %v2346
    %2375 = vmatprep.subr.bf16.mxu0 %v2344
    %2376 = vmatpush1.bf16.msra.mxu0 %v2343
    %2377 = vmatprep.subr.bf16.mxu0 %v2341
    %2378 = vmatpush1.bf16.msra.mxu0 %v2340
    %2379 = vmatprep.subr.bf16.mxu0 %v2338
    %2380 = vmatpush1.bf16.msra.mxu0 %v2337
    %2381 = vmatprep.subr.bf16.mxu0 %v2335
    %2382 = vmatpush1.bf16.msra.mxu0 %v2334
    %2383 = vmatprep.subr.bf16.mxu0 %v2332
    %2384 = vmatpush1.bf16.msra.mxu0 %v2331
    %2385 = vmatprep.subr.bf16.mxu0 %v2329
    %2386 = vmatpush1.bf16.msra.mxu0 %v2328
    %2387 = vmatprep.subr.bf16.mxu0 %v2326
    %2388 = vmatpush1.bf16.msra.mxu0 %v2325
    %2389 = vmatprep.subr.bf16.mxu0 0
    %2390 = vmatpush2.bf16.msra.mxu0 0
    %2391 = vmatprep.subr.bf16.mxu0 0
    %2392 = vmatpush2.bf16.msra.mxu0 0
    %2393 = vmatprep.subr.bf16.mxu0 0
    %2394 = vmatpush2.bf16.msra.mxu0 0
    %2395 = vmatprep.subr.bf16.mxu0 0
    %2396 = vmatpush2.bf16.msra.mxu0 0
    %2397 = vmatprep.subr.bf16.mxu0 0
    %2398 = vmatpush2.bf16.msra.mxu0 0
    %2399 = vmatprep.subr.bf16.mxu0 0
    %2400 = vmatpush2.bf16.msra.mxu0 0
    %2401 = vmatprep.subr.bf16.mxu0 0
    %2402 = vmatpush2.bf16.msra.mxu0 0
    %2403 = vmatprep.subr.bf16.mxu0 0
    %2404 = vmatpush2.bf16.msra.mxu0 0
    %2405 = vmatprep.mubr.bf16.mxu0 0
    %2406 = vmatmul.mubr.bf16.gmra.mxu0 0
    %v2407 = vpop.f32.mrf.mxu0
    %v2408 = vadd.f32 0.0, %v2407
    %v2409 = vpop.f32.mrf.mxu0
    %v2410 = vadd.f32 0.0, %v2409
    %v2411 = vpop.f32.mrf.mxu0
    %v2412 = vpop.f32.mrf.mxu0
    %2413 = vdwg.mxu0
    %2414 = vmatprep.subr.bf16.mxu0 0
    %2415 = vmatpush1.bf16.msra.mxu0 %v2348
    %2416 = vmatprep.subr.bf16.mxu0 0
    %2417 = vmatpush1.bf16.msra.mxu0 %v2345
    %2418 = vmatprep.subr.bf16.mxu0 0
    %2419 = vmatpush1.bf16.msra.mxu0 %v2342
    %2420 = vmatprep.subr.bf16.mxu0 0
    %2421 = vmatpush1.bf16.msra.mxu0 %v2339
    %2422 = vmatprep.subr.bf16.mxu0 0
    %2423 = vmatpush1.bf16.msra.mxu0 %v2336
    %2424 = vmatprep.subr.bf16.mxu0 0
    %2425 = vmatpush1.bf16.msra.mxu0 %v2333
    %2426 = vmatprep.subr.bf16.mxu0 0
    %2427 = vmatpush1.bf16.msra.mxu0 %v2330
    %2428 = vmatprep.subr.bf16.mxu0 0
    %2429 = vmatpush1.bf16.msra.mxu0 %v2327
    %2430 = vmatprep.subr.bf16.mxu0 0
    %2431 = vmatpush2.bf16.msra.mxu0 0
    %2432 = vmatprep.subr.bf16.mxu0 0
    %2433 = vmatpush2.bf16.msra.mxu0 0
    %2434 = vmatprep.subr.bf16.mxu0 0
    %2435 = vmatpush2.bf16.msra.mxu0 0
    %2436 = vmatprep.subr.bf16.mxu0 0
    %2437 = vmatpush2.bf16.msra.mxu0 0
    %2438 = vmatprep.subr.bf16.mxu0 0
    %2439 = vmatpush2.bf16.msra.mxu0 0
    %2440 = vmatprep.subr.bf16.mxu0 0
    %2441 = vmatpush2.bf16.msra.mxu0 0
    %2442 = vmatprep.subr.bf16.mxu0 0
    %2443 = vmatpush2.bf16.msra.mxu0 0
    %2444 = vmatprep.subr.bf16.mxu0 0
    %2445 = vmatpush2.bf16.msra.mxu0 0
    %2446 = vmatprep.mubr.bf16.mxu0 0
    %2447 = vmatmul.mubr.bf16.gmra.mxu0 0
    %v2448 = vpop.f32.mrf.mxu0
    %v2449 = vadd.f32 0.0, %v2448
    %v2450 = vpop.f32.mrf.mxu0
    %v2451 = vpop.f32.mrf.mxu0
    %v2452 = vpop.f32.mrf.mxu0
    %2453 = vdwg.mxu0
    %v2454 = vadd.f32 %v2242, %v2408
    %v2455 = vadd.f32 %v2243, %v2410
    %v2456 = vxor.u32 %v2454, 2147483648
    %v2457 = vxor.u32 %v2455, 2147483648
    %v2458 = vmul.f32 %v2456, 1.442695
    %v2459 = vpow.pop %v2458
    %v2460 = vmul.f32 %v2457, 1.442695
    %v2461 = vpow.pop %v2460
    %v2462 = vadd.f32 %v2459, 1.0
    %v2463 = vadd.f32 %v2461, 1.0
    %v2464 = vrcp.pop %v2462
    %v2465 = vmul.f32 1.0, %v2464
    %v2466 = vrcp.pop %v2463
    %v2467 = vmul.f32 1.0, %v2466
    %v2469 = vlaneseq
    %v2470 = vshrl.u32 %v2469, 7
    %v2471 = vsub.s32 0, %v2470
    %v2472 = vrot.slane %v2239, %v2471
    %v2474 = vadd.f32 %v2449, %v2472
    %v2475 = vmul.f32 %v2465, %v2474
    %v2476 = vadd.f32 %v2244, %v2475
    %v2477 = vtanh.pop %v2476
    %v2478 = vsub.f32 1.0, %v2467
    %v2479 = vmul.f32 %v2478, %v2477
    %v2480 = vmul.f32 %v2467, 0.0
    %v2481 = vadd.f32 %v2479, %v2480
    %v2482 = vld [vmem:[#allocation3] sm:$0xff]
    %v2483 = vadd.f32 %v2482, %v2481
    %2484 = vst [vmem:[#allocation3] sm:$0xff] %v2483
    %v2485 = vld [vmem:[%s851] sm:$0xff]
    %v2486 = vld [vmem:[%s851 + $0x8] sm:$0xf]
    %v2487 = vunpack.c.l.bf16 %v2485
    %v2488 = vunpack.c.h.bf16 %v2485
    %v2489 = vunpack.c.l.bf16 %v2486
    %v2490 = vpack.c.bf16 %v2481, %v2481
    %2491 = vmatprep.subr.bf16.mxu0 %v2347
    %2492 = vmatpush1.bf16.msra.mxu0 %v2346
    %2493 = vmatprep.subr.bf16.mxu0 %v2344
    %2494 = vmatpush1.bf16.msra.mxu0 %v2343
    %2495 = vmatprep.subr.bf16.mxu0 %v2341
    %2496 = vmatpush1.bf16.msra.mxu0 %v2340
    %2497 = vmatprep.subr.bf16.mxu0 %v2338
    %2498 = vmatpush1.bf16.msra.mxu0 %v2337
    %2499 = vmatprep.subr.bf16.mxu0 %v2335
    %2500 = vmatpush1.bf16.msra.mxu0 %v2334
    %2501 = vmatprep.subr.bf16.mxu0 %v2332
    %2502 = vmatpush1.bf16.msra.mxu0 %v2331
    %2503 = vmatprep.subr.bf16.mxu0 %v2329
    %2504 = vmatpush1.bf16.msra.mxu0 %v2328
    %2505 = vmatprep.subr.bf16.mxu0 %v2326
    %2506 = vmatpush1.bf16.msra.mxu0 %v2325
    %2507 = vmatprep.subr.bf16.mxu0 0
    %2508 = vmatpush2.bf16.msra.mxu0 0
    %2509 = vmatprep.subr.bf16.mxu0 0
    %2510 = vmatpush2.bf16.msra.mxu0 0
    %2511 = vmatprep.subr.bf16.mxu0 0
    %2512 = vmatpush2.bf16.msra.mxu0 0
    %2513 = vmatprep.subr.bf16.mxu0 0
    %2514 = vmatpush2.bf16.msra.mxu0 0
    %2515 = vmatprep.subr.bf16.mxu0 0
    %2516 = vmatpush2.bf16.msra.mxu0 0
    %2517 = vmatprep.subr.bf16.mxu0 0
    %2518 = vmatpush2.bf16.msra.mxu0 0
    %2519 = vmatprep.subr.bf16.mxu0 0
    %2520 = vmatpush2.bf16.msra.mxu0 0
    %2521 = vmatprep.subr.bf16.mxu0 0
    %2522 = vmatpush2.bf16.msra.mxu0 0
    %2523 = vmatprep.mubr.bf16.mxu0 0
    %2524 = vmatmul.mubr.bf16.gmra.mxu0 %v2490
    %v2525 = vpop.f32.mrf.mxu0
    %v2526 = vadd.f32 0.0, %v2525
    %v2527 = vpop.f32.mrf.mxu0
    %v2528 = vadd.f32 0.0, %v2527
    %v2529 = vpop.f32.mrf.mxu0
    %v2530 = vpop.f32.mrf.mxu0
    %2531 = vdwg.mxu0
    %2532 = vmatprep.subr.bf16.mxu0 0
    %2533 = vmatpush1.bf16.msra.mxu0 %v2348
    %2534 = vmatprep.subr.bf16.mxu0 0
    %2535 = vmatpush1.bf16.msra.mxu0 %v2345
    %2536 = vmatprep.subr.bf16.mxu0 0
    %2537 = vmatpush1.bf16.msra.mxu0 %v2342
    %2538 = vmatprep.subr.bf16.mxu0 0
    %2539 = vmatpush1.bf16.msra.mxu0 %v2339
    %2540 = vmatprep.subr.bf16.mxu0 0
    %2541 = vmatpush1.bf16.msra.mxu0 %v2336
    %2542 = vmatprep.subr.bf16.mxu0 0
    %2543 = vmatpush1.bf16.msra.mxu0 %v2333
    %2544 = vmatprep.subr.bf16.mxu0 0
    %2545 = vmatpush1.bf16.msra.mxu0 %v2330
    %2546 = vmatprep.subr.bf16.mxu0 0
    %2547 = vmatpush1.bf16.msra.mxu0 %v2327
    %2548 = vmatprep.subr.bf16.mxu0 0
    %2549 = vmatpush2.bf16.msra.mxu0 0
    %2550 = vmatprep.subr.bf16.mxu0 0
    %2551 = vmatpush2.bf16.msra.mxu0 0
    %2552 = vmatprep.subr.bf16.mxu0 0
    %2553 = vmatpush2.bf16.msra.mxu0 0
    %2554 = vmatprep.subr.bf16.mxu0 0
    %2555 = vmatpush2.bf16.msra.mxu0 0
    %2556 = vmatprep.subr.bf16.mxu0 0
    %2557 = vmatpush2.bf16.msra.mxu0 0
    %2558 = vmatprep.subr.bf16.mxu0 0
    %2559 = vmatpush2.bf16.msra.mxu0 0
    %2560 = vmatprep.subr.bf16.mxu0 0
    %2561 = vmatpush2.bf16.msra.mxu0 0
    %2562 = vmatprep.subr.bf16.mxu0 0
    %2563 = vmatpush2.bf16.msra.mxu0 0
    %2564 = vmatprep.mubr.bf16.mxu0 0
    %2565 = vmatmul.mubr.bf16.gmra.mxu0 %v2490
    %v2566 = vpop.f32.mrf.mxu0
    %v2567 = vadd.f32 0.0, %v2566
    %v2568 = vpop.f32.mrf.mxu0
    %v2569 = vpop.f32.mrf.mxu0
    %v2570 = vpop.f32.mrf.mxu0
    %2571 = vdwg.mxu0
    %v2572 = vadd.f32 %v2487, %v2526
    %v2573 = vadd.f32 %v2488, %v2528
    %v2574 = vxor.u32 %v2572, 2147483648
    %v2575 = vxor.u32 %v2573, 2147483648
    %v2576 = vmul.f32 %v2574, 1.442695
    %v2577 = vpow.pop %v2576
    %v2578 = vmul.f32 %v2575, 1.442695
    %v2579 = vpow.pop %v2578
    %v2580 = vadd.f32 %v2577, 1.0
    %v2581 = vadd.f32 %v2579, 1.0
    %v2582 = vrcp.pop %v2580
    %v2583 = vmul.f32 1.0, %v2582
    %v2584 = vrcp.pop %v2581
    %v2585 = vmul.f32 1.0, %v2584
    %v2586 = vadd.f32 %v2567, %v2472
    %v2587 = vmul.f32 %v2583, %v2586
    %v2588 = vadd.f32 %v2489, %v2587
    %v2589 = vtanh.pop %v2588
    %v2590 = vsub.f32 1.0, %v2585
    %v2591 = vmul.f32 %v2590, %v2589
    %v2592 = vmul.f32 %v2585, %v2481
    %v2593 = vadd.f32 %v2591, %v2592
    %v2594 = vld [vmem:[%s961] sm:$0xff]
    %v2595 = vadd.f32 %v2594, %v2593
    %2596 = vst [vmem:[%s961] sm:$0xff] %v2595
    %v2597 = vld [vmem:[%s965] sm:$0xff]
    %v2598 = vld [vmem:[%s965 + $0x8] sm:$0xf]
    %v2599 = vunpack.c.l.bf16 %v2597
    %v2600 = vunpack.c.h.bf16 %v2597
    %v2601 = vunpack.c.l.bf16 %v2598
    %v2602 = vpack.c.bf16 %v2593, %v2593
    %2603 = vmatprep.subr.bf16.mxu0 %v2347
    %2604 = vmatpush1.bf16.msra.mxu0 %v2346
    %2605 = vmatprep.subr.bf16.mxu0 %v2344
    %2606 = vmatpush1.bf16.msra.mxu0 %v2343
    %2607 = vmatprep.subr.bf16.mxu0 %v2341
    %2608 = vmatpush1.bf16.msra.mxu0 %v2340
    %2609 = vmatprep.subr.bf16.mxu0 %v2338
    %2610 = vmatpush1.bf16.msra.mxu0 %v2337
    %2611 = vmatprep.subr.bf16.mxu0 %v2335
    %2612 = vmatpush1.bf16.msra.mxu0 %v2334
    %2613 = vmatprep.subr.bf16.mxu0 %v2332
    %2614 = vmatpush1.bf16.msra.mxu0 %v2331
    %2615 = vmatprep.subr.bf16.mxu0 %v2329
    %2616 = vmatpush1.bf16.msra.mxu0 %v2328
    %2617 = vmatprep.subr.bf16.mxu0 %v2326
    %2618 = vmatpush1.bf16.msra.mxu0 %v2325
    %2619 = vmatprep.subr.bf16.mxu0 0
    %2620 = vmatpush2.bf16.msra.mxu0 0
    %2621 = vmatprep.subr.bf16.mxu0 0
    %2622 = vmatpush2.bf16.msra.mxu0 0
    %2623 = vmatprep.subr.bf16.mxu0 0
    %2624 = vmatpush2.bf16.msra.mxu0 0
    %2625 = vmatprep.subr.bf16.mxu0 0
    %2626 = vmatpush2.bf16.msra.mxu0 0
    %2627 = vmatprep.subr.bf16.mxu0 0
    %2628 = vmatpush2.bf16.msra.mxu0 0
    %2629 = vmatprep.subr.bf16.mxu0 0
    %2630 = vmatpush2.bf16.msra.mxu0 0
    %2631 = vmatprep.subr.bf16.mxu0 0
    %2632 = vmatpush2.bf16.msra.mxu0 0
    %2633 = vmatprep.subr.bf16.mxu0 0
    %2634 = vmatpush2.bf16.msra.mxu0 0
    %2635 = vmatprep.mubr.bf16.mxu0 0
    %2636 = vmatmul.mubr.bf16.gmra.mxu0 %v2602
    %v2637 = vpop.f32.mrf.mxu0
    %v2638 = vadd.f32 0.0, %v2637
    %v2639 = vpop.f32.mrf.mxu0
    %v2640 = vadd.f32 0.0, %v2639
    %v2641 = vpop.f32.mrf.mxu0
    %v2642 = vpop.f32.mrf.mxu0
    %2643 = vdwg.mxu0
    %2644 = vmatprep.subr.bf16.mxu0 0
    %2645 = vmatpush1.bf16.msra.mxu0 %v2348
    %2646 = vmatprep.subr.bf16.mxu0 0
    %2647 = vmatpush1.bf16.msra.mxu0 %v2345
    %2648 = vmatprep.subr.bf16.mxu0 0
    %2649 = vmatpush1.bf16.msra.mxu0 %v2342
    %2650 = vmatprep.subr.bf16.mxu0 0
    %2651 = vmatpush1.bf16.msra.mxu0 %v2339
    %2652 = vmatprep.subr.bf16.mxu0 0
    %2653 = vmatpush1.bf16.msra.mxu0 %v2336
    %2654 = vmatprep.subr.bf16.mxu0 0
    %2655 = vmatpush1.bf16.msra.mxu0 %v2333
    %2656 = vmatprep.subr.bf16.mxu0 0
    %2657 = vmatpush1.bf16.msra.mxu0 %v2330
    %2658 = vmatprep.subr.bf16.mxu0 0
    %2659 = vmatpush1.bf16.msra.mxu0 %v2327
    %2660 = vmatprep.subr.bf16.mxu0 0
    %2661 = vmatpush2.bf16.msra.mxu0 0
    %2662 = vmatprep.subr.bf16.mxu0 0
    %2663 = vmatpush2.bf16.msra.mxu0 0
    %2664 = vmatprep.subr.bf16.mxu0 0
    %2665 = vmatpush2.bf16.msra.mxu0 0
    %2666 = vmatprep.subr.bf16.mxu0 0
    %2667 = vmatpush2.bf16.msra.mxu0 0
    %2668 = vmatprep.subr.bf16.mxu0 0
    %2669 = vmatpush2.bf16.msra.mxu0 0
    %2670 = vmatprep.subr.bf16.mxu0 0
    %2671 = vmatpush2.bf16.msra.mxu0 0
    %2672 = vmatprep.subr.bf16.mxu0 0
    %2673 = vmatpush2.bf16.msra.mxu0 0
    %2674 = vmatprep.subr.bf16.mxu0 0
    %2675 = vmatpush2.bf16.msra.mxu0 0
    %2676 = vmatprep.mubr.bf16.mxu0 0
    %2677 = vmatmul.mubr.bf16.gmra.mxu0 %v2602
    %v2678 = vpop.f32.mrf.mxu0
    %v2679 = vadd.f32 0.0, %v2678
    %v2680 = vpop.f32.mrf.mxu0
    %v2681 = vpop.f32.mrf.mxu0
    %v2682 = vpop.f32.mrf.mxu0
    %2683 = vdwg.mxu0
    %v2684 = vadd.f32 %v2599, %v2638
    %v2685 = vadd.f32 %v2600, %v2640
    %v2686 = vxor.u32 %v2684, 2147483648
    %v2687 = vxor.u32 %v2685, 2147483648
    %v2688 = vmul.f32 %v2686, 1.442695
    %v2689 = vpow.pop %v2688
    %v2690 = vmul.f32 %v2687, 1.442695
    %v2691 = vpow.pop %v2690
    %v2692 = vadd.f32 %v2689, 1.0
    %v2693 = vadd.f32 %v2691, 1.0
    %v2694 = vrcp.pop %v2692
    %v2695 = vmul.f32 1.0, %v2694
    %v2696 = vrcp.pop %v2693
    %v2697 = vmul.f32 1.0, %v2696
    %v2698 = vadd.f32 %v2679, %v2472
    %v2699 = vmul.f32 %v2695, %v2698
    %v2700 = vadd.f32 %v2601, %v2699
    %v2701 = vtanh.pop %v2700
    %v2702 = vsub.f32 1.0, %v2697
    %v2703 = vmul.f32 %v2702, %v2701
    %v2704 = vmul.f32 %v2697, %v2593
    %v2705 = vadd.f32 %v2703, %v2704
    %v2706 = vld [vmem:[%s1075] sm:$0xff]
    %v2707 = vadd.f32 %v2706, %v2705
    %2708 = vst [vmem:[%s1075] sm:$0xff] %v2707
    %v2709 = vld [vmem:[%s1079] sm:$0xff]
    %v2710 = vld [vmem:[%s1079 + $0x8] sm:$0xf]
    %v2711 = vunpack.c.l.bf16 %v2709
    %v2712 = vunpack.c.h.bf16 %v2709
    %v2713 = vunpack.c.l.bf16 %v2710
    %v2714 = vpack.c.bf16 %v2705, %v2705
    %2715 = vmatprep.subr.bf16.mxu0 %v2347
    %2716 = vmatpush1.bf16.msra.mxu0 %v2346
    %2717 = vmatprep.subr.bf16.mxu0 %v2344
    %2718 = vmatpush1.bf16.msra.mxu0 %v2343
    %2719 = vmatprep.subr.bf16.mxu0 %v2341
    %2720 = vmatpush1.bf16.msra.mxu0 %v2340
    %2721 = vmatprep.subr.bf16.mxu0 %v2338
    %2722 = vmatpush1.bf16.msra.mxu0 %v2337
    %2723 = vmatprep.subr.bf16.mxu0 %v2335
    %2724 = vmatpush1.bf16.msra.mxu0 %v2334
    %2725 = vmatprep.subr.bf16.mxu0 %v2332
    %2726 = vmatpush1.bf16.msra.mxu0 %v2331
    %2727 = vmatprep.subr.bf16.mxu0 %v2329
    %2728 = vmatpush1.bf16.msra.mxu0 %v2328
    %2729 = vmatprep.subr.bf16.mxu0 %v2326
    %2730 = vmatpush1.bf16.msra.mxu0 %v2325
    %2731 = vmatprep.subr.bf16.mxu0 0
    %2732 = vmatpush2.bf16.msra.mxu0 0
    %2733 = vmatprep.subr.bf16.mxu0 0
    %2734 = vmatpush2.bf16.msra.mxu0 0
    %2735 = vmatprep.subr.bf16.mxu0 0
    %2736 = vmatpush2.bf16.msra.mxu0 0
    %2737 = vmatprep.subr.bf16.mxu0 0
    %2738 = vmatpush2.bf16.msra.mxu0 0
    %2739 = vmatprep.subr.bf16.mxu0 0
    %2740 = vmatpush2.bf16.msra.mxu0 0
    %2741 = vmatprep.subr.bf16.mxu0 0
    %2742 = vmatpush2.bf16.msra.mxu0 0
    %2743 = vmatprep.subr.bf16.mxu0 0
    %2744 = vmatpush2.bf16.msra.mxu0 0
    %2745 = vmatprep.subr.bf16.mxu0 0
    %2746 = vmatpush2.bf16.msra.mxu0 0
    %2747 = vmatprep.mubr.bf16.mxu0 0
    %2748 = vmatmul.mubr.bf16.gmra.mxu0 %v2714
    %v2749 = vpop.f32.mrf.mxu0
    %v2750 = vadd.f32 0.0, %v2749
    %v2751 = vpop.f32.mrf.mxu0
    %v2752 = vadd.f32 0.0, %v2751
    %v2753 = vpop.f32.mrf.mxu0
    %v2754 = vpop.f32.mrf.mxu0
    %2755 = vdwg.mxu0
    %2756 = vmatprep.subr.bf16.mxu0 0
    %2757 = vmatpush1.bf16.msra.mxu0 %v2348
    %2758 = vmatprep.subr.bf16.mxu0 0
    %2759 = vmatpush1.bf16.msra.mxu0 %v2345
    %2760 = vmatprep.subr.bf16.mxu0 0
    %2761 = vmatpush1.bf16.msra.mxu0 %v2342
    %2762 = vmatprep.subr.bf16.mxu0 0
    %2763 = vmatpush1.bf16.msra.mxu0 %v2339
    %2764 = vmatprep.subr.bf16.mxu0 0
    %2765 = vmatpush1.bf16.msra.mxu0 %v2336
    %2766 = vmatprep.subr.bf16.mxu0 0
    %2767 = vmatpush1.bf16.msra.mxu0 %v2333
    %2768 = vmatprep.subr.bf16.mxu0 0
    %2769 = vmatpush1.bf16.msra.mxu0 %v2330
    %2770 = vmatprep.subr.bf16.mxu0 0
    %2771 = vmatpush1.bf16.msra.mxu0 %v2327
    %2772 = vmatprep.subr.bf16.mxu0 0
    %2773 = vmatpush2.bf16.msra.mxu0 0
    %2774 = vmatprep.subr.bf16.mxu0 0
    %2775 = vmatpush2.bf16.msra.mxu0 0
    %2776 = vmatprep.subr.bf16.mxu0 0
    %2777 = vmatpush2.bf16.msra.mxu0 0
    %2778 = vmatprep.subr.bf16.mxu0 0
    %2779 = vmatpush2.bf16.msra.mxu0 0
    %2780 = vmatprep.subr.bf16.mxu0 0
    %2781 = vmatpush2.bf16.msra.mxu0 0
    %2782 = vmatprep.subr.bf16.mxu0 0
    %2783 = vmatpush2.bf16.msra.mxu0 0
    %2784 = vmatprep.subr.bf16.mxu0 0
    %2785 = vmatpush2.bf16.msra.mxu0 0
    %2786 = vmatprep.subr.bf16.mxu0 0
    %2787 = vmatpush2.bf16.msra.mxu0 0
    %2788 = vmatprep.mubr.bf16.mxu0 0
    %2789 = vmatmul.mubr.bf16.gmra.mxu0 %v2714
    %v2790 = vpop.f32.mrf.mxu0
    %v2791 = vadd.f32 0.0, %v2790
    %v2792 = vpop.f32.mrf.mxu0
    %v2793 = vpop.f32.mrf.mxu0
    %v2794 = vpop.f32.mrf.mxu0
    %2795 = vdwg.mxu0
    %v2796 = vadd.f32 %v2711, %v2750
    %v2797 = vadd.f32 %v2712, %v2752
    %v2798 = vxor.u32 %v2796, 2147483648
    %v2799 = vxor.u32 %v2797, 2147483648
    %v2800 = vmul.f32 %v2798, 1.442695
    %v2801 = vpow.pop %v2800
    %v2802 = vmul.f32 %v2799, 1.442695
    %v2803 = vpow.pop %v2802
    %v2804 = vadd.f32 %v2801, 1.0
    %v2805 = vadd.f32 %v2803, 1.0
    %v2806 = vrcp.pop %v2804
    %v2807 = vmul.f32 1.0, %v2806
    %v2808 = vrcp.pop %v2805
    %v2809 = vmul.f32 1.0, %v2808
    %v2810 = vadd.f32 %v2791, %v2472
    %v2811 = vmul.f32 %v2807, %v2810
    %v2812 = vadd.f32 %v2713, %v2811
    %v2813 = vtanh.pop %v2812
    %v2814 = vsub.f32 1.0, %v2809
    %v2815 = vmul.f32 %v2814, %v2813
    %v2816 = vmul.f32 %v2809, %v2705
    %v2817 = vadd.f32 %v2815, %v2816
    %v2818 = vld [vmem:[%s1189] sm:$0xff]
    %v2819 = vadd.f32 %v2818, %v2817
    %2820 = vst [vmem:[%s1189] sm:$0xff] %v2819
    %v2821 = vld [vmem:[%s1193] sm:$0xff]
    %v2822 = vld [vmem:[%s1193 + $0x8] sm:$0xf]
    %v2823 = vunpack.c.l.bf16 %v2821
    %v2824 = vunpack.c.h.bf16 %v2821
    %v2825 = vunpack.c.l.bf16 %v2822
    %v2826 = vpack.c.bf16 %v2817, %v2817
    %2827 = vmatprep.subr.bf16.mxu0 %v2347
    %2828 = vmatpush1.bf16.msra.mxu0 %v2346
    %2829 = vmatprep.subr.bf16.mxu0 %v2344
    %2830 = vmatpush1.bf16.msra.mxu0 %v2343
    %2831 = vmatprep.subr.bf16.mxu0 %v2341
    %2832 = vmatpush1.bf16.msra.mxu0 %v2340
    %2833 = vmatprep.subr.bf16.mxu0 %v2338
    %2834 = vmatpush1.bf16.msra.mxu0 %v2337
    %2835 = vmatprep.subr.bf16.mxu0 %v2335
    %2836 = vmatpush1.bf16.msra.mxu0 %v2334
    %2837 = vmatprep.subr.bf16.mxu0 %v2332
    %2838 = vmatpush1.bf16.msra.mxu0 %v2331
    %2839 = vmatprep.subr.bf16.mxu0 %v2329
    %2840 = vmatpush1.bf16.msra.mxu0 %v2328
    %2841 = vmatprep.subr.bf16.mxu0 %v2326
    %2842 = vmatpush1.bf16.msra.mxu0 %v2325
    %2843 = vmatprep.subr.bf16.mxu0 0
    %2844 = vmatpush2.bf16.msra.mxu0 0
    %2845 = vmatprep.subr.bf16.mxu0 0
    %2846 = vmatpush2.bf16.msra.mxu0 0
    %2847 = vmatprep.subr.bf16.mxu0 0
    %2848 = vmatpush2.bf16.msra.mxu0 0
    %2849 = vmatprep.subr.bf16.mxu0 0
    %2850 = vmatpush2.bf16.msra.mxu0 0
    %2851 = vmatprep.subr.bf16.mxu0 0
    %2852 = vmatpush2.bf16.msra.mxu0 0
    %2853 = vmatprep.subr.bf16.mxu0 0
    %2854 = vmatpush2.bf16.msra.mxu0 0
    %2855 = vmatprep.subr.bf16.mxu0 0
    %2856 = vmatpush2.bf16.msra.mxu0 0
    %2857 = vmatprep.subr.bf16.mxu0 0
    %2858 = vmatpush2.bf16.msra.mxu0 0
    %2859 = vmatprep.mubr.bf16.mxu0 0
    %2860 = vmatmul.mubr.bf16.gmra.mxu0 %v2826
    %v2861 = vpop.f32.mrf.mxu0
    %v2862 = vadd.f32 0.0, %v2861
    %v2863 = vpop.f32.mrf.mxu0
    %v2864 = vadd.f32 0.0, %v2863
    %v2865 = vpop.f32.mrf.mxu0
    %v2866 = vpop.f32.mrf.mxu0
    %2867 = vdwg.mxu0
    %2868 = vmatprep.subr.bf16.mxu0 0
    %2869 = vmatpush1.bf16.msra.mxu0 %v2348
    %2870 = vmatprep.subr.bf16.mxu0 0
    %2871 = vmatpush1.bf16.msra.mxu0 %v2345
    %2872 = vmatprep.subr.bf16.mxu0 0
    %2873 = vmatpush1.bf16.msra.mxu0 %v2342
    %2874 = vmatprep.subr.bf16.mxu0 0
    %2875 = vmatpush1.bf16.msra.mxu0 %v2339
    %2876 = vmatprep.subr.bf16.mxu0 0
    %2877 = vmatpush1.bf16.msra.mxu0 %v2336
    %2878 = vmatprep.subr.bf16.mxu0 0
    %2879 = vmatpush1.bf16.msra.mxu0 %v2333
    %2880 = vmatprep.subr.bf16.mxu0 0
    %2881 = vmatpush1.bf16.msra.mxu0 %v2330
    %2882 = vmatprep.subr.bf16.mxu0 0
    %2883 = vmatpush1.bf16.msra.mxu0 %v2327
    %2884 = vmatprep.subr.bf16.mxu0 0
    %2885 = vmatpush2.bf16.msra.mxu0 0
    %2886 = vmatprep.subr.bf16.mxu0 0
    %2887 = vmatpush2.bf16.msra.mxu0 0
    %2888 = vmatprep.subr.bf16.mxu0 0
    %2889 = vmatpush2.bf16.msra.mxu0 0
    %2890 = vmatprep.subr.bf16.mxu0 0
    %2891 = vmatpush2.bf16.msra.mxu0 0
    %2892 = vmatprep.subr.bf16.mxu0 0
    %2893 = vmatpush2.bf16.msra.mxu0 0
    %2894 = vmatprep.subr.bf16.mxu0 0
    %2895 = vmatpush2.bf16.msra.mxu0 0
    %2896 = vmatprep.subr.bf16.mxu0 0
    %2897 = vmatpush2.bf16.msra.mxu0 0
    %2898 = vmatprep.subr.bf16.mxu0 0
    %2899 = vmatpush2.bf16.msra.mxu0 0
    %2900 = vmatprep.mubr.bf16.mxu0 0
    %2901 = vmatmul.mubr.bf16.gmra.mxu0 %v2826
    %v2902 = vpop.f32.mrf.mxu0
    %v2903 = vadd.f32 0.0, %v2902
    %v2904 = vpop.f32.mrf.mxu0
    %v2905 = vpop.f32.mrf.mxu0
    %v2906 = vpop.f32.mrf.mxu0
    %2907 = vdwg.mxu0
    %v2908 = vadd.f32 %v2823, %v2862
    %v2909 = vadd.f32 %v2824, %v2864
    %v2910 = vxor.u32 %v2908, 2147483648
    %v2911 = vxor.u32 %v2909, 2147483648
    %v2912 = vmul.f32 %v2910, 1.442695
    %v2913 = vpow.pop %v2912
    %v2914 = vmul.f32 %v2911, 1.442695
    %v2915 = vpow.pop %v2914
    %v2916 = vadd.f32 %v2913, 1.0
    %v2917 = vadd.f32 %v2915, 1.0
    %v2918 = vrcp.pop %v2916
    %v2919 = vmul.f32 1.0, %v2918
    %v2920 = vrcp.pop %v2917
    %v2921 = vmul.f32 1.0, %v2920
    %v2922 = vadd.f32 %v2903, %v2472
    %v2923 = vmul.f32 %v2919, %v2922
    %v2924 = vadd.f32 %v2825, %v2923
    %v2925 = vtanh.pop %v2924
    %v2926 = vsub.f32 1.0, %v2921
    %v2927 = vmul.f32 %v2926, %v2925
    %v2928 = vmul.f32 %v2921, %v2817
    %v2929 = vadd.f32 %v2927, %v2928
    %v2930 = vld [vmem:[%s1191] sm:$0xff]
    %v2931 = vadd.f32 %v2930, %v2929
    %2932 = vst [vmem:[%s1191] sm:$0xff] %v2931
    %v2933 = vld [vmem:[%s1305] sm:$0xff]
    %v2934 = vld [vmem:[%s1305 + $0x8] sm:$0xf]
    %v2935 = vunpack.c.l.bf16 %v2933
    %v2936 = vunpack.c.h.bf16 %v2933
    %v2937 = vunpack.c.l.bf16 %v2934
    %v2938 = vpack.c.bf16 %v2929, %v2929
    %2939 = vmatprep.subr.bf16.mxu0 %v2347
    %2940 = vmatpush1.bf16.msra.mxu0 %v2346
    %2941 = vmatprep.subr.bf16.mxu0 %v2344
    %2942 = vmatpush1.bf16.msra.mxu0 %v2343
    %2943 = vmatprep.subr.bf16.mxu0 %v2341
    %2944 = vmatpush1.bf16.msra.mxu0 %v2340
    %2945 = vmatprep.subr.bf16.mxu0 %v2338
    %2946 = vmatpush1.bf16.msra.mxu0 %v2337
    %2947 = vmatprep.subr.bf16.mxu0 %v2335
    %2948 = vmatpush1.bf16.msra.mxu0 %v2334
    %2949 = vmatprep.subr.bf16.mxu0 %v2332
    %2950 = vmatpush1.bf16.msra.mxu0 %v2331
    %2951 = vmatprep.subr.bf16.mxu0 %v2329
    %2952 = vmatpush1.bf16.msra.mxu0 %v2328
    %2953 = vmatprep.subr.bf16.mxu0 %v2326
    %2954 = vmatpush1.bf16.msra.mxu0 %v2325
    %2955 = vmatprep.subr.bf16.mxu0 0
    %2956 = vmatpush2.bf16.msra.mxu0 0
    %2957 = vmatprep.subr.bf16.mxu0 0
    %2958 = vmatpush2.bf16.msra.mxu0 0
    %2959 = vmatprep.subr.bf16.mxu0 0
    %2960 = vmatpush2.bf16.msra.mxu0 0
    %2961 = vmatprep.subr.bf16.mxu0 0
    %2962 = vmatpush2.bf16.msra.mxu0 0
    %2963 = vmatprep.subr.bf16.mxu0 0
    %2964 = vmatpush2.bf16.msra.mxu0 0
    %2965 = vmatprep.subr.bf16.mxu0 0
    %2966 = vmatpush2.bf16.msra.mxu0 0
    %2967 = vmatprep.subr.bf16.mxu0 0
    %2968 = vmatpush2.bf16.msra.mxu0 0
    %2969 = vmatprep.subr.bf16.mxu0 0
    %2970 = vmatpush2.bf16.msra.mxu0 0
    %2971 = vmatprep.mubr.bf16.mxu0 0
    %2972 = vmatmul.mubr.bf16.gmra.mxu0 %v2938
    %v2973 = vpop.f32.mrf.mxu0
    %v2974 = vadd.f32 0.0, %v2973
    %v2975 = vpop.f32.mrf.mxu0
    %v2976 = vadd.f32 0.0, %v2975
    %v2977 = vpop.f32.mrf.mxu0
    %v2978 = vpop.f32.mrf.mxu0
    %2979 = vdwg.mxu0
    %2980 = vmatprep.subr.bf16.mxu0 0
    %2981 = vmatpush1.bf16.msra.mxu0 %v2348
    %2982 = vmatprep.subr.bf16.mxu0 0
    %2983 = vmatpush1.bf16.msra.mxu0 %v2345
    %2984 = vmatprep.subr.bf16.mxu0 0
    %2985 = vmatpush1.bf16.msra.mxu0 %v2342
    %2986 = vmatprep.subr.bf16.mxu0 0
    %2987 = vmatpush1.bf16.msra.mxu0 %v2339
    %2988 = vmatprep.subr.bf16.mxu0 0
    %2989 = vmatpush1.bf16.msra.mxu0 %v2336
    %2990 = vmatprep.subr.bf16.mxu0 0
    %2991 = vmatpush1.bf16.msra.mxu0 %v2333
    %2992 = vmatprep.subr.bf16.mxu0 0
    %2993 = vmatpush1.bf16.msra.mxu0 %v2330
    %2994 = vmatprep.subr.bf16.mxu0 0
    %2995 = vmatpush1.bf16.msra.mxu0 %v2327
    %2996 = vmatprep.subr.bf16.mxu0 0
    %2997 = vmatpush2.bf16.msra.mxu0 0
    %2998 = vmatprep.subr.bf16.mxu0 0
    %2999 = vmatpush2.bf16.msra.mxu0 0
    %3000 = vmatprep.subr.bf16.mxu0 0
    %3001 = vmatpush2.bf16.msra.mxu0 0
    %3002 = vmatprep.subr.bf16.mxu0 0
    %3003 = vmatpush2.bf16.msra.mxu0 0
    %3004 = vmatprep.subr.bf16.mxu0 0
    %3005 = vmatpush2.bf16.msra.mxu0 0
    %3006 = vmatprep.subr.bf16.mxu0 0
    %3007 = vmatpush2.bf16.msra.mxu0 0
    %3008 = vmatprep.subr.bf16.mxu0 0
    %3009 = vmatpush2.bf16.msra.mxu0 0
    %3010 = vmatprep.subr.bf16.mxu0 0
    %3011 = vmatpush2.bf16.msra.mxu0 0
    %3012 = vmatprep.mubr.bf16.mxu0 0
    %3013 = vmatmul.mubr.bf16.gmra.mxu0 %v2938
    %v3014 = vpop.f32.mrf.mxu0
    %v3015 = vadd.f32 0.0, %v3014
    %v3016 = vpop.f32.mrf.mxu0
    %v3017 = vpop.f32.mrf.mxu0
    %v3018 = vpop.f32.mrf.mxu0
    %3019 = vdwg.mxu0
    %v3020 = vadd.f32 %v2935, %v2974
    %v3021 = vadd.f32 %v2936, %v2976
    %v3022 = vxor.u32 %v3020, 2147483648
    %v3023 = vxor.u32 %v3021, 2147483648
    %v3024 = vmul.f32 %v3022, 1.442695
    %v3025 = vpow.pop %v3024
    %v3026 = vmul.f32 %v3023, 1.442695
    %v3027 = vpow.pop %v3026
    %v3028 = vadd.f32 %v3025, 1.0
    %v3029 = vadd.f32 %v3027, 1.0
    %v3030 = vrcp.pop %v3028
    %v3031 = vmul.f32 1.0, %v3030
    %v3032 = vrcp.pop %v3029
    %v3033 = vmul.f32 1.0, %v3032
    %v3034 = vadd.f32 %v3015, %v2472
    %v3035 = vmul.f32 %v3031, %v3034
    %v3036 = vadd.f32 %v2937, %v3035
    %v3037 = vtanh.pop %v3036
    %v3038 = vsub.f32 1.0, %v3033
    %v3039 = vmul.f32 %v3038, %v3037
    %v3040 = vmul.f32 %v3033, %v2929
    %v3041 = vadd.f32 %v3039, %v3040
    %v3042 = vld [vmem:[%s1077] sm:$0xff]
    %v3043 = vadd.f32 %v3042, %v3041
    %3044 = vst [vmem:[%s1077] sm:$0xff] %v3043
    %v3045 = vld [vmem:[%s1417] sm:$0xff]
    %v3046 = vld [vmem:[%s1417 + $0x8] sm:$0xf]
    %v3047 = vunpack.c.l.bf16 %v3045
    %v3048 = vunpack.c.h.bf16 %v3045
    %v3049 = vunpack.c.l.bf16 %v3046
    %v3050 = vpack.c.bf16 %v3041, %v3041
    %3051 = vmatprep.subr.bf16.mxu0 %v2347
    %3052 = vmatpush1.bf16.msra.mxu0 %v2346
    %3053 = vmatprep.subr.bf16.mxu0 %v2344
    %3054 = vmatpush1.bf16.msra.mxu0 %v2343
    %3055 = vmatprep.subr.bf16.mxu0 %v2341
    %3056 = vmatpush1.bf16.msra.mxu0 %v2340
    %3057 = vmatprep.subr.bf16.mxu0 %v2338
    %3058 = vmatpush1.bf16.msra.mxu0 %v2337
    %3059 = vmatprep.subr.bf16.mxu0 %v2335
    %3060 = vmatpush1.bf16.msra.mxu0 %v2334
    %3061 = vmatprep.subr.bf16.mxu0 %v2332
    %3062 = vmatpush1.bf16.msra.mxu0 %v2331
    %3063 = vmatprep.subr.bf16.mxu0 %v2329
    %3064 = vmatpush1.bf16.msra.mxu0 %v2328
    %3065 = vmatprep.subr.bf16.mxu0 %v2326
    %3066 = vmatpush1.bf16.msra.mxu0 %v2325
    %3067 = vmatprep.subr.bf16.mxu0 0
    %3068 = vmatpush2.bf16.msra.mxu0 0
    %3069 = vmatprep.subr.bf16.mxu0 0
    %3070 = vmatpush2.bf16.msra.mxu0 0
    %3071 = vmatprep.subr.bf16.mxu0 0
    %3072 = vmatpush2.bf16.msra.mxu0 0
    %3073 = vmatprep.subr.bf16.mxu0 0
    %3074 = vmatpush2.bf16.msra.mxu0 0
    %3075 = vmatprep.subr.bf16.mxu0 0
    %3076 = vmatpush2.bf16.msra.mxu0 0
    %3077 = vmatprep.subr.bf16.mxu0 0
    %3078 = vmatpush2.bf16.msra.mxu0 0
    %3079 = vmatprep.subr.bf16.mxu0 0
    %3080 = vmatpush2.bf16.msra.mxu0 0
    %3081 = vmatprep.subr.bf16.mxu0 0
    %3082 = vmatpush2.bf16.msra.mxu0 0
    %3083 = vmatprep.mubr.bf16.mxu0 0
    %3084 = vmatmul.mubr.bf16.gmra.mxu0 %v3050
    %v3085 = vpop.f32.mrf.mxu0
    %v3086 = vadd.f32 0.0, %v3085
    %v3087 = vpop.f32.mrf.mxu0
    %v3088 = vadd.f32 0.0, %v3087
    %v3089 = vpop.f32.mrf.mxu0
    %v3090 = vpop.f32.mrf.mxu0
    %3091 = vdwg.mxu0
    %3092 = vmatprep.subr.bf16.mxu0 0
    %3093 = vmatpush1.bf16.msra.mxu0 %v2348
    %3094 = vmatprep.subr.bf16.mxu0 0
    %3095 = vmatpush1.bf16.msra.mxu0 %v2345
    %3096 = vmatprep.subr.bf16.mxu0 0
    %3097 = vmatpush1.bf16.msra.mxu0 %v2342
    %3098 = vmatprep.subr.bf16.mxu0 0
    %3099 = vmatpush1.bf16.msra.mxu0 %v2339
    %3100 = vmatprep.subr.bf16.mxu0 0
    %3101 = vmatpush1.bf16.msra.mxu0 %v2336
    %3102 = vmatprep.subr.bf16.mxu0 0
    %3103 = vmatpush1.bf16.msra.mxu0 %v2333
    %3104 = vmatprep.subr.bf16.mxu0 0
    %3105 = vmatpush1.bf16.msra.mxu0 %v2330
    %3106 = vmatprep.subr.bf16.mxu0 0
    %3107 = vmatpush1.bf16.msra.mxu0 %v2327
    %3108 = vmatprep.subr.bf16.mxu0 0
    %3109 = vmatpush2.bf16.msra.mxu0 0
    %3110 = vmatprep.subr.bf16.mxu0 0
    %3111 = vmatpush2.bf16.msra.mxu0 0
    %3112 = vmatprep.subr.bf16.mxu0 0
    %3113 = vmatpush2.bf16.msra.mxu0 0
    %3114 = vmatprep.subr.bf16.mxu0 0
    %3115 = vmatpush2.bf16.msra.mxu0 0
    %3116 = vmatprep.subr.bf16.mxu0 0
    %3117 = vmatpush2.bf16.msra.mxu0 0
    %3118 = vmatprep.subr.bf16.mxu0 0
    %3119 = vmatpush2.bf16.msra.mxu0 0
    %3120 = vmatprep.subr.bf16.mxu0 0
    %3121 = vmatpush2.bf16.msra.mxu0 0
    %3122 = vmatprep.subr.bf16.mxu0 0
    %3123 = vmatpush2.bf16.msra.mxu0 0
    %3124 = vmatprep.mubr.bf16.mxu0 0
    %3125 = vmatmul.mubr.bf16.gmra.mxu0 %v3050
    %v3126 = vpop.f32.mrf.mxu0
    %v3127 = vadd.f32 0.0, %v3126
    %v3128 = vpop.f32.mrf.mxu0
    %v3129 = vpop.f32.mrf.mxu0
    %v3130 = vpop.f32.mrf.mxu0
    %3131 = vdwg.mxu0
    %v3132 = vadd.f32 %v3047, %v3086
    %v3133 = vadd.f32 %v3048, %v3088
    %v3134 = vxor.u32 %v3132, 2147483648
    %v3135 = vxor.u32 %v3133, 2147483648
    %v3136 = vmul.f32 %v3134, 1.442695
    %v3137 = vpow.pop %v3136
    %v3138 = vmul.f32 %v3135, 1.442695
    %v3139 = vpow.pop %v3138
    %v3140 = vadd.f32 %v3137, 1.0
    %v3141 = vadd.f32 %v3139, 1.0
    %v3142 = vrcp.pop %v3140
    %v3143 = vmul.f32 1.0, %v3142
    %v3144 = vrcp.pop %v3141
    %v3145 = vmul.f32 1.0, %v3144
    %v3146 = vadd.f32 %v3127, %v2472
    %v3147 = vmul.f32 %v3143, %v3146
    %v3148 = vadd.f32 %v3049, %v3147
    %v3149 = vtanh.pop %v3148
    %v3150 = vsub.f32 1.0, %v3145
    %v3151 = vmul.f32 %v3150, %v3149
    %v3152 = vmul.f32 %v3145, %v3041
    %v3153 = vadd.f32 %v3151, %v3152
    %v3154 = vld [vmem:[%s963] sm:$0xff]
    %v3155 = vadd.f32 %v3154, %v3153
    %3156 = vst [vmem:[%s963] sm:$0xff] %v3155
    %v3157 = vld [vmem:[%s1529] sm:$0xff]
    %v3158 = vld [vmem:[%s1529 + $0x8] sm:$0xf]
    %v3159 = vunpack.c.l.bf16 %v3157
    %v3160 = vunpack.c.h.bf16 %v3157
    %v3161 = vunpack.c.l.bf16 %v3158
    %v3162 = vpack.c.bf16 %v3153, %v3153
    %3163 = vmatprep.subr.bf16.mxu0 %v2347
    %3164 = vmatpush1.bf16.msra.mxu0 %v2346
    %3165 = vmatprep.subr.bf16.mxu0 %v2344
    %3166 = vmatpush1.bf16.msra.mxu0 %v2343
    %3167 = vmatprep.subr.bf16.mxu0 %v2341
    %3168 = vmatpush1.bf16.msra.mxu0 %v2340
    %3169 = vmatprep.subr.bf16.mxu0 %v2338
    %3170 = vmatpush1.bf16.msra.mxu0 %v2337
    %3171 = vmatprep.subr.bf16.mxu0 %v2335
    %3172 = vmatpush1.bf16.msra.mxu0 %v2334
    %3173 = vmatprep.subr.bf16.mxu0 %v2332
    %3174 = vmatpush1.bf16.msra.mxu0 %v2331
    %3175 = vmatprep.subr.bf16.mxu0 %v2329
    %3176 = vmatpush1.bf16.msra.mxu0 %v2328
    %3177 = vmatprep.subr.bf16.mxu0 %v2326
    %3178 = vmatpush1.bf16.msra.mxu0 %v2325
    %3179 = vmatprep.subr.bf16.mxu0 0
    %3180 = vmatpush2.bf16.msra.mxu0 0
    %3181 = vmatprep.subr.bf16.mxu0 0
    %3182 = vmatpush2.bf16.msra.mxu0 0
    %3183 = vmatprep.subr.bf16.mxu0 0
    %3184 = vmatpush2.bf16.msra.mxu0 0
    %3185 = vmatprep.subr.bf16.mxu0 0
    %3186 = vmatpush2.bf16.msra.mxu0 0
    %3187 = vmatprep.subr.bf16.mxu0 0
    %3188 = vmatpush2.bf16.msra.mxu0 0
    %3189 = vmatprep.subr.bf16.mxu0 0
    %3190 = vmatpush2.bf16.msra.mxu0 0
    %3191 = vmatprep.subr.bf16.mxu0 0
    %3192 = vmatpush2.bf16.msra.mxu0 0
    %3193 = vmatprep.subr.bf16.mxu0 0
    %3194 = vmatpush2.bf16.msra.mxu0 0
    %3195 = vmatprep.mubr.bf16.mxu0 0
    %3196 = vmatmul.mubr.bf16.gmra.mxu0 %v3162
    %v3197 = vpop.f32.mrf.mxu0
    %v3198 = vadd.f32 0.0, %v3197
    %v3199 = vpop.f32.mrf.mxu0
    %v3200 = vadd.f32 0.0, %v3199
    %v3201 = vpop.f32.mrf.mxu0
    %v3202 = vpop.f32.mrf.mxu0
    %3203 = vdwg.mxu0
    %3204 = vmatprep.subr.bf16.mxu0 0
    %3205 = vmatpush1.bf16.msra.mxu0 %v2348
    %3206 = vmatprep.subr.bf16.mxu0 0
    %3207 = vmatpush1.bf16.msra.mxu0 %v2345
    %3208 = vmatprep.subr.bf16.mxu0 0
    %3209 = vmatpush1.bf16.msra.mxu0 %v2342
    %3210 = vmatprep.subr.bf16.mxu0 0
    %3211 = vmatpush1.bf16.msra.mxu0 %v2339
    %3212 = vmatprep.subr.bf16.mxu0 0
    %3213 = vmatpush1.bf16.msra.mxu0 %v2336
    %3214 = vmatprep.subr.bf16.mxu0 0
    %3215 = vmatpush1.bf16.msra.mxu0 %v2333
    %3216 = vmatprep.subr.bf16.mxu0 0
    %3217 = vmatpush1.bf16.msra.mxu0 %v2330
    %3218 = vmatprep.subr.bf16.mxu0 0
    %3219 = vmatpush1.bf16.msra.mxu0 %v2327
    %3220 = vmatprep.subr.bf16.mxu0 0
    %3221 = vmatpush2.bf16.msra.mxu0 0
    %3222 = vmatprep.subr.bf16.mxu0 0
    %3223 = vmatpush2.bf16.msra.mxu0 0
    %3224 = vmatprep.subr.bf16.mxu0 0
    %3225 = vmatpush2.bf16.msra.mxu0 0
    %3226 = vmatprep.subr.bf16.mxu0 0
    %3227 = vmatpush2.bf16.msra.mxu0 0
    %3228 = vmatprep.subr.bf16.mxu0 0
    %3229 = vmatpush2.bf16.msra.mxu0 0
    %3230 = vmatprep.subr.bf16.mxu0 0
    %3231 = vmatpush2.bf16.msra.mxu0 0
    %3232 = vmatprep.subr.bf16.mxu0 0
    %3233 = vmatpush2.bf16.msra.mxu0 0
    %3234 = vmatprep.subr.bf16.mxu0 0
    %3235 = vmatpush2.bf16.msra.mxu0 0
    %3236 = vmatprep.mubr.bf16.mxu0 0
    %3237 = vmatmul.mubr.bf16.gmra.mxu0 %v3162
    %v3238 = vpop.f32.mrf.mxu0
    %v3239 = vadd.f32 0.0, %v3238
    %v3240 = vpop.f32.mrf.mxu0
    %v3241 = vpop.f32.mrf.mxu0
    %v3242 = vpop.f32.mrf.mxu0
    %3243 = vdwg.mxu0
    %v3244 = vadd.f32 %v3159, %v3198
    %v3245 = vadd.f32 %v3160, %v3200
    %v3246 = vxor.u32 %v3244, 2147483648
    %v3247 = vxor.u32 %v3245, 2147483648
    %v3248 = vmul.f32 %v3246, 1.442695
    %v3249 = vpow.pop %v3248
    %v3250 = vmul.f32 %v3247, 1.442695
    %v3251 = vpow.pop %v3250
    %v3252 = vadd.f32 %v3249, 1.0
    %v3253 = vadd.f32 %v3251, 1.0
    %v3254 = vrcp.pop %v3252
    %v3255 = vmul.f32 1.0, %v3254
    %v3256 = vrcp.pop %v3253
    %v3257 = vmul.f32 1.0, %v3256
    %v3258 = vadd.f32 %v3239, %v2472
    %v3259 = vmul.f32 %v3255, %v3258
    %v3260 = vadd.f32 %v3161, %v3259
    %v3261 = vtanh.pop %v3260
    %v3262 = vsub.f32 1.0, %v3257
    %v3263 = vmul.f32 %v3262, %v3261
    %v3264 = vmul.f32 %v3257, %v3153
    %v3265 = vadd.f32 %v3263, %v3264
    %v3266 = vld [vmem:[%s848] sm:$0xff]
    %v3267 = vadd.f32 %v3266, %v3265
    %3268 = vst [vmem:[%s848] sm:$0xff] %v3267
    %v3269 = vld [vmem:[#allocation3] sm:$0xff]
    %v3270 = vld [vmem:[#allocation3 + $0x8] sm:$0xff]
    %v3271 = vld [vmem:[#allocation3 + $0x10] sm:$0xff]
    %v3272 = vld [vmem:[#allocation3 + $0x18] sm:$0xff]
    %v3273 = vld [vmem:[#allocation3 + $0x20] sm:$0xff]
    %v3274 = vld [vmem:[#allocation3 + $0x28] sm:$0xff]
    %v3275 = vld [vmem:[#allocation3 + $0x30] sm:$0xff]
    %v3276 = vld [vmem:[#allocation3 + $0x38] sm:$0xff]
    %v3277 = vld [vmem:[%s11] sm:$0x1]
    %v3278 = vld [vmem:[%s12] sm:$0x1]
    %3279 = vadd.xlane.f32.xlu0 %v3269
    %v3280 = vpop.xlane.xlu0 %3279
    %3281 = vadd.xlane.f32.xlu0 %v3270
    %v3282 = vpop.xlane.xlu0 %3281
    %3283 = vadd.xlane.f32.xlu0 %v3271
    %v3284 = vpop.xlane.xlu0 %3283
    %3285 = vadd.xlane.f32.xlu0 %v3272
    %v3286 = vpop.xlane.xlu0 %3285
    %3287 = vadd.xlane.f32.xlu0 %v3273
    %v3288 = vpop.xlane.xlu0 %3287
    %3289 = vadd.xlane.f32.xlu0 %v3274
    %v3290 = vpop.xlane.xlu0 %3289
    %3291 = vadd.xlane.f32.xlu0 %v3275
    %v3292 = vpop.xlane.xlu0 %3291
    %3293 = vadd.xlane.f32.xlu0 %v3276
    %v3294 = vpop.xlane.xlu0 %3293
    %v3295 = vmul.f32 %v3280, %v1667
    %v3296 = vmul.f32 %v3282, %v1667
    %v3297 = vmul.f32 %v3284, %v1667
    %v3298 = vmul.f32 %v3286, %v1667
    %v3299 = vmul.f32 %v3288, %v1667
    %v3300 = vmul.f32 %v3290, %v1667
    %v3301 = vmul.f32 %v3292, %v1667
    %v3302 = vmul.f32 %v3294, %v1667
    %v3303 = vsub.f32 %v3269, %v3295
    %v3304 = vsub.f32 %v3270, %v3296
    %v3305 = vsub.f32 %v3271, %v3297
    %v3306 = vsub.f32 %v3272, %v3298
    %v3307 = vsub.f32 %v3273, %v3299
    %v3308 = vsub.f32 %v3274, %v3300
    %v3309 = vsub.f32 %v3275, %v3301
    %v3310 = vsub.f32 %v3276, %v3302
    %v3311 = vmul.f32 %v3303, %v3303
    %v3312 = vmul.f32 %v3304, %v3304
    %v3313 = vmul.f32 %v3305, %v3305
    %v3314 = vmul.f32 %v3306, %v3306
    %v3315 = vmul.f32 %v3307, %v3307
    %v3316 = vmul.f32 %v3308, %v3308
    %v3317 = vmul.f32 %v3309, %v3309
    %v3318 = vmul.f32 %v3310, %v3310
    %3319 = vadd.xlane.f32.xlu0 %v3311
    %v3320 = vpop.xlane.xlu0 %3319
    %3321 = vadd.xlane.f32.xlu0 %v3312
    %v3322 = vpop.xlane.xlu0 %3321
    %3323 = vadd.xlane.f32.xlu0 %v3313
    %v3324 = vpop.xlane.xlu0 %3323
    %3325 = vadd.xlane.f32.xlu0 %v3314
    %v3326 = vpop.xlane.xlu0 %3325
    %3327 = vadd.xlane.f32.xlu0 %v3315
    %v3328 = vpop.xlane.xlu0 %3327
    %3329 = vadd.xlane.f32.xlu0 %v3316
    %v3330 = vpop.xlane.xlu0 %3329
    %3331 = vadd.xlane.f32.xlu0 %v3317
    %v3332 = vpop.xlane.xlu0 %3331
    %3333 = vadd.xlane.f32.xlu0 %v3318
    %v3334 = vpop.xlane.xlu0 %3333
    %v3335 = vmul.f32 %v3320, %v1667
    %v3336 = vmul.f32 %v3322, %v1667
    %v3337 = vmul.f32 %v3324, %v1667
    %v3338 = vmul.f32 %v3326, %v1667
    %v3339 = vmul.f32 %v3328, %v1667
    %v3340 = vmul.f32 %v3330, %v1667
    %v3341 = vmul.f32 %v3332, %v1667
    %v3342 = vmul.f32 %v3334, %v1667
    %v3343 = vadd.f32 %v3335, 1e-05
    %v3344 = vadd.f32 %v3336, 1e-05
    %v3345 = vadd.f32 %v3337, 1e-05
    %v3346 = vadd.f32 %v3338, 1e-05
    %v3347 = vadd.f32 %v3339, 1e-05
    %v3348 = vadd.f32 %v3340, 1e-05
    %v3349 = vadd.f32 %v3341, 1e-05
    %v3350 = vadd.f32 %v3342, 1e-05
    %v3351 = vrsqrt.pop %v3343
    %v3352 = vrsqrt.pop %v3344
    %v3353 = vrsqrt.pop %v3345
    %v3354 = vrsqrt.pop %v3346
    %v3355 = vrsqrt.pop %v3347
    %v3356 = vrsqrt.pop %v3348
    %v3357 = vrsqrt.pop %v3349
    %v3358 = vrsqrt.pop %v3350
    %v3359 = vmul.f32 %v3303, %v3351
    %v3360 = vmul.f32 %v3304, %v3352
    %v3361 = vmul.f32 %v3305, %v3353
    %v3362 = vmul.f32 %v3306, %v3354
    %v3363 = vmul.f32 %v3307, %v3355
    %v3364 = vmul.f32 %v3308, %v3356
    %v3365 = vmul.f32 %v3309, %v3357
    %v3366 = vmul.f32 %v3310, %v3358
    %v3368 = vlaneseq
    %v3369 = vshrl.u32 %v3368, 7
    %v3370 = vsub.s32 0, %v3369
    %v3371 = vrot.slane %v3277, %v3370
    %v3373 = vmul.f32 %v3359, %v3371
    %v3374 = vmul.f32 %v3360, %v3371
    %v3375 = vmul.f32 %v3361, %v3371
    %v3376 = vmul.f32 %v3362, %v3371
    %v3377 = vmul.f32 %v3363, %v3371
    %v3378 = vmul.f32 %v3364, %v3371
    %v3379 = vmul.f32 %v3365, %v3371
    %v3380 = vmul.f32 %v3366, %v3371
    %v3382 = vlaneseq
    %v3383 = vshrl.u32 %v3382, 7
    %v3384 = vsub.s32 0, %v3383
    %v3385 = vrot.slane %v3278, %v3384
    %v3387 = vadd.f32 %v3373, %v3385
    %v3388 = vadd.f32 %v3374, %v3385
    %v3389 = vadd.f32 %v3375, %v3385
    %v3390 = vadd.f32 %v3376, %v3385
    %v3391 = vadd.f32 %v3377, %v3385
    %v3392 = vadd.f32 %v3378, %v3385
    %v3393 = vadd.f32 %v3379, %v3385
    %v3394 = vadd.f32 %v3380, %v3385
    %v3395 = vpack.c.bf16 %v3388, %v3387
    %v3396 = vpack.c.bf16 %v3390, %v3389
    %v3397 = vpack.c.bf16 %v3392, %v3391
    %v3398 = vpack.c.bf16 %v3394, %v3393
    %v3399 = vld [vmem:[#allocation16] sm:$0xff]
    %v3400 = vld [vmem:[#allocation16 + $0x8] sm:$0xf]
    %v3401 = vld [vmem:[#allocation16 + $0xc] sm:$0xff]
    %v3402 = vld [vmem:[#allocation16 + $0x14] sm:$0xf]
    %v3403 = vld [vmem:[#allocation16 + $0x18] sm:$0xff]
    %v3404 = vld [vmem:[#allocation16 + $0x20] sm:$0xf]
    %v3405 = vld [vmem:[#allocation16 + $0x24] sm:$0xff]
    %v3406 = vld [vmem:[#allocation16 + $0x2c] sm:$0xf]
    %v3407 = vld [vmem:[#allocation16 + $0x30] sm:$0xff]
    %v3408 = vld [vmem:[#allocation16 + $0x38] sm:$0xf]
    %v3409 = vld [vmem:[#allocation16 + $0x3c] sm:$0xff]
    %v3410 = vld [vmem:[#allocation16 + $0x44] sm:$0xf]
    %v3411 = vld [vmem:[#allocation16 + $0x48] sm:$0xff]
    %v3412 = vld [vmem:[#allocation16 + $0x50] sm:$0xf]
    %v3413 = vld [vmem:[#allocation16 + $0x54] sm:$0xff]
    %v3414 = vld [vmem:[#allocation16 + $0x5c] sm:$0xf]
    %v3415 = vld [vmem:[#allocation16 + $0x60] sm:$0xff]
    %v3416 = vld [vmem:[#allocation16 + $0x68] sm:$0xf]
    %v3417 = vld [vmem:[#allocation16 + $0x6c] sm:$0xff]
    %v3418 = vld [vmem:[#allocation16 + $0x74] sm:$0xf]
    %v3419 = vld [vmem:[#allocation16 + $0x78] sm:$0xff]
    %v3420 = vld [vmem:[#allocation16 + $0x80] sm:$0xf]
    %v3421 = vld [vmem:[#allocation16 + $0x84] sm:$0xff]
    %v3422 = vld [vmem:[#allocation16 + $0x8c] sm:$0xf]
    %v3423 = vld [vmem:[#allocation16 + $0x90] sm:$0xff]
    %v3424 = vld [vmem:[#allocation16 + $0x98] sm:$0xf]
    %v3425 = vld [vmem:[#allocation16 + $0x9c] sm:$0xff]
    %v3426 = vld [vmem:[#allocation16 + $0xa4] sm:$0xf]
    %v3427 = vld [vmem:[#allocation16 + $0xa8] sm:$0xff]
    %v3428 = vld [vmem:[#allocation16 + $0xb0] sm:$0xf]
    %v3429 = vld [vmem:[#allocation16 + $0xb4] sm:$0xff]
    %v3430 = vld [vmem:[#allocation16 + $0xbc] sm:$0xf]
    %v3431 = vld [vmem:[%s15] sm:$0x7]
    %v3433 = vlaneseq
    %v3434 = vshrl.u32 %v3433, 7
    %v3435 = vsub.s32 0, %v3434
    %v3436 = vrot.slane %v3431, %v3435
    %v3437 = vlaneseq
    %v3438 = vshrl.u32 %v3437, 7
    %v3439 = vsub.s32 1, %v3438
    %v3440 = vrot.slane %v3431, %v3439
    %v3441 = vlaneseq
    %v3442 = vshrl.u32 %v3441, 7
    %v3443 = vsub.s32 2, %v3442
    %v3444 = vrot.slane %v3431, %v3443
    %v3480 = vunpack.c.l.b16 %v3399
    %v3481 = vunpack.c.h.b16 %v3399
    %v3482 = vunpack.c.l.b16 %v3400
    %v3483 = vunpack.c.l.b16 %v3401
    %v3484 = vunpack.c.h.b16 %v3401
    %v3485 = vunpack.c.l.b16 %v3402
    %v3486 = vunpack.c.l.b16 %v3403
    %v3487 = vunpack.c.h.b16 %v3403
    %v3488 = vunpack.c.l.b16 %v3404
    %v3489 = vunpack.c.l.b16 %v3405
    %v3490 = vunpack.c.h.b16 %v3405
    %v3491 = vunpack.c.l.b16 %v3406
    %v3492 = vunpack.c.l.b16 %v3407
    %v3493 = vunpack.c.h.b16 %v3407
    %v3494 = vunpack.c.l.b16 %v3408
    %v3495 = vunpack.c.l.b16 %v3409
    %v3496 = vunpack.c.h.b16 %v3409
    %v3497 = vunpack.c.l.b16 %v3410
    %v3498 = vunpack.c.l.b16 %v3411
    %v3499 = vunpack.c.h.b16 %v3411
    %v3500 = vunpack.c.l.b16 %v3412
    %v3501 = vunpack.c.l.b16 %v3413
    %v3502 = vunpack.c.h.b16 %v3413
    %v3503 = vunpack.c.l.b16 %v3414
    %v3504 = vunpack.c.l.b16 %v3415
    %v3505 = vunpack.c.h.b16 %v3415
    %v3506 = vunpack.c.l.b16 %v3416
    %v3507 = vunpack.c.l.b16 %v3417
    %v3508 = vunpack.c.h.b16 %v3417
    %v3509 = vunpack.c.l.b16 %v3418
    %v3510 = vunpack.c.l.b16 %v3419
    %v3511 = vunpack.c.h.b16 %v3419
    %v3512 = vunpack.c.l.b16 %v3420
    %v3513 = vunpack.c.l.b16 %v3421
    %v3514 = vunpack.c.h.b16 %v3421
    %v3515 = vunpack.c.l.b16 %v3422
    %v3516 = vunpack.c.l.b16 %v3423
    %v3517 = vunpack.c.h.b16 %v3423
    %v3518 = vunpack.c.l.b16 %v3424
    %v3519 = vunpack.c.l.b16 %v3425
    %v3520 = vunpack.c.h.b16 %v3425
    %v3521 = vunpack.c.l.b16 %v3426
    %v3522 = vunpack.c.l.b16 %v3427
    %v3523 = vunpack.c.h.b16 %v3427
    %v3524 = vunpack.c.l.b16 %v3428
    %v3525 = vunpack.c.l.b16 %v3429
    %v3526 = vunpack.c.h.b16 %v3429
    %v3527 = vunpack.c.l.b16 %v3430
    %v3528 = vpack.c.b16 %v3483, %v3480
    %v3529 = vpack.c.b16 %v3484, %v3481
    %v3530 = vpack.c.b16 %v3485, %v3482
    %v3531 = vpack.c.b16 %v3489, %v3486
    %v3532 = vpack.c.b16 %v3490, %v3487
    %v3533 = vpack.c.b16 %v3491, %v3488
    %v3534 = vpack.c.b16 %v3495, %v3492
    %v3535 = vpack.c.b16 %v3496, %v3493
    %v3536 = vpack.c.b16 %v3497, %v3494
    %v3537 = vpack.c.b16 %v3501, %v3498
    %v3538 = vpack.c.b16 %v3502, %v3499
    %v3539 = vpack.c.b16 %v3503, %v3500
    %v3540 = vpack.c.b16 %v3507, %v3504
    %v3541 = vpack.c.b16 %v3508, %v3505
    %v3542 = vpack.c.b16 %v3509, %v3506
    %v3543 = vpack.c.b16 %v3513, %v3510
    %v3544 = vpack.c.b16 %v3514, %v3511
    %v3545 = vpack.c.b16 %v3515, %v3512
    %v3546 = vpack.c.b16 %v3519, %v3516
    %v3547 = vpack.c.b16 %v3520, %v3517
    %v3548 = vpack.c.b16 %v3521, %v3518
    %v3549 = vpack.c.b16 %v3525, %v3522
    %v3550 = vpack.c.b16 %v3526, %v3523
    %v3551 = vpack.c.b16 %v3527, %v3524
    %3576 = vmatprep.subr.bf16.mxu0 %v3550
    %3577 = vmatpush1.bf16.msra.mxu0 %v3549
    %3578 = vmatprep.subr.bf16.mxu0 %v3547
    %3579 = vmatpush1.bf16.msra.mxu0 %v3546
    %3580 = vmatprep.subr.bf16.mxu0 %v3544
    %3581 = vmatpush1.bf16.msra.mxu0 %v3543
    %3582 = vmatprep.subr.bf16.mxu0 %v3541
    %3583 = vmatpush1.bf16.msra.mxu0 %v3540
    %3584 = vmatprep.subr.bf16.mxu0 %v3538
    %3585 = vmatpush1.bf16.msra.mxu0 %v3537
    %3586 = vmatprep.subr.bf16.mxu0 %v3535
    %3587 = vmatpush1.bf16.msra.mxu0 %v3534
    %3588 = vmatprep.subr.bf16.mxu0 %v3532
    %3589 = vmatpush1.bf16.msra.mxu0 %v3531
    %3590 = vmatprep.subr.bf16.mxu0 %v3529
    %3591 = vmatpush1.bf16.msra.mxu0 %v3528
    %3592 = vmatprep.subr.bf16.mxu0 0
    %3593 = vmatpush2.bf16.msra.mxu0 0
    %3594 = vmatprep.subr.bf16.mxu0 0
    %3595 = vmatpush2.bf16.msra.mxu0 0
    %3596 = vmatprep.subr.bf16.mxu0 0
    %3597 = vmatpush2.bf16.msra.mxu0 0
    %3598 = vmatprep.subr.bf16.mxu0 0
    %3599 = vmatpush2.bf16.msra.mxu0 0
    %3600 = vmatprep.subr.bf16.mxu0 0
    %3601 = vmatpush2.bf16.msra.mxu0 0
    %3602 = vmatprep.subr.bf16.mxu0 0
    %3603 = vmatpush2.bf16.msra.mxu0 0
    %3604 = vmatprep.subr.bf16.mxu0 0
    %3605 = vmatpush2.bf16.msra.mxu0 0
    %3606 = vmatprep.subr.bf16.mxu0 0
    %3607 = vmatpush2.bf16.msra.mxu0 0
    %3608 = vmatprep.mubr.bf16.mxu0 0
    %3609 = vmatmul.mubr.bf16.gmra.mxu0 %v3395
    %v3610 = vpop.f32.mrf.mxu0
    %v3611 = vadd.f32 %v3436, %v3610
    %v3612 = vpop.f32.mrf.mxu0
    %v3613 = vadd.f32 %v3440, %v3612
    %v3614 = vpop.f32.mrf.mxu0
    %v3615 = vadd.f32 %v3436, %v3614
    %v3616 = vpop.f32.mrf.mxu0
    %v3617 = vadd.f32 %v3440, %v3616
    %3618 = vmatprep.mubr.bf16.mxu0 0
    %3619 = vmatmul.mubr.bf16.gmra.mxu0 %v3396
    %v3620 = vpop.f32.mrf.mxu0
    %v3621 = vadd.f32 %v3436, %v3620
    %v3622 = vpop.f32.mrf.mxu0
    %v3623 = vadd.f32 %v3440, %v3622
    %v3624 = vpop.f32.mrf.mxu0
    %v3625 = vadd.f32 %v3436, %v3624
    %v3626 = vpop.f32.mrf.mxu0
    %v3627 = vadd.f32 %v3440, %v3626
    %3628 = vmatprep.mubr.bf16.mxu0 0
    %3629 = vmatmul.mubr.bf16.gmra.mxu0 %v3397
    %v3630 = vpop.f32.mrf.mxu0
    %v3631 = vadd.f32 %v3436, %v3630
    %v3632 = vpop.f32.mrf.mxu0
    %v3633 = vadd.f32 %v3440, %v3632
    %v3634 = vpop.f32.mrf.mxu0
    %v3635 = vadd.f32 %v3436, %v3634
    %v3636 = vpop.f32.mrf.mxu0
    %v3637 = vadd.f32 %v3440, %v3636
    %3638 = vmatprep.mubr.bf16.mxu0 0
    %3639 = vmatmul.mubr.bf16.gmra.mxu0 %v3398
    %v3640 = vpop.f32.mrf.mxu0
    %v3641 = vadd.f32 %v3436, %v3640
    %v3642 = vpop.f32.mrf.mxu0
    %v3643 = vadd.f32 %v3440, %v3642
    %v3644 = vpop.f32.mrf.mxu0
    %v3645 = vadd.f32 %v3436, %v3644
    %v3646 = vpop.f32.mrf.mxu0
    %v3647 = vadd.f32 %v3440, %v3646
    %3648 = vdwg.mxu0
    %3649 = vmatprep.subr.bf16.mxu0 0
    %3650 = vmatpush1.bf16.msra.mxu0 %v3551
    %3651 = vmatprep.subr.bf16.mxu0 0
    %3652 = vmatpush1.bf16.msra.mxu0 %v3548
    %3653 = vmatprep.subr.bf16.mxu0 0
    %3654 = vmatpush1.bf16.msra.mxu0 %v3545
    %3655 = vmatprep.subr.bf16.mxu0 0
    %3656 = vmatpush1.bf16.msra.mxu0 %v3542
    %3657 = vmatprep.subr.bf16.mxu0 0
    %3658 = vmatpush1.bf16.msra.mxu0 %v3539
    %3659 = vmatprep.subr.bf16.mxu0 0
    %3660 = vmatpush1.bf16.msra.mxu0 %v3536
    %3661 = vmatprep.subr.bf16.mxu0 0
    %3662 = vmatpush1.bf16.msra.mxu0 %v3533
    %3663 = vmatprep.subr.bf16.mxu0 0
    %3664 = vmatpush1.bf16.msra.mxu0 %v3530
    %3665 = vmatprep.subr.bf16.mxu0 0
    %3666 = vmatpush2.bf16.msra.mxu0 0
    %3667 = vmatprep.subr.bf16.mxu0 0
    %3668 = vmatpush2.bf16.msra.mxu0 0
    %3669 = vmatprep.subr.bf16.mxu0 0
    %3670 = vmatpush2.bf16.msra.mxu0 0
    %3671 = vmatprep.subr.bf16.mxu0 0
    %3672 = vmatpush2.bf16.msra.mxu0 0
    %3673 = vmatprep.subr.bf16.mxu0 0
    %3674 = vmatpush2.bf16.msra.mxu0 0
    %3675 = vmatprep.subr.bf16.mxu0 0
    %3676 = vmatpush2.bf16.msra.mxu0 0
    %3677 = vmatprep.subr.bf16.mxu0 0
    %3678 = vmatpush2.bf16.msra.mxu0 0
    %3679 = vmatprep.subr.bf16.mxu0 0
    %3680 = vmatpush2.bf16.msra.mxu0 0
    %3681 = vmatprep.mubr.bf16.mxu0 0
    %3682 = vmatmul.mubr.bf16.gmra.mxu0 %v3395
    %v3683 = vpop.f32.mrf.mxu0
    %v3684 = vadd.f32 %v3444, %v3683
    %v3685 = vpop.f32.mrf.mxu0
    %v3686 = vpop.f32.mrf.mxu0
    %v3687 = vadd.f32 %v3444, %v3686
    %v3688 = vpop.f32.mrf.mxu0
    %3689 = vmatprep.mubr.bf16.mxu0 0
    %3690 = vmatmul.mubr.bf16.gmra.mxu0 %v3396
    %v3691 = vpop.f32.mrf.mxu0
    %v3692 = vadd.f32 %v3444, %v3691
    %v3693 = vpop.f32.mrf.mxu0
    %v3694 = vpop.f32.mrf.mxu0
    %v3695 = vadd.f32 %v3444, %v3694
    %v3696 = vpop.f32.mrf.mxu0
    %3697 = vmatprep.mubr.bf16.mxu0 0
    %3698 = vmatmul.mubr.bf16.gmra.mxu0 %v3397
    %v3699 = vpop.f32.mrf.mxu0
    %v3700 = vadd.f32 %v3444, %v3699
    %v3701 = vpop.f32.mrf.mxu0
    %v3702 = vpop.f32.mrf.mxu0
    %v3703 = vadd.f32 %v3444, %v3702
    %v3704 = vpop.f32.mrf.mxu0
    %3705 = vmatprep.mubr.bf16.mxu0 0
    %3706 = vmatmul.mubr.bf16.gmra.mxu0 %v3398
    %v3707 = vpop.f32.mrf.mxu0
    %v3708 = vadd.f32 %v3444, %v3707
    %v3709 = vpop.f32.mrf.mxu0
    %v3710 = vpop.f32.mrf.mxu0
    %v3711 = vadd.f32 %v3444, %v3710
    %v3712 = vpop.f32.mrf.mxu0
    %3713 = vdwg.mxu0
    %v3714 = vpack.c.bf16 %v3611, %v3611
    %v3715 = vpack.c.bf16 %v3613, %v3613
    %v3716 = vpack.c.bf16 %v3684, %v3684
    %v3717 = vpack.c.bf16 %v3615, %v3615
    %v3718 = vpack.c.bf16 %v3617, %v3617
    %v3719 = vpack.c.bf16 %v3687, %v3687
    %v3720 = vpack.c.bf16 %v3621, %v3621
    %v3721 = vpack.c.bf16 %v3623, %v3623
    %v3722 = vpack.c.bf16 %v3692, %v3692
    %v3723 = vpack.c.bf16 %v3625, %v3625
    %v3724 = vpack.c.bf16 %v3627, %v3627
    %v3725 = vpack.c.bf16 %v3695, %v3695
    %v3726 = vpack.c.bf16 %v3631, %v3631
    %v3727 = vpack.c.bf16 %v3633, %v3633
    %v3728 = vpack.c.bf16 %v3700, %v3700
    %v3729 = vpack.c.bf16 %v3635, %v3635
    %v3730 = vpack.c.bf16 %v3637, %v3637
    %v3731 = vpack.c.bf16 %v3703, %v3703
    %v3732 = vpack.c.bf16 %v3641, %v3641
    %v3733 = vpack.c.bf16 %v3643, %v3643
    %v3734 = vpack.c.bf16 %v3708, %v3708
    %v3735 = vpack.c.bf16 %v3645, %v3645
    %v3736 = vpack.c.bf16 %v3647, %v3647
    %v3737 = vpack.c.bf16 %v3711, %v3711
    %v3762 = vunpack.c.l.b16 %v3714
    %v3763 = vunpack.c.l.b16 %v3715
    %v3764 = vunpack.c.l.b16 %v3716
    %v3765 = vunpack.c.l.b16 %v3717
    %v3766 = vunpack.c.l.b16 %v3718
    %v3767 = vunpack.c.l.b16 %v3719
    %v3768 = vunpack.c.l.b16 %v3720
    %v3769 = vunpack.c.l.b16 %v3721
    %v3770 = vunpack.c.l.b16 %v3722
    %v3771 = vunpack.c.l.b16 %v3723
    %v3772 = vunpack.c.l.b16 %v3724
    %v3773 = vunpack.c.l.b16 %v3725
    %v3774 = vunpack.c.l.b16 %v3726
    %v3775 = vunpack.c.l.b16 %v3727
    %v3776 = vunpack.c.l.b16 %v3728
    %v3777 = vunpack.c.l.b16 %v3729
    %v3778 = vunpack.c.l.b16 %v3730
    %v3779 = vunpack.c.l.b16 %v3731
    %v3780 = vunpack.c.l.b16 %v3732
    %v3781 = vunpack.c.l.b16 %v3733
    %v3782 = vunpack.c.l.b16 %v3734
    %v3783 = vunpack.c.l.b16 %v3735
    %v3784 = vunpack.c.l.b16 %v3736
    %v3785 = vunpack.c.l.b16 %v3737
    %v3786 = vpack.c.b16 %v3763, %v3762
    %v3787 = vpack.c.b16 %v3764, %v3764
    %v3788 = vpack.c.b16 %v3766, %v3765
    %v3789 = vpack.c.b16 %v3767, %v3767
    %v3790 = vpack.c.b16 %v3769, %v3768
    %v3791 = vpack.c.b16 %v3770, %v3770
    %v3792 = vpack.c.b16 %v3772, %v3771
    %v3793 = vpack.c.b16 %v3773, %v3773
    %v3794 = vpack.c.b16 %v3775, %v3774
    %v3795 = vpack.c.b16 %v3776, %v3776
    %v3796 = vpack.c.b16 %v3778, %v3777
    %v3797 = vpack.c.b16 %v3779, %v3779
    %v3798 = vpack.c.b16 %v3781, %v3780
    %v3799 = vpack.c.b16 %v3782, %v3782
    %v3800 = vpack.c.b16 %v3784, %v3783
    %v3801 = vpack.c.b16 %v3785, %v3785
    %3818 = vst [vmem:[#allocation2] sm:$0xff] %v3786
    %3819 = vst [vmem:[#allocation2 + $0x8] sm:$0xf] %v3787
    %3820 = vst [vmem:[#allocation2 + $0xc] sm:$0xff] %v3788
    %3821 = vst [vmem:[#allocation2 + $0x14] sm:$0xf] %v3789
    %3822 = vst [vmem:[#allocation2 + $0x18] sm:$0xff] %v3790
    %3823 = vst [vmem:[#allocation2 + $0x20] sm:$0xf] %v3791
    %3824 = vst [vmem:[#allocation2 + $0x24] sm:$0xff] %v3792
    %3825 = vst [vmem:[#allocation2 + $0x2c] sm:$0xf] %v3793
    %3826 = vst [vmem:[#allocation2 + $0x30] sm:$0xff] %v3794
    %3827 = vst [vmem:[#allocation2 + $0x38] sm:$0xf] %v3795
    %3828 = vst [vmem:[#allocation2 + $0x3c] sm:$0xff] %v3796
    %3829 = vst [vmem:[#allocation2 + $0x44] sm:$0xf] %v3797
    %3830 = vst [vmem:[#allocation2 + $0x48] sm:$0xff] %v3798
    %3831 = vst [vmem:[#allocation2 + $0x50] sm:$0xf] %v3799
    %3832 = vst [vmem:[#allocation2 + $0x54] sm:$0xff] %v3800
    %3833 = vst [vmem:[#allocation2 + $0x5c] sm:$0xf] %v3801
    %v3834 = vld [vmem:[#allocation18] sm:$0xff]
    %v3835 = vld [vmem:[#allocation18 + $0x8] sm:$0xf]
    %v3836 = vld [vmem:[#allocation18 + $0xc] sm:$0xff]
    %v3837 = vld [vmem:[#allocation18 + $0x14] sm:$0xf]
    %v3838 = vld [vmem:[#allocation18 + $0x18] sm:$0xff]
    %v3839 = vld [vmem:[#allocation18 + $0x20] sm:$0xf]
    %v3840 = vld [vmem:[#allocation18 + $0x24] sm:$0xff]
    %v3841 = vld [vmem:[#allocation18 + $0x2c] sm:$0xf]
    %v3842 = vld [vmem:[#allocation18 + $0x30] sm:$0xff]
    %v3843 = vld [vmem:[#allocation18 + $0x38] sm:$0xf]
    %v3844 = vld [vmem:[#allocation18 + $0x3c] sm:$0xff]
    %v3845 = vld [vmem:[#allocation18 + $0x44] sm:$0xf]
    %v3846 = vld [vmem:[#allocation18 + $0x48] sm:$0xff]
    %v3847 = vld [vmem:[#allocation18 + $0x50] sm:$0xf]
    %v3848 = vld [vmem:[#allocation18 + $0x54] sm:$0xff]
    %v3849 = vld [vmem:[#allocation18 + $0x5c] sm:$0xf]
    %v3850 = vld [vmem:[#allocation18 + $0x60] sm:$0xff]
    %v3851 = vld [vmem:[#allocation18 + $0x68] sm:$0xf]
    %v3852 = vld [vmem:[#allocation18 + $0x6c] sm:$0xff]
    %v3853 = vld [vmem:[#allocation18 + $0x74] sm:$0xf]
    %v3854 = vld [vmem:[#allocation18 + $0x78] sm:$0xff]
    %v3855 = vld [vmem:[#allocation18 + $0x80] sm:$0xf]
    %v3856 = vld [vmem:[#allocation18 + $0x84] sm:$0xff]
    %v3857 = vld [vmem:[#allocation18 + $0x8c] sm:$0xf]
    %v3858 = vld [vmem:[#allocation18 + $0x90] sm:$0xff]
    %v3859 = vld [vmem:[#allocation18 + $0x98] sm:$0xf]
    %v3860 = vld [vmem:[#allocation18 + $0x9c] sm:$0xff]
    %v3861 = vld [vmem:[#allocation18 + $0xa4] sm:$0xf]
    %v3862 = vld [vmem:[#allocation18 + $0xa8] sm:$0xff]
    %v3863 = vld [vmem:[#allocation18 + $0xb0] sm:$0xf]
    %v3864 = vld [vmem:[#allocation18 + $0xb4] sm:$0xff]
    %v3865 = vld [vmem:[#allocation18 + $0xbc] sm:$0xf]
    %v3866 = vld [vmem:[%s16] sm:$0x1]
    %v3867 = vld [vmem:[#allocation2] sm:$0xff]
    %v3868 = vld [vmem:[#allocation2 + $0x8] sm:$0xf]
    %v3869 = vunpack.c.l.bf16 %v3867
    %v3870 = vunpack.c.h.bf16 %v3867
    %v3871 = vunpack.c.l.bf16 %v3868
    %v3904 = vunpack.c.l.b16 %v3834
    %v3905 = vunpack.c.h.b16 %v3834
    %v3906 = vunpack.c.l.b16 %v3835
    %v3907 = vunpack.c.l.b16 %v3836
    %v3908 = vunpack.c.h.b16 %v3836
    %v3909 = vunpack.c.l.b16 %v3837
    %v3910 = vunpack.c.l.b16 %v3838
    %v3911 = vunpack.c.h.b16 %v3838
    %v3912 = vunpack.c.l.b16 %v3839
    %v3913 = vunpack.c.l.b16 %v3840
    %v3914 = vunpack.c.h.b16 %v3840
    %v3915 = vunpack.c.l.b16 %v3841
    %v3916 = vunpack.c.l.b16 %v3842
    %v3917 = vunpack.c.h.b16 %v3842
    %v3918 = vunpack.c.l.b16 %v3843
    %v3919 = vunpack.c.l.b16 %v3844
    %v3920 = vunpack.c.h.b16 %v3844
    %v3921 = vunpack.c.l.b16 %v3845
    %v3922 = vunpack.c.l.b16 %v3846
    %v3923 = vunpack.c.h.b16 %v3846
    %v3924 = vunpack.c.l.b16 %v3847
    %v3925 = vunpack.c.l.b16 %v3848
    %v3926 = vunpack.c.h.b16 %v3848
    %v3927 = vunpack.c.l.b16 %v3849
    %v3928 = vunpack.c.l.b16 %v3850
    %v3929 = vunpack.c.h.b16 %v3850
    %v3930 = vunpack.c.l.b16 %v3851
    %v3931 = vunpack.c.l.b16 %v3852
    %v3932 = vunpack.c.h.b16 %v3852
    %v3933 = vunpack.c.l.b16 %v3853
    %v3934 = vunpack.c.l.b16 %v3854
    %v3935 = vunpack.c.h.b16 %v3854
    %v3936 = vunpack.c.l.b16 %v3855
    %v3937 = vunpack.c.l.b16 %v3856
    %v3938 = vunpack.c.h.b16 %v3856
    %v3939 = vunpack.c.l.b16 %v3857
    %v3940 = vunpack.c.l.b16 %v3858
    %v3941 = vunpack.c.h.b16 %v3858
    %v3942 = vunpack.c.l.b16 %v3859
    %v3943 = vunpack.c.l.b16 %v3860
    %v3944 = vunpack.c.h.b16 %v3860
    %v3945 = vunpack.c.l.b16 %v3861
    %v3946 = vunpack.c.l.b16 %v3862
    %v3947 = vunpack.c.h.b16 %v3862
    %v3948 = vunpack.c.l.b16 %v3863
    %v3949 = vunpack.c.l.b16 %v3864
    %v3950 = vunpack.c.h.b16 %v3864
    %v3951 = vunpack.c.l.b16 %v3865
    %v3952 = vpack.c.b16 %v3907, %v3904
    %v3953 = vpack.c.b16 %v3908, %v3905
    %v3954 = vpack.c.b16 %v3909, %v3906
    %v3955 = vpack.c.b16 %v3913, %v3910
    %v3956 = vpack.c.b16 %v3914, %v3911
    %v3957 = vpack.c.b16 %v3915, %v3912
    %v3958 = vpack.c.b16 %v3919, %v3916
    %v3959 = vpack.c.b16 %v3920, %v3917
    %v3960 = vpack.c.b16 %v3921, %v3918
    %v3961 = vpack.c.b16 %v3925, %v3922
    %v3962 = vpack.c.b16 %v3926, %v3923
    %v3963 = vpack.c.b16 %v3927, %v3924
    %v3964 = vpack.c.b16 %v3931, %v3928
    %v3965 = vpack.c.b16 %v3932, %v3929
    %v3966 = vpack.c.b16 %v3933, %v3930
    %v3967 = vpack.c.b16 %v3937, %v3934
    %v3968 = vpack.c.b16 %v3938, %v3935
    %v3969 = vpack.c.b16 %v3939, %v3936
    %v3970 = vpack.c.b16 %v3943, %v3940
    %v3971 = vpack.c.b16 %v3944, %v3941
    %v3972 = vpack.c.b16 %v3945, %v3942
    %v3973 = vpack.c.b16 %v3949, %v3946
    %v3974 = vpack.c.b16 %v3950, %v3947
    %v3975 = vpack.c.b16 %v3951, %v3948
    %4000 = vmatprep.subr.bf16.mxu0 %v3974
    %4001 = vmatpush1.bf16.msra.mxu0 %v3973
    %4002 = vmatprep.subr.bf16.mxu0 %v3971
    %4003 = vmatpush1.bf16.msra.mxu0 %v3970
    %4004 = vmatprep.subr.bf16.mxu0 %v3968
    %4005 = vmatpush1.bf16.msra.mxu0 %v3967
    %4006 = vmatprep.subr.bf16.mxu0 %v3965
    %4007 = vmatpush1.bf16.msra.mxu0 %v3964
    %4008 = vmatprep.subr.bf16.mxu0 %v3962
    %4009 = vmatpush1.bf16.msra.mxu0 %v3961
    %4010 = vmatprep.subr.bf16.mxu0 %v3959
    %4011 = vmatpush1.bf16.msra.mxu0 %v3958
    %4012 = vmatprep.subr.bf16.mxu0 %v3956
    %4013 = vmatpush1.bf16.msra.mxu0 %v3955
    %4014 = vmatprep.subr.bf16.mxu0 %v3953
    %4015 = vmatpush1.bf16.msra.mxu0 %v3952
    %4016 = vmatprep.subr.bf16.mxu0 0
    %4017 = vmatpush2.bf16.msra.mxu0 0
    %4018 = vmatprep.subr.bf16.mxu0 0
    %4019 = vmatpush2.bf16.msra.mxu0 0
    %4020 = vmatprep.subr.bf16.mxu0 0
    %4021 = vmatpush2.bf16.msra.mxu0 0
    %4022 = vmatprep.subr.bf16.mxu0 0
    %4023 = vmatpush2.bf16.msra.mxu0 0
    %4024 = vmatprep.subr.bf16.mxu0 0
    %4025 = vmatpush2.bf16.msra.mxu0 0
    %4026 = vmatprep.subr.bf16.mxu0 0
    %4027 = vmatpush2.bf16.msra.mxu0 0
    %4028 = vmatprep.subr.bf16.mxu0 0
    %4029 = vmatpush2.bf16.msra.mxu0 0
    %4030 = vmatprep.subr.bf16.mxu0 0
    %4031 = vmatpush2.bf16.msra.mxu0 0
    %4032 = vmatprep.mubr.bf16.mxu0 0
    %4033 = vmatmul.mubr.bf16.gmra.mxu0 0
    %v4034 = vpop.f32.mrf.mxu0
    %v4035 = vadd.f32 0.0, %v4034
    %v4036 = vpop.f32.mrf.mxu0
    %v4037 = vadd.f32 0.0, %v4036
    %v4038 = vpop.f32.mrf.mxu0
    %v4039 = vpop.f32.mrf.mxu0
    %4040 = vdwg.mxu0
    %4041 = vmatprep.subr.bf16.mxu0 0
    %4042 = vmatpush1.bf16.msra.mxu0 %v3975
    %4043 = vmatprep.subr.bf16.mxu0 0
    %4044 = vmatpush1.bf16.msra.mxu0 %v3972
    %4045 = vmatprep.subr.bf16.mxu0 0
    %4046 = vmatpush1.bf16.msra.mxu0 %v3969
    %4047 = vmatprep.subr.bf16.mxu0 0
    %4048 = vmatpush1.bf16.msra.mxu0 %v3966
    %4049 = vmatprep.subr.bf16.mxu0 0
    %4050 = vmatpush1.bf16.msra.mxu0 %v3963
    %4051 = vmatprep.subr.bf16.mxu0 0
    %4052 = vmatpush1.bf16.msra.mxu0 %v3960
    %4053 = vmatprep.subr.bf16.mxu0 0
    %4054 = vmatpush1.bf16.msra.mxu0 %v3957
    %4055 = vmatprep.subr.bf16.mxu0 0
    %4056 = vmatpush1.bf16.msra.mxu0 %v3954
    %4057 = vmatprep.subr.bf16.mxu0 0
    %4058 = vmatpush2.bf16.msra.mxu0 0
    %4059 = vmatprep.subr.bf16.mxu0 0
    %4060 = vmatpush2.bf16.msra.mxu0 0
    %4061 = vmatprep.subr.bf16.mxu0 0
    %4062 = vmatpush2.bf16.msra.mxu0 0
    %4063 = vmatprep.subr.bf16.mxu0 0
    %4064 = vmatpush2.bf16.msra.mxu0 0
    %4065 = vmatprep.subr.bf16.mxu0 0
    %4066 = vmatpush2.bf16.msra.mxu0 0
    %4067 = vmatprep.subr.bf16.mxu0 0
    %4068 = vmatpush2.bf16.msra.mxu0 0
    %4069 = vmatprep.subr.bf16.mxu0 0
    %4070 = vmatpush2.bf16.msra.mxu0 0
    %4071 = vmatprep.subr.bf16.mxu0 0
    %4072 = vmatpush2.bf16.msra.mxu0 0
    %4073 = vmatprep.mubr.bf16.mxu0 0
    %4074 = vmatmul.mubr.bf16.gmra.mxu0 0
    %v4075 = vpop.f32.mrf.mxu0
    %v4076 = vadd.f32 0.0, %v4075
    %v4077 = vpop.f32.mrf.mxu0
    %v4078 = vpop.f32.mrf.mxu0
    %v4079 = vpop.f32.mrf.mxu0
    %4080 = vdwg.mxu0
    %v4081 = vadd.f32 %v3869, %v4035
    %v4082 = vadd.f32 %v3870, %v4037
    %v4083 = vxor.u32 %v4081, 2147483648
    %v4084 = vxor.u32 %v4082, 2147483648
    %v4085 = vmul.f32 %v4083, 1.442695
    %v4086 = vpow.pop %v4085
    %v4087 = vmul.f32 %v4084, 1.442695
    %v4088 = vpow.pop %v4087
    %v4089 = vadd.f32 %v4086, 1.0
    %v4090 = vadd.f32 %v4088, 1.0
    %v4091 = vrcp.pop %v4089
    %v4092 = vmul.f32 1.0, %v4091
    %v4093 = vrcp.pop %v4090
    %v4094 = vmul.f32 1.0, %v4093
    %v4096 = vlaneseq
    %v4097 = vshrl.u32 %v4096, 7
    %v4098 = vsub.s32 0, %v4097
    %v4099 = vrot.slane %v3866, %v4098
    %v4101 = vadd.f32 %v4076, %v4099
    %v4102 = vmul.f32 %v4092, %v4101
    %v4103 = vadd.f32 %v3871, %v4102
    %v4104 = vtanh.pop %v4103
    %v4105 = vsub.f32 1.0, %v4094
    %v4106 = vmul.f32 %v4105, %v4104
    %v4107 = vmul.f32 %v4094, 0.0
    %v4108 = vadd.f32 %v4106, %v4107
    %4109 = vst [vmem:[#allocation19] sm:$0xff] %v4108
    %v4110 = vld [vmem:[%s851] sm:$0xff]
    %v4111 = vld [vmem:[%s851 + $0x8] sm:$0xf]
    %v4112 = vunpack.c.l.bf16 %v4110
    %v4113 = vunpack.c.h.bf16 %v4110
    %v4114 = vunpack.c.l.bf16 %v4111
    %v4115 = vpack.c.bf16 %v4108, %v4108
    %4116 = vmatprep.subr.bf16.mxu0 %v3974
    %4117 = vmatpush1.bf16.msra.mxu0 %v3973
    %4118 = vmatprep.subr.bf16.mxu0 %v3971
    %4119 = vmatpush1.bf16.msra.mxu0 %v3970
    %4120 = vmatprep.subr.bf16.mxu0 %v3968
    %4121 = vmatpush1.bf16.msra.mxu0 %v3967
    %4122 = vmatprep.subr.bf16.mxu0 %v3965
    %4123 = vmatpush1.bf16.msra.mxu0 %v3964
    %4124 = vmatprep.subr.bf16.mxu0 %v3962
    %4125 = vmatpush1.bf16.msra.mxu0 %v3961
    %4126 = vmatprep.subr.bf16.mxu0 %v3959
    %4127 = vmatpush1.bf16.msra.mxu0 %v3958
    %4128 = vmatprep.subr.bf16.mxu0 %v3956
    %4129 = vmatpush1.bf16.msra.mxu0 %v3955
    %4130 = vmatprep.subr.bf16.mxu0 %v3953
    %4131 = vmatpush1.bf16.msra.mxu0 %v3952
    %4132 = vmatprep.subr.bf16.mxu0 0
    %4133 = vmatpush2.bf16.msra.mxu0 0
    %4134 = vmatprep.subr.bf16.mxu0 0
    %4135 = vmatpush2.bf16.msra.mxu0 0
    %4136 = vmatprep.subr.bf16.mxu0 0
    %4137 = vmatpush2.bf16.msra.mxu0 0
    %4138 = vmatprep.subr.bf16.mxu0 0
    %4139 = vmatpush2.bf16.msra.mxu0 0
    %4140 = vmatprep.subr.bf16.mxu0 0
    %4141 = vmatpush2.bf16.msra.mxu0 0
    %4142 = vmatprep.subr.bf16.mxu0 0
    %4143 = vmatpush2.bf16.msra.mxu0 0
    %4144 = vmatprep.subr.bf16.mxu0 0
    %4145 = vmatpush2.bf16.msra.mxu0 0
    %4146 = vmatprep.subr.bf16.mxu0 0
    %4147 = vmatpush2.bf16.msra.mxu0 0
    %4148 = vmatprep.mubr.bf16.mxu0 0
    %4149 = vmatmul.mubr.bf16.gmra.mxu0 %v4115
    %v4150 = vpop.f32.mrf.mxu0
    %v4151 = vadd.f32 0.0, %v4150
    %v4152 = vpop.f32.mrf.mxu0
    %v4153 = vadd.f32 0.0, %v4152
    %v4154 = vpop.f32.mrf.mxu0
    %v4155 = vpop.f32.mrf.mxu0
    %4156 = vdwg.mxu0
    %4157 = vmatprep.subr.bf16.mxu0 0
    %4158 = vmatpush1.bf16.msra.mxu0 %v3975
    %4159 = vmatprep.subr.bf16.mxu0 0
    %4160 = vmatpush1.bf16.msra.mxu0 %v3972
    %4161 = vmatprep.subr.bf16.mxu0 0
    %4162 = vmatpush1.bf16.msra.mxu0 %v3969
    %4163 = vmatprep.subr.bf16.mxu0 0
    %4164 = vmatpush1.bf16.msra.mxu0 %v3966
    %4165 = vmatprep.subr.bf16.mxu0 0
    %4166 = vmatpush1.bf16.msra.mxu0 %v3963
    %4167 = vmatprep.subr.bf16.mxu0 0
    %4168 = vmatpush1.bf16.msra.mxu0 %v3960
    %4169 = vmatprep.subr.bf16.mxu0 0
    %4170 = vmatpush1.bf16.msra.mxu0 %v3957
    %4171 = vmatprep.subr.bf16.mxu0 0
    %4172 = vmatpush1.bf16.msra.mxu0 %v3954
    %4173 = vmatprep.subr.bf16.mxu0 0
    %4174 = vmatpush2.bf16.msra.mxu0 0
    %4175 = vmatprep.subr.bf16.mxu0 0
    %4176 = vmatpush2.bf16.msra.mxu0 0
    %4177 = vmatprep.subr.bf16.mxu0 0
    %4178 = vmatpush2.bf16.msra.mxu0 0
    %4179 = vmatprep.subr.bf16.mxu0 0
    %4180 = vmatpush2.bf16.msra.mxu0 0
    %4181 = vmatprep.subr.bf16.mxu0 0
    %4182 = vmatpush2.bf16.msra.mxu0 0
    %4183 = vmatprep.subr.bf16.mxu0 0
    %4184 = vmatpush2.bf16.msra.mxu0 0
    %4185 = vmatprep.subr.bf16.mxu0 0
    %4186 = vmatpush2.bf16.msra.mxu0 0
    %4187 = vmatprep.subr.bf16.mxu0 0
    %4188 = vmatpush2.bf16.msra.mxu0 0
    %4189 = vmatprep.mubr.bf16.mxu0 0
    %4190 = vmatmul.mubr.bf16.gmra.mxu0 %v4115
    %v4191 = vpop.f32.mrf.mxu0
    %v4192 = vadd.f32 0.0, %v4191
    %v4193 = vpop.f32.mrf.mxu0
    %v4194 = vpop.f32.mrf.mxu0
    %v4195 = vpop.f32.mrf.mxu0
    %4196 = vdwg.mxu0
    %v4197 = vadd.f32 %v4112, %v4151
    %v4198 = vadd.f32 %v4113, %v4153
    %v4199 = vxor.u32 %v4197, 2147483648
    %v4200 = vxor.u32 %v4198, 2147483648
    %v4201 = vmul.f32 %v4199, 1.442695
    %v4202 = vpow.pop %v4201
    %v4203 = vmul.f32 %v4200, 1.442695
    %v4204 = vpow.pop %v4203
    %v4205 = vadd.f32 %v4202, 1.0
    %v4206 = vadd.f32 %v4204, 1.0
    %v4207 = vrcp.pop %v4205
    %v4208 = vmul.f32 1.0, %v4207
    %v4209 = vrcp.pop %v4206
    %v4210 = vmul.f32 1.0, %v4209
    %v4211 = vadd.f32 %v4192, %v4099
    %v4212 = vmul.f32 %v4208, %v4211
    %v4213 = vadd.f32 %v4114, %v4212
    %v4214 = vtanh.pop %v4213
    %v4215 = vsub.f32 1.0, %v4210
    %v4216 = vmul.f32 %v4215, %v4214
    %v4217 = vmul.f32 %v4210, %v4108
    %v4218 = vadd.f32 %v4216, %v4217
    %s4219 = scalar_lea.vmem [#allocation19], 8
    %4220 = vst [vmem:[%s4219] sm:$0xff] %v4218
    %v4221 = vld [vmem:[%s965] sm:$0xff]
    %v4222 = vld [vmem:[%s965 + $0x8] sm:$0xf]
    %v4223 = vunpack.c.l.bf16 %v4221
    %v4224 = vunpack.c.h.bf16 %v4221
    %v4225 = vunpack.c.l.bf16 %v4222
    %v4226 = vpack.c.bf16 %v4218, %v4218
    %4227 = vmatprep.subr.bf16.mxu0 %v3974
    %4228 = vmatpush1.bf16.msra.mxu0 %v3973
    %4229 = vmatprep.subr.bf16.mxu0 %v3971
    %4230 = vmatpush1.bf16.msra.mxu0 %v3970
    %4231 = vmatprep.subr.bf16.mxu0 %v3968
    %4232 = vmatpush1.bf16.msra.mxu0 %v3967
    %4233 = vmatprep.subr.bf16.mxu0 %v3965
    %4234 = vmatpush1.bf16.msra.mxu0 %v3964
    %4235 = vmatprep.subr.bf16.mxu0 %v3962
    %4236 = vmatpush1.bf16.msra.mxu0 %v3961
    %4237 = vmatprep.subr.bf16.mxu0 %v3959
    %4238 = vmatpush1.bf16.msra.mxu0 %v3958
    %4239 = vmatprep.subr.bf16.mxu0 %v3956
    %4240 = vmatpush1.bf16.msra.mxu0 %v3955
    %4241 = vmatprep.subr.bf16.mxu0 %v3953
    %4242 = vmatpush1.bf16.msra.mxu0 %v3952
    %4243 = vmatprep.subr.bf16.mxu0 0
    %4244 = vmatpush2.bf16.msra.mxu0 0
    %4245 = vmatprep.subr.bf16.mxu0 0
    %4246 = vmatpush2.bf16.msra.mxu0 0
    %4247 = vmatprep.subr.bf16.mxu0 0
    %4248 = vmatpush2.bf16.msra.mxu0 0
    %4249 = vmatprep.subr.bf16.mxu0 0
    %4250 = vmatpush2.bf16.msra.mxu0 0
    %4251 = vmatprep.subr.bf16.mxu0 0
    %4252 = vmatpush2.bf16.msra.mxu0 0
    %4253 = vmatprep.subr.bf16.mxu0 0
    %4254 = vmatpush2.bf16.msra.mxu0 0
    %4255 = vmatprep.subr.bf16.mxu0 0
    %4256 = vmatpush2.bf16.msra.mxu0 0
    %4257 = vmatprep.subr.bf16.mxu0 0
    %4258 = vmatpush2.bf16.msra.mxu0 0
    %4259 = vmatprep.mubr.bf16.mxu0 0
    %4260 = vmatmul.mubr.bf16.gmra.mxu0 %v4226
    %v4261 = vpop.f32.mrf.mxu0
    %v4262 = vadd.f32 0.0, %v4261
    %v4263 = vpop.f32.mrf.mxu0
    %v4264 = vadd.f32 0.0, %v4263
    %v4265 = vpop.f32.mrf.mxu0
    %v4266 = vpop.f32.mrf.mxu0
    %4267 = vdwg.mxu0
    %4268 = vmatprep.subr.bf16.mxu0 0
    %4269 = vmatpush1.bf16.msra.mxu0 %v3975
    %4270 = vmatprep.subr.bf16.mxu0 0
    %4271 = vmatpush1.bf16.msra.mxu0 %v3972
    %4272 = vmatprep.subr.bf16.mxu0 0
    %4273 = vmatpush1.bf16.msra.mxu0 %v3969
    %4274 = vmatprep.subr.bf16.mxu0 0
    %4275 = vmatpush1.bf16.msra.mxu0 %v3966
    %4276 = vmatprep.subr.bf16.mxu0 0
    %4277 = vmatpush1.bf16.msra.mxu0 %v3963
    %4278 = vmatprep.subr.bf16.mxu0 0
    %4279 = vmatpush1.bf16.msra.mxu0 %v3960
    %4280 = vmatprep.subr.bf16.mxu0 0
    %4281 = vmatpush1.bf16.msra.mxu0 %v3957
    %4282 = vmatprep.subr.bf16.mxu0 0
    %4283 = vmatpush1.bf16.msra.mxu0 %v3954
    %4284 = vmatprep.subr.bf16.mxu0 0
    %4285 = vmatpush2.bf16.msra.mxu0 0
    %4286 = vmatprep.subr.bf16.mxu0 0
    %4287 = vmatpush2.bf16.msra.mxu0 0
    %4288 = vmatprep.subr.bf16.mxu0 0
    %4289 = vmatpush2.bf16.msra.mxu0 0
    %4290 = vmatprep.subr.bf16.mxu0 0
    %4291 = vmatpush2.bf16.msra.mxu0 0
    %4292 = vmatprep.subr.bf16.mxu0 0
    %4293 = vmatpush2.bf16.msra.mxu0 0
    %4294 = vmatprep.subr.bf16.mxu0 0
    %4295 = vmatpush2.bf16.msra.mxu0 0
    %4296 = vmatprep.subr.bf16.mxu0 0
    %4297 = vmatpush2.bf16.msra.mxu0 0
    %4298 = vmatprep.subr.bf16.mxu0 0
    %4299 = vmatpush2.bf16.msra.mxu0 0
    %4300 = vmatprep.mubr.bf16.mxu0 0
    %4301 = vmatmul.mubr.bf16.gmra.mxu0 %v4226
    %v4302 = vpop.f32.mrf.mxu0
    %v4303 = vadd.f32 0.0, %v4302
    %v4304 = vpop.f32.mrf.mxu0
    %v4305 = vpop.f32.mrf.mxu0
    %v4306 = vpop.f32.mrf.mxu0
    %4307 = vdwg.mxu0
    %v4308 = vadd.f32 %v4223, %v4262
    %v4309 = vadd.f32 %v4224, %v4264
    %v4310 = vxor.u32 %v4308, 2147483648
    %v4311 = vxor.u32 %v4309, 2147483648
    %v4312 = vmul.f32 %v4310, 1.442695
    %v4313 = vpow.pop %v4312
    %v4314 = vmul.f32 %v4311, 1.442695
    %v4315 = vpow.pop %v4314
    %v4316 = vadd.f32 %v4313, 1.0
    %v4317 = vadd.f32 %v4315, 1.0
    %v4318 = vrcp.pop %v4316
    %v4319 = vmul.f32 1.0, %v4318
    %v4320 = vrcp.pop %v4317
    %v4321 = vmul.f32 1.0, %v4320
    %v4322 = vadd.f32 %v4303, %v4099
    %v4323 = vmul.f32 %v4319, %v4322
    %v4324 = vadd.f32 %v4225, %v4323
    %v4325 = vtanh.pop %v4324
    %v4326 = vsub.f32 1.0, %v4321
    %v4327 = vmul.f32 %v4326, %v4325
    %v4328 = vmul.f32 %v4321, %v4218
    %v4329 = vadd.f32 %v4327, %v4328
    %s4330 = scalar_lea.vmem [#allocation19], 16
    %4331 = vst [vmem:[%s4330] sm:$0xff] %v4329
    %v4332 = vld [vmem:[%s1079] sm:$0xff]
    %v4333 = vld [vmem:[%s1079 + $0x8] sm:$0xf]
    %v4334 = vunpack.c.l.bf16 %v4332
    %v4335 = vunpack.c.h.bf16 %v4332
    %v4336 = vunpack.c.l.bf16 %v4333
    %v4337 = vpack.c.bf16 %v4329, %v4329
    %4338 = vmatprep.subr.bf16.mxu0 %v3974
    %4339 = vmatpush1.bf16.msra.mxu0 %v3973
    %4340 = vmatprep.subr.bf16.mxu0 %v3971
    %4341 = vmatpush1.bf16.msra.mxu0 %v3970
    %4342 = vmatprep.subr.bf16.mxu0 %v3968
    %4343 = vmatpush1.bf16.msra.mxu0 %v3967
    %4344 = vmatprep.subr.bf16.mxu0 %v3965
    %4345 = vmatpush1.bf16.msra.mxu0 %v3964
    %4346 = vmatprep.subr.bf16.mxu0 %v3962
    %4347 = vmatpush1.bf16.msra.mxu0 %v3961
    %4348 = vmatprep.subr.bf16.mxu0 %v3959
    %4349 = vmatpush1.bf16.msra.mxu0 %v3958
    %4350 = vmatprep.subr.bf16.mxu0 %v3956
    %4351 = vmatpush1.bf16.msra.mxu0 %v3955
    %4352 = vmatprep.subr.bf16.mxu0 %v3953
    %4353 = vmatpush1.bf16.msra.mxu0 %v3952
    %4354 = vmatprep.subr.bf16.mxu0 0
    %4355 = vmatpush2.bf16.msra.mxu0 0
    %4356 = vmatprep.subr.bf16.mxu0 0
    %4357 = vmatpush2.bf16.msra.mxu0 0
    %4358 = vmatprep.subr.bf16.mxu0 0
    %4359 = vmatpush2.bf16.msra.mxu0 0
    %4360 = vmatprep.subr.bf16.mxu0 0
    %4361 = vmatpush2.bf16.msra.mxu0 0
    %4362 = vmatprep.subr.bf16.mxu0 0
    %4363 = vmatpush2.bf16.msra.mxu0 0
    %4364 = vmatprep.subr.bf16.mxu0 0
    %4365 = vmatpush2.bf16.msra.mxu0 0
    %4366 = vmatprep.subr.bf16.mxu0 0
    %4367 = vmatpush2.bf16.msra.mxu0 0
    %4368 = vmatprep.subr.bf16.mxu0 0
    %4369 = vmatpush2.bf16.msra.mxu0 0
    %4370 = vmatprep.mubr.bf16.mxu0 0
    %4371 = vmatmul.mubr.bf16.gmra.mxu0 %v4337
    %v4372 = vpop.f32.mrf.mxu0
    %v4373 = vadd.f32 0.0, %v4372
    %v4374 = vpop.f32.mrf.mxu0
    %v4375 = vadd.f32 0.0, %v4374
    %v4376 = vpop.f32.mrf.mxu0
    %v4377 = vpop.f32.mrf.mxu0
    %4378 = vdwg.mxu0
    %4379 = vmatprep.subr.bf16.mxu0 0
    %4380 = vmatpush1.bf16.msra.mxu0 %v3975
    %4381 = vmatprep.subr.bf16.mxu0 0
    %4382 = vmatpush1.bf16.msra.mxu0 %v3972
    %4383 = vmatprep.subr.bf16.mxu0 0
    %4384 = vmatpush1.bf16.msra.mxu0 %v3969
    %4385 = vmatprep.subr.bf16.mxu0 0
    %4386 = vmatpush1.bf16.msra.mxu0 %v3966
    %4387 = vmatprep.subr.bf16.mxu0 0
    %4388 = vmatpush1.bf16.msra.mxu0 %v3963
    %4389 = vmatprep.subr.bf16.mxu0 0
    %4390 = vmatpush1.bf16.msra.mxu0 %v3960
    %4391 = vmatprep.subr.bf16.mxu0 0
    %4392 = vmatpush1.bf16.msra.mxu0 %v3957
    %4393 = vmatprep.subr.bf16.mxu0 0
    %4394 = vmatpush1.bf16.msra.mxu0 %v3954
    %4395 = vmatprep.subr.bf16.mxu0 0
    %4396 = vmatpush2.bf16.msra.mxu0 0
    %4397 = vmatprep.subr.bf16.mxu0 0
    %4398 = vmatpush2.bf16.msra.mxu0 0
    %4399 = vmatprep.subr.bf16.mxu0 0
    %4400 = vmatpush2.bf16.msra.mxu0 0
    %4401 = vmatprep.subr.bf16.mxu0 0
    %4402 = vmatpush2.bf16.msra.mxu0 0
    %4403 = vmatprep.subr.bf16.mxu0 0
    %4404 = vmatpush2.bf16.msra.mxu0 0
    %4405 = vmatprep.subr.bf16.mxu0 0
    %4406 = vmatpush2.bf16.msra.mxu0 0
    %4407 = vmatprep.subr.bf16.mxu0 0
    %4408 = vmatpush2.bf16.msra.mxu0 0
    %4409 = vmatprep.subr.bf16.mxu0 0
    %4410 = vmatpush2.bf16.msra.mxu0 0
    %4411 = vmatprep.mubr.bf16.mxu0 0
    %4412 = vmatmul.mubr.bf16.gmra.mxu0 %v4337
    %v4413 = vpop.f32.mrf.mxu0
    %v4414 = vadd.f32 0.0, %v4413
    %v4415 = vpop.f32.mrf.mxu0
    %v4416 = vpop.f32.mrf.mxu0
    %v4417 = vpop.f32.mrf.mxu0
    %4418 = vdwg.mxu0
    %v4419 = vadd.f32 %v4334, %v4373
    %v4420 = vadd.f32 %v4335, %v4375
    %v4421 = vxor.u32 %v4419, 2147483648
    %v4422 = vxor.u32 %v4420, 2147483648
    %v4423 = vmul.f32 %v4421, 1.442695
    %v4424 = vpow.pop %v4423
    %v4425 = vmul.f32 %v4422, 1.442695
    %v4426 = vpow.pop %v4425
    %v4427 = vadd.f32 %v4424, 1.0
    %v4428 = vadd.f32 %v4426, 1.0
    %v4429 = vrcp.pop %v4427
    %v4430 = vmul.f32 1.0, %v4429
    %v4431 = vrcp.pop %v4428
    %v4432 = vmul.f32 1.0, %v4431
    %v4433 = vadd.f32 %v4414, %v4099
    %v4434 = vmul.f32 %v4430, %v4433
    %v4435 = vadd.f32 %v4336, %v4434
    %v4436 = vtanh.pop %v4435
    %v4437 = vsub.f32 1.0, %v4432
    %v4438 = vmul.f32 %v4437, %v4436
    %v4439 = vmul.f32 %v4432, %v4329
    %v4440 = vadd.f32 %v4438, %v4439
    %s4441 = scalar_lea.vmem [#allocation19], 24
    %4442 = vst [vmem:[%s4441] sm:$0xff] %v4440
    %v4443 = vld [vmem:[%s1193] sm:$0xff]
    %v4444 = vld [vmem:[%s1193 + $0x8] sm:$0xf]
    %v4445 = vunpack.c.l.bf16 %v4443
    %v4446 = vunpack.c.h.bf16 %v4443
    %v4447 = vunpack.c.l.bf16 %v4444
    %v4448 = vpack.c.bf16 %v4440, %v4440
    %4449 = vmatprep.subr.bf16.mxu0 %v3974
    %4450 = vmatpush1.bf16.msra.mxu0 %v3973
    %4451 = vmatprep.subr.bf16.mxu0 %v3971
    %4452 = vmatpush1.bf16.msra.mxu0 %v3970
    %4453 = vmatprep.subr.bf16.mxu0 %v3968
    %4454 = vmatpush1.bf16.msra.mxu0 %v3967
    %4455 = vmatprep.subr.bf16.mxu0 %v3965
    %4456 = vmatpush1.bf16.msra.mxu0 %v3964
    %4457 = vmatprep.subr.bf16.mxu0 %v3962
    %4458 = vmatpush1.bf16.msra.mxu0 %v3961
    %4459 = vmatprep.subr.bf16.mxu0 %v3959
    %4460 = vmatpush1.bf16.msra.mxu0 %v3958
    %4461 = vmatprep.subr.bf16.mxu0 %v3956
    %4462 = vmatpush1.bf16.msra.mxu0 %v3955
    %4463 = vmatprep.subr.bf16.mxu0 %v3953
    %4464 = vmatpush1.bf16.msra.mxu0 %v3952
    %4465 = vmatprep.subr.bf16.mxu0 0
    %4466 = vmatpush2.bf16.msra.mxu0 0
    %4467 = vmatprep.subr.bf16.mxu0 0
    %4468 = vmatpush2.bf16.msra.mxu0 0
    %4469 = vmatprep.subr.bf16.mxu0 0
    %4470 = vmatpush2.bf16.msra.mxu0 0
    %4471 = vmatprep.subr.bf16.mxu0 0
    %4472 = vmatpush2.bf16.msra.mxu0 0
    %4473 = vmatprep.subr.bf16.mxu0 0
    %4474 = vmatpush2.bf16.msra.mxu0 0
    %4475 = vmatprep.subr.bf16.mxu0 0
    %4476 = vmatpush2.bf16.msra.mxu0 0
    %4477 = vmatprep.subr.bf16.mxu0 0
    %4478 = vmatpush2.bf16.msra.mxu0 0
    %4479 = vmatprep.subr.bf16.mxu0 0
    %4480 = vmatpush2.bf16.msra.mxu0 0
    %4481 = vmatprep.mubr.bf16.mxu0 0
    %4482 = vmatmul.mubr.bf16.gmra.mxu0 %v4448
    %v4483 = vpop.f32.mrf.mxu0
    %v4484 = vadd.f32 0.0, %v4483
    %v4485 = vpop.f32.mrf.mxu0
    %v4486 = vadd.f32 0.0, %v4485
    %v4487 = vpop.f32.mrf.mxu0
    %v4488 = vpop.f32.mrf.mxu0
    %4489 = vdwg.mxu0
    %4490 = vmatprep.subr.bf16.mxu0 0
    %4491 = vmatpush1.bf16.msra.mxu0 %v3975
    %4492 = vmatprep.subr.bf16.mxu0 0
    %4493 = vmatpush1.bf16.msra.mxu0 %v3972
    %4494 = vmatprep.subr.bf16.mxu0 0
    %4495 = vmatpush1.bf16.msra.mxu0 %v3969
    %4496 = vmatprep.subr.bf16.mxu0 0
    %4497 = vmatpush1.bf16.msra.mxu0 %v3966
    %4498 = vmatprep.subr.bf16.mxu0 0
    %4499 = vmatpush1.bf16.msra.mxu0 %v3963
    %4500 = vmatprep.subr.bf16.mxu0 0
    %4501 = vmatpush1.bf16.msra.mxu0 %v3960
    %4502 = vmatprep.subr.bf16.mxu0 0
    %4503 = vmatpush1.bf16.msra.mxu0 %v3957
    %4504 = vmatprep.subr.bf16.mxu0 0
    %4505 = vmatpush1.bf16.msra.mxu0 %v3954
    %4506 = vmatprep.subr.bf16.mxu0 0
    %4507 = vmatpush2.bf16.msra.mxu0 0
    %4508 = vmatprep.subr.bf16.mxu0 0
    %4509 = vmatpush2.bf16.msra.mxu0 0
    %4510 = vmatprep.subr.bf16.mxu0 0
    %4511 = vmatpush2.bf16.msra.mxu0 0
    %4512 = vmatprep.subr.bf16.mxu0 0
    %4513 = vmatpush2.bf16.msra.mxu0 0
    %4514 = vmatprep.subr.bf16.mxu0 0
    %4515 = vmatpush2.bf16.msra.mxu0 0
    %4516 = vmatprep.subr.bf16.mxu0 0
    %4517 = vmatpush2.bf16.msra.mxu0 0
    %4518 = vmatprep.subr.bf16.mxu0 0
    %4519 = vmatpush2.bf16.msra.mxu0 0
    %4520 = vmatprep.subr.bf16.mxu0 0
    %4521 = vmatpush2.bf16.msra.mxu0 0
    %4522 = vmatprep.mubr.bf16.mxu0 0
    %4523 = vmatmul.mubr.bf16.gmra.mxu0 %v4448
    %v4524 = vpop.f32.mrf.mxu0
    %v4525 = vadd.f32 0.0, %v4524
    %v4526 = vpop.f32.mrf.mxu0
    %v4527 = vpop.f32.mrf.mxu0
    %v4528 = vpop.f32.mrf.mxu0
    %4529 = vdwg.mxu0
    %v4530 = vadd.f32 %v4445, %v4484
    %v4531 = vadd.f32 %v4446, %v4486
    %v4532 = vxor.u32 %v4530, 2147483648
    %v4533 = vxor.u32 %v4531, 2147483648
    %v4534 = vmul.f32 %v4532, 1.442695
    %v4535 = vpow.pop %v4534
    %v4536 = vmul.f32 %v4533, 1.442695
    %v4537 = vpow.pop %v4536
    %v4538 = vadd.f32 %v4535, 1.0
    %v4539 = vadd.f32 %v4537, 1.0
    %v4540 = vrcp.pop %v4538
    %v4541 = vmul.f32 1.0, %v4540
    %v4542 = vrcp.pop %v4539
    %v4543 = vmul.f32 1.0, %v4542
    %v4544 = vadd.f32 %v4525, %v4099
    %v4545 = vmul.f32 %v4541, %v4544
    %v4546 = vadd.f32 %v4447, %v4545
    %v4547 = vtanh.pop %v4546
    %v4548 = vsub.f32 1.0, %v4543
    %v4549 = vmul.f32 %v4548, %v4547
    %v4550 = vmul.f32 %v4543, %v4440
    %v4551 = vadd.f32 %v4549, %v4550
    %s4552 = scalar_lea.vmem [#allocation19], 32
    %4553 = vst [vmem:[%s4552] sm:$0xff] %v4551
    %v4554 = vld [vmem:[%s1305] sm:$0xff]
    %v4555 = vld [vmem:[%s1305 + $0x8] sm:$0xf]
    %v4556 = vunpack.c.l.bf16 %v4554
    %v4557 = vunpack.c.h.bf16 %v4554
    %v4558 = vunpack.c.l.bf16 %v4555
    %v4559 = vpack.c.bf16 %v4551, %v4551
    %4560 = vmatprep.subr.bf16.mxu0 %v3974
    %4561 = vmatpush1.bf16.msra.mxu0 %v3973
    %4562 = vmatprep.subr.bf16.mxu0 %v3971
    %4563 = vmatpush1.bf16.msra.mxu0 %v3970
    %4564 = vmatprep.subr.bf16.mxu0 %v3968
    %4565 = vmatpush1.bf16.msra.mxu0 %v3967
    %4566 = vmatprep.subr.bf16.mxu0 %v3965
    %4567 = vmatpush1.bf16.msra.mxu0 %v3964
    %4568 = vmatprep.subr.bf16.mxu0 %v3962
    %4569 = vmatpush1.bf16.msra.mxu0 %v3961
    %4570 = vmatprep.subr.bf16.mxu0 %v3959
    %4571 = vmatpush1.bf16.msra.mxu0 %v3958
    %4572 = vmatprep.subr.bf16.mxu0 %v3956
    %4573 = vmatpush1.bf16.msra.mxu0 %v3955
    %4574 = vmatprep.subr.bf16.mxu0 %v3953
    %4575 = vmatpush1.bf16.msra.mxu0 %v3952
    %4576 = vmatprep.subr.bf16.mxu0 0
    %4577 = vmatpush2.bf16.msra.mxu0 0
    %4578 = vmatprep.subr.bf16.mxu0 0
    %4579 = vmatpush2.bf16.msra.mxu0 0
    %4580 = vmatprep.subr.bf16.mxu0 0
    %4581 = vmatpush2.bf16.msra.mxu0 0
    %4582 = vmatprep.subr.bf16.mxu0 0
    %4583 = vmatpush2.bf16.msra.mxu0 0
    %4584 = vmatprep.subr.bf16.mxu0 0
    %4585 = vmatpush2.bf16.msra.mxu0 0
    %4586 = vmatprep.subr.bf16.mxu0 0
    %4587 = vmatpush2.bf16.msra.mxu0 0
    %4588 = vmatprep.subr.bf16.mxu0 0
    %4589 = vmatpush2.bf16.msra.mxu0 0
    %4590 = vmatprep.subr.bf16.mxu0 0
    %4591 = vmatpush2.bf16.msra.mxu0 0
    %4592 = vmatprep.mubr.bf16.mxu0 0
    %4593 = vmatmul.mubr.bf16.gmra.mxu0 %v4559
    %v4594 = vpop.f32.mrf.mxu0
    %v4595 = vadd.f32 0.0, %v4594
    %v4596 = vpop.f32.mrf.mxu0
    %v4597 = vadd.f32 0.0, %v4596
    %v4598 = vpop.f32.mrf.mxu0
    %v4599 = vpop.f32.mrf.mxu0
    %4600 = vdwg.mxu0
    %4601 = vmatprep.subr.bf16.mxu0 0
    %4602 = vmatpush1.bf16.msra.mxu0 %v3975
    %4603 = vmatprep.subr.bf16.mxu0 0
    %4604 = vmatpush1.bf16.msra.mxu0 %v3972
    %4605 = vmatprep.subr.bf16.mxu0 0
    %4606 = vmatpush1.bf16.msra.mxu0 %v3969
    %4607 = vmatprep.subr.bf16.mxu0 0
    %4608 = vmatpush1.bf16.msra.mxu0 %v3966
    %4609 = vmatprep.subr.bf16.mxu0 0
    %4610 = vmatpush1.bf16.msra.mxu0 %v3963
    %4611 = vmatprep.subr.bf16.mxu0 0
    %4612 = vmatpush1.bf16.msra.mxu0 %v3960
    %4613 = vmatprep.subr.bf16.mxu0 0
    %4614 = vmatpush1.bf16.msra.mxu0 %v3957
    %4615 = vmatprep.subr.bf16.mxu0 0
    %4616 = vmatpush1.bf16.msra.mxu0 %v3954
    %4617 = vmatprep.subr.bf16.mxu0 0
    %4618 = vmatpush2.bf16.msra.mxu0 0
    %4619 = vmatprep.subr.bf16.mxu0 0
    %4620 = vmatpush2.bf16.msra.mxu0 0
    %4621 = vmatprep.subr.bf16.mxu0 0
    %4622 = vmatpush2.bf16.msra.mxu0 0
    %4623 = vmatprep.subr.bf16.mxu0 0
    %4624 = vmatpush2.bf16.msra.mxu0 0
    %4625 = vmatprep.subr.bf16.mxu0 0
    %4626 = vmatpush2.bf16.msra.mxu0 0
    %4627 = vmatprep.subr.bf16.mxu0 0
    %4628 = vmatpush2.bf16.msra.mxu0 0
    %4629 = vmatprep.subr.bf16.mxu0 0
    %4630 = vmatpush2.bf16.msra.mxu0 0
    %4631 = vmatprep.subr.bf16.mxu0 0
    %4632 = vmatpush2.bf16.msra.mxu0 0
    %4633 = vmatprep.mubr.bf16.mxu0 0
    %4634 = vmatmul.mubr.bf16.gmra.mxu0 %v4559
    %v4635 = vpop.f32.mrf.mxu0
    %v4636 = vadd.f32 0.0, %v4635
    %v4637 = vpop.f32.mrf.mxu0
    %v4638 = vpop.f32.mrf.mxu0
    %v4639 = vpop.f32.mrf.mxu0
    %4640 = vdwg.mxu0
    %v4641 = vadd.f32 %v4556, %v4595
    %v4642 = vadd.f32 %v4557, %v4597
    %v4643 = vxor.u32 %v4641, 2147483648
    %v4644 = vxor.u32 %v4642, 2147483648
    %v4645 = vmul.f32 %v4643, 1.442695
    %v4646 = vpow.pop %v4645
    %v4647 = vmul.f32 %v4644, 1.442695
    %v4648 = vpow.pop %v4647
    %v4649 = vadd.f32 %v4646, 1.0
    %v4650 = vadd.f32 %v4648, 1.0
    %v4651 = vrcp.pop %v4649
    %v4652 = vmul.f32 1.0, %v4651
    %v4653 = vrcp.pop %v4650
    %v4654 = vmul.f32 1.0, %v4653
    %v4655 = vadd.f32 %v4636, %v4099
    %v4656 = vmul.f32 %v4652, %v4655
    %v4657 = vadd.f32 %v4558, %v4656
    %v4658 = vtanh.pop %v4657
    %v4659 = vsub.f32 1.0, %v4654
    %v4660 = vmul.f32 %v4659, %v4658
    %v4661 = vmul.f32 %v4654, %v4551
    %v4662 = vadd.f32 %v4660, %v4661
    %s4663 = scalar_lea.vmem [#allocation19], 40
    %4664 = vst [vmem:[%s4663] sm:$0xff] %v4662
    %v4665 = vld [vmem:[%s1417] sm:$0xff]
    %v4666 = vld [vmem:[%s1417 + $0x8] sm:$0xf]
    %v4667 = vunpack.c.l.bf16 %v4665
    %v4668 = vunpack.c.h.bf16 %v4665
    %v4669 = vunpack.c.l.bf16 %v4666
    %v4670 = vpack.c.bf16 %v4662, %v4662
    %4671 = vmatprep.subr.bf16.mxu0 %v3974
    %4672 = vmatpush1.bf16.msra.mxu0 %v3973
    %4673 = vmatprep.subr.bf16.mxu0 %v3971
    %4674 = vmatpush1.bf16.msra.mxu0 %v3970
    %4675 = vmatprep.subr.bf16.mxu0 %v3968
    %4676 = vmatpush1.bf16.msra.mxu0 %v3967
    %4677 = vmatprep.subr.bf16.mxu0 %v3965
    %4678 = vmatpush1.bf16.msra.mxu0 %v3964
    %4679 = vmatprep.subr.bf16.mxu0 %v3962
    %4680 = vmatpush1.bf16.msra.mxu0 %v3961
    %4681 = vmatprep.subr.bf16.mxu0 %v3959
    %4682 = vmatpush1.bf16.msra.mxu0 %v3958
    %4683 = vmatprep.subr.bf16.mxu0 %v3956
    %4684 = vmatpush1.bf16.msra.mxu0 %v3955
    %4685 = vmatprep.subr.bf16.mxu0 %v3953
    %4686 = vmatpush1.bf16.msra.mxu0 %v3952
    %4687 = vmatprep.subr.bf16.mxu0 0
    %4688 = vmatpush2.bf16.msra.mxu0 0
    %4689 = vmatprep.subr.bf16.mxu0 0
    %4690 = vmatpush2.bf16.msra.mxu0 0
    %4691 = vmatprep.subr.bf16.mxu0 0
    %4692 = vmatpush2.bf16.msra.mxu0 0
    %4693 = vmatprep.subr.bf16.mxu0 0
    %4694 = vmatpush2.bf16.msra.mxu0 0
    %4695 = vmatprep.subr.bf16.mxu0 0
    %4696 = vmatpush2.bf16.msra.mxu0 0
    %4697 = vmatprep.subr.bf16.mxu0 0
    %4698 = vmatpush2.bf16.msra.mxu0 0
    %4699 = vmatprep.subr.bf16.mxu0 0
    %4700 = vmatpush2.bf16.msra.mxu0 0
    %4701 = vmatprep.subr.bf16.mxu0 0
    %4702 = vmatpush2.bf16.msra.mxu0 0
    %4703 = vmatprep.mubr.bf16.mxu0 0
    %4704 = vmatmul.mubr.bf16.gmra.mxu0 %v4670
    %v4705 = vpop.f32.mrf.mxu0
    %v4706 = vadd.f32 0.0, %v4705
    %v4707 = vpop.f32.mrf.mxu0
    %v4708 = vadd.f32 0.0, %v4707
    %v4709 = vpop.f32.mrf.mxu0
    %v4710 = vpop.f32.mrf.mxu0
    %4711 = vdwg.mxu0
    %4712 = vmatprep.subr.bf16.mxu0 0
    %4713 = vmatpush1.bf16.msra.mxu0 %v3975
    %4714 = vmatprep.subr.bf16.mxu0 0
    %4715 = vmatpush1.bf16.msra.mxu0 %v3972
    %4716 = vmatprep.subr.bf16.mxu0 0
    %4717 = vmatpush1.bf16.msra.mxu0 %v3969
    %4718 = vmatprep.subr.bf16.mxu0 0
    %4719 = vmatpush1.bf16.msra.mxu0 %v3966
    %4720 = vmatprep.subr.bf16.mxu0 0
    %4721 = vmatpush1.bf16.msra.mxu0 %v3963
    %4722 = vmatprep.subr.bf16.mxu0 0
    %4723 = vmatpush1.bf16.msra.mxu0 %v3960
    %4724 = vmatprep.subr.bf16.mxu0 0
    %4725 = vmatpush1.bf16.msra.mxu0 %v3957
    %4726 = vmatprep.subr.bf16.mxu0 0
    %4727 = vmatpush1.bf16.msra.mxu0 %v3954
    %4728 = vmatprep.subr.bf16.mxu0 0
    %4729 = vmatpush2.bf16.msra.mxu0 0
    %4730 = vmatprep.subr.bf16.mxu0 0
    %4731 = vmatpush2.bf16.msra.mxu0 0
    %4732 = vmatprep.subr.bf16.mxu0 0
    %4733 = vmatpush2.bf16.msra.mxu0 0
    %4734 = vmatprep.subr.bf16.mxu0 0
    %4735 = vmatpush2.bf16.msra.mxu0 0
    %4736 = vmatprep.subr.bf16.mxu0 0
    %4737 = vmatpush2.bf16.msra.mxu0 0
    %4738 = vmatprep.subr.bf16.mxu0 0
    %4739 = vmatpush2.bf16.msra.mxu0 0
    %4740 = vmatprep.subr.bf16.mxu0 0
    %4741 = vmatpush2.bf16.msra.mxu0 0
    %4742 = vmatprep.subr.bf16.mxu0 0
    %4743 = vmatpush2.bf16.msra.mxu0 0
    %4744 = vmatprep.mubr.bf16.mxu0 0
    %4745 = vmatmul.mubr.bf16.gmra.mxu0 %v4670
    %v4746 = vpop.f32.mrf.mxu0
    %v4747 = vadd.f32 0.0, %v4746
    %v4748 = vpop.f32.mrf.mxu0
    %v4749 = vpop.f32.mrf.mxu0
    %v4750 = vpop.f32.mrf.mxu0
    %4751 = vdwg.mxu0
    %v4752 = vadd.f32 %v4667, %v4706
    %v4753 = vadd.f32 %v4668, %v4708
    %v4754 = vxor.u32 %v4752, 2147483648
    %v4755 = vxor.u32 %v4753, 2147483648
    %v4756 = vmul.f32 %v4754, 1.442695
    %v4757 = vpow.pop %v4756
    %v4758 = vmul.f32 %v4755, 1.442695
    %v4759 = vpow.pop %v4758
    %v4760 = vadd.f32 %v4757, 1.0
    %v4761 = vadd.f32 %v4759, 1.0
    %v4762 = vrcp.pop %v4760
    %v4763 = vmul.f32 1.0, %v4762
    %v4764 = vrcp.pop %v4761
    %v4765 = vmul.f32 1.0, %v4764
    %v4766 = vadd.f32 %v4747, %v4099
    %v4767 = vmul.f32 %v4763, %v4766
    %v4768 = vadd.f32 %v4669, %v4767
    %v4769 = vtanh.pop %v4768
    %v4770 = vsub.f32 1.0, %v4765
    %v4771 = vmul.f32 %v4770, %v4769
    %v4772 = vmul.f32 %v4765, %v4662
    %v4773 = vadd.f32 %v4771, %v4772
    %s4774 = scalar_lea.vmem [#allocation19], 48
    %4775 = vst [vmem:[%s4774] sm:$0xff] %v4773
    %v4776 = vld [vmem:[%s1529] sm:$0xff]
    %v4777 = vld [vmem:[%s1529 + $0x8] sm:$0xf]
    %v4778 = vunpack.c.l.bf16 %v4776
    %v4779 = vunpack.c.h.bf16 %v4776
    %v4780 = vunpack.c.l.bf16 %v4777
    %v4781 = vpack.c.bf16 %v4773, %v4773
    %4782 = vmatprep.subr.bf16.mxu0 %v3974
    %4783 = vmatpush1.bf16.msra.mxu0 %v3973
    %4784 = vmatprep.subr.bf16.mxu0 %v3971
    %4785 = vmatpush1.bf16.msra.mxu0 %v3970
    %4786 = vmatprep.subr.bf16.mxu0 %v3968
    %4787 = vmatpush1.bf16.msra.mxu0 %v3967
    %4788 = vmatprep.subr.bf16.mxu0 %v3965
    %4789 = vmatpush1.bf16.msra.mxu0 %v3964
    %4790 = vmatprep.subr.bf16.mxu0 %v3962
    %4791 = vmatpush1.bf16.msra.mxu0 %v3961
    %4792 = vmatprep.subr.bf16.mxu0 %v3959
    %4793 = vmatpush1.bf16.msra.mxu0 %v3958
    %4794 = vmatprep.subr.bf16.mxu0 %v3956
    %4795 = vmatpush1.bf16.msra.mxu0 %v3955
    %4796 = vmatprep.subr.bf16.mxu0 %v3953
    %4797 = vmatpush1.bf16.msra.mxu0 %v3952
    %4798 = vmatprep.subr.bf16.mxu0 0
    %4799 = vmatpush2.bf16.msra.mxu0 0
    %4800 = vmatprep.subr.bf16.mxu0 0
    %4801 = vmatpush2.bf16.msra.mxu0 0
    %4802 = vmatprep.subr.bf16.mxu0 0
    %4803 = vmatpush2.bf16.msra.mxu0 0
    %4804 = vmatprep.subr.bf16.mxu0 0
    %4805 = vmatpush2.bf16.msra.mxu0 0
    %4806 = vmatprep.subr.bf16.mxu0 0
    %4807 = vmatpush2.bf16.msra.mxu0 0
    %4808 = vmatprep.subr.bf16.mxu0 0
    %4809 = vmatpush2.bf16.msra.mxu0 0
    %4810 = vmatprep.subr.bf16.mxu0 0
    %4811 = vmatpush2.bf16.msra.mxu0 0
    %4812 = vmatprep.subr.bf16.mxu0 0
    %4813 = vmatpush2.bf16.msra.mxu0 0
    %4814 = vmatprep.mubr.bf16.mxu0 0
    %4815 = vmatmul.mubr.bf16.gmra.mxu0 %v4781
    %v4816 = vpop.f32.mrf.mxu0
    %v4817 = vadd.f32 0.0, %v4816
    %v4818 = vpop.f32.mrf.mxu0
    %v4819 = vadd.f32 0.0, %v4818
    %v4820 = vpop.f32.mrf.mxu0
    %v4821 = vpop.f32.mrf.mxu0
    %4822 = vdwg.mxu0
    %4823 = vmatprep.subr.bf16.mxu0 0
    %4824 = vmatpush1.bf16.msra.mxu0 %v3975
    %4825 = vmatprep.subr.bf16.mxu0 0
    %4826 = vmatpush1.bf16.msra.mxu0 %v3972
    %4827 = vmatprep.subr.bf16.mxu0 0
    %4828 = vmatpush1.bf16.msra.mxu0 %v3969
    %4829 = vmatprep.subr.bf16.mxu0 0
    %4830 = vmatpush1.bf16.msra.mxu0 %v3966
    %4831 = vmatprep.subr.bf16.mxu0 0
    %4832 = vmatpush1.bf16.msra.mxu0 %v3963
    %4833 = vmatprep.subr.bf16.mxu0 0
    %4834 = vmatpush1.bf16.msra.mxu0 %v3960
    %4835 = vmatprep.subr.bf16.mxu0 0
    %4836 = vmatpush1.bf16.msra.mxu0 %v3957
    %4837 = vmatprep.subr.bf16.mxu0 0
    %4838 = vmatpush1.bf16.msra.mxu0 %v3954
    %4839 = vmatprep.subr.bf16.mxu0 0
    %4840 = vmatpush2.bf16.msra.mxu0 0
    %4841 = vmatprep.subr.bf16.mxu0 0
    %4842 = vmatpush2.bf16.msra.mxu0 0
    %4843 = vmatprep.subr.bf16.mxu0 0
    %4844 = vmatpush2.bf16.msra.mxu0 0
    %4845 = vmatprep.subr.bf16.mxu0 0
    %4846 = vmatpush2.bf16.msra.mxu0 0
    %4847 = vmatprep.subr.bf16.mxu0 0
    %4848 = vmatpush2.bf16.msra.mxu0 0
    %4849 = vmatprep.subr.bf16.mxu0 0
    %4850 = vmatpush2.bf16.msra.mxu0 0
    %4851 = vmatprep.subr.bf16.mxu0 0
    %4852 = vmatpush2.bf16.msra.mxu0 0
    %4853 = vmatprep.subr.bf16.mxu0 0
    %4854 = vmatpush2.bf16.msra.mxu0 0
    %4855 = vmatprep.mubr.bf16.mxu0 0
    %4856 = vmatmul.mubr.bf16.gmra.mxu0 %v4781
    %v4857 = vpop.f32.mrf.mxu0
    %v4858 = vadd.f32 0.0, %v4857
    %v4859 = vpop.f32.mrf.mxu0
    %v4860 = vpop.f32.mrf.mxu0
    %v4861 = vpop.f32.mrf.mxu0
    %4862 = vdwg.mxu0
    %v4863 = vadd.f32 %v4778, %v4817
    %v4864 = vadd.f32 %v4779, %v4819
    %v4865 = vxor.u32 %v4863, 2147483648
    %v4866 = vxor.u32 %v4864, 2147483648
    %v4867 = vmul.f32 %v4865, 1.442695
    %v4868 = vpow.pop %v4867
    %v4869 = vmul.f32 %v4866, 1.442695
    %v4870 = vpow.pop %v4869
    %v4871 = vadd.f32 %v4868, 1.0
    %v4872 = vadd.f32 %v4870, 1.0
    %v4873 = vrcp.pop %v4871
    %v4874 = vmul.f32 1.0, %v4873
    %v4875 = vrcp.pop %v4872
    %v4876 = vmul.f32 1.0, %v4875
    %v4877 = vadd.f32 %v4858, %v4099
    %v4878 = vmul.f32 %v4874, %v4877
    %v4879 = vadd.f32 %v4780, %v4878
    %v4880 = vtanh.pop %v4879
    %v4881 = vsub.f32 1.0, %v4876
    %v4882 = vmul.f32 %v4881, %v4880
    %v4883 = vmul.f32 %v4876, %v4773
    %v4884 = vadd.f32 %v4882, %v4883
    %s4885 = scalar_lea.vmem [#allocation19], 56
    %4886 = vst [vmem:[%s4885] sm:$0xff] %v4884
    // Predicated region
    $region106: #{tpu_custom_call.1} parent=1 // pred_check
      _
    $region107: #{tpu_custom_call.1} parent=1 // pred_check_branch
      %4888 = sbr.rel (0) target = $region109
    $region108: #{tpu_custom_call.1} parent=1 // pred_region
      %s4890 = ssub.s32 1024, 1024
      %4891 = vsyncadd [#allocation6], %s4890
      %s4892 = sshll.u32 [#allocation19], 4
      %s4893 = int_to_ptr.vmem [resolvable:$true] %s4892
      %4898 = dma.vmem_to_hbm [thread:$0]  %s4893, 1024, %s17, [#allocation6], 128, 128, 8
    $region109: #{tpu_custom_call.1} parent=1 // pred_fallthru
      _
    // Predicated region
    $region110: #{tpu_custom_call.1} parent=1 // pred_check
      _
    $region111: #{tpu_custom_call.1} parent=1 // pred_check_branch
      %4900 = sbr.rel (0) target = $region113
    $region112: #{tpu_custom_call.1} parent=1 // pred_region
      %4901 = dma.done [#allocation6], 1024
    $region113: #{tpu_custom_call.1} parent=1 // pred_fallthru
      _
    %4902 = vsyncpa [#allocation5], 1
    %4903 = vsyncpa [#allocation8], 1
    %4904 = vsyncpa [#allocation11], 1
    %4905 = vsyncpa [#allocation14], 1
    %4906 = vsyncpa [#allocation17], 1
    %4907 = vsyncpa [#allocation6], 1

</llo_original>
